<compile_context>
chip_gen: v5e
topology: v5e:2x2
jax: 0.10.0
libtpu: 0.0.40
codegen_flags: <defaults>
</compile_context>

<pallas_src>
import functools

import jax
import jax.numpy as jnp
import numpy as np
from jax.experimental import pallas as pl
from jax.experimental.pallas import tpu as pltpu


# ---------------------------------------------------------------------------
# Fused kernel: 7 ResBlock_SFT blocks, grid = (image, block).
# ---------------------------------------------------------------------------
def _stack_kernel(fea_ref, cond_ref, w0_ref, b0_ref, w1_ref, b1_ref,
                  wc_ref, bc_ref, mask_ref, out_ref, cols_ref, *, HS, S, cf):
    blk = pl.program_id(1)
    # tap row-offsets in the spacer-column flattened layout (row stride S = W+1)
    taps = [(dy - 1) * S + (dx - 1) for dy in range(3) for dx in range(3)]

    @pl.when(blk == 0)
    def _init():
        # seed the running feature map, carried in the resident output block
        out_ref[0] = fea_ref[0]

    cond = cond_ref[0]          # (HS, cc) bf16, VMEM-resident for the whole image
    mask = mask_ref[0]          # (HS, 1) f32, zero on the spacer rows

    def sft(inp, j):
        # scale/shift depend only on the side features.  bf16 GEMM operands,
        # f32 accumulation; '+1' folded into the scale bias; zero-padded
        # second-stage weights keep both outputs at lane 0 (no offset-64 slice).
        h = jnp.dot(cond, w0_ref[j],
                    preferred_element_type=jnp.float32) + b0_ref[j]
        h = jnp.where(h >= 0, h, 0.1 * h).astype(jnp.bfloat16)        # (HS, 2*cc)
        scale = jnp.dot(h, w1_ref[j, 0],
                        preferred_element_type=jnp.float32) + b1_ref[j, 0]
        shift = jnp.dot(h, w1_ref[j, 1],
                        preferred_element_type=jnp.float32) + b1_ref[j, 1]
        return inp * scale + shift

    def conv3x3(x, j):
        # Spacer-column layout: each tap is a pure row shift with zero fill of
        # the (HS, cf) slab, written lane-dense into the cols scratch; then one
        # (HS, 9*cf) @ (9*cf, cf) bf16 GEMM with the bias added once.
        xb = (x * mask).astype(jnp.bfloat16)           # zero spacers, cast once
        for t, off in enumerate(taps):
            lo = t * cf
            if off > 0:
                shifted = jnp.concatenate(
                    [xb[off:, :], jnp.zeros((off, cf), jnp.bfloat16)], axis=0)
            elif off < 0:
                shifted = jnp.concatenate(
                    [jnp.zeros((-off, cf), jnp.bfloat16), xb[:HS + off, :]],
                    axis=0)
            else:
                shifted = xb
            cols_ref[:, lo:lo + cf] = shifted
        return jnp.dot(cols_ref[...], wc_ref[j],
                       preferred_element_type=jnp.float32) + bc_ref[j]

    fea = out_ref[0]                                   # (HS, cf) f32 carry
    x = sft(fea, 0)
    x = jnp.maximum(conv3x3(x, 0), 0.0)
    x = sft(x, 1)
    out_ref[0] = fea + conv3x3(x, 1)


def fused_resblock_stack(fea_p, cond_p, w0, b0, w1, b1, wc, bc, mask, *, S):
    N, HS, cf = fea_p.shape
    cc = cond_p.shape[-1]
    n_layers = w0.shape[0]
    n_blocks = n_layers // 2
    kern = functools.partial(_stack_kernel, HS=HS, S=S, cf=cf)
    return pl.pallas_call(
        kern,
        out_shape=jax.ShapeDtypeStruct((N, HS, cf), fea_p.dtype),
        grid=(N, n_blocks),
        in_specs=[
            pl.BlockSpec((1, HS, cf), lambda n, b: (n, 0, 0)),        # fea (per image)
            pl.BlockSpec((1, HS, cc), lambda n, b: (n, 0, 0)),        # cond (per image)
            pl.BlockSpec((2, cc, 2 * cc), lambda n, b: (b, 0, 0)),    # sft stage-1 W
            pl.BlockSpec((2, 1, 2 * cc), lambda n, b: (b, 0, 0)),     # sft stage-1 b
            pl.BlockSpec((2, 2, 2 * cc, cf), lambda n, b: (b, 0, 0, 0)),  # sft stage-2 W
            pl.BlockSpec((2, 2, 1, cf), lambda n, b: (b, 0, 0, 0)),   # sft stage-2 b
            pl.BlockSpec((2, 9 * cf, cf), lambda n, b: (b, 0, 0)),    # conv weights
            pl.BlockSpec((2, 1, cf), lambda n, b: (b, 0, 0)),         # conv biases
            pl.BlockSpec((1, HS, 1), lambda n, b: (0, 0, 0)),         # spacer mask
        ],
        out_specs=pl.BlockSpec((1, HS, cf), lambda n, b: (n, 0, 0)),
        scratch_shapes=[pltpu.VMEM((HS, 9 * cf), jnp.bfloat16)],      # im2col cols
        compiler_params=pltpu.CompilerParams(
            dimension_semantics=("parallel", "arbitrary"),
            vmem_limit_bytes=64 * 1024 * 1024),
    )(fea_p, cond_p, w0, b0, w1, b1, wc, bc, mask)


# ---------------------------------------------------------------------------
# Weight packing (one-time JAX glue)
# ---------------------------------------------------------------------------
def _pack_params(params, nf, cc):
    sfts = []
    for p in params:
        sfts.append(p["sft0"])
        sfts.append(p["sft1"])
    # stage 1: [ws0 | wt0] per layer -> one K=32, N=64 GEMM
    w0 = jnp.stack([jnp.concatenate([s["ws0"], s["wt0"]], axis=1) for s in sfts])
    b0 = jnp.stack([jnp.concatenate([s["bs0"], s["bt0"]], axis=1) for s in sfts])
    # stage 2: zero-padded so scale/shift each come from a full-K GEMM at lane 0;
    # '+1' folded into the scale bias.
    z = jnp.zeros((cc, nf), jnp.float32)
    w1 = jnp.stack([jnp.stack([jnp.concatenate([s["ws1"], z], axis=0),
                               jnp.concatenate([z, s["wt1"]], axis=0)])
                    for s in sfts])                                  # (14, 2, 2cc, nf)
    b1 = jnp.stack([jnp.stack([s["bs1"] + 1.0, s["bt1"]]) for s in sfts])  # (14,2,1,nf)
    # 3x3 convs: tap-major (dy, dx) then input channel -> (14, 9*nf, nf)
    wc = jnp.stack([p[k].reshape(9 * nf, nf)
                    for p in params for k in ("conv0_w", "conv1_w")])
    bc = jnp.stack([p[k].reshape(1, nf)
                    for p in params for k in ("conv0_b", "conv1_b")])
    return (w0.astype(jnp.bfloat16), b0,
            w1.astype(jnp.bfloat16), b1,
            wc.astype(jnp.bfloat16), bc)


# ---------------------------------------------------------------------------
# Full forward pass
# ---------------------------------------------------------------------------
def side_embeded_feature_extract_block(img_feas, side_feas, params):
    # img_feas: (N,H,W,64) f32, side_feas: (N,H,W,32) f32 (NHWC)
    N, H, W, cf = img_feas.shape
    cc = side_feas.shape[-1]
    S = W + 1                                  # spacer column per image row
    HS = H * S
    w0, b0, w1, b1, wc, bc = _pack_params(params, cf, cc)
    fea_p = jnp.pad(img_feas, ((0, 0), (0, 0), (0, 1), (0, 0))).reshape(N, HS, cf)
    cond_p = jnp.pad(side_feas, ((0, 0), (0, 0), (0, 1), (0, 0))
                     ).reshape(N, HS, cc).astype(jnp.bfloat16)
    mask = (jnp.arange(HS) % S < W).astype(jnp.float32).reshape(1, HS, 1)
    out = fused_resblock_stack(fea_p, cond_p, w0, b0, w1, b1, wc, bc, mask, S=S)
    return out.reshape(N, H, S, cf)[:, :, :W, :]


# ---------------------------------------------------------------------------
# deterministic synthetic parameters
# ---------------------------------------------------------------------------
def init_params(key, nf=64, cc=32, n_blocks=7):
    def sft_init(k):
        ks = jax.random.split(k, 8)
        return dict(
            ws0=0.05 * jax.random.normal(ks[0], (cc, cc), jnp.float32),
            bs0=0.01 * jax.random.normal(ks[1], (1, cc), jnp.float32),
            ws1=0.05 * jax.random.normal(ks[2], (cc, nf), jnp.float32),
            bs1=0.01 * jax.random.normal(ks[3], (1, nf), jnp.float32),
            wt0=0.05 * jax.random.normal(ks[4], (cc, cc), jnp.float32),
            bt0=0.01 * jax.random.normal(ks[5], (1, cc), jnp.float32),
            wt1=0.05 * jax.random.normal(ks[6], (cc, nf), jnp.float32),
            bt1=0.01 * jax.random.normal(ks[7], (1, nf), jnp.float32),
        )

    params = []
    for b in range(n_blocks):
        k = jax.random.fold_in(key, b)
        k0, k1, k2, k3, k4, k5 = jax.random.split(k, 6)
        params.append(dict(
            sft0=sft_init(k0),
            conv0_w=0.03 * jax.random.normal(k1, (3, 3, nf, nf), jnp.float32),
            conv0_b=0.01 * jax.random.normal(k2, (nf,), jnp.float32),
            sft1=sft_init(k3),
            conv1_w=0.03 * jax.random.normal(k4, (3, 3, nf, nf), jnp.float32),
            conv1_b=0.01 * jax.random.normal(k5, (nf,), jnp.float32),
        ))
    return params


# ---------------------------------------------------------------------------
# plain-JAX reference (for correctness cross-check)
# ---------------------------------------------------------------------------
def _sft_ref(fea, cond, p):
    lrelu = lambda x: jnp.where(x >= 0, x, 0.1 * x)
    scale = lrelu(cond @ p["ws0"] + p["bs0"]) @ p["ws1"] + p["bs1"]
    shift = lrelu(cond @ p["wt0"] + p["bt0"]) @ p["wt1"] + p["bt1"]
    return fea * (scale + 1.0) + shift


def _conv_ref(x, w, b):
    return jax.lax.conv_general_dilated(
        x, w, (1, 1), "SAME",
        dimension_numbers=("NHWC", "HWIO", "NHWC")) + b


def _resblock_ref(fea, cond, p):
    x = _sft_ref(fea, cond, p["sft0"])
    x = jnp.maximum(_conv_ref(x, p["conv0_w"], p["conv0_b"]), 0.0)
    x = _sft_ref(x, cond, p["sft1"])
    x = _conv_ref(x, p["conv1_w"], p["conv1_b"])
    return fea + x


if __name__ == "__main__":
    key = jax.random.PRNGKey(0)
    kx, ks, kp = jax.random.split(key, 3)
    N, H, W, CF, CC = 2, 16, 16, 64, 32

    # PyTorch-style NCHW inputs, transposed to the kernel's NHWC layout.
    img_feas_nchw = jax.random.normal(kx, (N, CF, H, W), jnp.float32)
    side_feas_nchw = jax.random.normal(ks, (N, CC, H, W), jnp.float32)
    img_feas = jnp.transpose(img_feas_nchw, (0, 2, 3, 1))
    side_feas = jnp.transpose(side_feas_nchw, (0, 2, 3, 1))

    params = init_params(kp, nf=CF, cc=CC, n_blocks=7)

    out = jax.jit(side_embeded_feature_extract_block)(img_feas, side_feas, params)
    out = jax.block_until_ready(out)

    ref = img_feas
    for p in params:
        ref = _resblock_ref(ref, side_feas, p)
    np.testing.assert_allclose(np.asarray(out), np.asarray(ref),
                               atol=2e-2, rtol=2e-2)
    print("KERNEL_OK")
</pallas_src>

<mosaic_0001>
module attributes {stable_mosaic.version = 11 : i64} {
  func.func @_stack_kernel(%arg0: i32, %arg1: i32, %arg2: memref<1x272x64xf32, #tpu.memory_space<vmem>>, %arg3: memref<1x272x32xbf16, #tpu.memory_space<vmem>>, %arg4: memref<2x32x64xbf16, #tpu.memory_space<vmem>>, %arg5: memref<2x1x64xf32, #tpu.memory_space<vmem>>, %arg6: memref<2x2x64x64xbf16, #tpu.memory_space<vmem>>, %arg7: memref<2x2x1x64xf32, #tpu.memory_space<vmem>>, %arg8: memref<2x576x64xbf16, #tpu.memory_space<vmem>>, %arg9: memref<2x1x64xf32, #tpu.memory_space<vmem>>, %arg10: memref<1x272x1xf32, #tpu.memory_space<vmem>>, %arg11: memref<1x272x64xf32, #tpu.memory_space<vmem>>, %arg12: memref<272x576xbf16, #tpu.memory_space<vmem>>) attributes {dimension_semantics = [#tpu.dimension_semantics<parallel>, #tpu.dimension_semantics<arbitrary>], iteration_bounds = array<i64: 2, 7>, scalar_prefetch = 0 : i64, scratch_operands = 1 : i64, tpu.core_type = #tpu.core_type<tc>, window_params = [{transform_indices = @transform_0, window_bounds = array<i64: 1, 272, 64>}, {transform_indices = @transform_1, window_bounds = array<i64: 1, 272, 32>}, {transform_indices = @transform_2, window_bounds = array<i64: 2, 32, 64>}, {transform_indices = @transform_3, window_bounds = array<i64: 2, 1, 64>}, {transform_indices = @transform_4, window_bounds = array<i64: 2, 2, 64, 64>}, {transform_indices = @transform_5, window_bounds = array<i64: 2, 2, 1, 64>}, {transform_indices = @transform_6, window_bounds = array<i64: 2, 576, 64>}, {transform_indices = @transform_7, window_bounds = array<i64: 2, 1, 64>}, {pipeline_mode = #tpu.pipeline_mode<synchronous>, transform_indices = @transform_8, window_bounds = array<i64: 1, 272, 1>}, {transform_indices = @transform_9, window_bounds = array<i64: 1, 272, 64>}]} {
    %c0_i32 = arith.constant 0 : i32
    %0 = arith.cmpi eq, %arg1, %c0_i32 : i32
    %1 = arith.extui %0 : i1 to i32
    %c0_i32_0 = arith.constant 0 : i32
    %2 = arith.cmpi ne, %1, %c0_i32_0 : i32
    scf.if %2 {
      %c0_127 = arith.constant 0 : index
      %c0_128 = arith.constant 0 : index
      %c0_129 = arith.constant 0 : index
      %161 = vector.load %arg2[%c0_127, %c0_128, %c0_129] : memref<1x272x64xf32, #tpu.memory_space<vmem>>, vector<1x272x64xf32>
      %162 = vector.shape_cast %161 : vector<1x272x64xf32> to vector<272x64xf32>
      %c0_130 = arith.constant 0 : index
      %c0_131 = arith.constant 0 : index
      %c0_132 = arith.constant 0 : index
      %163 = vector.load %arg11[%c0_130, %c0_131, %c0_132] : memref<1x272x64xf32, #tpu.memory_space<vmem>>, vector<1x272x64xf32>
      %164 = vector.shape_cast %163 : vector<1x272x64xf32> to vector<272x64xf32>
      %165 = vector.shape_cast %162 : vector<272x64xf32> to vector<1x272x64xf32>
      tpu.vector_store %arg11[%c0_130, %c0_131, %c0_132], %165 {strides = array<i32>} : memref<1x272x64xf32, #tpu.memory_space<vmem>>, vector<1x272x64xf32>,
    } else {
    }
    %c0 = arith.constant 0 : index
    %c0_1 = arith.constant 0 : index
    %c0_2 = arith.constant 0 : index
    %3 = vector.load %arg3[%c0, %c0_1, %c0_2] : memref<1x272x32xbf16, #tpu.memory_space<vmem>>, vector<1x272x32xbf16>
    %4 = vector.shape_cast %3 : vector<1x272x32xbf16> to vector<272x32xbf16>
    %c0_3 = arith.constant 0 : index
    %c0_4 = arith.constant 0 : index
    %c0_5 = arith.constant 0 : index
    %5 = vector.load %arg10[%c0_3, %c0_4, %c0_5] : memref<1x272x1xf32, #tpu.memory_space<vmem>>, vector<1x272x1xf32>
    %6 = vector.shape_cast %5 : vector<1x272x1xf32> to vector<272x1xf32>
    %c0_6 = arith.constant 0 : index
    %c0_7 = arith.constant 0 : index
    %c0_8 = arith.constant 0 : index
    %7 = vector.load %arg11[%c0_6, %c0_7, %c0_8] : memref<1x272x64xf32, #tpu.memory_space<vmem>>, vector<1x272x64xf32>
    %8 = vector.shape_cast %7 : vector<1x272x64xf32> to vector<272x64xf32>
    %c0_9 = arith.constant 0 : index
    %c0_10 = arith.constant 0 : index
    %c0_11 = arith.constant 0 : index
    %9 = vector.load %arg4[%c0_9, %c0_10, %c0_11] : memref<2x32x64xbf16, #tpu.memory_space<vmem>>, vector<1x32x64xbf16>
    %10 = vector.shape_cast %9 : vector<1x32x64xbf16> to vector<32x64xbf16>
    %cst = arith.constant dense<0.000000e+00> : vector<272x64xf32>
    %11 = tpu.matmul %4, %10, %cst {dimension_numbers = #tpu.dot_dimension_numbers<[1], [0], [0], [1], [0, 0, 1, 1], [], []>} : vector<272x32xbf16>, vector<32x64xbf16>, vector<272x64xf32> -> vector<272x64xf32>
    %c0_12 = arith.constant 0 : index
    %c0_13 = arith.constant 0 : index
    %c0_14 = arith.constant 0 : index
    %12 = vector.load %arg5[%c0_12, %c0_13, %c0_14] : memref<2x1x64xf32, #tpu.memory_space<vmem>>, vector<1x1x64xf32>
    %13 = vector.shape_cast %12 : vector<1x1x64xf32> to vector<1x64xf32>
    %14 = vector.broadcast %13 : vector<1x64xf32> to vector<272x64xf32>
    %15 = arith.addf %11, %14 : vector<272x64xf32>
    %cst_15 = arith.constant 0.000000e+00 : f32
    %16 = vector.broadcast %cst_15 : f32 to vector<272x64xf32>
    %17 = arith.cmpf oge, %15, %16 : vector<272x64xf32>
    %cst_16 = arith.constant 1.000000e-01 : f32
    %18 = vector.broadcast %cst_16 : f32 to vector<272x64xf32>
    %19 = arith.mulf %18, %15 : vector<272x64xf32>
    %20 = arith.select %17, %15, %19 : vector<272x64xi1>, vector<272x64xf32>
    %21 = arith.truncf %20 : vector<272x64xf32> to vector<272x64xbf16>
    %c0_17 = arith.constant 0 : index
    %c0_18 = arith.constant 0 : index
    %c0_19 = arith.constant 0 : index
    %c0_20 = arith.constant 0 : index
    %22 = vector.load %arg6[%c0_17, %c0_18, %c0_19, %c0_20] : memref<2x2x64x64xbf16, #tpu.memory_space<vmem>>, vector<1x1x64x64xbf16>
    %23 = vector.shape_cast %22 : vector<1x1x64x64xbf16> to vector<64x64xbf16>
    %cst_21 = arith.constant dense<0.000000e+00> : vector<272x64xf32>
    %24 = tpu.matmul %21, %23, %cst_21 {dimension_numbers = #tpu.dot_dimension_numbers<[1], [0], [0], [1], [0, 0, 1, 1], [], []>} : vector<272x64xbf16>, vector<64x64xbf16>, vector<272x64xf32> -> vector<272x64xf32>
    %c0_22 = arith.constant 0 : index
    %c0_23 = arith.constant 0 : index
    %c0_24 = arith.constant 0 : index
    %c0_25 = arith.constant 0 : index
    %25 = vector.load %arg7[%c0_22, %c0_23, %c0_24, %c0_25] : memref<2x2x1x64xf32, #tpu.memory_space<vmem>>, vector<1x1x1x64xf32>
    %26 = vector.shape_cast %25 : vector<1x1x1x64xf32> to vector<1x64xf32>
    %27 = vector.broadcast %26 : vector<1x64xf32> to vector<272x64xf32>
    %28 = arith.addf %24, %27 : vector<272x64xf32>
    %c0_26 = arith.constant 0 : index
    %c1 = arith.constant 1 : index
    %c0_27 = arith.constant 0 : index
    %c0_28 = arith.constant 0 : index
    %29 = vector.load %arg6[%c0_26, %c1, %c0_27, %c0_28] : memref<2x2x64x64xbf16, #tpu.memory_space<vmem>>, vector<1x1x64x64xbf16>
    %30 = vector.shape_cast %29 : vector<1x1x64x64xbf16> to vector<64x64xbf16>
    %cst_29 = arith.constant dense<0.000000e+00> : vector<272x64xf32>
    %31 = tpu.matmul %21, %30, %cst_29 {dimension_numbers = #tpu.dot_dimension_numbers<[1], [0], [0], [1], [0, 0, 1, 1], [], []>} : vector<272x64xbf16>, vector<64x64xbf16>, vector<272x64xf32> -> vector<272x64xf32>
    %c0_30 = arith.constant 0 : index
    %c1_31 = arith.constant 1 : index
    %c0_32 = arith.constant 0 : index
    %c0_33 = arith.constant 0 : index
    %32 = vector.load %arg7[%c0_30, %c1_31, %c0_32, %c0_33] : memref<2x2x1x64xf32, #tpu.memory_space<vmem>>, vector<1x1x1x64xf32>
    %33 = vector.shape_cast %32 : vector<1x1x1x64xf32> to vector<1x64xf32>
    %34 = vector.broadcast %33 : vector<1x64xf32> to vector<272x64xf32>
    %35 = arith.addf %31, %34 : vector<272x64xf32>
    %36 = arith.mulf %8, %28 : vector<272x64xf32>
    %37 = arith.addf %36, %35 : vector<272x64xf32>
    %38 = vector.broadcast %6 : vector<272x1xf32> to vector<272x64xf32>
    %39 = arith.mulf %37, %38 : vector<272x64xf32>
    %40 = arith.truncf %39 : vector<272x64xf32> to vector<272x64xbf16>
    %cst_34 = arith.constant 0.000000e+00 : bf16
    %41 = vector.broadcast %cst_34 : bf16 to vector<18x64xbf16>
    %42 = vector.extract_strided_slice %40 {offsets = [0, 0], sizes = [254, 64], strides = [1, 1]} : vector<272x64xbf16> to vector<254x64xbf16>
    %43 = tpu.concatenate %41, %42 in 0 : vector<18x64xbf16>, vector<254x64xbf16> -> vector<272x64xbf16>
    %c0_35 = arith.constant 0 : index
    %c0_36 = arith.constant 0 : index
    %44 = vector.load %arg12[%c0_35, %c0_36] : memref<272x576xbf16, #tpu.memory_space<vmem>>, vector<272x64xbf16>
    tpu.vector_store %arg12[%c0_35, %c0_36], %43 {strides = array<i32>} : memref<272x576xbf16, #tpu.memory_space<vmem>>, vector<272x64xbf16>,
    %cst_37 = arith.constant 0.000000e+00 : bf16
    %45 = vector.broadcast %cst_37 : bf16 to vector<17x64xbf16>
    %46 = vector.extract_strided_slice %40 {offsets = [0, 0], sizes = [255, 64], strides = [1, 1]} : vector<272x64xbf16> to vector<255x64xbf16>
    %47 = tpu.concatenate %45, %46 in 0 : vector<17x64xbf16>, vector<255x64xbf16> -> vector<272x64xbf16>
    %c0_38 = arith.constant 0 : index
    %c64 = arith.constant 64 : index
    %48 = vector.load %arg12[%c0_38, %c64] : memref<272x576xbf16, #tpu.memory_space<vmem>>, vector<272x64xbf16>
    tpu.vector_store %arg12[%c0_38, %c64], %47 {strides = array<i32>} : memref<272x576xbf16, #tpu.memory_space<vmem>>, vector<272x64xbf16>,
    %cst_39 = arith.constant 0.000000e+00 : bf16
    %49 = vector.broadcast %cst_39 : bf16 to vector<16x64xbf16>
    %50 = vector.extract_strided_slice %40 {offsets = [0, 0], sizes = [256, 64], strides = [1, 1]} : vector<272x64xbf16> to vector<256x64xbf16>
    %51 = tpu.concatenate %49, %50 in 0 : vector<16x64xbf16>, vector<256x64xbf16> -> vector<272x64xbf16>
    %c0_40 = arith.constant 0 : index
    %c128 = arith.constant 128 : index
    %52 = vector.load %arg12[%c0_40, %c128] : memref<272x576xbf16, #tpu.memory_space<vmem>>, vector<272x64xbf16>
    tpu.vector_store %arg12[%c0_40, %c128], %51 {strides = array<i32>} : memref<272x576xbf16, #tpu.memory_space<vmem>>, vector<272x64xbf16>,
    %cst_41 = arith.constant 0.000000e+00 : bf16
    %53 = vector.broadcast %cst_41 : bf16 to vector<1x64xbf16>
    %54 = vector.extract_strided_slice %40 {offsets = [0, 0], sizes = [271, 64], strides = [1, 1]} : vector<272x64xbf16> to vector<271x64xbf16>
    %55 = tpu.concatenate %53, %54 in 0 : vector<1x64xbf16>, vector<271x64xbf16> -> vector<272x64xbf16>
    %c0_42 = arith.constant 0 : index
    %c192 = arith.constant 192 : index
    %56 = vector.load %arg12[%c0_42, %c192] : memref<272x576xbf16, #tpu.memory_space<vmem>>, vector<272x64xbf16>
    tpu.vector_store %arg12[%c0_42, %c192], %55 {strides = array<i32>} : memref<272x576xbf16, #tpu.memory_space<vmem>>, vector<272x64xbf16>,
    %c0_43 = arith.constant 0 : index
    %c256 = arith.constant 256 : index
    %57 = vector.load %arg12[%c0_43, %c256] : memref<272x576xbf16, #tpu.memory_space<vmem>>, vector<272x64xbf16>
    tpu.vector_store %arg12[%c0_43, %c256], %40 {strides = array<i32>} : memref<272x576xbf16, #tpu.memory_space<vmem>>, vector<272x64xbf16>,
    %58 = vector.extract_strided_slice %40 {offsets = [1, 0], sizes = [271, 64], strides = [1, 1]} : vector<272x64xbf16> to vector<271x64xbf16>
    %cst_44 = arith.constant 0.000000e+00 : bf16
    %59 = vector.broadcast %cst_44 : bf16 to vector<1x64xbf16>
    %60 = tpu.concatenate %58, %59 in 0 : vector<271x64xbf16>, vector<1x64xbf16> -> vector<272x64xbf16>
    %c0_45 = arith.constant 0 : index
    %c320 = arith.constant 320 : index
    %61 = vector.load %arg12[%c0_45, %c320] : memref<272x576xbf16, #tpu.memory_space<vmem>>, vector<272x64xbf16>
    tpu.vector_store %arg12[%c0_45, %c320], %60 {strides = array<i32>} : memref<272x576xbf16, #tpu.memory_space<vmem>>, vector<272x64xbf16>,
    %62 = vector.extract_strided_slice %40 {offsets = [16, 0], sizes = [256, 64], strides = [1, 1]} : vector<272x64xbf16> to vector<256x64xbf16>
    %cst_46 = arith.constant 0.000000e+00 : bf16
    %63 = vector.broadcast %cst_46 : bf16 to vector<16x64xbf16>
    %64 = tpu.concatenate %62, %63 in 0 : vector<256x64xbf16>, vector<16x64xbf16> -> vector<272x64xbf16>
    %c0_47 = arith.constant 0 : index
    %c384 = arith.constant 384 : index
    %65 = vector.load %arg12[%c0_47, %c384] : memref<272x576xbf16, #tpu.memory_space<vmem>>, vector<272x64xbf16>
    tpu.vector_store %arg12[%c0_47, %c384], %64 {strides = array<i32>} : memref<272x576xbf16, #tpu.memory_space<vmem>>, vector<272x64xbf16>,
    %66 = vector.extract_strided_slice %40 {offsets = [17, 0], sizes = [255, 64], strides = [1, 1]} : vector<272x64xbf16> to vector<255x64xbf16>
    %cst_48 = arith.constant 0.000000e+00 : bf16
    %67 = vector.broadcast %cst_48 : bf16 to vector<17x64xbf16>
    %68 = tpu.concatenate %66, %67 in 0 : vector<255x64xbf16>, vector<17x64xbf16> -> vector<272x64xbf16>
    %c0_49 = arith.constant 0 : index
    %c448 = arith.constant 448 : index
    %69 = vector.load %arg12[%c0_49, %c448] : memref<272x576xbf16, #tpu.memory_space<vmem>>, vector<272x64xbf16>
    tpu.vector_store %arg12[%c0_49, %c448], %68 {strides = array<i32>} : memref<272x576xbf16, #tpu.memory_space<vmem>>, vector<272x64xbf16>,
    %70 = vector.extract_strided_slice %40 {offsets = [18, 0], sizes = [254, 64], strides = [1, 1]} : vector<272x64xbf16> to vector<254x64xbf16>
    %cst_50 = arith.constant 0.000000e+00 : bf16
    %71 = vector.broadcast %cst_50 : bf16 to vector<18x64xbf16>
    %72 = tpu.concatenate %70, %71 in 0 : vector<254x64xbf16>, vector<18x64xbf16> -> vector<272x64xbf16>
    %c0_51 = arith.constant 0 : index
    %c512 = arith.constant 512 : index
    %73 = vector.load %arg12[%c0_51, %c512] : memref<272x576xbf16, #tpu.memory_space<vmem>>, vector<272x64xbf16>
    tpu.vector_store %arg12[%c0_51, %c512], %72 {strides = array<i32>} : memref<272x576xbf16, #tpu.memory_space<vmem>>, vector<272x64xbf16>,
    %c0_52 = arith.constant 0 : index
    %c0_53 = arith.constant 0 : index
    %74 = vector.load %arg12[%c0_52, %c0_53] : memref<272x576xbf16, #tpu.memory_space<vmem>>, vector<272x576xbf16>
    %c0_54 = arith.constant 0 : index
    %c0_55 = arith.constant 0 : index
    %c0_56 = arith.constant 0 : index
    %75 = vector.load %arg8[%c0_54, %c0_55, %c0_56] : memref<2x576x64xbf16, #tpu.memory_space<vmem>>, vector<1x576x64xbf16>
    %76 = vector.shape_cast %75 : vector<1x576x64xbf16> to vector<576x64xbf16>
    %cst_57 = arith.constant dense<0.000000e+00> : vector<272x64xf32>
    %77 = tpu.matmul %74, %76, %cst_57 {dimension_numbers = #tpu.dot_dimension_numbers<[1], [0], [0], [1], [0, 0, 1, 1], [], []>} : vector<272x576xbf16>, vector<576x64xbf16>, vector<272x64xf32> -> vector<272x64xf32>
    %c0_58 = arith.constant 0 : index
    %c0_59 = arith.constant 0 : index
    %c0_60 = arith.constant 0 : index
    %78 = vector.load %arg9[%c0_58, %c0_59, %c0_60] : memref<2x1x64xf32, #tpu.memory_space<vmem>>, vector<1x1x64xf32>
    %79 = vector.shape_cast %78 : vector<1x1x64xf32> to vector<1x64xf32>
    %80 = vector.broadcast %79 : vector<1x64xf32> to vector<272x64xf32>
    %81 = arith.addf %77, %80 : vector<272x64xf32>
    %cst_61 = arith.constant 0.000000e+00 : f32
    %82 = vector.broadcast %cst_61 : f32 to vector<272x64xf32>
    %83 = arith.maximumf %81, %82 : vector<272x64xf32>
    %c1_62 = arith.constant 1 : index
    %c0_63 = arith.constant 0 : index
    %c0_64 = arith.constant 0 : index
    %84 = vector.load %arg4[%c1_62, %c0_63, %c0_64] : memref<2x32x64xbf16, #tpu.memory_space<vmem>>, vector<1x32x64xbf16>
    %85 = vector.shape_cast %84 : vector<1x32x64xbf16> to vector<32x64xbf16>
    %cst_65 = arith.constant dense<0.000000e+00> : vector<272x64xf32>
    %86 = tpu.matmul %4, %85, %cst_65 {dimension_numbers = #tpu.dot_dimension_numbers<[1], [0], [0], [1], [0, 0, 1, 1], [], []>} : vector<272x32xbf16>, vector<32x64xbf16>, vector<272x64xf32> -> vector<272x64xf32>
    %c1_66 = arith.constant 1 : index
    %c0_67 = arith.constant 0 : index
    %c0_68 = arith.constant 0 : index
    %87 = vector.load %arg5[%c1_66, %c0_67, %c0_68] : memref<2x1x64xf32, #tpu.memory_space<vmem>>, vector<1x1x64xf32>
    %88 = vector.shape_cast %87 : vector<1x1x64xf32> to vector<1x64xf32>
    %89 = vector.broadcast %88 : vector<1x64xf32> to vector<272x64xf32>
    %90 = arith.addf %86, %89 : vector<272x64xf32>
    %cst_69 = arith.constant 0.000000e+00 : f32
    %91 = vector.broadcast %cst_69 : f32 to vector<272x64xf32>
    %92 = arith.cmpf oge, %90, %91 : vector<272x64xf32>
    %cst_70 = arith.constant 1.000000e-01 : f32
    %93 = vector.broadcast %cst_70 : f32 to vector<272x64xf32>
    %94 = arith.mulf %93, %90 : vector<272x64xf32>
    %95 = arith.select %92, %90, %94 : vector<272x64xi1>, vector<272x64xf32>
    %96 = arith.truncf %95 : vector<272x64xf32> to vector<272x64xbf16>
    %c1_71 = arith.constant 1 : index
    %c0_72 = arith.constant 0 : index
    %c0_73 = arith.constant 0 : index
    %c0_74 = arith.constant 0 : index
    %97 = vector.load %arg6[%c1_71, %c0_72, %c0_73, %c0_74] : memref<2x2x64x64xbf16, #tpu.memory_space<vmem>>, vector<1x1x64x64xbf16>
    %98 = vector.shape_cast %97 : vector<1x1x64x64xbf16> to vector<64x64xbf16>
    %cst_75 = arith.constant dense<0.000000e+00> : vector<272x64xf32>
    %99 = tpu.matmul %96, %98, %cst_75 {dimension_numbers = #tpu.dot_dimension_numbers<[1], [0], [0], [1], [0, 0, 1, 1], [], []>} : vector<272x64xbf16>, vector<64x64xbf16>, vector<272x64xf32> -> vector<272x64xf32>
    %c1_76 = arith.constant 1 : index
    %c0_77 = arith.constant 0 : index
    %c0_78 = arith.constant 0 : index
    %c0_79 = arith.constant 0 : index
    %100 = vector.load %arg7[%c1_76, %c0_77, %c0_78, %c0_79] : memref<2x2x1x64xf32, #tpu.memory_space<vmem>>, vector<1x1x1x64xf32>
    %101 = vector.shape_cast %100 : vector<1x1x1x64xf32> to vector<1x64xf32>
    %102 = vector.broadcast %101 : vector<1x64xf32> to vector<272x64xf32>
    %103 = arith.addf %99, %102 : vector<272x64xf32>
    %c1_80 = arith.constant 1 : index
    %c1_81 = arith.constant 1 : index
    %c0_82 = arith.constant 0 : index
    %c0_83 = arith.constant 0 : index
    %104 = vector.load %arg6[%c1_80, %c1_81, %c0_82, %c0_83] : memref<2x2x64x64xbf16, #tpu.memory_space<vmem>>, vector<1x1x64x64xbf16>
    %105 = vector.shape_cast %104 : vector<1x1x64x64xbf16> to vector<64x64xbf16>
    %cst_84 = arith.constant dense<0.000000e+00> : vector<272x64xf32>
    %106 = tpu.matmul %96, %105, %cst_84 {dimension_numbers = #tpu.dot_dimension_numbers<[1], [0], [0], [1], [0, 0, 1, 1], [], []>} : vector<272x64xbf16>, vector<64x64xbf16>, vector<272x64xf32> -> vector<272x64xf32>
    %c1_85 = arith.constant 1 : index
    %c1_86 = arith.constant 1 : index
    %c0_87 = arith.constant 0 : index
    %c0_88 = arith.constant 0 : index
    %107 = vector.load %arg7[%c1_85, %c1_86, %c0_87, %c0_88] : memref<2x2x1x64xf32, #tpu.memory_space<vmem>>, vector<1x1x1x64xf32>
    %108 = vector.shape_cast %107 : vector<1x1x1x64xf32> to vector<1x64xf32>
    %109 = vector.broadcast %108 : vector<1x64xf32> to vector<272x64xf32>
    %110 = arith.addf %106, %109 : vector<272x64xf32>
    %111 = arith.mulf %83, %103 : vector<272x64xf32>
    %112 = arith.addf %111, %110 : vector<272x64xf32>
    %113 = vector.broadcast %6 : vector<272x1xf32> to vector<272x64xf32>
    %114 = arith.mulf %112, %113 : vector<272x64xf32>
    %115 = arith.truncf %114 : vector<272x64xf32> to vector<272x64xbf16>
    %cst_89 = arith.constant 0.000000e+00 : bf16
    %116 = vector.broadcast %cst_89 : bf16 to vector<18x64xbf16>
    %117 = vector.extract_strided_slice %115 {offsets = [0, 0], sizes = [254, 64], strides = [1, 1]} : vector<272x64xbf16> to vector<254x64xbf16>
    %118 = tpu.concatenate %116, %117 in 0 : vector<18x64xbf16>, vector<254x64xbf16> -> vector<272x64xbf16>
    %c0_90 = arith.constant 0 : index
    %c0_91 = arith.constant 0 : index
    %119 = vector.load %arg12[%c0_90, %c0_91] : memref<272x576xbf16, #tpu.memory_space<vmem>>, vector<272x64xbf16>
    tpu.vector_store %arg12[%c0_90, %c0_91], %118 {strides = array<i32>} : memref<272x576xbf16, #tpu.memory_space<vmem>>, vector<272x64xbf16>,
    %cst_92 = arith.constant 0.000000e+00 : bf16
    %120 = vector.broadcast %cst_92 : bf16 to vector<17x64xbf16>
    %121 = vector.extract_strided_slice %115 {offsets = [0, 0], sizes = [255, 64], strides = [1, 1]} : vector<272x64xbf16> to vector<255x64xbf16>
    %122 = tpu.concatenate %120, %121 in 0 : vector<17x64xbf16>, vector<255x64xbf16> -> vector<272x64xbf16>
    %c0_93 = arith.constant 0 : index
    %c64_94 = arith.constant 64 : index
    %123 = vector.load %arg12[%c0_93, %c64_94] : memref<272x576xbf16, #tpu.memory_space<vmem>>, vector<272x64xbf16>
    tpu.vector_store %arg12[%c0_93, %c64_94], %122 {strides = array<i32>} : memref<272x576xbf16, #tpu.memory_space<vmem>>, vector<272x64xbf16>,
    %cst_95 = arith.constant 0.000000e+00 : bf16
    %124 = vector.broadcast %cst_95 : bf16 to vector<16x64xbf16>
    %125 = vector.extract_strided_slice %115 {offsets = [0, 0], sizes = [256, 64], strides = [1, 1]} : vector<272x64xbf16> to vector<256x64xbf16>
    %126 = tpu.concatenate %124, %125 in 0 : vector<16x64xbf16>, vector<256x64xbf16> -> vector<272x64xbf16>
    %c0_96 = arith.constant 0 : index
    %c128_97 = arith.constant 128 : index
    %127 = vector.load %arg12[%c0_96, %c128_97] : memref<272x576xbf16, #tpu.memory_space<vmem>>, vector<272x64xbf16>
    tpu.vector_store %arg12[%c0_96, %c128_97], %126 {strides = array<i32>} : memref<272x576xbf16, #tpu.memory_space<vmem>>, vector<272x64xbf16>,
    %cst_98 = arith.constant 0.000000e+00 : bf16
    %128 = vector.broadcast %cst_98 : bf16 to vector<1x64xbf16>
    %129 = vector.extract_strided_slice %115 {offsets = [0, 0], sizes = [271, 64], strides = [1, 1]} : vector<272x64xbf16> to vector<271x64xbf16>
    %130 = tpu.concatenate %128, %129 in 0 : vector<1x64xbf16>, vector<271x64xbf16> -> vector<272x64xbf16>
    %c0_99 = arith.constant 0 : index
    %c192_100 = arith.constant 192 : index
    %131 = vector.load %arg12[%c0_99, %c192_100] : memref<272x576xbf16, #tpu.memory_space<vmem>>, vector<272x64xbf16>
    tpu.vector_store %arg12[%c0_99, %c192_100], %130 {strides = array<i32>} : memref<272x576xbf16, #tpu.memory_space<vmem>>, vector<272x64xbf16>,
    %c0_101 = arith.constant 0 : index
    %c256_102 = arith.constant 256 : index
    %132 = vector.load %arg12[%c0_101, %c256_102] : memref<272x576xbf16, #tpu.memory_space<vmem>>, vector<272x64xbf16>
    tpu.vector_store %arg12[%c0_101, %c256_102], %115 {strides = array<i32>} : memref<272x576xbf16, #tpu.memory_space<vmem>>, vector<272x64xbf16>,
    %133 = vector.extract_strided_slice %115 {offsets = [1, 0], sizes = [271, 64], strides = [1, 1]} : vector<272x64xbf16> to vector<271x64xbf16>
    %cst_103 = arith.constant 0.000000e+00 : bf16
    %134 = vector.broadcast %cst_103 : bf16 to vector<1x64xbf16>
    %135 = tpu.concatenate %133, %134 in 0 : vector<271x64xbf16>, vector<1x64xbf16> -> vector<272x64xbf16>
    %c0_104 = arith.constant 0 : index
    %c320_105 = arith.constant 320 : index
    %136 = vector.load %arg12[%c0_104, %c320_105] : memref<272x576xbf16, #tpu.memory_space<vmem>>, vector<272x64xbf16>
    tpu.vector_store %arg12[%c0_104, %c320_105], %135 {strides = array<i32>} : memref<272x576xbf16, #tpu.memory_space<vmem>>, vector<272x64xbf16>,
    %137 = vector.extract_strided_slice %115 {offsets = [16, 0], sizes = [256, 64], strides = [1, 1]} : vector<272x64xbf16> to vector<256x64xbf16>
    %cst_106 = arith.constant 0.000000e+00 : bf16
    %138 = vector.broadcast %cst_106 : bf16 to vector<16x64xbf16>
    %139 = tpu.concatenate %137, %138 in 0 : vector<256x64xbf16>, vector<16x64xbf16> -> vector<272x64xbf16>
    %c0_107 = arith.constant 0 : index
    %c384_108 = arith.constant 384 : index
    %140 = vector.load %arg12[%c0_107, %c384_108] : memref<272x576xbf16, #tpu.memory_space<vmem>>, vector<272x64xbf16>
    tpu.vector_store %arg12[%c0_107, %c384_108], %139 {strides = array<i32>} : memref<272x576xbf16, #tpu.memory_space<vmem>>, vector<272x64xbf16>,
    %141 = vector.extract_strided_slice %115 {offsets = [17, 0], sizes = [255, 64], strides = [1, 1]} : vector<272x64xbf16> to vector<255x64xbf16>
    %cst_109 = arith.constant 0.000000e+00 : bf16
    %142 = vector.broadcast %cst_109 : bf16 to vector<17x64xbf16>
    %143 = tpu.concatenate %141, %142 in 0 : vector<255x64xbf16>, vector<17x64xbf16> -> vector<272x64xbf16>
    %c0_110 = arith.constant 0 : index
    %c448_111 = arith.constant 448 : index
    %144 = vector.load %arg12[%c0_110, %c448_111] : memref<272x576xbf16, #tpu.memory_space<vmem>>, vector<272x64xbf16>
    tpu.vector_store %arg12[%c0_110, %c448_111], %143 {strides = array<i32>} : memref<272x576xbf16, #tpu.memory_space<vmem>>, vector<272x64xbf16>,
    %145 = vector.extract_strided_slice %115 {offsets = [18, 0], sizes = [254, 64], strides = [1, 1]} : vector<272x64xbf16> to vector<254x64xbf16>
    %cst_112 = arith.constant 0.000000e+00 : bf16
    %146 = vector.broadcast %cst_112 : bf16 to vector<18x64xbf16>
    %147 = tpu.concatenate %145, %146 in 0 : vector<254x64xbf16>, vector<18x64xbf16> -> vector<272x64xbf16>
    %c0_113 = arith.constant 0 : index
    %c512_114 = arith.constant 512 : index
    %148 = vector.load %arg12[%c0_113, %c512_114] : memref<272x576xbf16, #tpu.memory_space<vmem>>, vector<272x64xbf16>
    tpu.vector_store %arg12[%c0_113, %c512_114], %147 {strides = array<i32>} : memref<272x576xbf16, #tpu.memory_space<vmem>>, vector<272x64xbf16>,
    %c0_115 = arith.constant 0 : index
    %c0_116 = arith.constant 0 : index
    %149 = vector.load %arg12[%c0_115, %c0_116] : memref<272x576xbf16, #tpu.memory_space<vmem>>, vector<272x576xbf16>
    %c1_117 = arith.constant 1 : index
    %c0_118 = arith.constant 0 : index
    %c0_119 = arith.constant 0 : index
    %150 = vector.load %arg8[%c1_117, %c0_118, %c0_119] : memref<2x576x64xbf16, #tpu.memory_space<vmem>>, vector<1x576x64xbf16>
    %151 = vector.shape_cast %150 : vector<1x576x64xbf16> to vector<576x64xbf16>
    %cst_120 = arith.constant dense<0.000000e+00> : vector<272x64xf32>
    %152 = tpu.matmul %149, %151, %cst_120 {dimension_numbers = #tpu.dot_dimension_numbers<[1], [0], [0], [1], [0, 0, 1, 1], [], []>} : vector<272x576xbf16>, vector<576x64xbf16>, vector<272x64xf32> -> vector<272x64xf32>
    %c1_121 = arith.constant 1 : index
    %c0_122 = arith.constant 0 : index
    %c0_123 = arith.constant 0 : index
    %153 = vector.load %arg9[%c1_121, %c0_122, %c0_123] : memref<2x1x64xf32, #tpu.memory_space<vmem>>, vector<1x1x64xf32>
    %154 = vector.shape_cast %153 : vector<1x1x64xf32> to vector<1x64xf32>
    %155 = vector.broadcast %154 : vector<1x64xf32> to vector<272x64xf32>
    %156 = arith.addf %152, %155 : vector<272x64xf32>
    %157 = arith.addf %8, %156 : vector<272x64xf32>
    %c0_124 = arith.constant 0 : index
    %c0_125 = arith.constant 0 : index
    %c0_126 = arith.constant 0 : index
    %158 = vector.load %arg11[%c0_124, %c0_125, %c0_126] : memref<1x272x64xf32, #tpu.memory_space<vmem>>, vector<1x272x64xf32>
    %159 = vector.shape_cast %158 : vector<1x272x64xf32> to vector<272x64xf32>
    %160 = vector.shape_cast %157 : vector<272x64xf32> to vector<1x272x64xf32>
    tpu.vector_store %arg11[%c0_124, %c0_125, %c0_126], %160 {strides = array<i32>} : memref<1x272x64xf32, #tpu.memory_space<vmem>>, vector<1x272x64xf32>,
    return
  }
  func.func @transform_0(%arg0: i32, %arg1: i32) -> (i32, i32, i32) {
    %c0_i32 = arith.constant 0 : i32
    %c0_i32_0 = arith.constant 0 : i32
    %c0_i32_1 = arith.constant 0 : i32
    return %arg0, %c0_i32, %c0_i32_0 : i32, i32, i32
  }
  func.func @transform_1(%arg0: i32, %arg1: i32) -> (i32, i32, i32) {
    %c0_i32 = arith.constant 0 : i32
    %c0_i32_0 = arith.constant 0 : i32
    %c0_i32_1 = arith.constant 0 : i32
    return %arg0, %c0_i32, %c0_i32_0 : i32, i32, i32
  }
  func.func @transform_2(%arg0: i32, %arg1: i32) -> (i32, i32, i32) {
    %c0_i32 = arith.constant 0 : i32
    %c0_i32_0 = arith.constant 0 : i32
    %c0_i32_1 = arith.constant 0 : i32
    return %arg1, %c0_i32, %c0_i32_0 : i32, i32, i32
  }
  func.func @transform_3(%arg0: i32, %arg1: i32) -> (i32, i32, i32) {
    %c0_i32 = arith.constant 0 : i32
    %c0_i32_0 = arith.constant 0 : i32
    %c0_i32_1 = arith.constant 0 : i32
    return %arg1, %c0_i32, %c0_i32_0 : i32, i32, i32
  }
  func.func @transform_4(%arg0: i32, %arg1: i32) -> (i32, i32, i32, i32) {
    %c0_i32 = arith.constant 0 : i32
    %c0_i32_0 = arith.constant 0 : i32
    %c0_i32_1 = arith.constant 0 : i32
    %c0_i32_2 = arith.constant 0 : i32
    return %arg1, %c0_i32, %c0_i32_0, %c0_i32_1 : i32, i32, i32, i32
  }
  func.func @transform_5(%arg0: i32, %arg1: i32) -> (i32, i32, i32, i32) {
    %c0_i32 = arith.constant 0 : i32
    %c0_i32_0 = arith.constant 0 : i32
    %c0_i32_1 = arith.constant 0 : i32
    %c0_i32_2 = arith.constant 0 : i32
    return %arg1, %c0_i32, %c0_i32_0, %c0_i32_1 : i32, i32, i32, i32
  }
  func.func @transform_6(%arg0: i32, %arg1: i32) -> (i32, i32, i32) {
    %c0_i32 = arith.constant 0 : i32
    %c0_i32_0 = arith.constant 0 : i32
    %c0_i32_1 = arith.constant 0 : i32
    return %arg1, %c0_i32, %c0_i32_0 : i32, i32, i32
  }
  func.func @transform_7(%arg0: i32, %arg1: i32) -> (i32, i32, i32) {
    %c0_i32 = arith.constant 0 : i32
    %c0_i32_0 = arith.constant 0 : i32
    %c0_i32_1 = arith.constant 0 : i32
    return %arg1, %c0_i32, %c0_i32_0 : i32, i32, i32
  }
  func.func @transform_8(%arg0: i32, %arg1: i32) -> (i32, i32, i32) {
    %c0_i32 = arith.constant 0 : i32
    %c0_i32_0 = arith.constant 0 : i32
    %c0_i32_1 = arith.constant 0 : i32
    %c0_i32_2 = arith.constant 0 : i32
    return %c0_i32, %c0_i32_0, %c0_i32_1 : i32, i32, i32
  }
  func.func @transform_9(%arg0: i32, %arg1: i32) -> (i32, i32, i32) {
    %c0_i32 = arith.constant 0 : i32
    %c0_i32_0 = arith.constant 0 : i32
    %c0_i32_1 = arith.constant 0 : i32
    return %arg0, %c0_i32, %c0_i32_0 : i32, i32, i32
  }
}

</mosaic_0001>

<llo_original>
// kernel: side_embeded_feature_extract_block.1
$region0: #{side_embeded_feature_extract_block.1}
  #allocation0 [shape = 'u32[]', space=smem, size = 0x4, offset = 0x4, fixed_abs, tag = 'smem constant byte address 0x4 - core index']
  #allocation1 [shape = 'u32[72,128]{1,0:T(1,128)}', space=vmem, size = 0x9000, scoped, tag = 'internal scratch']
  #allocation2 [shape = 'bf16[272,576]{1,0:T(8,128)(2,1)}', space=vmem, size = 0x55000, scoped, tag = 'scratch operand']
  %s0 = inlined_call_operand.vmem [shape: f32[2,272,64], index: 0, kind: input, shape index: {}]
  %s1 = inlined_call_operand.vmem [shape: bf16[2,272,32], index: 1, kind: input, shape index: {}]
  %s2 = inlined_call_operand.vmem [shape: bf16[14,32,64], index: 2, kind: input, shape index: {}]
  %s3 = inlined_call_operand.vmem [shape: f32[14,1,64], index: 3, kind: input, shape index: {}]
  %s4 = inlined_call_operand.vmem [shape: bf16[14,2,64,64], index: 4, kind: input, shape index: {}]
  %s5 = inlined_call_operand.vmem [shape: f32[14,2,1,64], index: 5, kind: input, shape index: {}]
  %s6 = inlined_call_operand.vmem [shape: bf16[14,576,64], index: 6, kind: input, shape index: {}]
  %s7 = inlined_call_operand.vmem [shape: f32[14,1,64], index: 7, kind: input, shape index: {}]
  %s8 = inlined_call_operand.vmem [shape: f32[1,272,1], index: 8, kind: input, shape index: {}]
  %s9 = inlined_call_operand.vmem [shape: f32[2,272,64], index: 9, kind: output, shape index: {}]
  %s10 = sld [smem:[#allocation0]]
  $region73: #{side_embeded_feature_extract_block.1} parent=0
    _
  %s12 = ssub.s32 1, %s10
  %s13 = scalar_select 0, %s12, %s10
  loop: start=0, step=1, limit=16
  $region2: #{side_embeded_feature_extract_block.1} parent=0 // loop_pre_header
    _
  $region3: #{side_embeded_feature_extract_block.1} parent=0 // loop_header
    %s15 = sphi 0, %s19
    %p16 = scmp.ge.s32.totalorder %s15, 16
    %s22 = sphi 0, %s34
    %s23 = sphi 0, %s30
    %s24 = sphi 0, %s22
    %s25 = sphi 0, %s23
    %s26 = sphi 0, %s24
    %s27 = sphi 0, %s25
    %s37 = sphi 0, %s39
    %s40 = sphi 0, %s37
    %s41 = sphi 0, %s40
    %s57 = sphi 0, %s41
    %s63 = sphi 0, %s65
    %s66 = sphi 0, %s63
    %s67 = sphi 0, %s66
    %s83 = sphi 0, %s67
    %s89 = sphi 0, %s91
    %s92 = sphi 0, %s89
    %s93 = sphi 0, %s92
    %s109 = sphi 0, %s93
    %s115 = sphi 0, %s117
    %s118 = sphi 0, %s115
    %s119 = sphi 0, %s118
    %s135 = sphi 0, %s119
    %s141 = sphi 0, %s143
    %s144 = sphi 0, %s141
    %s145 = sphi 0, %s144
    %s161 = sphi 0, %s145
    %s167 = sphi 0, %s169
    %s170 = sphi 0, %s167
    %s171 = sphi 0, %s170
    %s187 = sphi 0, %s171
    %s193 = sphi 0, %s195
    %s196 = sphi 0, %s193
    %s197 = sphi 0, %s196
    %s213 = sphi 0, %s197
    %s219 = sphi 0, %s221
    %s222 = sphi 0, %s219
    %s223 = sphi 0, %s222
    %s239 = sphi 0, %s223
    %s243 = sphi 0, %s243
    %s245 = sphi 0, %s243
    %s246 = sphi 0, %s245
    %s260 = sphi 0, %s246
    %s266 = sphi 0, %s268
    %s269 = sphi 0, %s266
    %s270 = sphi 0, %s269
    %s286 = sphi 0, %s270
  $region4: #{side_embeded_feature_extract_block.1} parent=0 // loop_header_branch
    %18 = sbr.rel (%p16) target = $region8
  $region5: #{side_embeded_feature_extract_block.1} parent=0 // loop_body
    %s20 = ssub.s32 %s15, 1
    %s21 = ssub.s32 %s15, 2
    %s28 = sadd.s32 1, %s23
    %p29 = scmp.ge.s32.totalorder %s28, 7
    %s30 = scalar_select %p29, 0, %s28
    %s31 = sadd.s32 1, %s22
    %s32 = scalar_select %p29, %s31, %s22
    %p33 = scmp.ge.s32.totalorder %s32, 2
    %s34 = scalar_select %p33, 0, %s32
    %s35 = ssub.s32 %s22, %s34
    %p36 = scmp.eq.s32.totalorder %s35, 0
    %s38 = sadd.s32 %s37, 1
    %s39 = scalar_select %p36, %s37, %s38
    %p42 = pneg %p36
    %p43 = scmp.eq.s32.totalorder %s15, 13
    %p44 = por %p42, %p43
    %p45 = scmp.ne.s32.totalorder %s37, %s40
    %p46 = scmp.eq.s32.totalorder %s15, 0
    %p47 = por %p45, %p46
    %p48 = scmp.ne.s32.totalorder %s37, %s40
    %p49 = scmp.eq.s32.totalorder %s20, 13
    %p50 = por %p48, %p49
    %p51 = scmp.ne.s32.totalorder %s40, %s41
    %p52 = scmp.eq.s32.totalorder %s20, 0
    %p53 = por %p51, %p52
    %p54 = scmp.ne.s32.totalorder %s40, %s41
    %p55 = scmp.eq.s32.totalorder %s21, 13
    %p56 = por %p54, %p55
    %p58 = scmp.ne.s32.totalorder %s41, %s57
    %p59 = scmp.eq.s32.totalorder %s21, 0
    %p60 = por %p58, %p59
    %s61 = ssub.s32 %s22, %s34
    %p62 = scmp.eq.s32.totalorder %s61, 0
    %s64 = sadd.s32 %s63, 1
    %s65 = scalar_select %p62, %s63, %s64
    %p68 = pneg %p62
    %p69 = scmp.eq.s32.totalorder %s15, 13
    %p70 = por %p68, %p69
    %p71 = scmp.ne.s32.totalorder %s63, %s66
    %p72 = scmp.eq.s32.totalorder %s15, 0
    %p73 = por %p71, %p72
    %p74 = scmp.ne.s32.totalorder %s63, %s66
    %p75 = scmp.eq.s32.totalorder %s20, 13
    %p76 = por %p74, %p75
    %p77 = scmp.ne.s32.totalorder %s66, %s67
    %p78 = scmp.eq.s32.totalorder %s20, 0
    %p79 = por %p77, %p78
    %p80 = scmp.ne.s32.totalorder %s66, %s67
    %p81 = scmp.eq.s32.totalorder %s21, 13
    %p82 = por %p80, %p81
    %p84 = scmp.ne.s32.totalorder %s67, %s83
    %p85 = scmp.eq.s32.totalorder %s21, 0
    %p86 = por %p84, %p85
    %s87 = ssub.s32 %s23, %s30
    %p88 = scmp.eq.s32.totalorder %s87, 0
    %s90 = sadd.s32 %s89, 1
    %s91 = scalar_select %p88, %s89, %s90
    %p94 = pneg %p88
    %p95 = scmp.eq.s32.totalorder %s15, 13
    %p96 = por %p94, %p95
    %p97 = scmp.ne.s32.totalorder %s89, %s92
    %p98 = scmp.eq.s32.totalorder %s15, 0
    %p99 = por %p97, %p98
    %p100 = scmp.ne.s32.totalorder %s89, %s92
    %p101 = scmp.eq.s32.totalorder %s20, 13
    %p102 = por %p100, %p101
    %p103 = scmp.ne.s32.totalorder %s92, %s93
    %p104 = scmp.eq.s32.totalorder %s20, 0
    %p105 = por %p103, %p104
    %p106 = scmp.ne.s32.totalorder %s92, %s93
    %p107 = scmp.eq.s32.totalorder %s21, 13
    %p108 = por %p106, %p107
    %p110 = scmp.ne.s32.totalorder %s93, %s109
    %p111 = scmp.eq.s32.totalorder %s21, 0
    %p112 = por %p110, %p111
    %s113 = ssub.s32 %s23, %s30
    %p114 = scmp.eq.s32.totalorder %s113, 0
    %s116 = sadd.s32 %s115, 1
    %s117 = scalar_select %p114, %s115, %s116
    %p120 = pneg %p114
    %p121 = scmp.eq.s32.totalorder %s15, 13
    %p122 = por %p120, %p121
    %p123 = scmp.ne.s32.totalorder %s115, %s118
    %p124 = scmp.eq.s32.totalorder %s15, 0
    %p125 = por %p123, %p124
    %p126 = scmp.ne.s32.totalorder %s115, %s118
    %p127 = scmp.eq.s32.totalorder %s20, 13
    %p128 = por %p126, %p127
    %p129 = scmp.ne.s32.totalorder %s118, %s119
    %p130 = scmp.eq.s32.totalorder %s20, 0
    %p131 = por %p129, %p130
    %p132 = scmp.ne.s32.totalorder %s118, %s119
    %p133 = scmp.eq.s32.totalorder %s21, 13
    %p134 = por %p132, %p133
    %p136 = scmp.ne.s32.totalorder %s119, %s135
    %p137 = scmp.eq.s32.totalorder %s21, 0
    %p138 = por %p136, %p137
    %s139 = ssub.s32 %s23, %s30
    %p140 = scmp.eq.s32.totalorder %s139, 0
    %s142 = sadd.s32 %s141, 1
    %s143 = scalar_select %p140, %s141, %s142
    %p146 = pneg %p140
    %p147 = scmp.eq.s32.totalorder %s15, 13
    %p148 = por %p146, %p147
    %p149 = scmp.ne.s32.totalorder %s141, %s144
    %p150 = scmp.eq.s32.totalorder %s15, 0
    %p151 = por %p149, %p150
    %p152 = scmp.ne.s32.totalorder %s141, %s144
    %p153 = scmp.eq.s32.totalorder %s20, 13
    %p154 = por %p152, %p153
    %p155 = scmp.ne.s32.totalorder %s144, %s145
    %p156 = scmp.eq.s32.totalorder %s20, 0
    %p157 = por %p155, %p156
    %p158 = scmp.ne.s32.totalorder %s144, %s145
    %p159 = scmp.eq.s32.totalorder %s21, 13
    %p160 = por %p158, %p159
    %p162 = scmp.ne.s32.totalorder %s145, %s161
    %p163 = scmp.eq.s32.totalorder %s21, 0
    %p164 = por %p162, %p163
    %s165 = ssub.s32 %s23, %s30
    %p166 = scmp.eq.s32.totalorder %s165, 0
    %s168 = sadd.s32 %s167, 1
    %s169 = scalar_select %p166, %s167, %s168
    %p172 = pneg %p166
    %p173 = scmp.eq.s32.totalorder %s15, 13
    %p174 = por %p172, %p173
    %p175 = scmp.ne.s32.totalorder %s167, %s170
    %p176 = scmp.eq.s32.totalorder %s15, 0
    %p177 = por %p175, %p176
    %p178 = scmp.ne.s32.totalorder %s167, %s170
    %p179 = scmp.eq.s32.totalorder %s20, 13
    %p180 = por %p178, %p179
    %p181 = scmp.ne.s32.totalorder %s170, %s171
    %p182 = scmp.eq.s32.totalorder %s20, 0
    %p183 = por %p181, %p182
    %p184 = scmp.ne.s32.totalorder %s170, %s171
    %p185 = scmp.eq.s32.totalorder %s21, 13
    %p186 = por %p184, %p185
    %p188 = scmp.ne.s32.totalorder %s171, %s187
    %p189 = scmp.eq.s32.totalorder %s21, 0
    %p190 = por %p188, %p189
    %s191 = ssub.s32 %s23, %s30
    %p192 = scmp.eq.s32.totalorder %s191, 0
    %s194 = sadd.s32 %s193, 1
    %s195 = scalar_select %p192, %s193, %s194
    %p198 = pneg %p192
    %p199 = scmp.eq.s32.totalorder %s15, 13
    %p200 = por %p198, %p199
    %p201 = scmp.ne.s32.totalorder %s193, %s196
    %p202 = scmp.eq.s32.totalorder %s15, 0
    %p203 = por %p201, %p202
    %p204 = scmp.ne.s32.totalorder %s193, %s196
    %p205 = scmp.eq.s32.totalorder %s20, 13
    %p206 = por %p204, %p205
    %p207 = scmp.ne.s32.totalorder %s196, %s197
    %p208 = scmp.eq.s32.totalorder %s20, 0
    %p209 = por %p207, %p208
    %p210 = scmp.ne.s32.totalorder %s196, %s197
    %p211 = scmp.eq.s32.totalorder %s21, 13
    %p212 = por %p210, %p211
    %p214 = scmp.ne.s32.totalorder %s197, %s213
    %p215 = scmp.eq.s32.totalorder %s21, 0
    %p216 = por %p214, %p215
    %s217 = ssub.s32 %s23, %s30
    %p218 = scmp.eq.s32.totalorder %s217, 0
    %s220 = sadd.s32 %s219, 1
    %s221 = scalar_select %p218, %s219, %s220
    %p224 = pneg %p218
    %p225 = scmp.eq.s32.totalorder %s15, 13
    %p226 = por %p224, %p225
    %p227 = scmp.ne.s32.totalorder %s219, %s222
    %p228 = scmp.eq.s32.totalorder %s15, 0
    %p229 = por %p227, %p228
    %p230 = scmp.ne.s32.totalorder %s219, %s222
    %p231 = scmp.eq.s32.totalorder %s20, 13
    %p232 = por %p230, %p231
    %p233 = scmp.ne.s32.totalorder %s222, %s223
    %p234 = scmp.eq.s32.totalorder %s20, 0
    %p235 = por %p233, %p234
    %p236 = scmp.ne.s32.totalorder %s222, %s223
    %p237 = scmp.eq.s32.totalorder %s21, 13
    %p238 = por %p236, %p237
    %p240 = scmp.ne.s32.totalorder %s223, %s239
    %p241 = scmp.eq.s32.totalorder %s21, 0
    %p242 = por %p240, %p241
    %s244 = sadd.s32 %s243, 1
    %p247 = scmp.eq.s32.totalorder %s15, 13
    %p248 = scmp.ne.s32.totalorder %s243, %s245
    %p249 = scmp.eq.s32.totalorder %s15, 0
    %p250 = por %p248, %p249
    %p251 = scmp.ne.s32.totalorder %s243, %s245
    %p252 = scmp.eq.s32.totalorder %s20, 13
    %p253 = por %p251, %p252
    %p254 = scmp.ne.s32.totalorder %s245, %s246
    %p255 = scmp.eq.s32.totalorder %s20, 0
    %p256 = por %p254, %p255
    %p257 = scmp.ne.s32.totalorder %s245, %s246
    %p258 = scmp.eq.s32.totalorder %s21, 13
    %p259 = por %p257, %p258
    %p261 = scmp.ne.s32.totalorder %s246, %s260
    %p262 = scmp.eq.s32.totalorder %s21, 0
    %p263 = por %p261, %p262
    %s264 = ssub.s32 %s22, %s34
    %p265 = scmp.eq.s32.totalorder %s264, 0
    %s267 = sadd.s32 %s266, 1
    %s268 = scalar_select %p265, %s266, %s267
    %p271 = pneg %p265
    %p272 = scmp.eq.s32.totalorder %s15, 13
    %p273 = por %p271, %p272
    %p274 = scmp.ne.s32.totalorder %s266, %s269
    %p275 = scmp.eq.s32.totalorder %s15, 0
    %p276 = por %p274, %p275
    %p277 = scmp.ne.s32.totalorder %s266, %s269
    %p278 = scmp.eq.s32.totalorder %s20, 13
    %p279 = por %p277, %p278
    %p280 = scmp.ne.s32.totalorder %s269, %s270
    %p281 = scmp.eq.s32.totalorder %s20, 0
    %p282 = por %p280, %p281
    %p283 = scmp.ne.s32.totalorder %s269, %s270
    %p284 = scmp.eq.s32.totalorder %s21, 13
    %p285 = por %p283, %p284
    %p287 = scmp.ne.s32.totalorder %s270, %s286
    %p288 = scmp.eq.s32.totalorder %s21, 0
    %p289 = por %p287, %p288
    %p290 = scmp.le.s32.totalorder 1, %s15
    %p291 = scmp.lt.s32.totalorder %s15, 15
    %p292 = pnand %p290, %p291
    %p293 = pneg %p292
    // Predicated region
    $region9: #{side_embeded_feature_extract_block.1} parent=5 // pred_check
      _
    $region10: #{side_embeded_feature_extract_block.1} parent=5 // pred_check_branch
      %295 = sbr.rel (%p292) target = $region12
    $region11: #{side_embeded_feature_extract_block.1} parent=5 // pred_region
      %s296 = ssub.s32 %s15, 1
      // Predicated region
      $region13: #{side_embeded_feature_extract_block.1} parent=11 // pred_check
        %p297 = pneg %p256
      $region14: #{side_embeded_feature_extract_block.1} parent=11 // pred_check_branch
        %299 = sbr.rel (%p297) target = $region16
      $region15: #{side_embeded_feature_extract_block.1} parent=11 // pred_region
        _
      $region16: #{side_embeded_feature_extract_block.1} parent=11 // pred_fallthru
        _
    $region12: #{side_embeded_feature_extract_block.1} parent=5 // pred_fallthru
      _
    %p300 = scmp.lt.s32.totalorder %s15, 14
    // Predicated region
    $region17: #{side_embeded_feature_extract_block.1} parent=5 // pred_check
      %p301 = pneg %p300
    $region18: #{side_embeded_feature_extract_block.1} parent=5 // pred_check_branch
      %303 = sbr.rel (%p301) target = $region20
    $region19: #{side_embeded_feature_extract_block.1} parent=5 // pred_region
      // Predicated region
      $region21: #{side_embeded_feature_extract_block.1} parent=19 // pred_check
        %p304 = pneg %p47
      $region22: #{side_embeded_feature_extract_block.1} parent=19 // pred_check_branch
        %306 = sbr.rel (%p304) target = $region24
      $region23: #{side_embeded_feature_extract_block.1} parent=19 // pred_region
        %p307 = scmp.lt.s32.totalorder %s22, 1
        %s308 = scalar_select %p307, %s22, 1
        %s309 = smul.addr %s308, 34
        %s310 = smul.addr %s309, 8
        %s311 = scalar_lea.vmem %s0, %s310
      $region24: #{side_embeded_feature_extract_block.1} parent=19 // pred_fallthru
        _
      // Predicated region
      $region25: #{side_embeded_feature_extract_block.1} parent=19 // pred_check
        %p312 = pneg %p73
      $region26: #{side_embeded_feature_extract_block.1} parent=19 // pred_check_branch
        %314 = sbr.rel (%p312) target = $region28
      $region27: #{side_embeded_feature_extract_block.1} parent=19 // pred_region
        %p315 = scmp.lt.s32.totalorder %s22, 1
        %s316 = scalar_select %p315, %s22, 1
        %s317 = smul.addr %s316, 34
        %s318 = smul.addr %s317, 4
        %s319 = scalar_lea.vmem %s1, %s318
      $region28: #{side_embeded_feature_extract_block.1} parent=19 // pred_fallthru
        _
      // Predicated region
      $region29: #{side_embeded_feature_extract_block.1} parent=19 // pred_check
        %p320 = pneg %p99
      $region30: #{side_embeded_feature_extract_block.1} parent=19 // pred_check_branch
        %322 = sbr.rel (%p320) target = $region32
      $region31: #{side_embeded_feature_extract_block.1} parent=19 // pred_region
        %s323 = smul.u32 2, %s23
        %p324 = scmp.lt.s32.totalorder %s323, 13
        %s325 = scalar_select %p324, %s323, 13
        %s326 = smul.addr %s325, 4
        %s327 = smul.addr %s326, 4
        %s328 = scalar_lea.vmem %s2, %s327
        %s329 = smul.u32 2, %s23
      $region32: #{side_embeded_feature_extract_block.1} parent=19 // pred_fallthru
        _
      // Predicated region
      $region33: #{side_embeded_feature_extract_block.1} parent=19 // pred_check
        %p330 = pneg %p125
      $region34: #{side_embeded_feature_extract_block.1} parent=19 // pred_check_branch
        %332 = sbr.rel (%p330) target = $region36
      $region35: #{side_embeded_feature_extract_block.1} parent=19 // pred_region
        %s333 = smul.u32 2, %s23
        %p334 = scmp.lt.s32.totalorder %s333, 13
        %s335 = scalar_select %p334, %s333, 13
        %s336 = scalar_lea.vmem %s3, %s335
        %s337 = smul.u32 2, %s23
      $region36: #{side_embeded_feature_extract_block.1} parent=19 // pred_fallthru
        _
      // Predicated region
      $region37: #{side_embeded_feature_extract_block.1} parent=19 // pred_check
        %p338 = pneg %p151
      $region38: #{side_embeded_feature_extract_block.1} parent=19 // pred_check_branch
        %340 = sbr.rel (%p338) target = $region40
      $region39: #{side_embeded_feature_extract_block.1} parent=19 // pred_region
        %s341 = smul.u32 2, %s23
        %p342 = scmp.lt.s32.totalorder %s341, 13
        %s343 = scalar_select %p342, %s341, 13
        %s344 = smul.addr %s343, 16
        %s345 = smul.addr %s344, 4
        %s346 = scalar_lea.vmem %s4, %s345
        %s347 = smul.u32 2, %s23
      $region40: #{side_embeded_feature_extract_block.1} parent=19 // pred_fallthru
        _
      // Predicated region
      $region41: #{side_embeded_feature_extract_block.1} parent=19 // pred_check
        %p348 = pneg %p177
      $region42: #{side_embeded_feature_extract_block.1} parent=19 // pred_check_branch
        %350 = sbr.rel (%p348) target = $region44
      $region43: #{side_embeded_feature_extract_block.1} parent=19 // pred_region
        %s351 = smul.u32 2, %s23
        %p352 = scmp.lt.s32.totalorder %s351, 13
        %s353 = scalar_select %p352, %s351, 13
        %s354 = smul.addr %s353, 2
        %s355 = scalar_lea.vmem %s5, %s354
        %s356 = smul.u32 2, %s23
      $region44: #{side_embeded_feature_extract_block.1} parent=19 // pred_fallthru
        _
      // Predicated region
      $region45: #{side_embeded_feature_extract_block.1} parent=19 // pred_check
        %p357 = pneg %p203
      $region46: #{side_embeded_feature_extract_block.1} parent=19 // pred_check_branch
        %359 = sbr.rel (%p357) target = $region48
      $region47: #{side_embeded_feature_extract_block.1} parent=19 // pred_region
        %s360 = smul.u32 2, %s23
        %p361 = scmp.lt.s32.totalorder %s360, 13
        %s362 = scalar_select %p361, %s360, 13
        %s363 = smul.addr %s362, 72
        %s364 = smul.addr %s363, 4
        %s365 = scalar_lea.vmem %s6, %s364
        %s366 = smul.u32 2, %s23
      $region48: #{side_embeded_feature_extract_block.1} parent=19 // pred_fallthru
        _
      // Predicated region
      $region49: #{side_embeded_feature_extract_block.1} parent=19 // pred_check
        %p367 = pneg %p229
      $region50: #{side_embeded_feature_extract_block.1} parent=19 // pred_check_branch
        %369 = sbr.rel (%p367) target = $region52
      $region51: #{side_embeded_feature_extract_block.1} parent=19 // pred_region
        %s370 = smul.u32 2, %s23
        %p371 = scmp.lt.s32.totalorder %s370, 13
        %s372 = scalar_select %p371, %s370, 13
        %s373 = scalar_lea.vmem %s7, %s372
        %s374 = smul.u32 2, %s23
      $region52: #{side_embeded_feature_extract_block.1} parent=19 // pred_fallthru
        _
    $region20: #{side_embeded_feature_extract_block.1} parent=5 // pred_fallthru
      _
    %p375 = scmp.le.s32.totalorder 1, %s15
    %p376 = scmp.lt.s32.totalorder %s15, 15
    %p377 = pnand %p375, %p376
    %p378 = pneg %p377
    // Predicated region
    $region53: #{side_embeded_feature_extract_block.1} parent=5 // pred_check
      _
    $region54: #{side_embeded_feature_extract_block.1} parent=5 // pred_check_branch
      %380 = sbr.rel (%p377) target = $region56
    $region55: #{side_embeded_feature_extract_block.1} parent=5 // pred_region
      %s381 = ssub.s32 %s15, 1
      %p382 = scmp.lt.s32.totalorder %s24, 1
      %s383 = scalar_select %p382, %s24, 1
      %s384 = smul.addr %s383, 34
      %s385 = smul.addr %s384, 8
      %s386 = scalar_lea.vmem %s0, %s385
      %p387 = pneg %p53
      %p388 = pneg %p50
      %p389 = scmp.lt.s32.totalorder %s24, 1
      %s390 = scalar_select %p389, %s24, 1
      %s391 = smul.addr %s390, 34
      %s392 = smul.addr %s391, 4
      %s393 = scalar_lea.vmem %s1, %s392
      %p394 = pneg %p79
      %p395 = pneg %p76
      %s396 = smul.u32 2, %s25
      %p397 = scmp.lt.s32.totalorder %s396, 13
      %s398 = scalar_select %p397, %s396, 13
      %s399 = smul.addr %s398, 4
      %s400 = smul.addr %s399, 4
      %s401 = scalar_lea.vmem %s2, %s400
      %p402 = pneg %p105
      %p403 = pneg %p102
      %s404 = smul.u32 2, %s25
      %p405 = scmp.lt.s32.totalorder %s404, 13
      %s406 = scalar_select %p405, %s404, 13
      %s407 = scalar_lea.vmem %s3, %s406
      %p408 = pneg %p131
      %p409 = pneg %p128
      %s410 = smul.u32 2, %s25
      %p411 = scmp.lt.s32.totalorder %s410, 13
      %s412 = scalar_select %p411, %s410, 13
      %s413 = smul.addr %s412, 16
      %s414 = smul.addr %s413, 4
      %s415 = scalar_lea.vmem %s4, %s414
      %p416 = pneg %p157
      %p417 = pneg %p154
      %s418 = smul.u32 2, %s25
      %p419 = scmp.lt.s32.totalorder %s418, 13
      %s420 = scalar_select %p419, %s418, 13
      %s421 = smul.addr %s420, 2
      %s422 = scalar_lea.vmem %s5, %s421
      %p423 = pneg %p183
      %p424 = pneg %p180
      %s425 = smul.u32 2, %s25
      %p426 = scmp.lt.s32.totalorder %s425, 13
      %s427 = scalar_select %p426, %s425, 13
      %s428 = smul.addr %s427, 72
      %s429 = smul.addr %s428, 4
      %s430 = scalar_lea.vmem %s6, %s429
      %p431 = pneg %p209
      %p432 = pneg %p206
      %s433 = smul.u32 2, %s25
      %p434 = scmp.lt.s32.totalorder %s433, 13
      %s435 = scalar_select %p434, %s433, 13
      %s436 = scalar_lea.vmem %s7, %s435
      %p437 = pneg %p235
      %p438 = pneg %p232
      %p439 = pneg %p256
      %p440 = pneg %p253
      %p441 = pneg %p282
      %p442 = pneg %p279
      %p443 = scmp.lt.s32.totalorder %s24, 1
      %s444 = scalar_select %p443, %s24, 1
      %s445 = smul.addr %s444, 34
      %s446 = smul.addr %s445, 8
      %s447 = scalar_lea.vmem %s9, %s446
      %p448 = scmp.lt.s32.totalorder %s24, 1
      %s449 = scalar_select %p448, %s24, 1
      %s450 = smul.addr %s449, 34
      %s451 = smul.addr %s450, 8
      %s452 = scalar_lea.vmem %s0, %s451
      %p453 = scmp.lt.s32.totalorder %s24, 1
      %s454 = scalar_select %p453, %s24, 1
      %s455 = smul.addr %s454, 34
      %s456 = smul.addr %s455, 4
      %s457 = scalar_lea.vmem %s1, %s456
      %s458 = smul.u32 2, %s25
      %p459 = scmp.lt.s32.totalorder %s458, 13
      %s460 = scalar_select %p459, %s458, 13
      %s461 = smul.addr %s460, 4
      %s462 = smul.addr %s461, 4
      %s463 = scalar_lea.vmem %s2, %s462
      %s464 = smul.u32 2, %s25
      %s465 = smul.u32 2, %s25
      %p466 = scmp.lt.s32.totalorder %s465, 13
      %s467 = scalar_select %p466, %s465, 13
      %s468 = scalar_lea.vmem %s3, %s467
      %s469 = smul.u32 2, %s25
      %s470 = smul.u32 2, %s25
      %p471 = scmp.lt.s32.totalorder %s470, 13
      %s472 = scalar_select %p471, %s470, 13
      %s473 = smul.addr %s472, 16
      %s474 = smul.addr %s473, 4
      %s475 = scalar_lea.vmem %s4, %s474
      %s476 = smul.u32 2, %s25
      %s477 = smul.u32 2, %s25
      %p478 = scmp.lt.s32.totalorder %s477, 13
      %s479 = scalar_select %p478, %s477, 13
      %s480 = smul.addr %s479, 2
      %s481 = scalar_lea.vmem %s5, %s480
      %s482 = smul.u32 2, %s25
      %s483 = smul.u32 2, %s25
      %p484 = scmp.lt.s32.totalorder %s483, 13
      %s485 = scalar_select %p484, %s483, 13
      %s486 = smul.addr %s485, 72
      %s487 = smul.addr %s486, 4
      %s488 = scalar_lea.vmem %s6, %s487
      %s489 = smul.u32 2, %s25
      %s490 = smul.u32 2, %s25
      %p491 = scmp.lt.s32.totalorder %s490, 13
      %s492 = scalar_select %p491, %s490, 13
      %s493 = scalar_lea.vmem %s7, %s492
      %s494 = smul.u32 2, %s25
      %p495 = scmp.lt.s32.totalorder %s24, 1
      %s496 = scalar_select %p495, %s24, 1
      %s497 = smul.addr %s496, 34
      %s498 = smul.addr %s497, 8
      %s499 = scalar_lea.vmem %s9, %s498
      %p501 = scmp.eq.s32.totalorder %s25, 0
      // Predicated region
      $region57: #{side_embeded_feature_extract_block.1} parent=55 // pred_check
        %p502 = pneg %p501
      $region58: #{side_embeded_feature_extract_block.1} parent=55 // pred_check_branch
        %504 = sbr.rel (%p502) target = $region60
      $region59: #{side_embeded_feature_extract_block.1} parent=55 // pred_region
        %v505 = vld [vmem:[%s452] sm:$0xff]
        %v506 = vld [vmem:[%s452 + $0x8] sm:$0xff]
        %v507 = vld [vmem:[%s452 + $0x10] sm:$0xff]
        %v508 = vld [vmem:[%s452 + $0x18] sm:$0xff]
        %v509 = vld [vmem:[%s452 + $0x20] sm:$0xff]
        %v510 = vld [vmem:[%s452 + $0x28] sm:$0xff]
        %v511 = vld [vmem:[%s452 + $0x30] sm:$0xff]
        %v512 = vld [vmem:[%s452 + $0x38] sm:$0xff]
        %v513 = vld [vmem:[%s452 + $0x40] sm:$0xff]
        %v514 = vld [vmem:[%s452 + $0x48] sm:$0xff]
        %v515 = vld [vmem:[%s452 + $0x50] sm:$0xff]
        %v516 = vld [vmem:[%s452 + $0x58] sm:$0xff]
        %v517 = vld [vmem:[%s452 + $0x60] sm:$0xff]
        %v518 = vld [vmem:[%s452 + $0x68] sm:$0xff]
        %v519 = vld [vmem:[%s452 + $0x70] sm:$0xff]
        %v520 = vld [vmem:[%s452 + $0x78] sm:$0xff]
        %v521 = vld [vmem:[%s452 + $0x80] sm:$0xff]
        %v522 = vld [vmem:[%s452 + $0x88] sm:$0xff]
        %v523 = vld [vmem:[%s452 + $0x90] sm:$0xff]
        %v524 = vld [vmem:[%s452 + $0x98] sm:$0xff]
        %v525 = vld [vmem:[%s452 + $0xa0] sm:$0xff]
        %v526 = vld [vmem:[%s452 + $0xa8] sm:$0xff]
        %v527 = vld [vmem:[%s452 + $0xb0] sm:$0xff]
        %v528 = vld [vmem:[%s452 + $0xb8] sm:$0xff]
        %v529 = vld [vmem:[%s452 + $0xc0] sm:$0xff]
        %v530 = vld [vmem:[%s452 + $0xc8] sm:$0xff]
        %v531 = vld [vmem:[%s452 + $0xd0] sm:$0xff]
        %v532 = vld [vmem:[%s452 + $0xd8] sm:$0xff]
        %v533 = vld [vmem:[%s452 + $0xe0] sm:$0xff]
        %v534 = vld [vmem:[%s452 + $0xe8] sm:$0xff]
        %v535 = vld [vmem:[%s452 + $0xf0] sm:$0xff]
        %v536 = vld [vmem:[%s452 + $0xf8] sm:$0xff]
        %v537 = vld [vmem:[%s452 + $0x100] sm:$0xff]
        %v538 = vld [vmem:[%s452 + $0x108] sm:$0xff]
        %vm539 = vcmask 523264
        %540 = vst.msk [vmem:[%s499] sm:$0xff] %vm539, %v505
        %541 = vst.msk [vmem:[%s499 + $0x8] sm:$0xff] %vm539, %v506
        %542 = vst.msk [vmem:[%s499 + $0x10] sm:$0xff] %vm539, %v507
        %543 = vst.msk [vmem:[%s499 + $0x18] sm:$0xff] %vm539, %v508
        %544 = vst.msk [vmem:[%s499 + $0x20] sm:$0xff] %vm539, %v509
        %545 = vst.msk [vmem:[%s499 + $0x28] sm:$0xff] %vm539, %v510
        %546 = vst.msk [vmem:[%s499 + $0x30] sm:$0xff] %vm539, %v511
        %547 = vst.msk [vmem:[%s499 + $0x38] sm:$0xff] %vm539, %v512
        %548 = vst.msk [vmem:[%s499 + $0x40] sm:$0xff] %vm539, %v513
        %549 = vst.msk [vmem:[%s499 + $0x48] sm:$0xff] %vm539, %v514
        %550 = vst.msk [vmem:[%s499 + $0x50] sm:$0xff] %vm539, %v515
        %551 = vst.msk [vmem:[%s499 + $0x58] sm:$0xff] %vm539, %v516
        %552 = vst.msk [vmem:[%s499 + $0x60] sm:$0xff] %vm539, %v517
        %553 = vst.msk [vmem:[%s499 + $0x68] sm:$0xff] %vm539, %v518
        %554 = vst.msk [vmem:[%s499 + $0x70] sm:$0xff] %vm539, %v519
        %555 = vst.msk [vmem:[%s499 + $0x78] sm:$0xff] %vm539, %v520
        %556 = vst.msk [vmem:[%s499 + $0x80] sm:$0xff] %vm539, %v521
        %557 = vst.msk [vmem:[%s499 + $0x88] sm:$0xff] %vm539, %v522
        %558 = vst.msk [vmem:[%s499 + $0x90] sm:$0xff] %vm539, %v523
        %559 = vst.msk [vmem:[%s499 + $0x98] sm:$0xff] %vm539, %v524
        %560 = vst.msk [vmem:[%s499 + $0xa0] sm:$0xff] %vm539, %v525
        %561 = vst.msk [vmem:[%s499 + $0xa8] sm:$0xff] %vm539, %v526
        %562 = vst.msk [vmem:[%s499 + $0xb0] sm:$0xff] %vm539, %v527
        %563 = vst.msk [vmem:[%s499 + $0xb8] sm:$0xff] %vm539, %v528
        %564 = vst.msk [vmem:[%s499 + $0xc0] sm:$0xff] %vm539, %v529
        %565 = vst.msk [vmem:[%s499 + $0xc8] sm:$0xff] %vm539, %v530
        %566 = vst.msk [vmem:[%s499 + $0xd0] sm:$0xff] %vm539, %v531
        %567 = vst.msk [vmem:[%s499 + $0xd8] sm:$0xff] %vm539, %v532
        %568 = vst.msk [vmem:[%s499 + $0xe0] sm:$0xff] %vm539, %v533
        %569 = vst.msk [vmem:[%s499 + $0xe8] sm:$0xff] %vm539, %v534
        %570 = vst.msk [vmem:[%s499 + $0xf0] sm:$0xff] %vm539, %v535
        %571 = vst.msk [vmem:[%s499 + $0xf8] sm:$0xff] %vm539, %v536
        %572 = vst.msk [vmem:[%s499 + $0x100] sm:$0xff] %vm539, %v537
        %573 = vst.msk [vmem:[%s499 + $0x108] sm:$0xff] %vm539, %v538
      $region60: #{side_embeded_feature_extract_block.1} parent=55 // pred_fallthru
        _
      %v574 = vld [vmem:[%s457] sm:$0xf]
      %v575 = vld [vmem:[%s457 + $0x4] sm:$0xf]
      %v576 = vld [vmem:[%s457 + $0x8] sm:$0xf]
      %v577 = vld [vmem:[%s457 + $0xc] sm:$0xf]
      %v578 = vld [vmem:[%s457 + $0x10] sm:$0xf]
      %v579 = vld [vmem:[%s457 + $0x14] sm:$0xf]
      %v580 = vld [vmem:[%s457 + $0x18] sm:$0xf]
      %v581 = vld [vmem:[%s457 + $0x1c] sm:$0xf]
      %v582 = vld [vmem:[%s457 + $0x20] sm:$0xf]
      %v583 = vld [vmem:[%s457 + $0x24] sm:$0xf]
      %v584 = vld [vmem:[%s457 + $0x28] sm:$0xf]
      %v585 = vld [vmem:[%s457 + $0x2c] sm:$0xf]
      %v586 = vld [vmem:[%s457 + $0x30] sm:$0xf]
      %v587 = vld [vmem:[%s457 + $0x34] sm:$0xf]
      %v588 = vld [vmem:[%s457 + $0x38] sm:$0xf]
      %v589 = vld [vmem:[%s457 + $0x3c] sm:$0xf]
      %v590 = vld [vmem:[%s457 + $0x40] sm:$0xf]
      %v591 = vld [vmem:[%s457 + $0x44] sm:$0xf]
      %v592 = vld [vmem:[%s457 + $0x48] sm:$0xf]
      %v593 = vld [vmem:[%s457 + $0x4c] sm:$0xf]
      %v594 = vld [vmem:[%s457 + $0x50] sm:$0xf]
      %v595 = vld [vmem:[%s457 + $0x54] sm:$0xf]
      %v596 = vld [vmem:[%s457 + $0x58] sm:$0xf]
      %v597 = vld [vmem:[%s457 + $0x5c] sm:$0xf]
      %v598 = vld [vmem:[%s457 + $0x60] sm:$0xf]
      %v599 = vld [vmem:[%s457 + $0x64] sm:$0xf]
      %v600 = vld [vmem:[%s457 + $0x68] sm:$0xf]
      %v601 = vld [vmem:[%s457 + $0x6c] sm:$0xf]
      %v602 = vld [vmem:[%s457 + $0x70] sm:$0xf]
      %v603 = vld [vmem:[%s457 + $0x74] sm:$0xf]
      %v604 = vld [vmem:[%s457 + $0x78] sm:$0xf]
      %v605 = vld [vmem:[%s457 + $0x7c] sm:$0xf]
      %v606 = vld [vmem:[%s457 + $0x80] sm:$0xf]
      %v607 = vld [vmem:[%s457 + $0x84] sm:$0xf]
      %v608 = vld [vmem:[%s8] sm:$0xff]
      %v609 = vld [vmem:[%s8 + $0x8] sm:$0xff]
      %v610 = vld [vmem:[%s8 + $0x10] sm:$0xff]
      %v611 = vld [vmem:[%s8 + $0x18] sm:$0xff]
      %v612 = vld [vmem:[%s8 + $0x20] sm:$0xff]
      %v613 = vld [vmem:[%s8 + $0x28] sm:$0xff]
      %v614 = vld [vmem:[%s8 + $0x30] sm:$0xff]
      %v615 = vld [vmem:[%s8 + $0x38] sm:$0xff]
      %v616 = vld [vmem:[%s8 + $0x40] sm:$0xff]
      %v617 = vld [vmem:[%s8 + $0x48] sm:$0xff]
      %v618 = vld [vmem:[%s8 + $0x50] sm:$0xff]
      %v619 = vld [vmem:[%s8 + $0x58] sm:$0xff]
      %v620 = vld [vmem:[%s8 + $0x60] sm:$0xff]
      %v621 = vld [vmem:[%s8 + $0x68] sm:$0xff]
      %v622 = vld [vmem:[%s8 + $0x70] sm:$0xff]
      %v623 = vld [vmem:[%s8 + $0x78] sm:$0xff]
      %v624 = vld [vmem:[%s8 + $0x80] sm:$0xff]
      %v625 = vld [vmem:[%s8 + $0x88] sm:$0xff]
      %v626 = vld [vmem:[%s8 + $0x90] sm:$0xff]
      %v627 = vld [vmem:[%s8 + $0x98] sm:$0xff]
      %v628 = vld [vmem:[%s8 + $0xa0] sm:$0xff]
      %v629 = vld [vmem:[%s8 + $0xa8] sm:$0xff]
      %v630 = vld [vmem:[%s8 + $0xb0] sm:$0xff]
      %v631 = vld [vmem:[%s8 + $0xb8] sm:$0xff]
      %v632 = vld [vmem:[%s8 + $0xc0] sm:$0xff]
      %v633 = vld [vmem:[%s8 + $0xc8] sm:$0xff]
      %v634 = vld [vmem:[%s8 + $0xd0] sm:$0xff]
      %v635 = vld [vmem:[%s8 + $0xd8] sm:$0xff]
      %v636 = vld [vmem:[%s8 + $0xe0] sm:$0xff]
      %v637 = vld [vmem:[%s8 + $0xe8] sm:$0xff]
      %v638 = vld [vmem:[%s8 + $0xf0] sm:$0xff]
      %v639 = vld [vmem:[%s8 + $0xf8] sm:$0xff]
      %v640 = vld [vmem:[%s8 + $0x100] sm:$0xff]
      %v641 = vld [vmem:[%s8 + $0x108] sm:$0xff]
      %v642 = vld [vmem:[%s499] sm:$0xff]
      %v643 = vld [vmem:[%s499 + $0x8] sm:$0xff]
      %v644 = vld [vmem:[%s499 + $0x10] sm:$0xff]
      %v645 = vld [vmem:[%s499 + $0x18] sm:$0xff]
      %v646 = vld [vmem:[%s499 + $0x20] sm:$0xff]
      %v647 = vld [vmem:[%s499 + $0x28] sm:$0xff]
      %v648 = vld [vmem:[%s499 + $0x30] sm:$0xff]
      %v649 = vld [vmem:[%s499 + $0x38] sm:$0xff]
      %v650 = vld [vmem:[%s499 + $0x40] sm:$0xff]
      %v651 = vld [vmem:[%s499 + $0x48] sm:$0xff]
      %v652 = vld [vmem:[%s499 + $0x50] sm:$0xff]
      %v653 = vld [vmem:[%s499 + $0x58] sm:$0xff]
      %v654 = vld [vmem:[%s499 + $0x60] sm:$0xff]
      %v655 = vld [vmem:[%s499 + $0x68] sm:$0xff]
      %v656 = vld [vmem:[%s499 + $0x70] sm:$0xff]
      %v657 = vld [vmem:[%s499 + $0x78] sm:$0xff]
      %v658 = vld [vmem:[%s499 + $0x80] sm:$0xff]
      %v659 = vld [vmem:[%s499 + $0x88] sm:$0xff]
      %v660 = vld [vmem:[%s499 + $0x90] sm:$0xff]
      %v661 = vld [vmem:[%s499 + $0x98] sm:$0xff]
      %v662 = vld [vmem:[%s499 + $0xa0] sm:$0xff]
      %v663 = vld [vmem:[%s499 + $0xa8] sm:$0xff]
      %v664 = vld [vmem:[%s499 + $0xb0] sm:$0xff]
      %v665 = vld [vmem:[%s499 + $0xb8] sm:$0xff]
      %v666 = vld [vmem:[%s499 + $0xc0] sm:$0xff]
      %v667 = vld [vmem:[%s499 + $0xc8] sm:$0xff]
      %v668 = vld [vmem:[%s499 + $0xd0] sm:$0xff]
      %v669 = vld [vmem:[%s499 + $0xd8] sm:$0xff]
      %v670 = vld [vmem:[%s499 + $0xe0] sm:$0xff]
      %v671 = vld [vmem:[%s499 + $0xe8] sm:$0xff]
      %v672 = vld [vmem:[%s499 + $0xf0] sm:$0xff]
      %v673 = vld [vmem:[%s499 + $0xf8] sm:$0xff]
      %v674 = vld [vmem:[%s499 + $0x100] sm:$0xff]
      %v675 = vld [vmem:[%s499 + $0x108] sm:$0xff]
      %v676 = vld [vmem:[%s463] sm:$0xf]
      %v677 = vld [vmem:[%s463 + $0x4] sm:$0xf]
      %v678 = vld [vmem:[%s463 + $0x8] sm:$0xf]
      %v679 = vld [vmem:[%s463 + $0xc] sm:$0xf]
      %v680 = vld [vmem:[%s468] sm:$0x1]
      %v682 = vperm.slane %v680, 0
      %v718 = vunpack.c.l.b16 %v574
      %v719 = vunpack.c.l.b16 %v575
      %v720 = vunpack.c.l.b16 %v576
      %v721 = vunpack.c.l.b16 %v577
      %v722 = vunpack.c.l.b16 %v578
      %v723 = vunpack.c.l.b16 %v579
      %v724 = vunpack.c.l.b16 %v580
      %v725 = vunpack.c.l.b16 %v581
      %v726 = vunpack.c.l.b16 %v582
      %v727 = vunpack.c.l.b16 %v583
      %v728 = vunpack.c.l.b16 %v584
      %v729 = vunpack.c.l.b16 %v585
      %v730 = vunpack.c.l.b16 %v586
      %v731 = vunpack.c.l.b16 %v587
      %v732 = vunpack.c.l.b16 %v588
      %v733 = vunpack.c.l.b16 %v589
      %v734 = vunpack.c.l.b16 %v590
      %v735 = vunpack.c.l.b16 %v591
      %v736 = vunpack.c.l.b16 %v592
      %v737 = vunpack.c.l.b16 %v593
      %v738 = vunpack.c.l.b16 %v594
      %v739 = vunpack.c.l.b16 %v595
      %v740 = vunpack.c.l.b16 %v596
      %v741 = vunpack.c.l.b16 %v597
      %v742 = vunpack.c.l.b16 %v598
      %v743 = vunpack.c.l.b16 %v599
      %v744 = vunpack.c.l.b16 %v600
      %v745 = vunpack.c.l.b16 %v601
      %v746 = vunpack.c.l.b16 %v602
      %v747 = vunpack.c.l.b16 %v603
      %v748 = vunpack.c.l.b16 %v604
      %v749 = vunpack.c.l.b16 %v605
      %v750 = vunpack.c.l.b16 %v606
      %v751 = vunpack.c.l.b16 %v607
      %v752 = vpack.c.b16 %v719, %v718
      %v753 = vpack.c.b16 %v721, %v720
      %v754 = vpack.c.b16 %v723, %v722
      %v755 = vpack.c.b16 %v725, %v724
      %v756 = vpack.c.b16 %v727, %v726
      %v757 = vpack.c.b16 %v729, %v728
      %v758 = vpack.c.b16 %v731, %v730
      %v759 = vpack.c.b16 %v733, %v732
      %v760 = vpack.c.b16 %v735, %v734
      %v761 = vpack.c.b16 %v737, %v736
      %v762 = vpack.c.b16 %v739, %v738
      %v763 = vpack.c.b16 %v741, %v740
      %v764 = vpack.c.b16 %v743, %v742
      %v765 = vpack.c.b16 %v745, %v744
      %v766 = vpack.c.b16 %v747, %v746
      %v767 = vpack.c.b16 %v749, %v748
      %v768 = vpack.c.b16 %v751, %v750
      %v773 = vunpack.c.l.b16 %v676
      %v774 = vunpack.c.l.b16 %v677
      %v775 = vunpack.c.l.b16 %v678
      %v776 = vunpack.c.l.b16 %v679
      %v777 = vpack.c.b16 %v774, %v773
      %v778 = vpack.c.b16 %v776, %v775
      %vm781 = vcmask 261120
      %v783 = vsel %vm781, %v752, 0
      %v786 = vsel %vm781, %v753, 0
      %v789 = vsel %vm781, %v754, 0
      %v792 = vsel %vm781, %v755, 0
      %v795 = vsel %vm781, %v756, 0
      %v798 = vsel %vm781, %v757, 0
      %v801 = vsel %vm781, %v758, 0
      %v804 = vsel %vm781, %v759, 0
      %v807 = vsel %vm781, %v760, 0
      %v810 = vsel %vm781, %v761, 0
      %v813 = vsel %vm781, %v762, 0
      %v816 = vsel %vm781, %v763, 0
      %v819 = vsel %vm781, %v764, 0
      %v822 = vsel %vm781, %v765, 0
      %v825 = vsel %vm781, %v766, 0
      %v828 = vsel %vm781, %v767, 0
      %v831 = vsel %vm781, %v768, 0
      %833 = vmatpush.bf16.msra.mxu0 0
      %834 = vmatpush.bf16.msra.mxu0 0
      %835 = vmatpush.bf16.msra.mxu0 0
      %836 = vmatpush.bf16.msra.mxu0 0
      %837 = vmatpush.bf16.msra.mxu0 0
      %838 = vmatpush.bf16.msra.mxu0 0
      %839 = vmatpush.bf16.msra.mxu0 %v778
      %840 = vmatpush.bf16.msra.mxu0 %v777
      %841 = vmatmul.bf16.gmra.mxu0 %v783
      %v842 = vpop.f32.mrf.mxu0
      %v843 = vadd.f32 %v682, %v842
      %v844 = vpop.f32.mrf.mxu0
      %v845 = vadd.f32 %v682, %v844
      %846 = vmatmul.bf16.gmra.mxu0 %v786
      %v847 = vpop.f32.mrf.mxu0
      %v848 = vadd.f32 %v682, %v847
      %v849 = vpop.f32.mrf.mxu0
      %v850 = vadd.f32 %v682, %v849
      %851 = vmatmul.bf16.gmra.mxu0 %v789
      %v852 = vpop.f32.mrf.mxu0
      %v853 = vadd.f32 %v682, %v852
      %v854 = vpop.f32.mrf.mxu0
      %v855 = vadd.f32 %v682, %v854
      %856 = vmatmul.bf16.gmra.mxu0 %v792
      %v857 = vpop.f32.mrf.mxu0
      %v858 = vadd.f32 %v682, %v857
      %v859 = vpop.f32.mrf.mxu0
      %v860 = vadd.f32 %v682, %v859
      %861 = vmatmul.bf16.gmra.mxu0 %v795
      %v862 = vpop.f32.mrf.mxu0
      %v863 = vadd.f32 %v682, %v862
      %v864 = vpop.f32.mrf.mxu0
      %v865 = vadd.f32 %v682, %v864
      %866 = vmatmul.bf16.gmra.mxu0 %v798
      %v867 = vpop.f32.mrf.mxu0
      %v868 = vadd.f32 %v682, %v867
      %v869 = vpop.f32.mrf.mxu0
      %v870 = vadd.f32 %v682, %v869
      %871 = vmatmul.bf16.gmra.mxu0 %v801
      %v872 = vpop.f32.mrf.mxu0
      %v873 = vadd.f32 %v682, %v872
      %v874 = vpop.f32.mrf.mxu0
      %v875 = vadd.f32 %v682, %v874
      %876 = vmatmul.bf16.gmra.mxu0 %v804
      %v877 = vpop.f32.mrf.mxu0
      %v878 = vadd.f32 %v682, %v877
      %v879 = vpop.f32.mrf.mxu0
      %v880 = vadd.f32 %v682, %v879
      %881 = vmatmul.bf16.gmra.mxu0 %v807
      %v882 = vpop.f32.mrf.mxu0
      %v883 = vadd.f32 %v682, %v882
      %v884 = vpop.f32.mrf.mxu0
      %v885 = vadd.f32 %v682, %v884
      %886 = vmatmul.bf16.gmra.mxu0 %v810
      %v887 = vpop.f32.mrf.mxu0
      %v888 = vadd.f32 %v682, %v887
      %v889 = vpop.f32.mrf.mxu0
      %v890 = vadd.f32 %v682, %v889
      %891 = vmatmul.bf16.gmra.mxu0 %v813
      %v892 = vpop.f32.mrf.mxu0
      %v893 = vadd.f32 %v682, %v892
      %v894 = vpop.f32.mrf.mxu0
      %v895 = vadd.f32 %v682, %v894
      %896 = vmatmul.bf16.gmra.mxu0 %v816
      %v897 = vpop.f32.mrf.mxu0
      %v898 = vadd.f32 %v682, %v897
      %v899 = vpop.f32.mrf.mxu0
      %v900 = vadd.f32 %v682, %v899
      %901 = vmatmul.bf16.gmra.mxu0 %v819
      %v902 = vpop.f32.mrf.mxu0
      %v903 = vadd.f32 %v682, %v902
      %v904 = vpop.f32.mrf.mxu0
      %v905 = vadd.f32 %v682, %v904
      %906 = vmatmul.bf16.gmra.mxu0 %v822
      %v907 = vpop.f32.mrf.mxu0
      %v908 = vadd.f32 %v682, %v907
      %v909 = vpop.f32.mrf.mxu0
      %v910 = vadd.f32 %v682, %v909
      %911 = vmatmul.bf16.gmra.mxu0 %v825
      %v912 = vpop.f32.mrf.mxu0
      %v913 = vadd.f32 %v682, %v912
      %v914 = vpop.f32.mrf.mxu0
      %v915 = vadd.f32 %v682, %v914
      %916 = vmatmul.bf16.gmra.mxu0 %v828
      %v917 = vpop.f32.mrf.mxu0
      %v918 = vadd.f32 %v682, %v917
      %v919 = vpop.f32.mrf.mxu0
      %v920 = vadd.f32 %v682, %v919
      %921 = vmatmul.bf16.gmra.mxu0 %v831
      %v922 = vpop.f32.mrf.mxu0
      %v923 = vadd.f32 %v682, %v922
      %v924 = vpop.f32.mrf.mxu0
      %v925 = vadd.f32 %v682, %v924
      %926 = vdwg.mxu0
      %vm927 = vcmp.ge.f32.partialorder %v843, 0.0
      %vm928 = vcmp.ge.f32.partialorder %v845, 0.0
      %vm929 = vcmp.ge.f32.partialorder %v848, 0.0
      %vm930 = vcmp.ge.f32.partialorder %v850, 0.0
      %vm931 = vcmp.ge.f32.partialorder %v853, 0.0
      %vm932 = vcmp.ge.f32.partialorder %v855, 0.0
      %vm933 = vcmp.ge.f32.partialorder %v858, 0.0
      %vm934 = vcmp.ge.f32.partialorder %v860, 0.0
      %vm935 = vcmp.ge.f32.partialorder %v863, 0.0
      %vm936 = vcmp.ge.f32.partialorder %v865, 0.0
      %vm937 = vcmp.ge.f32.partialorder %v868, 0.0
      %vm938 = vcmp.ge.f32.partialorder %v870, 0.0
      %vm939 = vcmp.ge.f32.partialorder %v873, 0.0
      %vm940 = vcmp.ge.f32.partialorder %v875, 0.0
      %vm941 = vcmp.ge.f32.partialorder %v878, 0.0
      %vm942 = vcmp.ge.f32.partialorder %v880, 0.0
      %vm943 = vcmp.ge.f32.partialorder %v883, 0.0
      %vm944 = vcmp.ge.f32.partialorder %v885, 0.0
      %vm945 = vcmp.ge.f32.partialorder %v888, 0.0
      %vm946 = vcmp.ge.f32.partialorder %v890, 0.0
      %vm947 = vcmp.ge.f32.partialorder %v893, 0.0
      %vm948 = vcmp.ge.f32.partialorder %v895, 0.0
      %vm949 = vcmp.ge.f32.partialorder %v898, 0.0
      %vm950 = vcmp.ge.f32.partialorder %v900, 0.0
      %vm951 = vcmp.ge.f32.partialorder %v903, 0.0
      %vm952 = vcmp.ge.f32.partialorder %v905, 0.0
      %vm953 = vcmp.ge.f32.partialorder %v908, 0.0
      %vm954 = vcmp.ge.f32.partialorder %v910, 0.0
      %vm955 = vcmp.ge.f32.partialorder %v913, 0.0
      %vm956 = vcmp.ge.f32.partialorder %v915, 0.0
      %vm957 = vcmp.ge.f32.partialorder %v918, 0.0
      %vm958 = vcmp.ge.f32.partialorder %v920, 0.0
      %vm959 = vcmp.ge.f32.partialorder %v923, 0.0
      %vm960 = vcmp.ge.f32.partialorder %v925, 0.0
      %v961 = vmul.f32 %v843, 0.1
      %v962 = vmul.f32 %v845, 0.1
      %v963 = vmul.f32 %v848, 0.1
      %v964 = vmul.f32 %v850, 0.1
      %v965 = vmul.f32 %v853, 0.1
      %v966 = vmul.f32 %v855, 0.1
      %v967 = vmul.f32 %v858, 0.1
      %v968 = vmul.f32 %v860, 0.1
      %v969 = vmul.f32 %v863, 0.1
      %v970 = vmul.f32 %v865, 0.1
      %v971 = vmul.f32 %v868, 0.1
      %v972 = vmul.f32 %v870, 0.1
      %v973 = vmul.f32 %v873, 0.1
      %v974 = vmul.f32 %v875, 0.1
      %v975 = vmul.f32 %v878, 0.1
      %v976 = vmul.f32 %v880, 0.1
      %v977 = vmul.f32 %v883, 0.1
      %v978 = vmul.f32 %v885, 0.1
      %v979 = vmul.f32 %v888, 0.1
      %v980 = vmul.f32 %v890, 0.1
      %v981 = vmul.f32 %v893, 0.1
      %v982 = vmul.f32 %v895, 0.1
      %v983 = vmul.f32 %v898, 0.1
      %v984 = vmul.f32 %v900, 0.1
      %v985 = vmul.f32 %v903, 0.1
      %v986 = vmul.f32 %v905, 0.1
      %v987 = vmul.f32 %v908, 0.1
      %v988 = vmul.f32 %v910, 0.1
      %v989 = vmul.f32 %v913, 0.1
      %v990 = vmul.f32 %v915, 0.1
      %v991 = vmul.f32 %v918, 0.1
      %v992 = vmul.f32 %v920, 0.1
      %v993 = vmul.f32 %v923, 0.1
      %v994 = vmul.f32 %v925, 0.1
      %v995 = vsel %vm927, %v843, %v961
      %v996 = vsel %vm928, %v845, %v962
      %v997 = vsel %vm929, %v848, %v963
      %v998 = vsel %vm930, %v850, %v964
      %v999 = vsel %vm931, %v853, %v965
      %v1000 = vsel %vm932, %v855, %v966
      %v1001 = vsel %vm933, %v858, %v967
      %v1002 = vsel %vm934, %v860, %v968
      %v1003 = vsel %vm935, %v863, %v969
      %v1004 = vsel %vm936, %v865, %v970
      %v1005 = vsel %vm937, %v868, %v971
      %v1006 = vsel %vm938, %v870, %v972
      %v1007 = vsel %vm939, %v873, %v973
      %v1008 = vsel %vm940, %v875, %v974
      %v1009 = vsel %vm941, %v878, %v975
      %v1010 = vsel %vm942, %v880, %v976
      %v1011 = vsel %vm943, %v883, %v977
      %v1012 = vsel %vm944, %v885, %v978
      %v1013 = vsel %vm945, %v888, %v979
      %v1014 = vsel %vm946, %v890, %v980
      %v1015 = vsel %vm947, %v893, %v981
      %v1016 = vsel %vm948, %v895, %v982
      %v1017 = vsel %vm949, %v898, %v983
      %v1018 = vsel %vm950, %v900, %v984
      %v1019 = vsel %vm951, %v903, %v985
      %v1020 = vsel %vm952, %v905, %v986
      %v1021 = vsel %vm953, %v908, %v987
      %v1022 = vsel %vm954, %v910, %v988
      %v1023 = vsel %vm955, %v913, %v989
      %v1024 = vsel %vm956, %v915, %v990
      %v1025 = vsel %vm957, %v918, %v991
      %v1026 = vsel %vm958, %v920, %v992
      %v1027 = vsel %vm959, %v923, %v993
      %v1028 = vsel %vm960, %v925, %v994
      %v1029 = vpack.c.bf16 %v996, %v995
      %v1030 = vpack.c.bf16 %v998, %v997
      %v1031 = vpack.c.bf16 %v1000, %v999
      %v1032 = vpack.c.bf16 %v1002, %v1001
      %v1033 = vpack.c.bf16 %v1004, %v1003
      %v1034 = vpack.c.bf16 %v1006, %v1005
      %v1035 = vpack.c.bf16 %v1008, %v1007
      %v1036 = vpack.c.bf16 %v1010, %v1009
      %v1037 = vpack.c.bf16 %v1012, %v1011
      %v1038 = vpack.c.bf16 %v1014, %v1013
      %v1039 = vpack.c.bf16 %v1016, %v1015
      %v1040 = vpack.c.bf16 %v1018, %v1017
      %v1041 = vpack.c.bf16 %v1020, %v1019
      %v1042 = vpack.c.bf16 %v1022, %v1021
      %v1043 = vpack.c.bf16 %v1024, %v1023
      %v1044 = vpack.c.bf16 %v1026, %v1025
      %v1045 = vpack.c.bf16 %v1028, %v1027
      %v1046 = vld [vmem:[%s475] sm:$0xf]
      %v1047 = vld [vmem:[%s475 + $0x4] sm:$0xf]
      %v1048 = vld [vmem:[%s475 + $0x8] sm:$0xf]
      %v1049 = vld [vmem:[%s475 + $0xc] sm:$0xf]
      %v1050 = vld [vmem:[%s475 + $0x10] sm:$0xf]
      %v1051 = vld [vmem:[%s475 + $0x14] sm:$0xf]
      %v1052 = vld [vmem:[%s475 + $0x18] sm:$0xf]
      %v1053 = vld [vmem:[%s475 + $0x1c] sm:$0xf]
      %v1054 = vld [vmem:[%s481] sm:$0x1]
      %v1056 = vperm.slane %v1054, 0
      %v1066 = vunpack.c.l.b16 %v1046
      %v1067 = vunpack.c.l.b16 %v1047
      %v1068 = vunpack.c.l.b16 %v1048
      %v1069 = vunpack.c.l.b16 %v1049
      %v1070 = vunpack.c.l.b16 %v1050
      %v1071 = vunpack.c.l.b16 %v1051
      %v1072 = vunpack.c.l.b16 %v1052
      %v1073 = vunpack.c.l.b16 %v1053
      %v1074 = vpack.c.b16 %v1067, %v1066
      %v1075 = vpack.c.b16 %v1069, %v1068
      %v1076 = vpack.c.b16 %v1071, %v1070
      %v1077 = vpack.c.b16 %v1073, %v1072
      %vm1082 = vcmask 523264
      %v1084 = vsel %vm1082, %v1029, 0
      %v1087 = vsel %vm1082, %v1030, 0
      %v1090 = vsel %vm1082, %v1031, 0
      %v1093 = vsel %vm1082, %v1032, 0
      %v1096 = vsel %vm1082, %v1033, 0
      %v1099 = vsel %vm1082, %v1034, 0
      %v1102 = vsel %vm1082, %v1035, 0
      %v1105 = vsel %vm1082, %v1036, 0
      %v1108 = vsel %vm1082, %v1037, 0
      %v1111 = vsel %vm1082, %v1038, 0
      %v1114 = vsel %vm1082, %v1039, 0
      %v1117 = vsel %vm1082, %v1040, 0
      %v1120 = vsel %vm1082, %v1041, 0
      %v1123 = vsel %vm1082, %v1042, 0
      %v1126 = vsel %vm1082, %v1043, 0
      %v1129 = vsel %vm1082, %v1044, 0
      %v1132 = vsel %vm1082, %v1045, 0
      %1134 = vmatpush.bf16.msra.mxu0 0
      %1135 = vmatpush.bf16.msra.mxu0 0
      %1136 = vmatpush.bf16.msra.mxu0 0
      %1137 = vmatpush.bf16.msra.mxu0 0
      %1138 = vmatpush.bf16.msra.mxu0 %v1077
      %1139 = vmatpush.bf16.msra.mxu0 %v1076
      %1140 = vmatpush.bf16.msra.mxu0 %v1075
      %1141 = vmatpush.bf16.msra.mxu0 %v1074
      %1142 = vmatmul.bf16.gmra.mxu0 %v1084
      %v1143 = vpop.f32.mrf.mxu0
      %v1144 = vadd.f32 %v1056, %v1143
      %v1145 = vpop.f32.mrf.mxu0
      %v1146 = vadd.f32 %v1056, %v1145
      %1147 = vmatmul.bf16.gmra.mxu0 %v1087
      %v1148 = vpop.f32.mrf.mxu0
      %v1149 = vadd.f32 %v1056, %v1148
      %v1150 = vpop.f32.mrf.mxu0
      %v1151 = vadd.f32 %v1056, %v1150
      %1152 = vmatmul.bf16.gmra.mxu0 %v1090
      %v1153 = vpop.f32.mrf.mxu0
      %v1154 = vadd.f32 %v1056, %v1153
      %v1155 = vpop.f32.mrf.mxu0
      %v1156 = vadd.f32 %v1056, %v1155
      %1157 = vmatmul.bf16.gmra.mxu0 %v1093
      %v1158 = vpop.f32.mrf.mxu0
      %v1159 = vadd.f32 %v1056, %v1158
      %v1160 = vpop.f32.mrf.mxu0
      %v1161 = vadd.f32 %v1056, %v1160
      %1162 = vmatmul.bf16.gmra.mxu0 %v1096
      %v1163 = vpop.f32.mrf.mxu0
      %v1164 = vadd.f32 %v1056, %v1163
      %v1165 = vpop.f32.mrf.mxu0
      %v1166 = vadd.f32 %v1056, %v1165
      %1167 = vmatmul.bf16.gmra.mxu0 %v1099
      %v1168 = vpop.f32.mrf.mxu0
      %v1169 = vadd.f32 %v1056, %v1168
      %v1170 = vpop.f32.mrf.mxu0
      %v1171 = vadd.f32 %v1056, %v1170
      %1172 = vmatmul.bf16.gmra.mxu0 %v1102
      %v1173 = vpop.f32.mrf.mxu0
      %v1174 = vadd.f32 %v1056, %v1173
      %v1175 = vpop.f32.mrf.mxu0
      %v1176 = vadd.f32 %v1056, %v1175
      %1177 = vmatmul.bf16.gmra.mxu0 %v1105
      %v1178 = vpop.f32.mrf.mxu0
      %v1179 = vadd.f32 %v1056, %v1178
      %v1180 = vpop.f32.mrf.mxu0
      %v1181 = vadd.f32 %v1056, %v1180
      %1182 = vmatmul.bf16.gmra.mxu0 %v1108
      %v1183 = vpop.f32.mrf.mxu0
      %v1184 = vadd.f32 %v1056, %v1183
      %v1185 = vpop.f32.mrf.mxu0
      %v1186 = vadd.f32 %v1056, %v1185
      %1187 = vmatmul.bf16.gmra.mxu0 %v1111
      %v1188 = vpop.f32.mrf.mxu0
      %v1189 = vadd.f32 %v1056, %v1188
      %v1190 = vpop.f32.mrf.mxu0
      %v1191 = vadd.f32 %v1056, %v1190
      %1192 = vmatmul.bf16.gmra.mxu0 %v1114
      %v1193 = vpop.f32.mrf.mxu0
      %v1194 = vadd.f32 %v1056, %v1193
      %v1195 = vpop.f32.mrf.mxu0
      %v1196 = vadd.f32 %v1056, %v1195
      %1197 = vmatmul.bf16.gmra.mxu0 %v1117
      %v1198 = vpop.f32.mrf.mxu0
      %v1199 = vadd.f32 %v1056, %v1198
      %v1200 = vpop.f32.mrf.mxu0
      %v1201 = vadd.f32 %v1056, %v1200
      %1202 = vmatmul.bf16.gmra.mxu0 %v1120
      %v1203 = vpop.f32.mrf.mxu0
      %v1204 = vadd.f32 %v1056, %v1203
      %v1205 = vpop.f32.mrf.mxu0
      %v1206 = vadd.f32 %v1056, %v1205
      %1207 = vmatmul.bf16.gmra.mxu0 %v1123
      %v1208 = vpop.f32.mrf.mxu0
      %v1209 = vadd.f32 %v1056, %v1208
      %v1210 = vpop.f32.mrf.mxu0
      %v1211 = vadd.f32 %v1056, %v1210
      %1212 = vmatmul.bf16.gmra.mxu0 %v1126
      %v1213 = vpop.f32.mrf.mxu0
      %v1214 = vadd.f32 %v1056, %v1213
      %v1215 = vpop.f32.mrf.mxu0
      %v1216 = vadd.f32 %v1056, %v1215
      %1217 = vmatmul.bf16.gmra.mxu0 %v1129
      %v1218 = vpop.f32.mrf.mxu0
      %v1219 = vadd.f32 %v1056, %v1218
      %v1220 = vpop.f32.mrf.mxu0
      %v1221 = vadd.f32 %v1056, %v1220
      %1222 = vmatmul.bf16.gmra.mxu0 %v1132
      %v1223 = vpop.f32.mrf.mxu0
      %v1224 = vadd.f32 %v1056, %v1223
      %v1225 = vpop.f32.mrf.mxu0
      %v1226 = vadd.f32 %v1056, %v1225
      %1227 = vdwg.mxu0
      %s1228 = scalar_lea.vmem %s475, 32
      %v1229 = vld [vmem:[%s1228] sm:$0xf]
      %v1230 = vld [vmem:[%s1228 + $0x4] sm:$0xf]
      %v1231 = vld [vmem:[%s1228 + $0x8] sm:$0xf]
      %v1232 = vld [vmem:[%s1228 + $0xc] sm:$0xf]
      %v1233 = vld [vmem:[%s1228 + $0x10] sm:$0xf]
      %v1234 = vld [vmem:[%s1228 + $0x14] sm:$0xf]
      %v1235 = vld [vmem:[%s1228 + $0x18] sm:$0xf]
      %v1236 = vld [vmem:[%s1228 + $0x1c] sm:$0xf]
      %s1237 = scalar_lea.vmem %s481, 1
      %v1238 = vld [vmem:[%s1237] sm:$0x1]
      %v1240 = vperm.slane %v1238, 0
      %v1250 = vunpack.c.l.b16 %v1229
      %v1251 = vunpack.c.l.b16 %v1230
      %v1252 = vunpack.c.l.b16 %v1231
      %v1253 = vunpack.c.l.b16 %v1232
      %v1254 = vunpack.c.l.b16 %v1233
      %v1255 = vunpack.c.l.b16 %v1234
      %v1256 = vunpack.c.l.b16 %v1235
      %v1257 = vunpack.c.l.b16 %v1236
      %v1258 = vpack.c.b16 %v1251, %v1250
      %v1259 = vpack.c.b16 %v1253, %v1252
      %v1260 = vpack.c.b16 %v1255, %v1254
      %v1261 = vpack.c.b16 %v1257, %v1256
      %1266 = vmatpush.bf16.msra.mxu0 0
      %1267 = vmatpush.bf16.msra.mxu0 0
      %1268 = vmatpush.bf16.msra.mxu0 0
      %1269 = vmatpush.bf16.msra.mxu0 0
      %1270 = vmatpush.bf16.msra.mxu0 %v1261
      %1271 = vmatpush.bf16.msra.mxu0 %v1260
      %1272 = vmatpush.bf16.msra.mxu0 %v1259
      %1273 = vmatpush.bf16.msra.mxu0 %v1258
      %1274 = vmatmul.bf16.gmra.mxu0 %v1084
      %v1275 = vpop.f32.mrf.mxu0
      %v1276 = vadd.f32 %v1240, %v1275
      %v1277 = vpop.f32.mrf.mxu0
      %v1278 = vadd.f32 %v1240, %v1277
      %1279 = vmatmul.bf16.gmra.mxu0 %v1087
      %v1280 = vpop.f32.mrf.mxu0
      %v1281 = vadd.f32 %v1240, %v1280
      %v1282 = vpop.f32.mrf.mxu0
      %v1283 = vadd.f32 %v1240, %v1282
      %1284 = vmatmul.bf16.gmra.mxu0 %v1090
      %v1285 = vpop.f32.mrf.mxu0
      %v1286 = vadd.f32 %v1240, %v1285
      %v1287 = vpop.f32.mrf.mxu0
      %v1288 = vadd.f32 %v1240, %v1287
      %1289 = vmatmul.bf16.gmra.mxu0 %v1093
      %v1290 = vpop.f32.mrf.mxu0
      %v1291 = vadd.f32 %v1240, %v1290
      %v1292 = vpop.f32.mrf.mxu0
      %v1293 = vadd.f32 %v1240, %v1292
      %1294 = vmatmul.bf16.gmra.mxu0 %v1096
      %v1295 = vpop.f32.mrf.mxu0
      %v1296 = vadd.f32 %v1240, %v1295
      %v1297 = vpop.f32.mrf.mxu0
      %v1298 = vadd.f32 %v1240, %v1297
      %1299 = vmatmul.bf16.gmra.mxu0 %v1099
      %v1300 = vpop.f32.mrf.mxu0
      %v1301 = vadd.f32 %v1240, %v1300
      %v1302 = vpop.f32.mrf.mxu0
      %v1303 = vadd.f32 %v1240, %v1302
      %1304 = vmatmul.bf16.gmra.mxu0 %v1102
      %v1305 = vpop.f32.mrf.mxu0
      %v1306 = vadd.f32 %v1240, %v1305
      %v1307 = vpop.f32.mrf.mxu0
      %v1308 = vadd.f32 %v1240, %v1307
      %1309 = vmatmul.bf16.gmra.mxu0 %v1105
      %v1310 = vpop.f32.mrf.mxu0
      %v1311 = vadd.f32 %v1240, %v1310
      %v1312 = vpop.f32.mrf.mxu0
      %v1313 = vadd.f32 %v1240, %v1312
      %1314 = vmatmul.bf16.gmra.mxu0 %v1108
      %v1315 = vpop.f32.mrf.mxu0
      %v1316 = vadd.f32 %v1240, %v1315
      %v1317 = vpop.f32.mrf.mxu0
      %v1318 = vadd.f32 %v1240, %v1317
      %1319 = vmatmul.bf16.gmra.mxu0 %v1111
      %v1320 = vpop.f32.mrf.mxu0
      %v1321 = vadd.f32 %v1240, %v1320
      %v1322 = vpop.f32.mrf.mxu0
      %v1323 = vadd.f32 %v1240, %v1322
      %1324 = vmatmul.bf16.gmra.mxu0 %v1114
      %v1325 = vpop.f32.mrf.mxu0
      %v1326 = vadd.f32 %v1240, %v1325
      %v1327 = vpop.f32.mrf.mxu0
      %v1328 = vadd.f32 %v1240, %v1327
      %1329 = vmatmul.bf16.gmra.mxu0 %v1117
      %v1330 = vpop.f32.mrf.mxu0
      %v1331 = vadd.f32 %v1240, %v1330
      %v1332 = vpop.f32.mrf.mxu0
      %v1333 = vadd.f32 %v1240, %v1332
      %1334 = vmatmul.bf16.gmra.mxu0 %v1120
      %v1335 = vpop.f32.mrf.mxu0
      %v1336 = vadd.f32 %v1240, %v1335
      %v1337 = vpop.f32.mrf.mxu0
      %v1338 = vadd.f32 %v1240, %v1337
      %1339 = vmatmul.bf16.gmra.mxu0 %v1123
      %v1340 = vpop.f32.mrf.mxu0
      %v1341 = vadd.f32 %v1240, %v1340
      %v1342 = vpop.f32.mrf.mxu0
      %v1343 = vadd.f32 %v1240, %v1342
      %1344 = vmatmul.bf16.gmra.mxu0 %v1126
      %v1345 = vpop.f32.mrf.mxu0
      %v1346 = vadd.f32 %v1240, %v1345
      %v1347 = vpop.f32.mrf.mxu0
      %v1348 = vadd.f32 %v1240, %v1347
      %1349 = vmatmul.bf16.gmra.mxu0 %v1129
      %v1350 = vpop.f32.mrf.mxu0
      %v1351 = vadd.f32 %v1240, %v1350
      %v1352 = vpop.f32.mrf.mxu0
      %v1353 = vadd.f32 %v1240, %v1352
      %1354 = vmatmul.bf16.gmra.mxu0 %v1132
      %v1355 = vpop.f32.mrf.mxu0
      %v1356 = vadd.f32 %v1240, %v1355
      %v1357 = vpop.f32.mrf.mxu0
      %v1358 = vadd.f32 %v1240, %v1357
      %1359 = vdwg.mxu0
      %v1360 = vmul.f32 %v642, %v1144
      %v1361 = vmul.f32 %v643, %v1146
      %v1362 = vmul.f32 %v644, %v1149
      %v1363 = vmul.f32 %v645, %v1151
      %v1364 = vmul.f32 %v646, %v1154
      %v1365 = vmul.f32 %v647, %v1156
      %v1366 = vmul.f32 %v648, %v1159
      %v1367 = vmul.f32 %v649, %v1161
      %v1368 = vmul.f32 %v650, %v1164
      %v1369 = vmul.f32 %v651, %v1166
      %v1370 = vmul.f32 %v652, %v1169
      %v1371 = vmul.f32 %v653, %v1171
      %v1372 = vmul.f32 %v654, %v1174
      %v1373 = vmul.f32 %v655, %v1176
      %v1374 = vmul.f32 %v656, %v1179
      %v1375 = vmul.f32 %v657, %v1181
      %v1376 = vmul.f32 %v658, %v1184
      %v1377 = vmul.f32 %v659, %v1186
      %v1378 = vmul.f32 %v660, %v1189
      %v1379 = vmul.f32 %v661, %v1191
      %v1380 = vmul.f32 %v662, %v1194
      %v1381 = vmul.f32 %v663, %v1196
      %v1382 = vmul.f32 %v664, %v1199
      %v1383 = vmul.f32 %v665, %v1201
      %v1384 = vmul.f32 %v666, %v1204
      %v1385 = vmul.f32 %v667, %v1206
      %v1386 = vmul.f32 %v668, %v1209
      %v1387 = vmul.f32 %v669, %v1211
      %v1388 = vmul.f32 %v670, %v1214
      %v1389 = vmul.f32 %v671, %v1216
      %v1390 = vmul.f32 %v672, %v1219
      %v1391 = vmul.f32 %v673, %v1221
      %v1392 = vmul.f32 %v674, %v1224
      %v1393 = vmul.f32 %v675, %v1226
      %v1394 = vadd.f32 %v1360, %v1276
      %v1395 = vadd.f32 %v1361, %v1278
      %v1396 = vadd.f32 %v1362, %v1281
      %v1397 = vadd.f32 %v1363, %v1283
      %v1398 = vadd.f32 %v1364, %v1286
      %v1399 = vadd.f32 %v1365, %v1288
      %v1400 = vadd.f32 %v1366, %v1291
      %v1401 = vadd.f32 %v1367, %v1293
      %v1402 = vadd.f32 %v1368, %v1296
      %v1403 = vadd.f32 %v1369, %v1298
      %v1404 = vadd.f32 %v1370, %v1301
      %v1405 = vadd.f32 %v1371, %v1303
      %v1406 = vadd.f32 %v1372, %v1306
      %v1407 = vadd.f32 %v1373, %v1308
      %v1408 = vadd.f32 %v1374, %v1311
      %v1409 = vadd.f32 %v1375, %v1313
      %v1410 = vadd.f32 %v1376, %v1316
      %v1411 = vadd.f32 %v1377, %v1318
      %v1412 = vadd.f32 %v1378, %v1321
      %v1413 = vadd.f32 %v1379, %v1323
      %v1414 = vadd.f32 %v1380, %v1326
      %v1415 = vadd.f32 %v1381, %v1328
      %v1416 = vadd.f32 %v1382, %v1331
      %v1417 = vadd.f32 %v1383, %v1333
      %v1418 = vadd.f32 %v1384, %v1336
      %v1419 = vadd.f32 %v1385, %v1338
      %v1420 = vadd.f32 %v1386, %v1341
      %v1421 = vadd.f32 %v1387, %v1343
      %v1422 = vadd.f32 %v1388, %v1346
      %v1423 = vadd.f32 %v1389, %v1348
      %v1424 = vadd.f32 %v1390, %v1351
      %v1425 = vadd.f32 %v1391, %v1353
      %v1426 = vadd.f32 %v1392, %v1356
      %v1427 = vadd.f32 %v1393, %v1358
      %1429 = vset.pattern.permute.xlu0 0
      %1430 = vperm.xlu0 %1429, %v608
      %v1431 = vpop.permute.xlu0 %1430
      %1434 = vset.pattern.permute.xlu0 0
      %1435 = vperm.xlu0 %1434, %v609
      %v1436 = vpop.permute.xlu0 %1435
      %1439 = vset.pattern.permute.xlu0 0
      %1440 = vperm.xlu0 %1439, %v610
      %v1441 = vpop.permute.xlu0 %1440
      %1444 = vset.pattern.permute.xlu0 0
      %1445 = vperm.xlu0 %1444, %v611
      %v1446 = vpop.permute.xlu0 %1445
      %1449 = vset.pattern.permute.xlu0 0
      %1450 = vperm.xlu0 %1449, %v612
      %v1451 = vpop.permute.xlu0 %1450
      %1454 = vset.pattern.permute.xlu0 0
      %1455 = vperm.xlu0 %1454, %v613
      %v1456 = vpop.permute.xlu0 %1455
      %1459 = vset.pattern.permute.xlu0 0
      %1460 = vperm.xlu0 %1459, %v614
      %v1461 = vpop.permute.xlu0 %1460
      %1464 = vset.pattern.permute.xlu0 0
      %1465 = vperm.xlu0 %1464, %v615
      %v1466 = vpop.permute.xlu0 %1465
      %1469 = vset.pattern.permute.xlu0 0
      %1470 = vperm.xlu0 %1469, %v616
      %v1471 = vpop.permute.xlu0 %1470
      %1474 = vset.pattern.permute.xlu0 0
      %1475 = vperm.xlu0 %1474, %v617
      %v1476 = vpop.permute.xlu0 %1475
      %1479 = vset.pattern.permute.xlu0 0
      %1480 = vperm.xlu0 %1479, %v618
      %v1481 = vpop.permute.xlu0 %1480
      %1484 = vset.pattern.permute.xlu0 0
      %1485 = vperm.xlu0 %1484, %v619
      %v1486 = vpop.permute.xlu0 %1485
      %1489 = vset.pattern.permute.xlu0 0
      %1490 = vperm.xlu0 %1489, %v620
      %v1491 = vpop.permute.xlu0 %1490
      %1494 = vset.pattern.permute.xlu0 0
      %1495 = vperm.xlu0 %1494, %v621
      %v1496 = vpop.permute.xlu0 %1495
      %1499 = vset.pattern.permute.xlu0 0
      %1500 = vperm.xlu0 %1499, %v622
      %v1501 = vpop.permute.xlu0 %1500
      %1504 = vset.pattern.permute.xlu0 0
      %1505 = vperm.xlu0 %1504, %v623
      %v1506 = vpop.permute.xlu0 %1505
      %1509 = vset.pattern.permute.xlu0 0
      %1510 = vperm.xlu0 %1509, %v624
      %v1511 = vpop.permute.xlu0 %1510
      %1514 = vset.pattern.permute.xlu0 0
      %1515 = vperm.xlu0 %1514, %v625
      %v1516 = vpop.permute.xlu0 %1515
      %1519 = vset.pattern.permute.xlu0 0
      %1520 = vperm.xlu0 %1519, %v626
      %v1521 = vpop.permute.xlu0 %1520
      %1524 = vset.pattern.permute.xlu0 0
      %1525 = vperm.xlu0 %1524, %v627
      %v1526 = vpop.permute.xlu0 %1525
      %1529 = vset.pattern.permute.xlu0 0
      %1530 = vperm.xlu0 %1529, %v628
      %v1531 = vpop.permute.xlu0 %1530
      %1534 = vset.pattern.permute.xlu0 0
      %1535 = vperm.xlu0 %1534, %v629
      %v1536 = vpop.permute.xlu0 %1535
      %1539 = vset.pattern.permute.xlu0 0
      %1540 = vperm.xlu0 %1539, %v630
      %v1541 = vpop.permute.xlu0 %1540
      %1544 = vset.pattern.permute.xlu0 0
      %1545 = vperm.xlu0 %1544, %v631
      %v1546 = vpop.permute.xlu0 %1545
      %1549 = vset.pattern.permute.xlu0 0
      %1550 = vperm.xlu0 %1549, %v632
      %v1551 = vpop.permute.xlu0 %1550
      %1554 = vset.pattern.permute.xlu0 0
      %1555 = vperm.xlu0 %1554, %v633
      %v1556 = vpop.permute.xlu0 %1555
      %1559 = vset.pattern.permute.xlu0 0
      %1560 = vperm.xlu0 %1559, %v634
      %v1561 = vpop.permute.xlu0 %1560
      %1564 = vset.pattern.permute.xlu0 0
      %1565 = vperm.xlu0 %1564, %v635
      %v1566 = vpop.permute.xlu0 %1565
      %1569 = vset.pattern.permute.xlu0 0
      %1570 = vperm.xlu0 %1569, %v636
      %v1571 = vpop.permute.xlu0 %1570
      %1574 = vset.pattern.permute.xlu0 0
      %1575 = vperm.xlu0 %1574, %v637
      %v1576 = vpop.permute.xlu0 %1575
      %1579 = vset.pattern.permute.xlu0 0
      %1580 = vperm.xlu0 %1579, %v638
      %v1581 = vpop.permute.xlu0 %1580
      %1584 = vset.pattern.permute.xlu0 0
      %1585 = vperm.xlu0 %1584, %v639
      %v1586 = vpop.permute.xlu0 %1585
      %1589 = vset.pattern.permute.xlu0 0
      %1590 = vperm.xlu0 %1589, %v640
      %v1591 = vpop.permute.xlu0 %1590
      %1594 = vset.pattern.permute.xlu0 0
      %1595 = vperm.xlu0 %1594, %v641
      %v1596 = vpop.permute.xlu0 %1595
      %v1598 = vmul.f32 %v1394, %v1431
      %v1599 = vmul.f32 %v1395, %v1436
      %v1600 = vmul.f32 %v1396, %v1441
      %v1601 = vmul.f32 %v1397, %v1446
      %v1602 = vmul.f32 %v1398, %v1451
      %v1603 = vmul.f32 %v1399, %v1456
      %v1604 = vmul.f32 %v1400, %v1461
      %v1605 = vmul.f32 %v1401, %v1466
      %v1606 = vmul.f32 %v1402, %v1471
      %v1607 = vmul.f32 %v1403, %v1476
      %v1608 = vmul.f32 %v1404, %v1481
      %v1609 = vmul.f32 %v1405, %v1486
      %v1610 = vmul.f32 %v1406, %v1491
      %v1611 = vmul.f32 %v1407, %v1496
      %v1612 = vmul.f32 %v1408, %v1501
      %v1613 = vmul.f32 %v1409, %v1506
      %v1614 = vmul.f32 %v1410, %v1511
      %v1615 = vmul.f32 %v1411, %v1516
      %v1616 = vmul.f32 %v1412, %v1521
      %v1617 = vmul.f32 %v1413, %v1526
      %v1618 = vmul.f32 %v1414, %v1531
      %v1619 = vmul.f32 %v1415, %v1536
      %v1620 = vmul.f32 %v1416, %v1541
      %v1621 = vmul.f32 %v1417, %v1546
      %v1622 = vmul.f32 %v1418, %v1551
      %v1623 = vmul.f32 %v1419, %v1556
      %v1624 = vmul.f32 %v1420, %v1561
      %v1625 = vmul.f32 %v1421, %v1566
      %v1626 = vmul.f32 %v1422, %v1571
      %v1627 = vmul.f32 %v1423, %v1576
      %v1628 = vmul.f32 %v1424, %v1581
      %v1629 = vmul.f32 %v1425, %v1586
      %v1630 = vmul.f32 %v1426, %v1591
      %v1631 = vmul.f32 %v1427, %v1596
      %v1632 = vpack.c.bf16 %v1598, %v1598
      %v1633 = vpack.c.bf16 %v1599, %v1599
      %v1634 = vpack.c.bf16 %v1600, %v1600
      %v1635 = vpack.c.bf16 %v1601, %v1601
      %v1636 = vpack.c.bf16 %v1602, %v1602
      %v1637 = vpack.c.bf16 %v1603, %v1603
      %v1638 = vpack.c.bf16 %v1604, %v1604
      %v1639 = vpack.c.bf16 %v1605, %v1605
      %v1640 = vpack.c.bf16 %v1606, %v1606
      %v1641 = vpack.c.bf16 %v1607, %v1607
      %v1642 = vpack.c.bf16 %v1608, %v1608
      %v1643 = vpack.c.bf16 %v1609, %v1609
      %v1644 = vpack.c.bf16 %v1610, %v1610
      %v1645 = vpack.c.bf16 %v1611, %v1611
      %v1646 = vpack.c.bf16 %v1612, %v1612
      %v1647 = vpack.c.bf16 %v1613, %v1613
      %v1648 = vpack.c.bf16 %v1614, %v1614
      %v1649 = vpack.c.bf16 %v1615, %v1615
      %v1650 = vpack.c.bf16 %v1616, %v1616
      %v1651 = vpack.c.bf16 %v1617, %v1617
      %v1652 = vpack.c.bf16 %v1618, %v1618
      %v1653 = vpack.c.bf16 %v1619, %v1619
      %v1654 = vpack.c.bf16 %v1620, %v1620
      %v1655 = vpack.c.bf16 %v1621, %v1621
      %v1656 = vpack.c.bf16 %v1622, %v1622
      %v1657 = vpack.c.bf16 %v1623, %v1623
      %v1658 = vpack.c.bf16 %v1624, %v1624
      %v1659 = vpack.c.bf16 %v1625, %v1625
      %v1660 = vpack.c.bf16 %v1626, %v1626
      %v1661 = vpack.c.bf16 %v1627, %v1627
      %v1662 = vpack.c.bf16 %v1628, %v1628
      %v1663 = vpack.c.bf16 %v1629, %v1629
      %v1664 = vpack.c.bf16 %v1630, %v1630
      %v1665 = vpack.c.bf16 %v1631, %v1631
      %v1698 = vunpack.c.l.b16 %v1632
      %v1699 = vunpack.c.l.b16 %v1633
      %v1700 = vunpack.c.l.b16 %v1634
      %v1701 = vunpack.c.l.b16 %v1635
      %v1702 = vunpack.c.l.b16 %v1636
      %v1703 = vunpack.c.l.b16 %v1637
      %v1704 = vunpack.c.l.b16 %v1638
      %v1705 = vunpack.c.l.b16 %v1639
      %v1706 = vunpack.c.l.b16 %v1640
      %v1707 = vunpack.c.l.b16 %v1641
      %v1708 = vunpack.c.l.b16 %v1642
      %v1709 = vunpack.c.l.b16 %v1643
      %v1710 = vunpack.c.l.b16 %v1644
      %v1711 = vunpack.c.l.b16 %v1645
      %v1712 = vunpack.c.l.b16 %v1646
      %v1713 = vunpack.c.l.b16 %v1647
      %v1714 = vunpack.c.l.b16 %v1648
      %v1715 = vunpack.c.l.b16 %v1649
      %v1716 = vunpack.c.l.b16 %v1650
      %v1717 = vunpack.c.l.b16 %v1651
      %v1718 = vunpack.c.l.b16 %v1652
      %v1719 = vunpack.c.l.b16 %v1653
      %v1720 = vunpack.c.l.b16 %v1654
      %v1721 = vunpack.c.l.b16 %v1655
      %v1722 = vunpack.c.l.b16 %v1656
      %v1723 = vunpack.c.l.b16 %v1657
      %v1724 = vunpack.c.l.b16 %v1658
      %v1725 = vunpack.c.l.b16 %v1659
      %v1726 = vunpack.c.l.b16 %v1660
      %v1727 = vunpack.c.l.b16 %v1661
      %v1728 = vunpack.c.l.b16 %v1662
      %v1729 = vunpack.c.l.b16 %v1663
      %v1730 = vpack.c.b16 %v1699, %v1698
      %v1731 = vpack.c.b16 %v1701, %v1700
      %v1732 = vpack.c.b16 %v1703, %v1702
      %v1733 = vpack.c.b16 %v1705, %v1704
      %v1734 = vpack.c.b16 %v1707, %v1706
      %v1735 = vpack.c.b16 %v1709, %v1708
      %v1736 = vpack.c.b16 %v1711, %v1710
      %v1737 = vpack.c.b16 %v1713, %v1712
      %v1738 = vpack.c.b16 %v1715, %v1714
      %v1739 = vpack.c.b16 %v1717, %v1716
      %v1740 = vpack.c.b16 %v1719, %v1718
      %v1741 = vpack.c.b16 %v1721, %v1720
      %v1742 = vpack.c.b16 %v1723, %v1722
      %v1743 = vpack.c.b16 %v1725, %v1724
      %v1744 = vpack.c.b16 %v1727, %v1726
      %v1745 = vpack.c.b16 %v1729, %v1728
      %vm1746 = vcmask 1040384
      %v1747 = vrot.slane %v1730, 7
      %v1748 = vrot.slane %v1731, 7
      %v1749 = vsel %vm1746, %v1747, %v1748
      %v1750 = vrot.slane %v1732, 7
      %v1751 = vsel %vm1746, %v1748, %v1750
      %v1752 = vrot.slane %v1733, 7
      %v1753 = vsel %vm1746, %v1750, %v1752
      %v1754 = vrot.slane %v1734, 7
      %v1755 = vsel %vm1746, %v1752, %v1754
      %v1756 = vrot.slane %v1735, 7
      %v1757 = vsel %vm1746, %v1754, %v1756
      %v1758 = vrot.slane %v1736, 7
      %v1759 = vsel %vm1746, %v1756, %v1758
      %v1760 = vrot.slane %v1737, 7
      %v1761 = vsel %vm1746, %v1758, %v1760
      %v1762 = vrot.slane %v1738, 7
      %v1763 = vsel %vm1746, %v1760, %v1762
      %v1764 = vrot.slane %v1739, 7
      %v1765 = vsel %vm1746, %v1762, %v1764
      %v1766 = vrot.slane %v1740, 7
      %v1767 = vsel %vm1746, %v1764, %v1766
      %v1768 = vrot.slane %v1741, 7
      %v1769 = vsel %vm1746, %v1766, %v1768
      %v1770 = vrot.slane %v1742, 7
      %v1771 = vsel %vm1746, %v1768, %v1770
      %v1772 = vrot.slane %v1743, 7
      %v1773 = vsel %vm1746, %v1770, %v1772
      %v1774 = vrot.slane %v1744, 7
      %v1775 = vsel %vm1746, %v1772, %v1774
      %v1776 = vrot.slane %v1745, 7
      %v1777 = vsel %vm1746, %v1774, %v1776
      %vm1778 = vcmask 1040384
      %v1781 = vsel %vm1778, 0, %v1747
      %v1784 = vunpack.c.l.b16 0
      %v1785 = vunpack.c.h.b16 0
      %v1786 = vunpack.c.l.b16 %v1781
      %v1787 = vunpack.c.h.b16 %v1781
      %v1788 = vunpack.c.l.b16 %v1749
      %v1789 = vunpack.c.h.b16 %v1749
      %v1790 = vunpack.c.l.b16 %v1751
      %v1791 = vunpack.c.h.b16 %v1751
      %v1792 = vunpack.c.l.b16 %v1753
      %v1793 = vunpack.c.h.b16 %v1753
      %v1794 = vunpack.c.l.b16 %v1755
      %v1795 = vunpack.c.h.b16 %v1755
      %v1796 = vunpack.c.l.b16 %v1757
      %v1797 = vunpack.c.h.b16 %v1757
      %v1798 = vunpack.c.l.b16 %v1759
      %v1799 = vunpack.c.h.b16 %v1759
      %v1800 = vunpack.c.l.b16 %v1761
      %v1801 = vunpack.c.h.b16 %v1761
      %v1802 = vunpack.c.l.b16 %v1763
      %v1803 = vunpack.c.h.b16 %v1763
      %v1804 = vunpack.c.l.b16 %v1765
      %v1805 = vunpack.c.h.b16 %v1765
      %v1806 = vunpack.c.l.b16 %v1767
      %v1807 = vunpack.c.h.b16 %v1767
      %v1808 = vunpack.c.l.b16 %v1769
      %v1809 = vunpack.c.h.b16 %v1769
      %v1810 = vunpack.c.l.b16 %v1771
      %v1811 = vunpack.c.h.b16 %v1771
      %v1812 = vunpack.c.l.b16 %v1773
      %v1813 = vunpack.c.h.b16 %v1773
      %v1814 = vunpack.c.l.b16 %v1775
      %v1815 = vunpack.c.h.b16 %v1775
      %v1816 = vunpack.c.l.b16 %v1777
      %v1817 = vunpack.c.h.b16 %v1777
      %v1818 = vpack.c.b16 %v1784, %v1784
      %v1819 = vpack.c.b16 %v1785, %v1785
      %v1820 = vpack.c.b16 %v1786, %v1786
      %v1821 = vpack.c.b16 %v1787, %v1787
      %v1822 = vpack.c.b16 %v1788, %v1788
      %v1823 = vpack.c.b16 %v1789, %v1789
      %v1824 = vpack.c.b16 %v1790, %v1790
      %v1825 = vpack.c.b16 %v1791, %v1791
      %v1826 = vpack.c.b16 %v1792, %v1792
      %v1827 = vpack.c.b16 %v1793, %v1793
      %v1828 = vpack.c.b16 %v1794, %v1794
      %v1829 = vpack.c.b16 %v1795, %v1795
      %v1830 = vpack.c.b16 %v1796, %v1796
      %v1831 = vpack.c.b16 %v1797, %v1797
      %v1832 = vpack.c.b16 %v1798, %v1798
      %v1833 = vpack.c.b16 %v1799, %v1799
      %v1834 = vpack.c.b16 %v1800, %v1800
      %v1835 = vpack.c.b16 %v1801, %v1801
      %v1836 = vpack.c.b16 %v1802, %v1802
      %v1837 = vpack.c.b16 %v1803, %v1803
      %v1838 = vpack.c.b16 %v1804, %v1804
      %v1839 = vpack.c.b16 %v1805, %v1805
      %v1840 = vpack.c.b16 %v1806, %v1806
      %v1841 = vpack.c.b16 %v1807, %v1807
      %v1842 = vpack.c.b16 %v1808, %v1808
      %v1843 = vpack.c.b16 %v1809, %v1809
      %v1844 = vpack.c.b16 %v1810, %v1810
      %v1845 = vpack.c.b16 %v1811, %v1811
      %v1846 = vpack.c.b16 %v1812, %v1812
      %v1847 = vpack.c.b16 %v1813, %v1813
      %v1848 = vpack.c.b16 %v1814, %v1814
      %v1849 = vpack.c.b16 %v1815, %v1815
      %v1850 = vpack.c.b16 %v1816, %v1816
      %v1851 = vpack.c.b16 %v1817, %v1817
      %vm1886 = vcmask 519168
      %1887 = vst.msk [vmem:[#allocation2] sm:$0xf] %vm1886, %v1818
      %1888 = vst.msk [vmem:[#allocation2 + $0x14] sm:$0xf] %vm1886, %v1819
      %1889 = vst.msk [vmem:[#allocation2 + $0x28] sm:$0xf] %vm1886, %v1820
      %1890 = vst.msk [vmem:[#allocation2 + $0x3c] sm:$0xf] %vm1886, %v1821
      %1891 = vst.msk [vmem:[#allocation2 + $0x50] sm:$0xf] %vm1886, %v1822
      %1892 = vst.msk [vmem:[#allocation2 + $0x64] sm:$0xf] %vm1886, %v1823
      %1893 = vst.msk [vmem:[#allocation2 + $0x78] sm:$0xf] %vm1886, %v1824
      %1894 = vst.msk [vmem:[#allocation2 + $0x8c] sm:$0xf] %vm1886, %v1825
      %1895 = vst.msk [vmem:[#allocation2 + $0xa0] sm:$0xf] %vm1886, %v1826
      %1896 = vst.msk [vmem:[#allocation2 + $0xb4] sm:$0xf] %vm1886, %v1827
      %1897 = vst.msk [vmem:[#allocation2 + $0xc8] sm:$0xf] %vm1886, %v1828
      %1898 = vst.msk [vmem:[#allocation2 + $0xdc] sm:$0xf] %vm1886, %v1829
      %1899 = vst.msk [vmem:[#allocation2 + $0xf0] sm:$0xf] %vm1886, %v1830
      %1900 = vst.msk [vmem:[#allocation2 + $0x104] sm:$0xf] %vm1886, %v1831
      %1901 = vst.msk [vmem:[#allocation2 + $0x118] sm:$0xf] %vm1886, %v1832
      %1902 = vst.msk [vmem:[#allocation2 + $0x12c] sm:$0xf] %vm1886, %v1833
      %1903 = vst.msk [vmem:[#allocation2 + $0x140] sm:$0xf] %vm1886, %v1834
      %1904 = vst.msk [vmem:[#allocation2 + $0x154] sm:$0xf] %vm1886, %v1835
      %1905 = vst.msk [vmem:[#allocation2 + $0x168] sm:$0xf] %vm1886, %v1836
      %1906 = vst.msk [vmem:[#allocation2 + $0x17c] sm:$0xf] %vm1886, %v1837
      %1907 = vst.msk [vmem:[#allocation2 + $0x190] sm:$0xf] %vm1886, %v1838
      %1908 = vst.msk [vmem:[#allocation2 + $0x1a4] sm:$0xf] %vm1886, %v1839
      %1909 = vst.msk [vmem:[#allocation2 + $0x1b8] sm:$0xf] %vm1886, %v1840
      %1910 = vst.msk [vmem:[#allocation2 + $0x1cc] sm:$0xf] %vm1886, %v1841
      %1911 = vst.msk [vmem:[#allocation2 + $0x1e0] sm:$0xf] %vm1886, %v1842
      %1912 = vst.msk [vmem:[#allocation2 + $0x1f4] sm:$0xf] %vm1886, %v1843
      %1913 = vst.msk [vmem:[#allocation2 + $0x208] sm:$0xf] %vm1886, %v1844
      %1914 = vst.msk [vmem:[#allocation2 + $0x21c] sm:$0xf] %vm1886, %v1845
      %1915 = vst.msk [vmem:[#allocation2 + $0x230] sm:$0xf] %vm1886, %v1846
      %1916 = vst.msk [vmem:[#allocation2 + $0x244] sm:$0xf] %vm1886, %v1847
      %1917 = vst.msk [vmem:[#allocation2 + $0x258] sm:$0xf] %vm1886, %v1848
      %1918 = vst.msk [vmem:[#allocation2 + $0x26c] sm:$0xf] %vm1886, %v1849
      %1919 = vst.msk [vmem:[#allocation2 + $0x280] sm:$0xf] %vm1886, %v1850
      %1920 = vst.msk [vmem:[#allocation2 + $0x294] sm:$0xf] %vm1886, %v1851
      %vm1921 = vsmask.f32 256
      %v1923 = vshrl.u32 %v1730, 16
      %v1925 = vrot.slane %v1923, 7
      %v1926 = vshll.u32 %v1730, 16
      %v1928 = vor.u32 %v1925, %v1926
      %v1930 = vshrl.u32 %v1731, 16
      %v1932 = vrot.slane %v1930, 7
      %v1933 = vshll.u32 %v1731, 16
      %v1935 = vor.u32 %v1932, %v1933
      %v1936 = vsel %vm1921, %v1925, %v1935
      %v1938 = vshrl.u32 %v1732, 16
      %v1940 = vrot.slane %v1938, 7
      %v1941 = vshll.u32 %v1732, 16
      %v1943 = vor.u32 %v1940, %v1941
      %v1944 = vsel %vm1921, %v1932, %v1943
      %v1946 = vshrl.u32 %v1733, 16
      %v1948 = vrot.slane %v1946, 7
      %v1949 = vshll.u32 %v1733, 16
      %v1951 = vor.u32 %v1948, %v1949
      %v1952 = vsel %vm1921, %v1940, %v1951
      %v1954 = vshrl.u32 %v1734, 16
      %v1956 = vrot.slane %v1954, 7
      %v1957 = vshll.u32 %v1734, 16
      %v1959 = vor.u32 %v1956, %v1957
      %v1960 = vsel %vm1921, %v1948, %v1959
      %v1962 = vshrl.u32 %v1735, 16
      %v1964 = vrot.slane %v1962, 7
      %v1965 = vshll.u32 %v1735, 16
      %v1967 = vor.u32 %v1964, %v1965
      %v1968 = vsel %vm1921, %v1956, %v1967
      %v1970 = vshrl.u32 %v1736, 16
      %v1972 = vrot.slane %v1970, 7
      %v1973 = vshll.u32 %v1736, 16
      %v1975 = vor.u32 %v1972, %v1973
      %v1976 = vsel %vm1921, %v1964, %v1975
      %v1978 = vshrl.u32 %v1737, 16
      %v1980 = vrot.slane %v1978, 7
      %v1981 = vshll.u32 %v1737, 16
      %v1983 = vor.u32 %v1980, %v1981
      %v1984 = vsel %vm1921, %v1972, %v1983
      %v1986 = vshrl.u32 %v1738, 16
      %v1988 = vrot.slane %v1986, 7
      %v1989 = vshll.u32 %v1738, 16
      %v1991 = vor.u32 %v1988, %v1989
      %v1992 = vsel %vm1921, %v1980, %v1991
      %v1994 = vshrl.u32 %v1739, 16
      %v1996 = vrot.slane %v1994, 7
      %v1997 = vshll.u32 %v1739, 16
      %v1999 = vor.u32 %v1996, %v1997
      %v2000 = vsel %vm1921, %v1988, %v1999
      %v2002 = vshrl.u32 %v1740, 16
      %v2004 = vrot.slane %v2002, 7
      %v2005 = vshll.u32 %v1740, 16
      %v2007 = vor.u32 %v2004, %v2005
      %v2008 = vsel %vm1921, %v1996, %v2007
      %v2010 = vshrl.u32 %v1741, 16
      %v2012 = vrot.slane %v2010, 7
      %v2013 = vshll.u32 %v1741, 16
      %v2015 = vor.u32 %v2012, %v2013
      %v2016 = vsel %vm1921, %v2004, %v2015
      %v2018 = vshrl.u32 %v1742, 16
      %v2020 = vrot.slane %v2018, 7
      %v2021 = vshll.u32 %v1742, 16
      %v2023 = vor.u32 %v2020, %v2021
      %v2024 = vsel %vm1921, %v2012, %v2023
      %v2026 = vshrl.u32 %v1743, 16
      %v2028 = vrot.slane %v2026, 7
      %v2029 = vshll.u32 %v1743, 16
      %v2031 = vor.u32 %v2028, %v2029
      %v2032 = vsel %vm1921, %v2020, %v2031
      %v2034 = vshrl.u32 %v1744, 16
      %v2036 = vrot.slane %v2034, 7
      %v2037 = vshll.u32 %v1744, 16
      %v2039 = vor.u32 %v2036, %v2037
      %v2040 = vsel %vm1921, %v2028, %v2039
      %v2042 = vshrl.u32 %v1745, 16
      %v2044 = vrot.slane %v2042, 7
      %v2045 = vshll.u32 %v1745, 16
      %v2047 = vor.u32 %v2044, %v2045
      %v2048 = vsel %vm1921, %v2036, %v2047
      %vm2050 = vmand %vm1746, %vm1921
      %v2051 = vsel %vm2050, 0, %v1928
      %v2053 = vunpack.c.l.b16 %v2051
      %v2054 = vunpack.c.h.b16 %v2051
      %v2055 = vunpack.c.l.b16 %v1936
      %v2056 = vunpack.c.h.b16 %v1936
      %v2057 = vunpack.c.l.b16 %v1944
      %v2058 = vunpack.c.h.b16 %v1944
      %v2059 = vunpack.c.l.b16 %v1952
      %v2060 = vunpack.c.h.b16 %v1952
      %v2061 = vunpack.c.l.b16 %v1960
      %v2062 = vunpack.c.h.b16 %v1960
      %v2063 = vunpack.c.l.b16 %v1968
      %v2064 = vunpack.c.h.b16 %v1968
      %v2065 = vunpack.c.l.b16 %v1976
      %v2066 = vunpack.c.h.b16 %v1976
      %v2067 = vunpack.c.l.b16 %v1984
      %v2068 = vunpack.c.h.b16 %v1984
      %v2069 = vunpack.c.l.b16 %v1992
      %v2070 = vunpack.c.h.b16 %v1992
      %v2071 = vunpack.c.l.b16 %v2000
      %v2072 = vunpack.c.h.b16 %v2000
      %v2073 = vunpack.c.l.b16 %v2008
      %v2074 = vunpack.c.h.b16 %v2008
      %v2075 = vunpack.c.l.b16 %v2016
      %v2076 = vunpack.c.h.b16 %v2016
      %v2077 = vunpack.c.l.b16 %v2024
      %v2078 = vunpack.c.h.b16 %v2024
      %v2079 = vunpack.c.l.b16 %v2032
      %v2080 = vunpack.c.h.b16 %v2032
      %v2081 = vunpack.c.l.b16 %v2040
      %v2082 = vunpack.c.h.b16 %v2040
      %v2083 = vunpack.c.l.b16 %v2048
      %v2084 = vunpack.c.h.b16 %v2048
      %v2085 = vpack.c.b16 %v2053, %v2053
      %v2086 = vpack.c.b16 %v2054, %v2054
      %v2087 = vpack.c.b16 %v2055, %v2055
      %v2088 = vpack.c.b16 %v2056, %v2056
      %v2089 = vpack.c.b16 %v2057, %v2057
      %v2090 = vpack.c.b16 %v2058, %v2058
      %v2091 = vpack.c.b16 %v2059, %v2059
      %v2092 = vpack.c.b16 %v2060, %v2060
      %v2093 = vpack.c.b16 %v2061, %v2061
      %v2094 = vpack.c.b16 %v2062, %v2062
      %v2095 = vpack.c.b16 %v2063, %v2063
      %v2096 = vpack.c.b16 %v2064, %v2064
      %v2097 = vpack.c.b16 %v2065, %v2065
      %v2098 = vpack.c.b16 %v2066, %v2066
      %v2099 = vpack.c.b16 %v2067, %v2067
      %v2100 = vpack.c.b16 %v2068, %v2068
      %v2101 = vpack.c.b16 %v2069, %v2069
      %v2102 = vpack.c.b16 %v2070, %v2070
      %v2103 = vpack.c.b16 %v2071, %v2071
      %v2104 = vpack.c.b16 %v2072, %v2072
      %v2105 = vpack.c.b16 %v2073, %v2073
      %v2106 = vpack.c.b16 %v2074, %v2074
      %v2107 = vpack.c.b16 %v2075, %v2075
      %v2108 = vpack.c.b16 %v2076, %v2076
      %v2109 = vpack.c.b16 %v2077, %v2077
      %v2110 = vpack.c.b16 %v2078, %v2078
      %v2111 = vpack.c.b16 %v2079, %v2079
      %v2112 = vpack.c.b16 %v2080, %v2080
      %v2113 = vpack.c.b16 %v2081, %v2081
      %v2114 = vpack.c.b16 %v2082, %v2082
      %v2115 = vpack.c.b16 %v2083, %v2083
      %v2116 = vpack.c.b16 %v2084, %v2084
      %2117 = vrot.lane.b32.xlu0 %v1818, 64
      %v2118 = vpop.permute.xlu0 %2117
      %2119 = vrot.lane.b32.xlu0 %v1819, 64
      %v2120 = vpop.permute.xlu0 %2119
      %2121 = vrot.lane.b32.xlu0 %v2085, 64
      %v2122 = vpop.permute.xlu0 %2121
      %2123 = vrot.lane.b32.xlu0 %v2086, 64
      %v2124 = vpop.permute.xlu0 %2123
      %2125 = vrot.lane.b32.xlu0 %v2087, 64
      %v2126 = vpop.permute.xlu0 %2125
      %2127 = vrot.lane.b32.xlu0 %v2088, 64
      %v2128 = vpop.permute.xlu0 %2127
      %2129 = vrot.lane.b32.xlu0 %v2089, 64
      %v2130 = vpop.permute.xlu0 %2129
      %2131 = vrot.lane.b32.xlu0 %v2090, 64
      %v2132 = vpop.permute.xlu0 %2131
      %2133 = vrot.lane.b32.xlu0 %v2091, 64
      %v2134 = vpop.permute.xlu0 %2133
      %2135 = vrot.lane.b32.xlu0 %v2092, 64
      %v2136 = vpop.permute.xlu0 %2135
      %2137 = vrot.lane.b32.xlu0 %v2093, 64
      %v2138 = vpop.permute.xlu0 %2137
      %2139 = vrot.lane.b32.xlu0 %v2094, 64
      %v2140 = vpop.permute.xlu0 %2139
      %2141 = vrot.lane.b32.xlu0 %v2095, 64
      %v2142 = vpop.permute.xlu0 %2141
      %2143 = vrot.lane.b32.xlu0 %v2096, 64
      %v2144 = vpop.permute.xlu0 %2143
      %2145 = vrot.lane.b32.xlu0 %v2097, 64
      %v2146 = vpop.permute.xlu0 %2145
      %2147 = vrot.lane.b32.xlu0 %v2098, 64
      %v2148 = vpop.permute.xlu0 %2147
      %2149 = vrot.lane.b32.xlu0 %v2099, 64
      %v2150 = vpop.permute.xlu0 %2149
      %2151 = vrot.lane.b32.xlu0 %v2100, 64
      %v2152 = vpop.permute.xlu0 %2151
      %2153 = vrot.lane.b32.xlu0 %v2101, 64
      %v2154 = vpop.permute.xlu0 %2153
      %2155 = vrot.lane.b32.xlu0 %v2102, 64
      %v2156 = vpop.permute.xlu0 %2155
      %2157 = vrot.lane.b32.xlu0 %v2103, 64
      %v2158 = vpop.permute.xlu0 %2157
      %2159 = vrot.lane.b32.xlu0 %v2104, 64
      %v2160 = vpop.permute.xlu0 %2159
      %2161 = vrot.lane.b32.xlu0 %v2105, 64
      %v2162 = vpop.permute.xlu0 %2161
      %2163 = vrot.lane.b32.xlu0 %v2106, 64
      %v2164 = vpop.permute.xlu0 %2163
      %2165 = vrot.lane.b32.xlu0 %v2107, 64
      %v2166 = vpop.permute.xlu0 %2165
      %2167 = vrot.lane.b32.xlu0 %v2108, 64
      %v2168 = vpop.permute.xlu0 %2167
      %2169 = vrot.lane.b32.xlu0 %v2109, 64
      %v2170 = vpop.permute.xlu0 %2169
      %2171 = vrot.lane.b32.xlu0 %v2110, 64
      %v2172 = vpop.permute.xlu0 %2171
      %2173 = vrot.lane.b32.xlu0 %v2111, 64
      %v2174 = vpop.permute.xlu0 %2173
      %2175 = vrot.lane.b32.xlu0 %v2112, 64
      %v2176 = vpop.permute.xlu0 %2175
      %2177 = vrot.lane.b32.xlu0 %v2113, 64
      %v2178 = vpop.permute.xlu0 %2177
      %2179 = vrot.lane.b32.xlu0 %v2114, 64
      %v2180 = vpop.permute.xlu0 %2179
      %2181 = vrot.lane.b32.xlu0 %v2115, 64
      %v2182 = vpop.permute.xlu0 %2181
      %2183 = vrot.lane.b32.xlu0 %v2116, 64
      %v2184 = vpop.permute.xlu0 %2183
      %vm2219 = vcmask 1043968
      %2220 = vst.msk [vmem:[#allocation2] sm:$0xf] %vm2219, %v2118
      %2221 = vst.msk [vmem:[#allocation2 + $0x14] sm:$0xf] %vm2219, %v2120
      %2222 = vst.msk [vmem:[#allocation2 + $0x28] sm:$0xf] %vm2219, %v2122
      %2223 = vst.msk [vmem:[#allocation2 + $0x3c] sm:$0xf] %vm2219, %v2124
      %2224 = vst.msk [vmem:[#allocation2 + $0x50] sm:$0xf] %vm2219, %v2126
      %2225 = vst.msk [vmem:[#allocation2 + $0x64] sm:$0xf] %vm2219, %v2128
      %2226 = vst.msk [vmem:[#allocation2 + $0x78] sm:$0xf] %vm2219, %v2130
      %2227 = vst.msk [vmem:[#allocation2 + $0x8c] sm:$0xf] %vm2219, %v2132
      %2228 = vst.msk [vmem:[#allocation2 + $0xa0] sm:$0xf] %vm2219, %v2134
      %2229 = vst.msk [vmem:[#allocation2 + $0xb4] sm:$0xf] %vm2219, %v2136
      %2230 = vst.msk [vmem:[#allocation2 + $0xc8] sm:$0xf] %vm2219, %v2138
      %2231 = vst.msk [vmem:[#allocation2 + $0xdc] sm:$0xf] %vm2219, %v2140
      %2232 = vst.msk [vmem:[#allocation2 + $0xf0] sm:$0xf] %vm2219, %v2142
      %2233 = vst.msk [vmem:[#allocation2 + $0x104] sm:$0xf] %vm2219, %v2144
      %2234 = vst.msk [vmem:[#allocation2 + $0x118] sm:$0xf] %vm2219, %v2146
      %2235 = vst.msk [vmem:[#allocation2 + $0x12c] sm:$0xf] %vm2219, %v2148
      %2236 = vst.msk [vmem:[#allocation2 + $0x140] sm:$0xf] %vm2219, %v2150
      %2237 = vst.msk [vmem:[#allocation2 + $0x154] sm:$0xf] %vm2219, %v2152
      %2238 = vst.msk [vmem:[#allocation2 + $0x168] sm:$0xf] %vm2219, %v2154
      %2239 = vst.msk [vmem:[#allocation2 + $0x17c] sm:$0xf] %vm2219, %v2156
      %2240 = vst.msk [vmem:[#allocation2 + $0x190] sm:$0xf] %vm2219, %v2158
      %2241 = vst.msk [vmem:[#allocation2 + $0x1a4] sm:$0xf] %vm2219, %v2160
      %2242 = vst.msk [vmem:[#allocation2 + $0x1b8] sm:$0xf] %vm2219, %v2162
      %2243 = vst.msk [vmem:[#allocation2 + $0x1cc] sm:$0xf] %vm2219, %v2164
      %2244 = vst.msk [vmem:[#allocation2 + $0x1e0] sm:$0xf] %vm2219, %v2166
      %2245 = vst.msk [vmem:[#allocation2 + $0x1f4] sm:$0xf] %vm2219, %v2168
      %2246 = vst.msk [vmem:[#allocation2 + $0x208] sm:$0xf] %vm2219, %v2170
      %2247 = vst.msk [vmem:[#allocation2 + $0x21c] sm:$0xf] %vm2219, %v2172
      %2248 = vst.msk [vmem:[#allocation2 + $0x230] sm:$0xf] %vm2219, %v2174
      %2249 = vst.msk [vmem:[#allocation2 + $0x244] sm:$0xf] %vm2219, %v2176
      %2250 = vst.msk [vmem:[#allocation2 + $0x258] sm:$0xf] %vm2219, %v2178
      %2251 = vst.msk [vmem:[#allocation2 + $0x26c] sm:$0xf] %vm2219, %v2180
      %2252 = vst.msk [vmem:[#allocation2 + $0x280] sm:$0xf] %vm2219, %v2182
      %2253 = vst.msk [vmem:[#allocation2 + $0x294] sm:$0xf] %vm2219, %v2184
      %v2254 = vpack.c.b16 %v1698, %v1698
      %v2255 = vpack.c.b16 %v1699, %v1699
      %v2256 = vpack.c.b16 %v1700, %v1700
      %v2257 = vpack.c.b16 %v1701, %v1701
      %v2258 = vpack.c.b16 %v1702, %v1702
      %v2259 = vpack.c.b16 %v1703, %v1703
      %v2260 = vpack.c.b16 %v1704, %v1704
      %v2261 = vpack.c.b16 %v1705, %v1705
      %v2262 = vpack.c.b16 %v1706, %v1706
      %v2263 = vpack.c.b16 %v1707, %v1707
      %v2264 = vpack.c.b16 %v1708, %v1708
      %v2265 = vpack.c.b16 %v1709, %v1709
      %v2266 = vpack.c.b16 %v1710, %v1710
      %v2267 = vpack.c.b16 %v1711, %v1711
      %v2268 = vpack.c.b16 %v1712, %v1712
      %v2269 = vpack.c.b16 %v1713, %v1713
      %v2270 = vpack.c.b16 %v1714, %v1714
      %v2271 = vpack.c.b16 %v1715, %v1715
      %v2272 = vpack.c.b16 %v1716, %v1716
      %v2273 = vpack.c.b16 %v1717, %v1717
      %v2274 = vpack.c.b16 %v1718, %v1718
      %v2275 = vpack.c.b16 %v1719, %v1719
      %v2276 = vpack.c.b16 %v1720, %v1720
      %v2277 = vpack.c.b16 %v1721, %v1721
      %v2278 = vpack.c.b16 %v1722, %v1722
      %v2279 = vpack.c.b16 %v1723, %v1723
      %v2280 = vpack.c.b16 %v1724, %v1724
      %v2281 = vpack.c.b16 %v1725, %v1725
      %v2282 = vpack.c.b16 %v1726, %v1726
      %v2283 = vpack.c.b16 %v1727, %v1727
      %v2284 = vpack.c.b16 %v1728, %v1728
      %v2285 = vpack.c.b16 %v1729, %v1729
      %2318 = vst.msk [vmem:[#allocation2 + $0x4] sm:$0xf] %vm1886, %v1818
      %2319 = vst.msk [vmem:[#allocation2 + $0x18] sm:$0xf] %vm1886, %v1819
      %2320 = vst.msk [vmem:[#allocation2 + $0x2c] sm:$0xf] %vm1886, %v2254
      %2321 = vst.msk [vmem:[#allocation2 + $0x40] sm:$0xf] %vm1886, %v2255
      %2322 = vst.msk [vmem:[#allocation2 + $0x54] sm:$0xf] %vm1886, %v2256
      %2323 = vst.msk [vmem:[#allocation2 + $0x68] sm:$0xf] %vm1886, %v2257
      %2324 = vst.msk [vmem:[#allocation2 + $0x7c] sm:$0xf] %vm1886, %v2258
      %2325 = vst.msk [vmem:[#allocation2 + $0x90] sm:$0xf] %vm1886, %v2259
      %2326 = vst.msk [vmem:[#allocation2 + $0xa4] sm:$0xf] %vm1886, %v2260
      %2327 = vst.msk [vmem:[#allocation2 + $0xb8] sm:$0xf] %vm1886, %v2261
      %2328 = vst.msk [vmem:[#allocation2 + $0xcc] sm:$0xf] %vm1886, %v2262
      %2329 = vst.msk [vmem:[#allocation2 + $0xe0] sm:$0xf] %vm1886, %v2263
      %2330 = vst.msk [vmem:[#allocation2 + $0xf4] sm:$0xf] %vm1886, %v2264
      %2331 = vst.msk [vmem:[#allocation2 + $0x108] sm:$0xf] %vm1886, %v2265
      %2332 = vst.msk [vmem:[#allocation2 + $0x11c] sm:$0xf] %vm1886, %v2266
      %2333 = vst.msk [vmem:[#allocation2 + $0x130] sm:$0xf] %vm1886, %v2267
      %2334 = vst.msk [vmem:[#allocation2 + $0x144] sm:$0xf] %vm1886, %v2268
      %2335 = vst.msk [vmem:[#allocation2 + $0x158] sm:$0xf] %vm1886, %v2269
      %2336 = vst.msk [vmem:[#allocation2 + $0x16c] sm:$0xf] %vm1886, %v2270
      %2337 = vst.msk [vmem:[#allocation2 + $0x180] sm:$0xf] %vm1886, %v2271
      %2338 = vst.msk [vmem:[#allocation2 + $0x194] sm:$0xf] %vm1886, %v2272
      %2339 = vst.msk [vmem:[#allocation2 + $0x1a8] sm:$0xf] %vm1886, %v2273
      %2340 = vst.msk [vmem:[#allocation2 + $0x1bc] sm:$0xf] %vm1886, %v2274
      %2341 = vst.msk [vmem:[#allocation2 + $0x1d0] sm:$0xf] %vm1886, %v2275
      %2342 = vst.msk [vmem:[#allocation2 + $0x1e4] sm:$0xf] %vm1886, %v2276
      %2343 = vst.msk [vmem:[#allocation2 + $0x1f8] sm:$0xf] %vm1886, %v2277
      %2344 = vst.msk [vmem:[#allocation2 + $0x20c] sm:$0xf] %vm1886, %v2278
      %2345 = vst.msk [vmem:[#allocation2 + $0x220] sm:$0xf] %vm1886, %v2279
      %2346 = vst.msk [vmem:[#allocation2 + $0x234] sm:$0xf] %vm1886, %v2280
      %2347 = vst.msk [vmem:[#allocation2 + $0x248] sm:$0xf] %vm1886, %v2281
      %2348 = vst.msk [vmem:[#allocation2 + $0x25c] sm:$0xf] %vm1886, %v2282
      %2349 = vst.msk [vmem:[#allocation2 + $0x270] sm:$0xf] %vm1886, %v2283
      %2350 = vst.msk [vmem:[#allocation2 + $0x284] sm:$0xf] %vm1886, %v2284
      %2351 = vst.msk [vmem:[#allocation2 + $0x298] sm:$0xf] %vm1886, %v2285
      %v2354 = vunpack.c.l.b16 %v1664
      %v2355 = vunpack.c.l.b16 %v1665
      %v2356 = vpack.c.b16 %v2355, %v2354
      %v2358 = vshrl.u32 %v2356, 16
      %v2360 = vrot.slane %v2358, 7
      %v2361 = vshll.u32 %v2356, 16
      %v2363 = vor.u32 %v2360, %v2361
      %v2364 = vsel %vm1921, %v2044, %v2363
      %v2365 = vunpack.c.l.b16 %v2364
      %v2366 = vunpack.c.h.b16 %v2364
      %v2367 = vpack.c.b16 %v2365, %v2365
      %v2368 = vpack.c.b16 %v2366, %v2366
      %2369 = vrot.lane.b32.xlu0 %v2367, 64
      %v2370 = vpop.permute.xlu0 %2369
      %2371 = vrot.lane.b32.xlu0 %v2368, 64
      %v2372 = vpop.permute.xlu0 %2371
      %2375 = vst.msk [vmem:[#allocation2 + $0x4] sm:$0xf] %vm2219, %v2122
      %2376 = vst.msk [vmem:[#allocation2 + $0x18] sm:$0xf] %vm2219, %v2124
      %2377 = vst.msk [vmem:[#allocation2 + $0x2c] sm:$0xf] %vm2219, %v2126
      %2378 = vst.msk [vmem:[#allocation2 + $0x40] sm:$0xf] %vm2219, %v2128
      %2379 = vst.msk [vmem:[#allocation2 + $0x54] sm:$0xf] %vm2219, %v2130
      %2380 = vst.msk [vmem:[#allocation2 + $0x68] sm:$0xf] %vm2219, %v2132
      %2381 = vst.msk [vmem:[#allocation2 + $0x7c] sm:$0xf] %vm2219, %v2134
      %2382 = vst.msk [vmem:[#allocation2 + $0x90] sm:$0xf] %vm2219, %v2136
      %2383 = vst.msk [vmem:[#allocation2 + $0xa4] sm:$0xf] %vm2219, %v2138
      %2384 = vst.msk [vmem:[#allocation2 + $0xb8] sm:$0xf] %vm2219, %v2140
      %2385 = vst.msk [vmem:[#allocation2 + $0xcc] sm:$0xf] %vm2219, %v2142
      %2386 = vst.msk [vmem:[#allocation2 + $0xe0] sm:$0xf] %vm2219, %v2144
      %2387 = vst.msk [vmem:[#allocation2 + $0xf4] sm:$0xf] %vm2219, %v2146
      %2388 = vst.msk [vmem:[#allocation2 + $0x108] sm:$0xf] %vm2219, %v2148
      %2389 = vst.msk [vmem:[#allocation2 + $0x11c] sm:$0xf] %vm2219, %v2150
      %2390 = vst.msk [vmem:[#allocation2 + $0x130] sm:$0xf] %vm2219, %v2152
      %2391 = vst.msk [vmem:[#allocation2 + $0x144] sm:$0xf] %vm2219, %v2154
      %2392 = vst.msk [vmem:[#allocation2 + $0x158] sm:$0xf] %vm2219, %v2156
      %2393 = vst.msk [vmem:[#allocation2 + $0x16c] sm:$0xf] %vm2219, %v2158
      %2394 = vst.msk [vmem:[#allocation2 + $0x180] sm:$0xf] %vm2219, %v2160
      %2395 = vst.msk [vmem:[#allocation2 + $0x194] sm:$0xf] %vm2219, %v2162
      %2396 = vst.msk [vmem:[#allocation2 + $0x1a8] sm:$0xf] %vm2219, %v2164
      %2397 = vst.msk [vmem:[#allocation2 + $0x1bc] sm:$0xf] %vm2219, %v2166
      %2398 = vst.msk [vmem:[#allocation2 + $0x1d0] sm:$0xf] %vm2219, %v2168
      %2399 = vst.msk [vmem:[#allocation2 + $0x1e4] sm:$0xf] %vm2219, %v2170
      %2400 = vst.msk [vmem:[#allocation2 + $0x1f8] sm:$0xf] %vm2219, %v2172
      %2401 = vst.msk [vmem:[#allocation2 + $0x20c] sm:$0xf] %vm2219, %v2174
      %2402 = vst.msk [vmem:[#allocation2 + $0x220] sm:$0xf] %vm2219, %v2176
      %2403 = vst.msk [vmem:[#allocation2 + $0x234] sm:$0xf] %vm2219, %v2178
      %2404 = vst.msk [vmem:[#allocation2 + $0x248] sm:$0xf] %vm2219, %v2180
      %2405 = vst.msk [vmem:[#allocation2 + $0x25c] sm:$0xf] %vm2219, %v2182
      %2406 = vst.msk [vmem:[#allocation2 + $0x270] sm:$0xf] %vm2219, %v2184
      %2407 = vst.msk [vmem:[#allocation2 + $0x284] sm:$0xf] %vm2219, %v2370
      %2408 = vst.msk [vmem:[#allocation2 + $0x298] sm:$0xf] %vm2219, %v2372
      %2409 = vst.msk [vmem:[#allocation2 + $0x8] sm:$0xf] %vm1886, %v1632
      %2410 = vst.msk [vmem:[#allocation2 + $0x1c] sm:$0xf] %vm1886, %v1633
      %2411 = vst.msk [vmem:[#allocation2 + $0x30] sm:$0xf] %vm1886, %v1634
      %2412 = vst.msk [vmem:[#allocation2 + $0x44] sm:$0xf] %vm1886, %v1635
      %2413 = vst.msk [vmem:[#allocation2 + $0x58] sm:$0xf] %vm1886, %v1636
      %2414 = vst.msk [vmem:[#allocation2 + $0x6c] sm:$0xf] %vm1886, %v1637
      %2415 = vst.msk [vmem:[#allocation2 + $0x80] sm:$0xf] %vm1886, %v1638
      %2416 = vst.msk [vmem:[#allocation2 + $0x94] sm:$0xf] %vm1886, %v1639
      %2417 = vst.msk [vmem:[#allocation2 + $0xa8] sm:$0xf] %vm1886, %v1640
      %2418 = vst.msk [vmem:[#allocation2 + $0xbc] sm:$0xf] %vm1886, %v1641
      %2419 = vst.msk [vmem:[#allocation2 + $0xd0] sm:$0xf] %vm1886, %v1642
      %2420 = vst.msk [vmem:[#allocation2 + $0xe4] sm:$0xf] %vm1886, %v1643
      %2421 = vst.msk [vmem:[#allocation2 + $0xf8] sm:$0xf] %vm1886, %v1644
      %2422 = vst.msk [vmem:[#allocation2 + $0x10c] sm:$0xf] %vm1886, %v1645
      %2423 = vst.msk [vmem:[#allocation2 + $0x120] sm:$0xf] %vm1886, %v1646
      %2424 = vst.msk [vmem:[#allocation2 + $0x134] sm:$0xf] %vm1886, %v1647
      %2425 = vst.msk [vmem:[#allocation2 + $0x148] sm:$0xf] %vm1886, %v1648
      %2426 = vst.msk [vmem:[#allocation2 + $0x15c] sm:$0xf] %vm1886, %v1649
      %2427 = vst.msk [vmem:[#allocation2 + $0x170] sm:$0xf] %vm1886, %v1650
      %2428 = vst.msk [vmem:[#allocation2 + $0x184] sm:$0xf] %vm1886, %v1651
      %2429 = vst.msk [vmem:[#allocation2 + $0x198] sm:$0xf] %vm1886, %v1652
      %2430 = vst.msk [vmem:[#allocation2 + $0x1ac] sm:$0xf] %vm1886, %v1653
      %2431 = vst.msk [vmem:[#allocation2 + $0x1c0] sm:$0xf] %vm1886, %v1654
      %2432 = vst.msk [vmem:[#allocation2 + $0x1d4] sm:$0xf] %vm1886, %v1655
      %2433 = vst.msk [vmem:[#allocation2 + $0x1e8] sm:$0xf] %vm1886, %v1656
      %2434 = vst.msk [vmem:[#allocation2 + $0x1fc] sm:$0xf] %vm1886, %v1657
      %2435 = vst.msk [vmem:[#allocation2 + $0x210] sm:$0xf] %vm1886, %v1658
      %2436 = vst.msk [vmem:[#allocation2 + $0x224] sm:$0xf] %vm1886, %v1659
      %2437 = vst.msk [vmem:[#allocation2 + $0x238] sm:$0xf] %vm1886, %v1660
      %2438 = vst.msk [vmem:[#allocation2 + $0x24c] sm:$0xf] %vm1886, %v1661
      %2439 = vst.msk [vmem:[#allocation2 + $0x260] sm:$0xf] %vm1886, %v1662
      %2440 = vst.msk [vmem:[#allocation2 + $0x274] sm:$0xf] %vm1886, %v1663
      %2441 = vst.msk [vmem:[#allocation2 + $0x288] sm:$0xf] %vm1886, %v1664
      %2442 = vst.msk [vmem:[#allocation2 + $0x29c] sm:$0xf] %vm1886, %v1665
      %vm2443 = vsmask.f32 7424
      %v2444 = vrot.slane %v1926, 1
      %v2445 = vor.u32 %v1923, %v2444
      %v2446 = vrot.slane %v1933, 1
      %v2447 = vsel %vm2443, %v2445, %v2446
      %v2448 = vor.u32 %v1930, %v2446
      %v2449 = vrot.slane %v1941, 1
      %v2450 = vsel %vm2443, %v2448, %v2449
      %v2451 = vor.u32 %v1938, %v2449
      %v2452 = vrot.slane %v1949, 1
      %v2453 = vsel %vm2443, %v2451, %v2452
      %v2454 = vor.u32 %v1946, %v2452
      %v2455 = vrot.slane %v1957, 1
      %v2456 = vsel %vm2443, %v2454, %v2455
      %v2457 = vor.u32 %v1954, %v2455
      %v2458 = vrot.slane %v1965, 1
      %v2459 = vsel %vm2443, %v2457, %v2458
      %v2460 = vor.u32 %v1962, %v2458
      %v2461 = vrot.slane %v1973, 1
      %v2462 = vsel %vm2443, %v2460, %v2461
      %v2463 = vor.u32 %v1970, %v2461
      %v2464 = vrot.slane %v1981, 1
      %v2465 = vsel %vm2443, %v2463, %v2464
      %v2466 = vor.u32 %v1978, %v2464
      %v2467 = vrot.slane %v1989, 1
      %v2468 = vsel %vm2443, %v2466, %v2467
      %v2469 = vor.u32 %v1986, %v2467
      %v2470 = vrot.slane %v1997, 1
      %v2471 = vsel %vm2443, %v2469, %v2470
      %v2472 = vor.u32 %v1994, %v2470
      %v2473 = vrot.slane %v2005, 1
      %v2474 = vsel %vm2443, %v2472, %v2473
      %v2475 = vor.u32 %v2002, %v2473
      %v2476 = vrot.slane %v2013, 1
      %v2477 = vsel %vm2443, %v2475, %v2476
      %v2478 = vor.u32 %v2010, %v2476
      %v2479 = vrot.slane %v2021, 1
      %v2480 = vsel %vm2443, %v2478, %v2479
      %v2481 = vor.u32 %v2018, %v2479
      %v2482 = vrot.slane %v2029, 1
      %v2483 = vsel %vm2443, %v2481, %v2482
      %v2484 = vor.u32 %v2026, %v2482
      %v2485 = vrot.slane %v2037, 1
      %v2486 = vsel %vm2443, %v2484, %v2485
      %v2487 = vor.u32 %v2034, %v2485
      %v2488 = vrot.slane %v2045, 1
      %v2489 = vsel %vm2443, %v2487, %v2488
      %v2490 = vor.u32 %v2042, %v2488
      %v2491 = vrot.slane %v2361, 1
      %v2492 = vsel %vm2443, %v2490, %v2491
      %v2493 = vor.u32 %v2358, %v2491
      %vm2495 = vcmask 1047552
      %vm2496 = vmand %vm2495, %vm2443
      %v2497 = vsel %vm2496, %v2493, 0
      %v2499 = vunpack.c.l.b16 %v2447
      %v2500 = vunpack.c.h.b16 %v2447
      %v2501 = vunpack.c.l.b16 %v2450
      %v2502 = vunpack.c.h.b16 %v2450
      %v2503 = vunpack.c.l.b16 %v2453
      %v2504 = vunpack.c.h.b16 %v2453
      %v2505 = vunpack.c.l.b16 %v2456
      %v2506 = vunpack.c.h.b16 %v2456
      %v2507 = vunpack.c.l.b16 %v2459
      %v2508 = vunpack.c.h.b16 %v2459
      %v2509 = vunpack.c.l.b16 %v2462
      %v2510 = vunpack.c.h.b16 %v2462
      %v2511 = vunpack.c.l.b16 %v2465
      %v2512 = vunpack.c.h.b16 %v2465
      %v2513 = vunpack.c.l.b16 %v2468
      %v2514 = vunpack.c.h.b16 %v2468
      %v2515 = vunpack.c.l.b16 %v2471
      %v2516 = vunpack.c.h.b16 %v2471
      %v2517 = vunpack.c.l.b16 %v2474
      %v2518 = vunpack.c.h.b16 %v2474
      %v2519 = vunpack.c.l.b16 %v2477
      %v2520 = vunpack.c.h.b16 %v2477
      %v2521 = vunpack.c.l.b16 %v2480
      %v2522 = vunpack.c.h.b16 %v2480
      %v2523 = vunpack.c.l.b16 %v2483
      %v2524 = vunpack.c.h.b16 %v2483
      %v2525 = vunpack.c.l.b16 %v2486
      %v2526 = vunpack.c.h.b16 %v2486
      %v2527 = vunpack.c.l.b16 %v2489
      %v2528 = vunpack.c.h.b16 %v2489
      %v2529 = vunpack.c.l.b16 %v2492
      %v2530 = vunpack.c.h.b16 %v2492
      %v2531 = vunpack.c.l.b16 %v2497
      %v2532 = vunpack.c.h.b16 %v2497
      %v2533 = vpack.c.b16 %v2499, %v2499
      %v2534 = vpack.c.b16 %v2500, %v2500
      %v2535 = vpack.c.b16 %v2501, %v2501
      %v2536 = vpack.c.b16 %v2502, %v2502
      %v2537 = vpack.c.b16 %v2503, %v2503
      %v2538 = vpack.c.b16 %v2504, %v2504
      %v2539 = vpack.c.b16 %v2505, %v2505
      %v2540 = vpack.c.b16 %v2506, %v2506
      %v2541 = vpack.c.b16 %v2507, %v2507
      %v2542 = vpack.c.b16 %v2508, %v2508
      %v2543 = vpack.c.b16 %v2509, %v2509
      %v2544 = vpack.c.b16 %v2510, %v2510
      %v2545 = vpack.c.b16 %v2511, %v2511
      %v2546 = vpack.c.b16 %v2512, %v2512
      %v2547 = vpack.c.b16 %v2513, %v2513
      %v2548 = vpack.c.b16 %v2514, %v2514
      %v2549 = vpack.c.b16 %v2515, %v2515
      %v2550 = vpack.c.b16 %v2516, %v2516
      %v2551 = vpack.c.b16 %v2517, %v2517
      %v2552 = vpack.c.b16 %v2518, %v2518
      %v2553 = vpack.c.b16 %v2519, %v2519
      %v2554 = vpack.c.b16 %v2520, %v2520
      %v2555 = vpack.c.b16 %v2521, %v2521
      %v2556 = vpack.c.b16 %v2522, %v2522
      %v2557 = vpack.c.b16 %v2523, %v2523
      %v2558 = vpack.c.b16 %v2524, %v2524
      %v2559 = vpack.c.b16 %v2525, %v2525
      %v2560 = vpack.c.b16 %v2526, %v2526
      %v2561 = vpack.c.b16 %v2527, %v2527
      %v2562 = vpack.c.b16 %v2528, %v2528
      %v2563 = vpack.c.b16 %v2529, %v2529
      %v2564 = vpack.c.b16 %v2530, %v2530
      %v2565 = vpack.c.b16 %v2531, %v2531
      %v2566 = vpack.c.b16 %v2532, %v2532
      %2567 = vrot.lane.b32.xlu0 %v2533, 64
      %v2568 = vpop.permute.xlu0 %2567
      %2569 = vrot.lane.b32.xlu0 %v2534, 64
      %v2570 = vpop.permute.xlu0 %2569
      %2571 = vrot.lane.b32.xlu0 %v2535, 64
      %v2572 = vpop.permute.xlu0 %2571
      %2573 = vrot.lane.b32.xlu0 %v2536, 64
      %v2574 = vpop.permute.xlu0 %2573
      %2575 = vrot.lane.b32.xlu0 %v2537, 64
      %v2576 = vpop.permute.xlu0 %2575
      %2577 = vrot.lane.b32.xlu0 %v2538, 64
      %v2578 = vpop.permute.xlu0 %2577
      %2579 = vrot.lane.b32.xlu0 %v2539, 64
      %v2580 = vpop.permute.xlu0 %2579
      %2581 = vrot.lane.b32.xlu0 %v2540, 64
      %v2582 = vpop.permute.xlu0 %2581
      %2583 = vrot.lane.b32.xlu0 %v2541, 64
      %v2584 = vpop.permute.xlu0 %2583
      %2585 = vrot.lane.b32.xlu0 %v2542, 64
      %v2586 = vpop.permute.xlu0 %2585
      %2587 = vrot.lane.b32.xlu0 %v2543, 64
      %v2588 = vpop.permute.xlu0 %2587
      %2589 = vrot.lane.b32.xlu0 %v2544, 64
      %v2590 = vpop.permute.xlu0 %2589
      %2591 = vrot.lane.b32.xlu0 %v2545, 64
      %v2592 = vpop.permute.xlu0 %2591
      %2593 = vrot.lane.b32.xlu0 %v2546, 64
      %v2594 = vpop.permute.xlu0 %2593
      %2595 = vrot.lane.b32.xlu0 %v2547, 64
      %v2596 = vpop.permute.xlu0 %2595
      %2597 = vrot.lane.b32.xlu0 %v2548, 64
      %v2598 = vpop.permute.xlu0 %2597
      %2599 = vrot.lane.b32.xlu0 %v2549, 64
      %v2600 = vpop.permute.xlu0 %2599
      %2601 = vrot.lane.b32.xlu0 %v2550, 64
      %v2602 = vpop.permute.xlu0 %2601
      %2603 = vrot.lane.b32.xlu0 %v2551, 64
      %v2604 = vpop.permute.xlu0 %2603
      %2605 = vrot.lane.b32.xlu0 %v2552, 64
      %v2606 = vpop.permute.xlu0 %2605
      %2607 = vrot.lane.b32.xlu0 %v2553, 64
      %v2608 = vpop.permute.xlu0 %2607
      %2609 = vrot.lane.b32.xlu0 %v2554, 64
      %v2610 = vpop.permute.xlu0 %2609
      %2611 = vrot.lane.b32.xlu0 %v2555, 64
      %v2612 = vpop.permute.xlu0 %2611
      %2613 = vrot.lane.b32.xlu0 %v2556, 64
      %v2614 = vpop.permute.xlu0 %2613
      %2615 = vrot.lane.b32.xlu0 %v2557, 64
      %v2616 = vpop.permute.xlu0 %2615
      %2617 = vrot.lane.b32.xlu0 %v2558, 64
      %v2618 = vpop.permute.xlu0 %2617
      %2619 = vrot.lane.b32.xlu0 %v2559, 64
      %v2620 = vpop.permute.xlu0 %2619
      %2621 = vrot.lane.b32.xlu0 %v2560, 64
      %v2622 = vpop.permute.xlu0 %2621
      %2623 = vrot.lane.b32.xlu0 %v2561, 64
      %v2624 = vpop.permute.xlu0 %2623
      %2625 = vrot.lane.b32.xlu0 %v2562, 64
      %v2626 = vpop.permute.xlu0 %2625
      %2627 = vrot.lane.b32.xlu0 %v2563, 64
      %v2628 = vpop.permute.xlu0 %2627
      %2629 = vrot.lane.b32.xlu0 %v2564, 64
      %v2630 = vpop.permute.xlu0 %2629
      %2631 = vrot.lane.b32.xlu0 %v2565, 64
      %v2632 = vpop.permute.xlu0 %2631
      %2633 = vrot.lane.b32.xlu0 %v2566, 64
      %v2634 = vpop.permute.xlu0 %2633
      %2669 = vst.msk [vmem:[#allocation2 + $0x8] sm:$0xf] %vm2219, %v2568
      %2670 = vst.msk [vmem:[#allocation2 + $0x1c] sm:$0xf] %vm2219, %v2570
      %2671 = vst.msk [vmem:[#allocation2 + $0x30] sm:$0xf] %vm2219, %v2572
      %2672 = vst.msk [vmem:[#allocation2 + $0x44] sm:$0xf] %vm2219, %v2574
      %2673 = vst.msk [vmem:[#allocation2 + $0x58] sm:$0xf] %vm2219, %v2576
      %2674 = vst.msk [vmem:[#allocation2 + $0x6c] sm:$0xf] %vm2219, %v2578
      %2675 = vst.msk [vmem:[#allocation2 + $0x80] sm:$0xf] %vm2219, %v2580
      %2676 = vst.msk [vmem:[#allocation2 + $0x94] sm:$0xf] %vm2219, %v2582
      %2677 = vst.msk [vmem:[#allocation2 + $0xa8] sm:$0xf] %vm2219, %v2584
      %2678 = vst.msk [vmem:[#allocation2 + $0xbc] sm:$0xf] %vm2219, %v2586
      %2679 = vst.msk [vmem:[#allocation2 + $0xd0] sm:$0xf] %vm2219, %v2588
      %2680 = vst.msk [vmem:[#allocation2 + $0xe4] sm:$0xf] %vm2219, %v2590
      %2681 = vst.msk [vmem:[#allocation2 + $0xf8] sm:$0xf] %vm2219, %v2592
      %2682 = vst.msk [vmem:[#allocation2 + $0x10c] sm:$0xf] %vm2219, %v2594
      %2683 = vst.msk [vmem:[#allocation2 + $0x120] sm:$0xf] %vm2219, %v2596
      %2684 = vst.msk [vmem:[#allocation2 + $0x134] sm:$0xf] %vm2219, %v2598
      %2685 = vst.msk [vmem:[#allocation2 + $0x148] sm:$0xf] %vm2219, %v2600
      %2686 = vst.msk [vmem:[#allocation2 + $0x15c] sm:$0xf] %vm2219, %v2602
      %2687 = vst.msk [vmem:[#allocation2 + $0x170] sm:$0xf] %vm2219, %v2604
      %2688 = vst.msk [vmem:[#allocation2 + $0x184] sm:$0xf] %vm2219, %v2606
      %2689 = vst.msk [vmem:[#allocation2 + $0x198] sm:$0xf] %vm2219, %v2608
      %2690 = vst.msk [vmem:[#allocation2 + $0x1ac] sm:$0xf] %vm2219, %v2610
      %2691 = vst.msk [vmem:[#allocation2 + $0x1c0] sm:$0xf] %vm2219, %v2612
      %2692 = vst.msk [vmem:[#allocation2 + $0x1d4] sm:$0xf] %vm2219, %v2614
      %2693 = vst.msk [vmem:[#allocation2 + $0x1e8] sm:$0xf] %vm2219, %v2616
      %2694 = vst.msk [vmem:[#allocation2 + $0x1fc] sm:$0xf] %vm2219, %v2618
      %2695 = vst.msk [vmem:[#allocation2 + $0x210] sm:$0xf] %vm2219, %v2620
      %2696 = vst.msk [vmem:[#allocation2 + $0x224] sm:$0xf] %vm2219, %v2622
      %2697 = vst.msk [vmem:[#allocation2 + $0x238] sm:$0xf] %vm2219, %v2624
      %2698 = vst.msk [vmem:[#allocation2 + $0x24c] sm:$0xf] %vm2219, %v2626
      %2699 = vst.msk [vmem:[#allocation2 + $0x260] sm:$0xf] %vm2219, %v2628
      %2700 = vst.msk [vmem:[#allocation2 + $0x274] sm:$0xf] %vm2219, %v2630
      %2701 = vst.msk [vmem:[#allocation2 + $0x288] sm:$0xf] %vm2219, %v2632
      %2702 = vst.msk [vmem:[#allocation2 + $0x29c] sm:$0xf] %vm2219, %v2634
      %v2703 = vpack.c.b16 %v2354, %v2354
      %v2704 = vpack.c.b16 %v2355, %v2355
      %2707 = vst.msk [vmem:[#allocation2 + $0xc] sm:$0xf] %vm1886, %v2256
      %2708 = vst.msk [vmem:[#allocation2 + $0x20] sm:$0xf] %vm1886, %v2257
      %2709 = vst.msk [vmem:[#allocation2 + $0x34] sm:$0xf] %vm1886, %v2258
      %2710 = vst.msk [vmem:[#allocation2 + $0x48] sm:$0xf] %vm1886, %v2259
      %2711 = vst.msk [vmem:[#allocation2 + $0x5c] sm:$0xf] %vm1886, %v2260
      %2712 = vst.msk [vmem:[#allocation2 + $0x70] sm:$0xf] %vm1886, %v2261
      %2713 = vst.msk [vmem:[#allocation2 + $0x84] sm:$0xf] %vm1886, %v2262
      %2714 = vst.msk [vmem:[#allocation2 + $0x98] sm:$0xf] %vm1886, %v2263
      %2715 = vst.msk [vmem:[#allocation2 + $0xac] sm:$0xf] %vm1886, %v2264
      %2716 = vst.msk [vmem:[#allocation2 + $0xc0] sm:$0xf] %vm1886, %v2265
      %2717 = vst.msk [vmem:[#allocation2 + $0xd4] sm:$0xf] %vm1886, %v2266
      %2718 = vst.msk [vmem:[#allocation2 + $0xe8] sm:$0xf] %vm1886, %v2267
      %2719 = vst.msk [vmem:[#allocation2 + $0xfc] sm:$0xf] %vm1886, %v2268
      %2720 = vst.msk [vmem:[#allocation2 + $0x110] sm:$0xf] %vm1886, %v2269
      %2721 = vst.msk [vmem:[#allocation2 + $0x124] sm:$0xf] %vm1886, %v2270
      %2722 = vst.msk [vmem:[#allocation2 + $0x138] sm:$0xf] %vm1886, %v2271
      %2723 = vst.msk [vmem:[#allocation2 + $0x14c] sm:$0xf] %vm1886, %v2272
      %2724 = vst.msk [vmem:[#allocation2 + $0x160] sm:$0xf] %vm1886, %v2273
      %2725 = vst.msk [vmem:[#allocation2 + $0x174] sm:$0xf] %vm1886, %v2274
      %2726 = vst.msk [vmem:[#allocation2 + $0x188] sm:$0xf] %vm1886, %v2275
      %2727 = vst.msk [vmem:[#allocation2 + $0x19c] sm:$0xf] %vm1886, %v2276
      %2728 = vst.msk [vmem:[#allocation2 + $0x1b0] sm:$0xf] %vm1886, %v2277
      %2729 = vst.msk [vmem:[#allocation2 + $0x1c4] sm:$0xf] %vm1886, %v2278
      %2730 = vst.msk [vmem:[#allocation2 + $0x1d8] sm:$0xf] %vm1886, %v2279
      %2731 = vst.msk [vmem:[#allocation2 + $0x1ec] sm:$0xf] %vm1886, %v2280
      %2732 = vst.msk [vmem:[#allocation2 + $0x200] sm:$0xf] %vm1886, %v2281
      %2733 = vst.msk [vmem:[#allocation2 + $0x214] sm:$0xf] %vm1886, %v2282
      %2734 = vst.msk [vmem:[#allocation2 + $0x228] sm:$0xf] %vm1886, %v2283
      %2735 = vst.msk [vmem:[#allocation2 + $0x23c] sm:$0xf] %vm1886, %v2284
      %2736 = vst.msk [vmem:[#allocation2 + $0x250] sm:$0xf] %vm1886, %v2285
      %2737 = vst.msk [vmem:[#allocation2 + $0x264] sm:$0xf] %vm1886, %v2703
      %2738 = vst.msk [vmem:[#allocation2 + $0x278] sm:$0xf] %vm1886, %v2704
      %2739 = vst.msk [vmem:[#allocation2 + $0x28c] sm:$0xf] %vm1886, %v1818
      %2740 = vst.msk [vmem:[#allocation2 + $0x2a0] sm:$0xf] %vm1886, %v1819
      %2741 = vst.msk [vmem:[#allocation2 + $0xc] sm:$0xf] %vm2219, %v2572
      %2742 = vst.msk [vmem:[#allocation2 + $0x20] sm:$0xf] %vm2219, %v2574
      %2743 = vst.msk [vmem:[#allocation2 + $0x34] sm:$0xf] %vm2219, %v2576
      %2744 = vst.msk [vmem:[#allocation2 + $0x48] sm:$0xf] %vm2219, %v2578
      %2745 = vst.msk [vmem:[#allocation2 + $0x5c] sm:$0xf] %vm2219, %v2580
      %2746 = vst.msk [vmem:[#allocation2 + $0x70] sm:$0xf] %vm2219, %v2582
      %2747 = vst.msk [vmem:[#allocation2 + $0x84] sm:$0xf] %vm2219, %v2584
      %2748 = vst.msk [vmem:[#allocation2 + $0x98] sm:$0xf] %vm2219, %v2586
      %2749 = vst.msk [vmem:[#allocation2 + $0xac] sm:$0xf] %vm2219, %v2588
      %2750 = vst.msk [vmem:[#allocation2 + $0xc0] sm:$0xf] %vm2219, %v2590
      %2751 = vst.msk [vmem:[#allocation2 + $0xd4] sm:$0xf] %vm2219, %v2592
      %2752 = vst.msk [vmem:[#allocation2 + $0xe8] sm:$0xf] %vm2219, %v2594
      %2753 = vst.msk [vmem:[#allocation2 + $0xfc] sm:$0xf] %vm2219, %v2596
      %2754 = vst.msk [vmem:[#allocation2 + $0x110] sm:$0xf] %vm2219, %v2598
      %2755 = vst.msk [vmem:[#allocation2 + $0x124] sm:$0xf] %vm2219, %v2600
      %2756 = vst.msk [vmem:[#allocation2 + $0x138] sm:$0xf] %vm2219, %v2602
      %2757 = vst.msk [vmem:[#allocation2 + $0x14c] sm:$0xf] %vm2219, %v2604
      %2758 = vst.msk [vmem:[#allocation2 + $0x160] sm:$0xf] %vm2219, %v2606
      %2759 = vst.msk [vmem:[#allocation2 + $0x174] sm:$0xf] %vm2219, %v2608
      %2760 = vst.msk [vmem:[#allocation2 + $0x188] sm:$0xf] %vm2219, %v2610
      %2761 = vst.msk [vmem:[#allocation2 + $0x19c] sm:$0xf] %vm2219, %v2612
      %2762 = vst.msk [vmem:[#allocation2 + $0x1b0] sm:$0xf] %vm2219, %v2614
      %2763 = vst.msk [vmem:[#allocation2 + $0x1c4] sm:$0xf] %vm2219, %v2616
      %2764 = vst.msk [vmem:[#allocation2 + $0x1d8] sm:$0xf] %vm2219, %v2618
      %2765 = vst.msk [vmem:[#allocation2 + $0x1ec] sm:$0xf] %vm2219, %v2620
      %2766 = vst.msk [vmem:[#allocation2 + $0x200] sm:$0xf] %vm2219, %v2622
      %2767 = vst.msk [vmem:[#allocation2 + $0x214] sm:$0xf] %vm2219, %v2624
      %2768 = vst.msk [vmem:[#allocation2 + $0x228] sm:$0xf] %vm2219, %v2626
      %2769 = vst.msk [vmem:[#allocation2 + $0x23c] sm:$0xf] %vm2219, %v2628
      %2770 = vst.msk [vmem:[#allocation2 + $0x250] sm:$0xf] %vm2219, %v2630
      %2771 = vst.msk [vmem:[#allocation2 + $0x264] sm:$0xf] %vm2219, %v2632
      %2772 = vst.msk [vmem:[#allocation2 + $0x278] sm:$0xf] %vm2219, %v2634
      %2773 = vst.msk [vmem:[#allocation2 + $0x28c] sm:$0xf] %vm2219, %v2118
      %2774 = vst.msk [vmem:[#allocation2 + $0x2a0] sm:$0xf] %vm2219, %v2120
      %vm2775 = vcmask 1046528
      %v2776 = vrot.slane %v1731, 1
      %v2777 = vrot.slane %v1732, 1
      %v2778 = vsel %vm2775, %v2776, %v2777
      %v2779 = vrot.slane %v1733, 1
      %v2780 = vsel %vm2775, %v2777, %v2779
      %v2781 = vrot.slane %v1734, 1
      %v2782 = vsel %vm2775, %v2779, %v2781
      %v2783 = vrot.slane %v1735, 1
      %v2784 = vsel %vm2775, %v2781, %v2783
      %v2785 = vrot.slane %v1736, 1
      %v2786 = vsel %vm2775, %v2783, %v2785
      %v2787 = vrot.slane %v1737, 1
      %v2788 = vsel %vm2775, %v2785, %v2787
      %v2789 = vrot.slane %v1738, 1
      %v2790 = vsel %vm2775, %v2787, %v2789
      %v2791 = vrot.slane %v1739, 1
      %v2792 = vsel %vm2775, %v2789, %v2791
      %v2793 = vrot.slane %v1740, 1
      %v2794 = vsel %vm2775, %v2791, %v2793
      %v2795 = vrot.slane %v1741, 1
      %v2796 = vsel %vm2775, %v2793, %v2795
      %v2797 = vrot.slane %v1742, 1
      %v2798 = vsel %vm2775, %v2795, %v2797
      %v2799 = vrot.slane %v1743, 1
      %v2800 = vsel %vm2775, %v2797, %v2799
      %v2801 = vrot.slane %v1744, 1
      %v2802 = vsel %vm2775, %v2799, %v2801
      %v2803 = vrot.slane %v1745, 1
      %v2804 = vsel %vm2775, %v2801, %v2803
      %v2805 = vrot.slane %v2356, 1
      %v2806 = vsel %vm2775, %v2803, %v2805
      %vm2807 = vcmask 1046528
      %v2809 = vsel %vm2807, %v2805, 0
      %v2811 = vunpack.c.l.b16 %v2778
      %v2812 = vunpack.c.h.b16 %v2778
      %v2813 = vunpack.c.l.b16 %v2780
      %v2814 = vunpack.c.h.b16 %v2780
      %v2815 = vunpack.c.l.b16 %v2782
      %v2816 = vunpack.c.h.b16 %v2782
      %v2817 = vunpack.c.l.b16 %v2784
      %v2818 = vunpack.c.h.b16 %v2784
      %v2819 = vunpack.c.l.b16 %v2786
      %v2820 = vunpack.c.h.b16 %v2786
      %v2821 = vunpack.c.l.b16 %v2788
      %v2822 = vunpack.c.h.b16 %v2788
      %v2823 = vunpack.c.l.b16 %v2790
      %v2824 = vunpack.c.h.b16 %v2790
      %v2825 = vunpack.c.l.b16 %v2792
      %v2826 = vunpack.c.h.b16 %v2792
      %v2827 = vunpack.c.l.b16 %v2794
      %v2828 = vunpack.c.h.b16 %v2794
      %v2829 = vunpack.c.l.b16 %v2796
      %v2830 = vunpack.c.h.b16 %v2796
      %v2831 = vunpack.c.l.b16 %v2798
      %v2832 = vunpack.c.h.b16 %v2798
      %v2833 = vunpack.c.l.b16 %v2800
      %v2834 = vunpack.c.h.b16 %v2800
      %v2835 = vunpack.c.l.b16 %v2802
      %v2836 = vunpack.c.h.b16 %v2802
      %v2837 = vunpack.c.l.b16 %v2804
      %v2838 = vunpack.c.h.b16 %v2804
      %v2839 = vunpack.c.l.b16 %v2806
      %v2840 = vunpack.c.h.b16 %v2806
      %v2841 = vunpack.c.l.b16 %v2809
      %v2842 = vunpack.c.h.b16 %v2809
      %v2843 = vpack.c.b16 %v2811, %v2811
      %v2844 = vpack.c.b16 %v2812, %v2812
      %v2845 = vpack.c.b16 %v2813, %v2813
      %v2846 = vpack.c.b16 %v2814, %v2814
      %v2847 = vpack.c.b16 %v2815, %v2815
      %v2848 = vpack.c.b16 %v2816, %v2816
      %v2849 = vpack.c.b16 %v2817, %v2817
      %v2850 = vpack.c.b16 %v2818, %v2818
      %v2851 = vpack.c.b16 %v2819, %v2819
      %v2852 = vpack.c.b16 %v2820, %v2820
      %v2853 = vpack.c.b16 %v2821, %v2821
      %v2854 = vpack.c.b16 %v2822, %v2822
      %v2855 = vpack.c.b16 %v2823, %v2823
      %v2856 = vpack.c.b16 %v2824, %v2824
      %v2857 = vpack.c.b16 %v2825, %v2825
      %v2858 = vpack.c.b16 %v2826, %v2826
      %v2859 = vpack.c.b16 %v2827, %v2827
      %v2860 = vpack.c.b16 %v2828, %v2828
      %v2861 = vpack.c.b16 %v2829, %v2829
      %v2862 = vpack.c.b16 %v2830, %v2830
      %v2863 = vpack.c.b16 %v2831, %v2831
      %v2864 = vpack.c.b16 %v2832, %v2832
      %v2865 = vpack.c.b16 %v2833, %v2833
      %v2866 = vpack.c.b16 %v2834, %v2834
      %v2867 = vpack.c.b16 %v2835, %v2835
      %v2868 = vpack.c.b16 %v2836, %v2836
      %v2869 = vpack.c.b16 %v2837, %v2837
      %v2870 = vpack.c.b16 %v2838, %v2838
      %v2871 = vpack.c.b16 %v2839, %v2839
      %v2872 = vpack.c.b16 %v2840, %v2840
      %v2873 = vpack.c.b16 %v2841, %v2841
      %v2874 = vpack.c.b16 %v2842, %v2842
      %2907 = vst.msk [vmem:[#allocation2 + $0x10] sm:$0xf] %vm1886, %v2843
      %2908 = vst.msk [vmem:[#allocation2 + $0x24] sm:$0xf] %vm1886, %v2844
      %2909 = vst.msk [vmem:[#allocation2 + $0x38] sm:$0xf] %vm1886, %v2845
      %2910 = vst.msk [vmem:[#allocation2 + $0x4c] sm:$0xf] %vm1886, %v2846
      %2911 = vst.msk [vmem:[#allocation2 + $0x60] sm:$0xf] %vm1886, %v2847
      %2912 = vst.msk [vmem:[#allocation2 + $0x74] sm:$0xf] %vm1886, %v2848
      %2913 = vst.msk [vmem:[#allocation2 + $0x88] sm:$0xf] %vm1886, %v2849
      %2914 = vst.msk [vmem:[#allocation2 + $0x9c] sm:$0xf] %vm1886, %v2850
      %2915 = vst.msk [vmem:[#allocation2 + $0xb0] sm:$0xf] %vm1886, %v2851
      %2916 = vst.msk [vmem:[#allocation2 + $0xc4] sm:$0xf] %vm1886, %v2852
      %2917 = vst.msk [vmem:[#allocation2 + $0xd8] sm:$0xf] %vm1886, %v2853
      %2918 = vst.msk [vmem:[#allocation2 + $0xec] sm:$0xf] %vm1886, %v2854
      %2919 = vst.msk [vmem:[#allocation2 + $0x100] sm:$0xf] %vm1886, %v2855
      %2920 = vst.msk [vmem:[#allocation2 + $0x114] sm:$0xf] %vm1886, %v2856
      %2921 = vst.msk [vmem:[#allocation2 + $0x128] sm:$0xf] %vm1886, %v2857
      %2922 = vst.msk [vmem:[#allocation2 + $0x13c] sm:$0xf] %vm1886, %v2858
      %2923 = vst.msk [vmem:[#allocation2 + $0x150] sm:$0xf] %vm1886, %v2859
      %2924 = vst.msk [vmem:[#allocation2 + $0x164] sm:$0xf] %vm1886, %v2860
      %2925 = vst.msk [vmem:[#allocation2 + $0x178] sm:$0xf] %vm1886, %v2861
      %2926 = vst.msk [vmem:[#allocation2 + $0x18c] sm:$0xf] %vm1886, %v2862
      %2927 = vst.msk [vmem:[#allocation2 + $0x1a0] sm:$0xf] %vm1886, %v2863
      %2928 = vst.msk [vmem:[#allocation2 + $0x1b4] sm:$0xf] %vm1886, %v2864
      %2929 = vst.msk [vmem:[#allocation2 + $0x1c8] sm:$0xf] %vm1886, %v2865
      %2930 = vst.msk [vmem:[#allocation2 + $0x1dc] sm:$0xf] %vm1886, %v2866
      %2931 = vst.msk [vmem:[#allocation2 + $0x1f0] sm:$0xf] %vm1886, %v2867
      %2932 = vst.msk [vmem:[#allocation2 + $0x204] sm:$0xf] %vm1886, %v2868
      %2933 = vst.msk [vmem:[#allocation2 + $0x218] sm:$0xf] %vm1886, %v2869
      %2934 = vst.msk [vmem:[#allocation2 + $0x22c] sm:$0xf] %vm1886, %v2870
      %2935 = vst.msk [vmem:[#allocation2 + $0x240] sm:$0xf] %vm1886, %v2871
      %2936 = vst.msk [vmem:[#allocation2 + $0x254] sm:$0xf] %vm1886, %v2872
      %2937 = vst.msk [vmem:[#allocation2 + $0x268] sm:$0xf] %vm1886, %v2873
      %2938 = vst.msk [vmem:[#allocation2 + $0x27c] sm:$0xf] %vm1886, %v2874
      %2939 = vst.msk [vmem:[#allocation2 + $0x290] sm:$0xf] %vm1886, %v1818
      %2940 = vst.msk [vmem:[#allocation2 + $0x2a4] sm:$0xf] %vm1886, %v1819
      %v2941 = vld [vmem:[#allocation2] sm:$0xff]
      %v2942 = vld [vmem:[#allocation2 + $0x8] sm:$0xff]
      %v2943 = vld [vmem:[#allocation2 + $0x10] sm:$0xf]
      %v2944 = vld [vmem:[#allocation2 + $0x14] sm:$0xff]
      %v2945 = vld [vmem:[#allocation2 + $0x1c] sm:$0xff]
      %v2946 = vld [vmem:[#allocation2 + $0x24] sm:$0xf]
      %v2947 = vld [vmem:[#allocation2 + $0x28] sm:$0xff]
      %v2948 = vld [vmem:[#allocation2 + $0x30] sm:$0xff]
      %v2949 = vld [vmem:[#allocation2 + $0x38] sm:$0xf]
      %v2950 = vld [vmem:[#allocation2 + $0x3c] sm:$0xff]
      %v2951 = vld [vmem:[#allocation2 + $0x44] sm:$0xff]
      %v2952 = vld [vmem:[#allocation2 + $0x4c] sm:$0xf]
      %v2953 = vld [vmem:[#allocation2 + $0x50] sm:$0xff]
      %v2954 = vld [vmem:[#allocation2 + $0x58] sm:$0xff]
      %v2955 = vld [vmem:[#allocation2 + $0x60] sm:$0xf]
      %v2956 = vld [vmem:[#allocation2 + $0x64] sm:$0xff]
      %v2957 = vld [vmem:[#allocation2 + $0x6c] sm:$0xff]
      %v2958 = vld [vmem:[#allocation2 + $0x74] sm:$0xf]
      %v2959 = vld [vmem:[#allocation2 + $0x78] sm:$0xff]
      %v2960 = vld [vmem:[#allocation2 + $0x80] sm:$0xff]
      %v2961 = vld [vmem:[#allocation2 + $0x88] sm:$0xf]
      %v2962 = vld [vmem:[#allocation2 + $0x8c] sm:$0xff]
      %v2963 = vld [vmem:[#allocation2 + $0x94] sm:$0xff]
      %v2964 = vld [vmem:[#allocation2 + $0x9c] sm:$0xf]
      %v2965 = vld [vmem:[#allocation2 + $0xa0] sm:$0xff]
      %v2966 = vld [vmem:[#allocation2 + $0xa8] sm:$0xff]
      %v2967 = vld [vmem:[#allocation2 + $0xb0] sm:$0xf]
      %v2968 = vld [vmem:[#allocation2 + $0xb4] sm:$0xff]
      %v2969 = vld [vmem:[#allocation2 + $0xbc] sm:$0xff]
      %v2970 = vld [vmem:[#allocation2 + $0xc4] sm:$0xf]
      %v2971 = vld [vmem:[#allocation2 + $0xc8] sm:$0xff]
      %v2972 = vld [vmem:[#allocation2 + $0xd0] sm:$0xff]
      %v2973 = vld [vmem:[#allocation2 + $0xd8] sm:$0xf]
      %v2974 = vld [vmem:[#allocation2 + $0xdc] sm:$0xff]
      %v2975 = vld [vmem:[#allocation2 + $0xe4] sm:$0xff]
      %v2976 = vld [vmem:[#allocation2 + $0xec] sm:$0xf]
      %v2977 = vld [vmem:[#allocation2 + $0xf0] sm:$0xff]
      %v2978 = vld [vmem:[#allocation2 + $0xf8] sm:$0xff]
      %v2979 = vld [vmem:[#allocation2 + $0x100] sm:$0xf]
      %v2980 = vld [vmem:[#allocation2 + $0x104] sm:$0xff]
      %v2981 = vld [vmem:[#allocation2 + $0x10c] sm:$0xff]
      %v2982 = vld [vmem:[#allocation2 + $0x114] sm:$0xf]
      %v2983 = vld [vmem:[#allocation2 + $0x118] sm:$0xff]
      %v2984 = vld [vmem:[#allocation2 + $0x120] sm:$0xff]
      %v2985 = vld [vmem:[#allocation2 + $0x128] sm:$0xf]
      %v2986 = vld [vmem:[#allocation2 + $0x12c] sm:$0xff]
      %v2987 = vld [vmem:[#allocation2 + $0x134] sm:$0xff]
      %v2988 = vld [vmem:[#allocation2 + $0x13c] sm:$0xf]
      %v2989 = vld [vmem:[#allocation2 + $0x140] sm:$0xff]
      %v2990 = vld [vmem:[#allocation2 + $0x148] sm:$0xff]
      %v2991 = vld [vmem:[#allocation2 + $0x150] sm:$0xf]
      %v2992 = vld [vmem:[#allocation2 + $0x154] sm:$0xff]
      %v2993 = vld [vmem:[#allocation2 + $0x15c] sm:$0xff]
      %v2994 = vld [vmem:[#allocation2 + $0x164] sm:$0xf]
      %v2995 = vld [vmem:[#allocation2 + $0x168] sm:$0xff]
      %v2996 = vld [vmem:[#allocation2 + $0x170] sm:$0xff]
      %v2997 = vld [vmem:[#allocation2 + $0x178] sm:$0xf]
      %v2998 = vld [vmem:[#allocation2 + $0x17c] sm:$0xff]
      %v2999 = vld [vmem:[#allocation2 + $0x184] sm:$0xff]
      %v3000 = vld [vmem:[#allocation2 + $0x18c] sm:$0xf]
      %v3001 = vld [vmem:[#allocation2 + $0x190] sm:$0xff]
      %v3002 = vld [vmem:[#allocation2 + $0x198] sm:$0xff]
      %v3003 = vld [vmem:[#allocation2 + $0x1a0] sm:$0xf]
      %v3004 = vld [vmem:[#allocation2 + $0x1a4] sm:$0xff]
      %v3005 = vld [vmem:[#allocation2 + $0x1ac] sm:$0xff]
      %v3006 = vld [vmem:[#allocation2 + $0x1b4] sm:$0xf]
      %v3007 = vld [vmem:[#allocation2 + $0x1b8] sm:$0xff]
      %v3008 = vld [vmem:[#allocation2 + $0x1c0] sm:$0xff]
      %v3009 = vld [vmem:[#allocation2 + $0x1c8] sm:$0xf]
      %v3010 = vld [vmem:[#allocation2 + $0x1cc] sm:$0xff]
      %v3011 = vld [vmem:[#allocation2 + $0x1d4] sm:$0xff]
      %v3012 = vld [vmem:[#allocation2 + $0x1dc] sm:$0xf]
      %v3013 = vld [vmem:[#allocation2 + $0x1e0] sm:$0xff]
      %v3014 = vld [vmem:[#allocation2 + $0x1e8] sm:$0xff]
      %v3015 = vld [vmem:[#allocation2 + $0x1f0] sm:$0xf]
      %v3016 = vld [vmem:[#allocation2 + $0x1f4] sm:$0xff]
      %v3017 = vld [vmem:[#allocation2 + $0x1fc] sm:$0xff]
      %v3018 = vld [vmem:[#allocation2 + $0x204] sm:$0xf]
      %v3019 = vld [vmem:[#allocation2 + $0x208] sm:$0xff]
      %v3020 = vld [vmem:[#allocation2 + $0x210] sm:$0xff]
      %v3021 = vld [vmem:[#allocation2 + $0x218] sm:$0xf]
      %v3022 = vld [vmem:[#allocation2 + $0x21c] sm:$0xff]
      %v3023 = vld [vmem:[#allocation2 + $0x224] sm:$0xff]
      %v3024 = vld [vmem:[#allocation2 + $0x22c] sm:$0xf]
      %v3025 = vld [vmem:[#allocation2 + $0x230] sm:$0xff]
      %v3026 = vld [vmem:[#allocation2 + $0x238] sm:$0xff]
      %v3027 = vld [vmem:[#allocation2 + $0x240] sm:$0xf]
      %v3028 = vld [vmem:[#allocation2 + $0x244] sm:$0xff]
      %v3029 = vld [vmem:[#allocation2 + $0x24c] sm:$0xff]
      %v3030 = vld [vmem:[#allocation2 + $0x254] sm:$0xf]
      %v3031 = vld [vmem:[#allocation2 + $0x258] sm:$0xff]
      %v3032 = vld [vmem:[#allocation2 + $0x260] sm:$0xff]
      %v3033 = vld [vmem:[#allocation2 + $0x268] sm:$0xf]
      %v3034 = vld [vmem:[#allocation2 + $0x26c] sm:$0xff]
      %v3035 = vld [vmem:[#allocation2 + $0x274] sm:$0xff]
      %v3036 = vld [vmem:[#allocation2 + $0x27c] sm:$0xf]
      %v3037 = vld [vmem:[#allocation2 + $0x280] sm:$0xff]
      %v3038 = vld [vmem:[#allocation2 + $0x288] sm:$0xff]
      %v3039 = vld [vmem:[#allocation2 + $0x290] sm:$0xf]
      %v3040 = vld [vmem:[#allocation2 + $0x294] sm:$0xff]
      %v3041 = vld [vmem:[#allocation2 + $0x29c] sm:$0xff]
      %v3042 = vld [vmem:[#allocation2 + $0x2a4] sm:$0xf]
      %v3043 = vld [vmem:[%s488] sm:$0xf]
      %v3044 = vld [vmem:[%s488 + $0x4] sm:$0xf]
      %v3045 = vld [vmem:[%s488 + $0x8] sm:$0xf]
      %v3046 = vld [vmem:[%s488 + $0xc] sm:$0xf]
      %v3047 = vld [vmem:[%s488 + $0x10] sm:$0xf]
      %v3048 = vld [vmem:[%s488 + $0x14] sm:$0xf]
      %v3049 = vld [vmem:[%s488 + $0x18] sm:$0xf]
      %v3050 = vld [vmem:[%s488 + $0x1c] sm:$0xf]
      %v3051 = vld [vmem:[%s488 + $0x20] sm:$0xf]
      %v3052 = vld [vmem:[%s488 + $0x24] sm:$0xf]
      %v3053 = vld [vmem:[%s488 + $0x28] sm:$0xf]
      %v3054 = vld [vmem:[%s488 + $0x2c] sm:$0xf]
      %v3055 = vld [vmem:[%s488 + $0x30] sm:$0xf]
      %v3056 = vld [vmem:[%s488 + $0x34] sm:$0xf]
      %v3057 = vld [vmem:[%s488 + $0x38] sm:$0xf]
      %v3058 = vld [vmem:[%s488 + $0x3c] sm:$0xf]
      %v3059 = vld [vmem:[%s488 + $0x40] sm:$0xf]
      %v3060 = vld [vmem:[%s488 + $0x44] sm:$0xf]
      %v3061 = vld [vmem:[%s488 + $0x48] sm:$0xf]
      %v3062 = vld [vmem:[%s488 + $0x4c] sm:$0xf]
      %v3063 = vld [vmem:[%s488 + $0x50] sm:$0xf]
      %v3064 = vld [vmem:[%s488 + $0x54] sm:$0xf]
      %v3065 = vld [vmem:[%s488 + $0x58] sm:$0xf]
      %v3066 = vld [vmem:[%s488 + $0x5c] sm:$0xf]
      %v3067 = vld [vmem:[%s488 + $0x60] sm:$0xf]
      %v3068 = vld [vmem:[%s488 + $0x64] sm:$0xf]
      %v3069 = vld [vmem:[%s488 + $0x68] sm:$0xf]
      %v3070 = vld [vmem:[%s488 + $0x6c] sm:$0xf]
      %v3071 = vld [vmem:[%s488 + $0x70] sm:$0xf]
      %v3072 = vld [vmem:[%s488 + $0x74] sm:$0xf]
      %v3073 = vld [vmem:[%s488 + $0x78] sm:$0xf]
      %v3074 = vld [vmem:[%s488 + $0x7c] sm:$0xf]
      %v3075 = vld [vmem:[%s488 + $0x80] sm:$0xf]
      %v3076 = vld [vmem:[%s488 + $0x84] sm:$0xf]
      %v3077 = vld [vmem:[%s488 + $0x88] sm:$0xf]
      %v3078 = vld [vmem:[%s488 + $0x8c] sm:$0xf]
      %v3079 = vld [vmem:[%s488 + $0x90] sm:$0xf]
      %v3080 = vld [vmem:[%s488 + $0x94] sm:$0xf]
      %v3081 = vld [vmem:[%s488 + $0x98] sm:$0xf]
      %v3082 = vld [vmem:[%s488 + $0x9c] sm:$0xf]
      %v3083 = vld [vmem:[%s488 + $0xa0] sm:$0xf]
      %v3084 = vld [vmem:[%s488 + $0xa4] sm:$0xf]
      %v3085 = vld [vmem:[%s488 + $0xa8] sm:$0xf]
      %v3086 = vld [vmem:[%s488 + $0xac] sm:$0xf]
      %v3087 = vld [vmem:[%s488 + $0xb0] sm:$0xf]
      %v3088 = vld [vmem:[%s488 + $0xb4] sm:$0xf]
      %v3089 = vld [vmem:[%s488 + $0xb8] sm:$0xf]
      %v3090 = vld [vmem:[%s488 + $0xbc] sm:$0xf]
      %v3091 = vld [vmem:[%s488 + $0xc0] sm:$0xf]
      %v3092 = vld [vmem:[%s488 + $0xc4] sm:$0xf]
      %v3093 = vld [vmem:[%s488 + $0xc8] sm:$0xf]
      %v3094 = vld [vmem:[%s488 + $0xcc] sm:$0xf]
      %v3095 = vld [vmem:[%s488 + $0xd0] sm:$0xf]
      %v3096 = vld [vmem:[%s488 + $0xd4] sm:$0xf]
      %v3097 = vld [vmem:[%s488 + $0xd8] sm:$0xf]
      %v3098 = vld [vmem:[%s488 + $0xdc] sm:$0xf]
      %v3099 = vld [vmem:[%s488 + $0xe0] sm:$0xf]
      %v3100 = vld [vmem:[%s488 + $0xe4] sm:$0xf]
      %v3101 = vld [vmem:[%s488 + $0xe8] sm:$0xf]
      %v3102 = vld [vmem:[%s488 + $0xec] sm:$0xf]
      %v3103 = vld [vmem:[%s488 + $0xf0] sm:$0xf]
      %v3104 = vld [vmem:[%s488 + $0xf4] sm:$0xf]
      %v3105 = vld [vmem:[%s488 + $0xf8] sm:$0xf]
      %v3106 = vld [vmem:[%s488 + $0xfc] sm:$0xf]
      %v3107 = vld [vmem:[%s488 + $0x100] sm:$0xf]
      %v3108 = vld [vmem:[%s488 + $0x104] sm:$0xf]
      %v3109 = vld [vmem:[%s488 + $0x108] sm:$0xf]
      %v3110 = vld [vmem:[%s488 + $0x10c] sm:$0xf]
      %v3111 = vld [vmem:[%s488 + $0x110] sm:$0xf]
      %v3112 = vld [vmem:[%s488 + $0x114] sm:$0xf]
      %v3113 = vld [vmem:[%s488 + $0x118] sm:$0xf]
      %v3114 = vld [vmem:[%s488 + $0x11c] sm:$0xf]
      %v3115 = vld [vmem:[%s493] sm:$0x1]
      %v3117 = vperm.slane %v3115, 0
      %v3221 = vunpack.c.l.b16 %v2941
      %v3222 = vunpack.c.h.b16 %v2941
      %v3223 = vunpack.c.l.b16 %v2942
      %v3224 = vunpack.c.h.b16 %v2942
      %v3225 = vunpack.c.l.b16 %v2943
      %v3226 = vunpack.c.l.b16 %v2944
      %v3227 = vunpack.c.h.b16 %v2944
      %v3228 = vunpack.c.l.b16 %v2945
      %v3229 = vunpack.c.h.b16 %v2945
      %v3230 = vunpack.c.l.b16 %v2946
      %v3231 = vunpack.c.l.b16 %v2947
      %v3232 = vunpack.c.h.b16 %v2947
      %v3233 = vunpack.c.l.b16 %v2948
      %v3234 = vunpack.c.h.b16 %v2948
      %v3235 = vunpack.c.l.b16 %v2949
      %v3236 = vunpack.c.l.b16 %v2950
      %v3237 = vunpack.c.h.b16 %v2950
      %v3238 = vunpack.c.l.b16 %v2951
      %v3239 = vunpack.c.h.b16 %v2951
      %v3240 = vunpack.c.l.b16 %v2952
      %v3241 = vunpack.c.l.b16 %v2953
      %v3242 = vunpack.c.h.b16 %v2953
      %v3243 = vunpack.c.l.b16 %v2954
      %v3244 = vunpack.c.h.b16 %v2954
      %v3245 = vunpack.c.l.b16 %v2955
      %v3246 = vunpack.c.l.b16 %v2956
      %v3247 = vunpack.c.h.b16 %v2956
      %v3248 = vunpack.c.l.b16 %v2957
      %v3249 = vunpack.c.h.b16 %v2957
      %v3250 = vunpack.c.l.b16 %v2958
      %v3251 = vunpack.c.l.b16 %v2959
      %v3252 = vunpack.c.h.b16 %v2959
      %v3253 = vunpack.c.l.b16 %v2960
      %v3254 = vunpack.c.h.b16 %v2960
      %v3255 = vunpack.c.l.b16 %v2961
      %v3256 = vunpack.c.l.b16 %v2962
      %v3257 = vunpack.c.h.b16 %v2962
      %v3258 = vunpack.c.l.b16 %v2963
      %v3259 = vunpack.c.h.b16 %v2963
      %v3260 = vunpack.c.l.b16 %v2964
      %v3261 = vunpack.c.l.b16 %v2965
      %v3262 = vunpack.c.h.b16 %v2965
      %v3263 = vunpack.c.l.b16 %v2966
      %v3264 = vunpack.c.h.b16 %v2966
      %v3265 = vunpack.c.l.b16 %v2967
      %v3266 = vunpack.c.l.b16 %v2968
      %v3267 = vunpack.c.h.b16 %v2968
      %v3268 = vunpack.c.l.b16 %v2969
      %v3269 = vunpack.c.h.b16 %v2969
      %v3270 = vunpack.c.l.b16 %v2970
      %v3271 = vunpack.c.l.b16 %v2971
      %v3272 = vunpack.c.h.b16 %v2971
      %v3273 = vunpack.c.l.b16 %v2972
      %v3274 = vunpack.c.h.b16 %v2972
      %v3275 = vunpack.c.l.b16 %v2973
      %v3276 = vunpack.c.l.b16 %v2974
      %v3277 = vunpack.c.h.b16 %v2974
      %v3278 = vunpack.c.l.b16 %v2975
      %v3279 = vunpack.c.h.b16 %v2975
      %v3280 = vunpack.c.l.b16 %v2976
      %v3281 = vunpack.c.l.b16 %v2977
      %v3282 = vunpack.c.h.b16 %v2977
      %v3283 = vunpack.c.l.b16 %v2978
      %v3284 = vunpack.c.h.b16 %v2978
      %v3285 = vunpack.c.l.b16 %v2979
      %v3286 = vunpack.c.l.b16 %v2980
      %v3287 = vunpack.c.h.b16 %v2980
      %v3288 = vunpack.c.l.b16 %v2981
      %v3289 = vunpack.c.h.b16 %v2981
      %v3290 = vunpack.c.l.b16 %v2982
      %v3291 = vunpack.c.l.b16 %v2983
      %v3292 = vunpack.c.h.b16 %v2983
      %v3293 = vunpack.c.l.b16 %v2984
      %v3294 = vunpack.c.h.b16 %v2984
      %v3295 = vunpack.c.l.b16 %v2985
      %v3296 = vunpack.c.l.b16 %v2986
      %v3297 = vunpack.c.h.b16 %v2986
      %v3298 = vunpack.c.l.b16 %v2987
      %v3299 = vunpack.c.h.b16 %v2987
      %v3300 = vunpack.c.l.b16 %v2988
      %v3301 = vunpack.c.l.b16 %v2989
      %v3302 = vunpack.c.h.b16 %v2989
      %v3303 = vunpack.c.l.b16 %v2990
      %v3304 = vunpack.c.h.b16 %v2990
      %v3305 = vunpack.c.l.b16 %v2991
      %v3306 = vunpack.c.l.b16 %v2992
      %v3307 = vunpack.c.h.b16 %v2992
      %v3308 = vunpack.c.l.b16 %v2993
      %v3309 = vunpack.c.h.b16 %v2993
      %v3310 = vunpack.c.l.b16 %v2994
      %v3311 = vunpack.c.l.b16 %v2995
      %v3312 = vunpack.c.h.b16 %v2995
      %v3313 = vunpack.c.l.b16 %v2996
      %v3314 = vunpack.c.h.b16 %v2996
      %v3315 = vunpack.c.l.b16 %v2997
      %v3316 = vunpack.c.l.b16 %v2998
      %v3317 = vunpack.c.h.b16 %v2998
      %v3318 = vunpack.c.l.b16 %v2999
      %v3319 = vunpack.c.h.b16 %v2999
      %v3320 = vunpack.c.l.b16 %v3000
      %v3321 = vunpack.c.l.b16 %v3001
      %v3322 = vunpack.c.h.b16 %v3001
      %v3323 = vunpack.c.l.b16 %v3002
      %v3324 = vunpack.c.h.b16 %v3002
      %v3325 = vunpack.c.l.b16 %v3003
      %v3326 = vunpack.c.l.b16 %v3004
      %v3327 = vunpack.c.h.b16 %v3004
      %v3328 = vunpack.c.l.b16 %v3005
      %v3329 = vunpack.c.h.b16 %v3005
      %v3330 = vunpack.c.l.b16 %v3006
      %v3331 = vunpack.c.l.b16 %v3007
      %v3332 = vunpack.c.h.b16 %v3007
      %v3333 = vunpack.c.l.b16 %v3008
      %v3334 = vunpack.c.h.b16 %v3008
      %v3335 = vunpack.c.l.b16 %v3009
      %v3336 = vunpack.c.l.b16 %v3010
      %v3337 = vunpack.c.h.b16 %v3010
      %v3338 = vunpack.c.l.b16 %v3011
      %v3339 = vunpack.c.h.b16 %v3011
      %v3340 = vunpack.c.l.b16 %v3012
      %v3341 = vunpack.c.l.b16 %v3013
      %v3342 = vunpack.c.h.b16 %v3013
      %v3343 = vunpack.c.l.b16 %v3014
      %v3344 = vunpack.c.h.b16 %v3014
      %v3345 = vunpack.c.l.b16 %v3015
      %v3346 = vunpack.c.l.b16 %v3016
      %v3347 = vunpack.c.h.b16 %v3016
      %v3348 = vunpack.c.l.b16 %v3017
      %v3349 = vunpack.c.h.b16 %v3017
      %v3350 = vunpack.c.l.b16 %v3018
      %v3351 = vunpack.c.l.b16 %v3019
      %v3352 = vunpack.c.h.b16 %v3019
      %v3353 = vunpack.c.l.b16 %v3020
      %v3354 = vunpack.c.h.b16 %v3020
      %v3355 = vunpack.c.l.b16 %v3021
      %v3356 = vunpack.c.l.b16 %v3022
      %v3357 = vunpack.c.h.b16 %v3022
      %v3358 = vunpack.c.l.b16 %v3023
      %v3359 = vunpack.c.h.b16 %v3023
      %v3360 = vunpack.c.l.b16 %v3024
      %v3361 = vunpack.c.l.b16 %v3025
      %v3362 = vunpack.c.h.b16 %v3025
      %v3363 = vunpack.c.l.b16 %v3026
      %v3364 = vunpack.c.h.b16 %v3026
      %v3365 = vunpack.c.l.b16 %v3027
      %v3366 = vunpack.c.l.b16 %v3028
      %v3367 = vunpack.c.h.b16 %v3028
      %v3368 = vunpack.c.l.b16 %v3029
      %v3369 = vunpack.c.h.b16 %v3029
      %v3370 = vunpack.c.l.b16 %v3030
      %v3371 = vunpack.c.l.b16 %v3031
      %v3372 = vunpack.c.h.b16 %v3031
      %v3373 = vunpack.c.l.b16 %v3032
      %v3374 = vunpack.c.h.b16 %v3032
      %v3375 = vunpack.c.l.b16 %v3033
      %v3376 = vunpack.c.l.b16 %v3034
      %v3377 = vunpack.c.h.b16 %v3034
      %v3378 = vunpack.c.l.b16 %v3035
      %v3379 = vunpack.c.h.b16 %v3035
      %v3380 = vunpack.c.l.b16 %v3036
      %v3381 = vunpack.c.l.b16 %v3037
      %v3382 = vunpack.c.h.b16 %v3037
      %v3383 = vunpack.c.l.b16 %v3038
      %v3384 = vunpack.c.h.b16 %v3038
      %v3385 = vunpack.c.l.b16 %v3039
      %v3386 = vunpack.c.l.b16 %v3040
      %v3387 = vunpack.c.h.b16 %v3040
      %v3388 = vunpack.c.l.b16 %v3041
      %v3389 = vunpack.c.h.b16 %v3041
      %v3390 = vunpack.c.l.b16 %v3042
      %v3391 = vpack.c.b16 %v3226, %v3221
      %v3392 = vpack.c.b16 %v3227, %v3222
      %v3393 = vpack.c.b16 %v3228, %v3223
      %v3394 = vpack.c.b16 %v3229, %v3224
      %v3395 = vpack.c.b16 %v3230, %v3225
      %v3396 = vpack.c.b16 %v3236, %v3231
      %v3397 = vpack.c.b16 %v3237, %v3232
      %v3398 = vpack.c.b16 %v3238, %v3233
      %v3399 = vpack.c.b16 %v3239, %v3234
      %v3400 = vpack.c.b16 %v3240, %v3235
      %v3401 = vpack.c.b16 %v3246, %v3241
      %v3402 = vpack.c.b16 %v3247, %v3242
      %v3403 = vpack.c.b16 %v3248, %v3243
      %v3404 = vpack.c.b16 %v3249, %v3244
      %v3405 = vpack.c.b16 %v3250, %v3245
      %v3406 = vpack.c.b16 %v3256, %v3251
      %v3407 = vpack.c.b16 %v3257, %v3252
      %v3408 = vpack.c.b16 %v3258, %v3253
      %v3409 = vpack.c.b16 %v3259, %v3254
      %v3410 = vpack.c.b16 %v3260, %v3255
      %v3411 = vpack.c.b16 %v3266, %v3261
      %v3412 = vpack.c.b16 %v3267, %v3262
      %v3413 = vpack.c.b16 %v3268, %v3263
      %v3414 = vpack.c.b16 %v3269, %v3264
      %v3415 = vpack.c.b16 %v3270, %v3265
      %v3416 = vpack.c.b16 %v3276, %v3271
      %v3417 = vpack.c.b16 %v3277, %v3272
      %v3418 = vpack.c.b16 %v3278, %v3273
      %v3419 = vpack.c.b16 %v3279, %v3274
      %v3420 = vpack.c.b16 %v3280, %v3275
      %v3421 = vpack.c.b16 %v3286, %v3281
      %v3422 = vpack.c.b16 %v3287, %v3282
      %v3423 = vpack.c.b16 %v3288, %v3283
      %v3424 = vpack.c.b16 %v3289, %v3284
      %v3425 = vpack.c.b16 %v3290, %v3285
      %v3426 = vpack.c.b16 %v3296, %v3291
      %v3427 = vpack.c.b16 %v3297, %v3292
      %v3428 = vpack.c.b16 %v3298, %v3293
      %v3429 = vpack.c.b16 %v3299, %v3294
      %v3430 = vpack.c.b16 %v3300, %v3295
      %v3431 = vpack.c.b16 %v3306, %v3301
      %v3432 = vpack.c.b16 %v3307, %v3302
      %v3433 = vpack.c.b16 %v3308, %v3303
      %v3434 = vpack.c.b16 %v3309, %v3304
      %v3435 = vpack.c.b16 %v3310, %v3305
      %v3436 = vpack.c.b16 %v3316, %v3311
      %v3437 = vpack.c.b16 %v3317, %v3312
      %v3438 = vpack.c.b16 %v3318, %v3313
      %v3439 = vpack.c.b16 %v3319, %v3314
      %v3440 = vpack.c.b16 %v3320, %v3315
      %v3441 = vpack.c.b16 %v3326, %v3321
      %v3442 = vpack.c.b16 %v3327, %v3322
      %v3443 = vpack.c.b16 %v3328, %v3323
      %v3444 = vpack.c.b16 %v3329, %v3324
      %v3445 = vpack.c.b16 %v3330, %v3325
      %v3446 = vpack.c.b16 %v3336, %v3331
      %v3447 = vpack.c.b16 %v3337, %v3332
      %v3448 = vpack.c.b16 %v3338, %v3333
      %v3449 = vpack.c.b16 %v3339, %v3334
      %v3450 = vpack.c.b16 %v3340, %v3335
      %v3451 = vpack.c.b16 %v3346, %v3341
      %v3452 = vpack.c.b16 %v3347, %v3342
      %v3453 = vpack.c.b16 %v3348, %v3343
      %v3454 = vpack.c.b16 %v3349, %v3344
      %v3455 = vpack.c.b16 %v3350, %v3345
      %v3456 = vpack.c.b16 %v3356, %v3351
      %v3457 = vpack.c.b16 %v3357, %v3352
      %v3458 = vpack.c.b16 %v3358, %v3353
      %v3459 = vpack.c.b16 %v3359, %v3354
      %v3460 = vpack.c.b16 %v3360, %v3355
      %v3461 = vpack.c.b16 %v3366, %v3361
      %v3462 = vpack.c.b16 %v3367, %v3362
      %v3463 = vpack.c.b16 %v3368, %v3363
      %v3464 = vpack.c.b16 %v3369, %v3364
      %v3465 = vpack.c.b16 %v3370, %v3365
      %v3466 = vpack.c.b16 %v3376, %v3371
      %v3467 = vpack.c.b16 %v3377, %v3372
      %v3468 = vpack.c.b16 %v3378, %v3373
      %v3469 = vpack.c.b16 %v3379, %v3374
      %v3470 = vpack.c.b16 %v3380, %v3375
      %v3471 = vpack.c.b16 %v3386, %v3381
      %v3472 = vpack.c.b16 %v3387, %v3382
      %v3473 = vpack.c.b16 %v3388, %v3383
      %v3474 = vpack.c.b16 %v3389, %v3384
      %v3475 = vpack.c.b16 %v3390, %v3385
      %v3616 = vunpack.c.l.b16 %v3043
      %v3617 = vunpack.c.l.b16 %v3044
      %v3618 = vunpack.c.l.b16 %v3045
      %v3619 = vunpack.c.l.b16 %v3046
      %v3620 = vunpack.c.l.b16 %v3047
      %v3621 = vunpack.c.l.b16 %v3048
      %v3622 = vunpack.c.l.b16 %v3049
      %v3623 = vunpack.c.l.b16 %v3050
      %v3624 = vunpack.c.l.b16 %v3051
      %v3625 = vunpack.c.l.b16 %v3052
      %v3626 = vunpack.c.l.b16 %v3053
      %v3627 = vunpack.c.l.b16 %v3054
      %v3628 = vunpack.c.l.b16 %v3055
      %v3629 = vunpack.c.l.b16 %v3056
      %v3630 = vunpack.c.l.b16 %v3057
      %v3631 = vunpack.c.l.b16 %v3058
      %v3632 = vunpack.c.l.b16 %v3059
      %v3633 = vunpack.c.l.b16 %v3060
      %v3634 = vunpack.c.l.b16 %v3061
      %v3635 = vunpack.c.l.b16 %v3062
      %v3636 = vunpack.c.l.b16 %v3063
      %v3637 = vunpack.c.l.b16 %v3064
      %v3638 = vunpack.c.l.b16 %v3065
      %v3639 = vunpack.c.l.b16 %v3066
      %v3640 = vunpack.c.l.b16 %v3067
      %v3641 = vunpack.c.l.b16 %v3068
      %v3642 = vunpack.c.l.b16 %v3069
      %v3643 = vunpack.c.l.b16 %v3070
      %v3644 = vunpack.c.l.b16 %v3071
      %v3645 = vunpack.c.l.b16 %v3072
      %v3646 = vunpack.c.l.b16 %v3073
      %v3647 = vunpack.c.l.b16 %v3074
      %v3648 = vunpack.c.l.b16 %v3075
      %v3649 = vunpack.c.l.b16 %v3076
      %v3650 = vunpack.c.l.b16 %v3077
      %v3651 = vunpack.c.l.b16 %v3078
      %v3652 = vunpack.c.l.b16 %v3079
      %v3653 = vunpack.c.l.b16 %v3080
      %v3654 = vunpack.c.l.b16 %v3081
      %v3655 = vunpack.c.l.b16 %v3082
      %v3656 = vunpack.c.l.b16 %v3083
      %v3657 = vunpack.c.l.b16 %v3084
      %v3658 = vunpack.c.l.b16 %v3085
      %v3659 = vunpack.c.l.b16 %v3086
      %v3660 = vunpack.c.l.b16 %v3087
      %v3661 = vunpack.c.l.b16 %v3088
      %v3662 = vunpack.c.l.b16 %v3089
      %v3663 = vunpack.c.l.b16 %v3090
      %v3664 = vunpack.c.l.b16 %v3091
      %v3665 = vunpack.c.l.b16 %v3092
      %v3666 = vunpack.c.l.b16 %v3093
      %v3667 = vunpack.c.l.b16 %v3094
      %v3668 = vunpack.c.l.b16 %v3095
      %v3669 = vunpack.c.l.b16 %v3096
      %v3670 = vunpack.c.l.b16 %v3097
      %v3671 = vunpack.c.l.b16 %v3098
      %v3672 = vunpack.c.l.b16 %v3099
      %v3673 = vunpack.c.l.b16 %v3100
      %v3674 = vunpack.c.l.b16 %v3101
      %v3675 = vunpack.c.l.b16 %v3102
      %v3676 = vunpack.c.l.b16 %v3103
      %v3677 = vunpack.c.l.b16 %v3104
      %v3678 = vunpack.c.l.b16 %v3105
      %v3679 = vunpack.c.l.b16 %v3106
      %v3680 = vunpack.c.l.b16 %v3107
      %v3681 = vunpack.c.l.b16 %v3108
      %v3682 = vunpack.c.l.b16 %v3109
      %v3683 = vunpack.c.l.b16 %v3110
      %v3684 = vunpack.c.l.b16 %v3111
      %v3685 = vunpack.c.l.b16 %v3112
      %v3686 = vunpack.c.l.b16 %v3113
      %v3687 = vunpack.c.l.b16 %v3114
      %v3688 = vpack.c.b16 %v3617, %v3616
      %v3689 = vpack.c.b16 %v3619, %v3618
      %v3690 = vpack.c.b16 %v3621, %v3620
      %v3691 = vpack.c.b16 %v3623, %v3622
      %v3692 = vpack.c.b16 %v3625, %v3624
      %v3693 = vpack.c.b16 %v3627, %v3626
      %v3694 = vpack.c.b16 %v3629, %v3628
      %v3695 = vpack.c.b16 %v3631, %v3630
      %v3696 = vpack.c.b16 %v3633, %v3632
      %v3697 = vpack.c.b16 %v3635, %v3634
      %v3698 = vpack.c.b16 %v3637, %v3636
      %v3699 = vpack.c.b16 %v3639, %v3638
      %v3700 = vpack.c.b16 %v3641, %v3640
      %v3701 = vpack.c.b16 %v3643, %v3642
      %v3702 = vpack.c.b16 %v3645, %v3644
      %v3703 = vpack.c.b16 %v3647, %v3646
      %v3704 = vpack.c.b16 %v3649, %v3648
      %v3705 = vpack.c.b16 %v3651, %v3650
      %v3706 = vpack.c.b16 %v3653, %v3652
      %v3707 = vpack.c.b16 %v3655, %v3654
      %v3708 = vpack.c.b16 %v3657, %v3656
      %v3709 = vpack.c.b16 %v3659, %v3658
      %v3710 = vpack.c.b16 %v3661, %v3660
      %v3711 = vpack.c.b16 %v3663, %v3662
      %v3712 = vpack.c.b16 %v3665, %v3664
      %v3713 = vpack.c.b16 %v3667, %v3666
      %v3714 = vpack.c.b16 %v3669, %v3668
      %v3715 = vpack.c.b16 %v3671, %v3670
      %v3716 = vpack.c.b16 %v3673, %v3672
      %v3717 = vpack.c.b16 %v3675, %v3674
      %v3718 = vpack.c.b16 %v3677, %v3676
      %v3719 = vpack.c.b16 %v3679, %v3678
      %v3720 = vpack.c.b16 %v3681, %v3680
      %v3721 = vpack.c.b16 %v3683, %v3682
      %v3722 = vpack.c.b16 %v3685, %v3684
      %v3723 = vpack.c.b16 %v3687, %v3686
      %v3761 = vsel %vm1082, %v3395, 0
      %v3764 = vsel %vm1082, %v3400, 0
      %v3767 = vsel %vm1082, %v3405, 0
      %v3770 = vsel %vm1082, %v3410, 0
      %v3773 = vsel %vm1082, %v3415, 0
      %v3776 = vsel %vm1082, %v3420, 0
      %v3779 = vsel %vm1082, %v3425, 0
      %v3782 = vsel %vm1082, %v3430, 0
      %v3785 = vsel %vm1082, %v3435, 0
      %v3788 = vsel %vm1082, %v3440, 0
      %v3791 = vsel %vm1082, %v3445, 0
      %v3794 = vsel %vm1082, %v3450, 0
      %v3797 = vsel %vm1082, %v3455, 0
      %v3800 = vsel %vm1082, %v3460, 0
      %v3803 = vsel %vm1082, %v3465, 0
      %v3806 = vsel %vm1082, %v3470, 0
      %v3809 = vsel %vm1082, %v3475, 0
      %3811 = vmatpush.bf16.msra.mxu0 %v3695
      %3812 = vmatpush.bf16.msra.mxu0 %v3694
      %3813 = vmatpush.bf16.msra.mxu0 %v3693
      %3814 = vmatpush.bf16.msra.mxu0 %v3692
      %3815 = vmatpush.bf16.msra.mxu0 %v3691
      %3816 = vmatpush.bf16.msra.mxu0 %v3690
      %3817 = vmatpush.bf16.msra.mxu0 %v3689
      %3818 = vmatpush.bf16.msra.mxu0 %v3688
      %3819 = vmatmul.bf16.gmra.mxu0 %v3391
      %v3820 = vpop.f32.mrf.mxu0
      %v3821 = vadd.f32 %v3117, %v3820
      %v3822 = vpop.f32.mrf.mxu0
      %v3823 = vadd.f32 %v3117, %v3822
      %3824 = vmatmul.bf16.gmra.mxu0 %v3396
      %v3825 = vpop.f32.mrf.mxu0
      %v3826 = vadd.f32 %v3117, %v3825
      %v3827 = vpop.f32.mrf.mxu0
      %v3828 = vadd.f32 %v3117, %v3827
      %3829 = vmatmul.bf16.gmra.mxu0 %v3401
      %v3830 = vpop.f32.mrf.mxu0
      %v3831 = vadd.f32 %v3117, %v3830
      %v3832 = vpop.f32.mrf.mxu0
      %v3833 = vadd.f32 %v3117, %v3832
      %3834 = vmatmul.bf16.gmra.mxu0 %v3406
      %v3835 = vpop.f32.mrf.mxu0
      %v3836 = vadd.f32 %v3117, %v3835
      %v3837 = vpop.f32.mrf.mxu0
      %v3838 = vadd.f32 %v3117, %v3837
      %3839 = vmatmul.bf16.gmra.mxu0 %v3411
      %v3840 = vpop.f32.mrf.mxu0
      %v3841 = vadd.f32 %v3117, %v3840
      %v3842 = vpop.f32.mrf.mxu0
      %v3843 = vadd.f32 %v3117, %v3842
      %3844 = vmatmul.bf16.gmra.mxu0 %v3416
      %v3845 = vpop.f32.mrf.mxu0
      %v3846 = vadd.f32 %v3117, %v3845
      %v3847 = vpop.f32.mrf.mxu0
      %v3848 = vadd.f32 %v3117, %v3847
      %3849 = vmatmul.bf16.gmra.mxu0 %v3421
      %v3850 = vpop.f32.mrf.mxu0
      %v3851 = vadd.f32 %v3117, %v3850
      %v3852 = vpop.f32.mrf.mxu0
      %v3853 = vadd.f32 %v3117, %v3852
      %3854 = vmatmul.bf16.gmra.mxu0 %v3426
      %v3855 = vpop.f32.mrf.mxu0
      %v3856 = vadd.f32 %v3117, %v3855
      %v3857 = vpop.f32.mrf.mxu0
      %v3858 = vadd.f32 %v3117, %v3857
      %3859 = vmatmul.bf16.gmra.mxu0 %v3431
      %v3860 = vpop.f32.mrf.mxu0
      %v3861 = vadd.f32 %v3117, %v3860
      %v3862 = vpop.f32.mrf.mxu0
      %v3863 = vadd.f32 %v3117, %v3862
      %3864 = vmatmul.bf16.gmra.mxu0 %v3436
      %v3865 = vpop.f32.mrf.mxu0
      %v3866 = vadd.f32 %v3117, %v3865
      %v3867 = vpop.f32.mrf.mxu0
      %v3868 = vadd.f32 %v3117, %v3867
      %3869 = vmatmul.bf16.gmra.mxu0 %v3441
      %v3870 = vpop.f32.mrf.mxu0
      %v3871 = vadd.f32 %v3117, %v3870
      %v3872 = vpop.f32.mrf.mxu0
      %v3873 = vadd.f32 %v3117, %v3872
      %3874 = vmatmul.bf16.gmra.mxu0 %v3446
      %v3875 = vpop.f32.mrf.mxu0
      %v3876 = vadd.f32 %v3117, %v3875
      %v3877 = vpop.f32.mrf.mxu0
      %v3878 = vadd.f32 %v3117, %v3877
      %3879 = vmatmul.bf16.gmra.mxu0 %v3451
      %v3880 = vpop.f32.mrf.mxu0
      %v3881 = vadd.f32 %v3117, %v3880
      %v3882 = vpop.f32.mrf.mxu0
      %v3883 = vadd.f32 %v3117, %v3882
      %3884 = vmatmul.bf16.gmra.mxu0 %v3456
      %v3885 = vpop.f32.mrf.mxu0
      %v3886 = vadd.f32 %v3117, %v3885
      %v3887 = vpop.f32.mrf.mxu0
      %v3888 = vadd.f32 %v3117, %v3887
      %3889 = vmatmul.bf16.gmra.mxu0 %v3461
      %v3890 = vpop.f32.mrf.mxu0
      %v3891 = vadd.f32 %v3117, %v3890
      %v3892 = vpop.f32.mrf.mxu0
      %v3893 = vadd.f32 %v3117, %v3892
      %3894 = vmatmul.bf16.gmra.mxu0 %v3466
      %v3895 = vpop.f32.mrf.mxu0
      %v3896 = vadd.f32 %v3117, %v3895
      %v3897 = vpop.f32.mrf.mxu0
      %v3898 = vadd.f32 %v3117, %v3897
      %3899 = vmatmul.bf16.gmra.mxu0 %v3471
      %v3900 = vpop.f32.mrf.mxu0
      %v3901 = vadd.f32 %v3117, %v3900
      %v3902 = vpop.f32.mrf.mxu0
      %v3903 = vadd.f32 %v3117, %v3902
      %3904 = vdwg.mxu0
      %3905 = vmatpush.bf16.msra.mxu0 %v3703
      %3906 = vmatpush.bf16.msra.mxu0 %v3702
      %3907 = vmatpush.bf16.msra.mxu0 %v3701
      %3908 = vmatpush.bf16.msra.mxu0 %v3700
      %3909 = vmatpush.bf16.msra.mxu0 %v3699
      %3910 = vmatpush.bf16.msra.mxu0 %v3698
      %3911 = vmatpush.bf16.msra.mxu0 %v3697
      %3912 = vmatpush.bf16.msra.mxu0 %v3696
      %3913 = vmatmul.bf16.gmra.mxu0 %v3392
      %v3914 = vpop.f32.mrf.mxu0
      %v3915 = vadd.f32 %v3821, %v3914
      %v3916 = vpop.f32.mrf.mxu0
      %v3917 = vadd.f32 %v3823, %v3916
      %3918 = vmatmul.bf16.gmra.mxu0 %v3397
      %v3919 = vpop.f32.mrf.mxu0
      %v3920 = vadd.f32 %v3826, %v3919
      %v3921 = vpop.f32.mrf.mxu0
      %v3922 = vadd.f32 %v3828, %v3921
      %3923 = vmatmul.bf16.gmra.mxu0 %v3402
      %v3924 = vpop.f32.mrf.mxu0
      %v3925 = vadd.f32 %v3831, %v3924
      %v3926 = vpop.f32.mrf.mxu0
      %v3927 = vadd.f32 %v3833, %v3926
      %3928 = vmatmul.bf16.gmra.mxu0 %v3407
      %v3929 = vpop.f32.mrf.mxu0
      %v3930 = vadd.f32 %v3836, %v3929
      %v3931 = vpop.f32.mrf.mxu0
      %v3932 = vadd.f32 %v3838, %v3931
      %3933 = vmatmul.bf16.gmra.mxu0 %v3412
      %v3934 = vpop.f32.mrf.mxu0
      %v3935 = vadd.f32 %v3841, %v3934
      %v3936 = vpop.f32.mrf.mxu0
      %v3937 = vadd.f32 %v3843, %v3936
      %3938 = vmatmul.bf16.gmra.mxu0 %v3417
      %v3939 = vpop.f32.mrf.mxu0
      %v3940 = vadd.f32 %v3846, %v3939
      %v3941 = vpop.f32.mrf.mxu0
      %v3942 = vadd.f32 %v3848, %v3941
      %3943 = vmatmul.bf16.gmra.mxu0 %v3422
      %v3944 = vpop.f32.mrf.mxu0
      %v3945 = vadd.f32 %v3851, %v3944
      %v3946 = vpop.f32.mrf.mxu0
      %v3947 = vadd.f32 %v3853, %v3946
      %3948 = vmatmul.bf16.gmra.mxu0 %v3427
      %v3949 = vpop.f32.mrf.mxu0
      %v3950 = vadd.f32 %v3856, %v3949
      %v3951 = vpop.f32.mrf.mxu0
      %v3952 = vadd.f32 %v3858, %v3951
      %3953 = vmatmul.bf16.gmra.mxu0 %v3432
      %v3954 = vpop.f32.mrf.mxu0
      %v3955 = vadd.f32 %v3861, %v3954
      %v3956 = vpop.f32.mrf.mxu0
      %v3957 = vadd.f32 %v3863, %v3956
      %3958 = vmatmul.bf16.gmra.mxu0 %v3437
      %v3959 = vpop.f32.mrf.mxu0
      %v3960 = vadd.f32 %v3866, %v3959
      %v3961 = vpop.f32.mrf.mxu0
      %v3962 = vadd.f32 %v3868, %v3961
      %3963 = vmatmul.bf16.gmra.mxu0 %v3442
      %v3964 = vpop.f32.mrf.mxu0
      %v3965 = vadd.f32 %v3871, %v3964
      %v3966 = vpop.f32.mrf.mxu0
      %v3967 = vadd.f32 %v3873, %v3966
      %3968 = vmatmul.bf16.gmra.mxu0 %v3447
      %v3969 = vpop.f32.mrf.mxu0
      %v3970 = vadd.f32 %v3876, %v3969
      %v3971 = vpop.f32.mrf.mxu0
      %v3972 = vadd.f32 %v3878, %v3971
      %3973 = vmatmul.bf16.gmra.mxu0 %v3452
      %v3974 = vpop.f32.mrf.mxu0
      %v3975 = vadd.f32 %v3881, %v3974
      %v3976 = vpop.f32.mrf.mxu0
      %v3977 = vadd.f32 %v3883, %v3976
      %3978 = vmatmul.bf16.gmra.mxu0 %v3457
      %v3979 = vpop.f32.mrf.mxu0
      %v3980 = vadd.f32 %v3886, %v3979
      %v3981 = vpop.f32.mrf.mxu0
      %v3982 = vadd.f32 %v3888, %v3981
      %3983 = vmatmul.bf16.gmra.mxu0 %v3462
      %v3984 = vpop.f32.mrf.mxu0
      %v3985 = vadd.f32 %v3891, %v3984
      %v3986 = vpop.f32.mrf.mxu0
      %v3987 = vadd.f32 %v3893, %v3986
      %3988 = vmatmul.bf16.gmra.mxu0 %v3467
      %v3989 = vpop.f32.mrf.mxu0
      %v3990 = vadd.f32 %v3896, %v3989
      %v3991 = vpop.f32.mrf.mxu0
      %v3992 = vadd.f32 %v3898, %v3991
      %3993 = vmatmul.bf16.gmra.mxu0 %v3472
      %v3994 = vpop.f32.mrf.mxu0
      %v3995 = vadd.f32 %v3901, %v3994
      %v3996 = vpop.f32.mrf.mxu0
      %v3997 = vadd.f32 %v3903, %v3996
      %3998 = vdwg.mxu0
      %3999 = vmatpush.bf16.msra.mxu0 %v3711
      %4000 = vmatpush.bf16.msra.mxu0 %v3710
      %4001 = vmatpush.bf16.msra.mxu0 %v3709
      %4002 = vmatpush.bf16.msra.mxu0 %v3708
      %4003 = vmatpush.bf16.msra.mxu0 %v3707
      %4004 = vmatpush.bf16.msra.mxu0 %v3706
      %4005 = vmatpush.bf16.msra.mxu0 %v3705
      %4006 = vmatpush.bf16.msra.mxu0 %v3704
      %4007 = vmatmul.bf16.gmra.mxu0 %v3393
      %v4008 = vpop.f32.mrf.mxu0
      %v4009 = vadd.f32 %v3915, %v4008
      %v4010 = vpop.f32.mrf.mxu0
      %v4011 = vadd.f32 %v3917, %v4010
      %4012 = vmatmul.bf16.gmra.mxu0 %v3398
      %v4013 = vpop.f32.mrf.mxu0
      %v4014 = vadd.f32 %v3920, %v4013
      %v4015 = vpop.f32.mrf.mxu0
      %v4016 = vadd.f32 %v3922, %v4015
      %4017 = vmatmul.bf16.gmra.mxu0 %v3403
      %v4018 = vpop.f32.mrf.mxu0
      %v4019 = vadd.f32 %v3925, %v4018
      %v4020 = vpop.f32.mrf.mxu0
      %v4021 = vadd.f32 %v3927, %v4020
      %4022 = vmatmul.bf16.gmra.mxu0 %v3408
      %v4023 = vpop.f32.mrf.mxu0
      %v4024 = vadd.f32 %v3930, %v4023
      %v4025 = vpop.f32.mrf.mxu0
      %v4026 = vadd.f32 %v3932, %v4025
      %4027 = vmatmul.bf16.gmra.mxu0 %v3413
      %v4028 = vpop.f32.mrf.mxu0
      %v4029 = vadd.f32 %v3935, %v4028
      %v4030 = vpop.f32.mrf.mxu0
      %v4031 = vadd.f32 %v3937, %v4030
      %4032 = vmatmul.bf16.gmra.mxu0 %v3418
      %v4033 = vpop.f32.mrf.mxu0
      %v4034 = vadd.f32 %v3940, %v4033
      %v4035 = vpop.f32.mrf.mxu0
      %v4036 = vadd.f32 %v3942, %v4035
      %4037 = vmatmul.bf16.gmra.mxu0 %v3423
      %v4038 = vpop.f32.mrf.mxu0
      %v4039 = vadd.f32 %v3945, %v4038
      %v4040 = vpop.f32.mrf.mxu0
      %v4041 = vadd.f32 %v3947, %v4040
      %4042 = vmatmul.bf16.gmra.mxu0 %v3428
      %v4043 = vpop.f32.mrf.mxu0
      %v4044 = vadd.f32 %v3950, %v4043
      %v4045 = vpop.f32.mrf.mxu0
      %v4046 = vadd.f32 %v3952, %v4045
      %4047 = vmatmul.bf16.gmra.mxu0 %v3433
      %v4048 = vpop.f32.mrf.mxu0
      %v4049 = vadd.f32 %v3955, %v4048
      %v4050 = vpop.f32.mrf.mxu0
      %v4051 = vadd.f32 %v3957, %v4050
      %4052 = vmatmul.bf16.gmra.mxu0 %v3438
      %v4053 = vpop.f32.mrf.mxu0
      %v4054 = vadd.f32 %v3960, %v4053
      %v4055 = vpop.f32.mrf.mxu0
      %v4056 = vadd.f32 %v3962, %v4055
      %4057 = vmatmul.bf16.gmra.mxu0 %v3443
      %v4058 = vpop.f32.mrf.mxu0
      %v4059 = vadd.f32 %v3965, %v4058
      %v4060 = vpop.f32.mrf.mxu0
      %v4061 = vadd.f32 %v3967, %v4060
      %4062 = vmatmul.bf16.gmra.mxu0 %v3448
      %v4063 = vpop.f32.mrf.mxu0
      %v4064 = vadd.f32 %v3970, %v4063
      %v4065 = vpop.f32.mrf.mxu0
      %v4066 = vadd.f32 %v3972, %v4065
      %4067 = vmatmul.bf16.gmra.mxu0 %v3453
      %v4068 = vpop.f32.mrf.mxu0
      %v4069 = vadd.f32 %v3975, %v4068
      %v4070 = vpop.f32.mrf.mxu0
      %v4071 = vadd.f32 %v3977, %v4070
      %4072 = vmatmul.bf16.gmra.mxu0 %v3458
      %v4073 = vpop.f32.mrf.mxu0
      %v4074 = vadd.f32 %v3980, %v4073
      %v4075 = vpop.f32.mrf.mxu0
      %v4076 = vadd.f32 %v3982, %v4075
      %4077 = vmatmul.bf16.gmra.mxu0 %v3463
      %v4078 = vpop.f32.mrf.mxu0
      %v4079 = vadd.f32 %v3985, %v4078
      %v4080 = vpop.f32.mrf.mxu0
      %v4081 = vadd.f32 %v3987, %v4080
      %4082 = vmatmul.bf16.gmra.mxu0 %v3468
      %v4083 = vpop.f32.mrf.mxu0
      %v4084 = vadd.f32 %v3990, %v4083
      %v4085 = vpop.f32.mrf.mxu0
      %v4086 = vadd.f32 %v3992, %v4085
      %4087 = vmatmul.bf16.gmra.mxu0 %v3473
      %v4088 = vpop.f32.mrf.mxu0
      %v4089 = vadd.f32 %v3995, %v4088
      %v4090 = vpop.f32.mrf.mxu0
      %v4091 = vadd.f32 %v3997, %v4090
      %4092 = vdwg.mxu0
      %4093 = vmatpush.bf16.msra.mxu0 %v3719
      %4094 = vmatpush.bf16.msra.mxu0 %v3718
      %4095 = vmatpush.bf16.msra.mxu0 %v3717
      %4096 = vmatpush.bf16.msra.mxu0 %v3716
      %4097 = vmatpush.bf16.msra.mxu0 %v3715
      %4098 = vmatpush.bf16.msra.mxu0 %v3714
      %4099 = vmatpush.bf16.msra.mxu0 %v3713
      %4100 = vmatpush.bf16.msra.mxu0 %v3712
      %4101 = vmatmul.bf16.gmra.mxu0 %v3394
      %v4102 = vpop.f32.mrf.mxu0
      %v4103 = vadd.f32 %v4009, %v4102
      %v4104 = vpop.f32.mrf.mxu0
      %v4105 = vadd.f32 %v4011, %v4104
      %4106 = vmatmul.bf16.gmra.mxu0 %v3399
      %v4107 = vpop.f32.mrf.mxu0
      %v4108 = vadd.f32 %v4014, %v4107
      %v4109 = vpop.f32.mrf.mxu0
      %v4110 = vadd.f32 %v4016, %v4109
      %4111 = vmatmul.bf16.gmra.mxu0 %v3404
      %v4112 = vpop.f32.mrf.mxu0
      %v4113 = vadd.f32 %v4019, %v4112
      %v4114 = vpop.f32.mrf.mxu0
      %v4115 = vadd.f32 %v4021, %v4114
      %4116 = vmatmul.bf16.gmra.mxu0 %v3409
      %v4117 = vpop.f32.mrf.mxu0
      %v4118 = vadd.f32 %v4024, %v4117
      %v4119 = vpop.f32.mrf.mxu0
      %v4120 = vadd.f32 %v4026, %v4119
      %4121 = vmatmul.bf16.gmra.mxu0 %v3414
      %v4122 = vpop.f32.mrf.mxu0
      %v4123 = vadd.f32 %v4029, %v4122
      %v4124 = vpop.f32.mrf.mxu0
      %v4125 = vadd.f32 %v4031, %v4124
      %4126 = vmatmul.bf16.gmra.mxu0 %v3419
      %v4127 = vpop.f32.mrf.mxu0
      %v4128 = vadd.f32 %v4034, %v4127
      %v4129 = vpop.f32.mrf.mxu0
      %v4130 = vadd.f32 %v4036, %v4129
      %4131 = vmatmul.bf16.gmra.mxu0 %v3424
      %v4132 = vpop.f32.mrf.mxu0
      %v4133 = vadd.f32 %v4039, %v4132
      %v4134 = vpop.f32.mrf.mxu0
      %v4135 = vadd.f32 %v4041, %v4134
      %4136 = vmatmul.bf16.gmra.mxu0 %v3429
      %v4137 = vpop.f32.mrf.mxu0
      %v4138 = vadd.f32 %v4044, %v4137
      %v4139 = vpop.f32.mrf.mxu0
      %v4140 = vadd.f32 %v4046, %v4139
      %4141 = vmatmul.bf16.gmra.mxu0 %v3434
      %v4142 = vpop.f32.mrf.mxu0
      %v4143 = vadd.f32 %v4049, %v4142
      %v4144 = vpop.f32.mrf.mxu0
      %v4145 = vadd.f32 %v4051, %v4144
      %4146 = vmatmul.bf16.gmra.mxu0 %v3439
      %v4147 = vpop.f32.mrf.mxu0
      %v4148 = vadd.f32 %v4054, %v4147
      %v4149 = vpop.f32.mrf.mxu0
      %v4150 = vadd.f32 %v4056, %v4149
      %4151 = vmatmul.bf16.gmra.mxu0 %v3444
      %v4152 = vpop.f32.mrf.mxu0
      %v4153 = vadd.f32 %v4059, %v4152
      %v4154 = vpop.f32.mrf.mxu0
      %v4155 = vadd.f32 %v4061, %v4154
      %4156 = vmatmul.bf16.gmra.mxu0 %v3449
      %v4157 = vpop.f32.mrf.mxu0
      %v4158 = vadd.f32 %v4064, %v4157
      %v4159 = vpop.f32.mrf.mxu0
      %v4160 = vadd.f32 %v4066, %v4159
      %4161 = vmatmul.bf16.gmra.mxu0 %v3454
      %v4162 = vpop.f32.mrf.mxu0
      %v4163 = vadd.f32 %v4069, %v4162
      %v4164 = vpop.f32.mrf.mxu0
      %v4165 = vadd.f32 %v4071, %v4164
      %4166 = vmatmul.bf16.gmra.mxu0 %v3459
      %v4167 = vpop.f32.mrf.mxu0
      %v4168 = vadd.f32 %v4074, %v4167
      %v4169 = vpop.f32.mrf.mxu0
      %v4170 = vadd.f32 %v4076, %v4169
      %4171 = vmatmul.bf16.gmra.mxu0 %v3464
      %v4172 = vpop.f32.mrf.mxu0
      %v4173 = vadd.f32 %v4079, %v4172
      %v4174 = vpop.f32.mrf.mxu0
      %v4175 = vadd.f32 %v4081, %v4174
      %4176 = vmatmul.bf16.gmra.mxu0 %v3469
      %v4177 = vpop.f32.mrf.mxu0
      %v4178 = vadd.f32 %v4084, %v4177
      %v4179 = vpop.f32.mrf.mxu0
      %v4180 = vadd.f32 %v4086, %v4179
      %4181 = vmatmul.bf16.gmra.mxu0 %v3474
      %v4182 = vpop.f32.mrf.mxu0
      %v4183 = vadd.f32 %v4089, %v4182
      %v4184 = vpop.f32.mrf.mxu0
      %v4185 = vadd.f32 %v4091, %v4184
      %4186 = vdwg.mxu0
      %4187 = vmatpush.bf16.msra.mxu0 0
      %4188 = vmatpush.bf16.msra.mxu0 0
      %4189 = vmatpush.bf16.msra.mxu0 0
      %4190 = vmatpush.bf16.msra.mxu0 0
      %4191 = vmatpush.bf16.msra.mxu0 %v3723
      %4192 = vmatpush.bf16.msra.mxu0 %v3722
      %4193 = vmatpush.bf16.msra.mxu0 %v3721
      %4194 = vmatpush.bf16.msra.mxu0 %v3720
      %4195 = vmatmul.bf16.gmra.mxu0 %v3761
      %v4196 = vpop.f32.mrf.mxu0
      %v4197 = vadd.f32 %v4103, %v4196
      %v4198 = vpop.f32.mrf.mxu0
      %v4199 = vadd.f32 %v4105, %v4198
      %4200 = vmatmul.bf16.gmra.mxu0 %v3764
      %v4201 = vpop.f32.mrf.mxu0
      %v4202 = vadd.f32 %v4108, %v4201
      %v4203 = vpop.f32.mrf.mxu0
      %v4204 = vadd.f32 %v4110, %v4203
      %4205 = vmatmul.bf16.gmra.mxu0 %v3767
      %v4206 = vpop.f32.mrf.mxu0
      %v4207 = vadd.f32 %v4113, %v4206
      %v4208 = vpop.f32.mrf.mxu0
      %v4209 = vadd.f32 %v4115, %v4208
      %4210 = vmatmul.bf16.gmra.mxu0 %v3770
      %v4211 = vpop.f32.mrf.mxu0
      %v4212 = vadd.f32 %v4118, %v4211
      %v4213 = vpop.f32.mrf.mxu0
      %v4214 = vadd.f32 %v4120, %v4213
      %4215 = vmatmul.bf16.gmra.mxu0 %v3773
      %v4216 = vpop.f32.mrf.mxu0
      %v4217 = vadd.f32 %v4123, %v4216
      %v4218 = vpop.f32.mrf.mxu0
      %v4219 = vadd.f32 %v4125, %v4218
      %4220 = vmatmul.bf16.gmra.mxu0 %v3776
      %v4221 = vpop.f32.mrf.mxu0
      %v4222 = vadd.f32 %v4128, %v4221
      %v4223 = vpop.f32.mrf.mxu0
      %v4224 = vadd.f32 %v4130, %v4223
      %4225 = vmatmul.bf16.gmra.mxu0 %v3779
      %v4226 = vpop.f32.mrf.mxu0
      %v4227 = vadd.f32 %v4133, %v4226
      %v4228 = vpop.f32.mrf.mxu0
      %v4229 = vadd.f32 %v4135, %v4228
      %4230 = vmatmul.bf16.gmra.mxu0 %v3782
      %v4231 = vpop.f32.mrf.mxu0
      %v4232 = vadd.f32 %v4138, %v4231
      %v4233 = vpop.f32.mrf.mxu0
      %v4234 = vadd.f32 %v4140, %v4233
      %4235 = vmatmul.bf16.gmra.mxu0 %v3785
      %v4236 = vpop.f32.mrf.mxu0
      %v4237 = vadd.f32 %v4143, %v4236
      %v4238 = vpop.f32.mrf.mxu0
      %v4239 = vadd.f32 %v4145, %v4238
      %4240 = vmatmul.bf16.gmra.mxu0 %v3788
      %v4241 = vpop.f32.mrf.mxu0
      %v4242 = vadd.f32 %v4148, %v4241
      %v4243 = vpop.f32.mrf.mxu0
      %v4244 = vadd.f32 %v4150, %v4243
      %4245 = vmatmul.bf16.gmra.mxu0 %v3791
      %v4246 = vpop.f32.mrf.mxu0
      %v4247 = vadd.f32 %v4153, %v4246
      %v4248 = vpop.f32.mrf.mxu0
      %v4249 = vadd.f32 %v4155, %v4248
      %4250 = vmatmul.bf16.gmra.mxu0 %v3794
      %v4251 = vpop.f32.mrf.mxu0
      %v4252 = vadd.f32 %v4158, %v4251
      %v4253 = vpop.f32.mrf.mxu0
      %v4254 = vadd.f32 %v4160, %v4253
      %4255 = vmatmul.bf16.gmra.mxu0 %v3797
      %v4256 = vpop.f32.mrf.mxu0
      %v4257 = vadd.f32 %v4163, %v4256
      %v4258 = vpop.f32.mrf.mxu0
      %v4259 = vadd.f32 %v4165, %v4258
      %4260 = vmatmul.bf16.gmra.mxu0 %v3800
      %v4261 = vpop.f32.mrf.mxu0
      %v4262 = vadd.f32 %v4168, %v4261
      %v4263 = vpop.f32.mrf.mxu0
      %v4264 = vadd.f32 %v4170, %v4263
      %4265 = vmatmul.bf16.gmra.mxu0 %v3803
      %v4266 = vpop.f32.mrf.mxu0
      %v4267 = vadd.f32 %v4173, %v4266
      %v4268 = vpop.f32.mrf.mxu0
      %v4269 = vadd.f32 %v4175, %v4268
      %4270 = vmatmul.bf16.gmra.mxu0 %v3806
      %v4271 = vpop.f32.mrf.mxu0
      %v4272 = vadd.f32 %v4178, %v4271
      %v4273 = vpop.f32.mrf.mxu0
      %v4274 = vadd.f32 %v4180, %v4273
      %4275 = vmatmul.bf16.gmra.mxu0 %v3809
      %v4276 = vpop.f32.mrf.mxu0
      %v4277 = vadd.f32 %v4183, %v4276
      %v4278 = vpop.f32.mrf.mxu0
      %v4279 = vadd.f32 %v4185, %v4278
      %4280 = vdwg.mxu0
      %v4281 = vmax.f32 %v4197, 0.0
      %v4282 = vmax.f32 %v4199, 0.0
      %v4283 = vmax.f32 %v4202, 0.0
      %v4284 = vmax.f32 %v4204, 0.0
      %v4285 = vmax.f32 %v4207, 0.0
      %v4286 = vmax.f32 %v4209, 0.0
      %v4287 = vmax.f32 %v4212, 0.0
      %v4288 = vmax.f32 %v4214, 0.0
      %v4289 = vmax.f32 %v4217, 0.0
      %v4290 = vmax.f32 %v4219, 0.0
      %v4291 = vmax.f32 %v4222, 0.0
      %v4292 = vmax.f32 %v4224, 0.0
      %v4293 = vmax.f32 %v4227, 0.0
      %v4294 = vmax.f32 %v4229, 0.0
      %v4295 = vmax.f32 %v4232, 0.0
      %v4296 = vmax.f32 %v4234, 0.0
      %v4297 = vmax.f32 %v4237, 0.0
      %v4298 = vmax.f32 %v4239, 0.0
      %v4299 = vmax.f32 %v4242, 0.0
      %v4300 = vmax.f32 %v4244, 0.0
      %v4301 = vmax.f32 %v4247, 0.0
      %v4302 = vmax.f32 %v4249, 0.0
      %v4303 = vmax.f32 %v4252, 0.0
      %v4304 = vmax.f32 %v4254, 0.0
      %v4305 = vmax.f32 %v4257, 0.0
      %v4306 = vmax.f32 %v4259, 0.0
      %v4307 = vmax.f32 %v4262, 0.0
      %v4308 = vmax.f32 %v4264, 0.0
      %v4309 = vmax.f32 %v4267, 0.0
      %v4310 = vmax.f32 %v4269, 0.0
      %v4311 = vmax.f32 %v4272, 0.0
      %v4312 = vmax.f32 %v4274, 0.0
      %v4313 = vmax.f32 %v4277, 0.0
      %v4314 = vmax.f32 %v4279, 0.0
      %s4315 = scalar_lea.vmem %s463, 16
      %v4316 = vld [vmem:[%s4315] sm:$0xf]
      %v4317 = vld [vmem:[%s4315 + $0x4] sm:$0xf]
      %v4318 = vld [vmem:[%s4315 + $0x8] sm:$0xf]
      %v4319 = vld [vmem:[%s4315 + $0xc] sm:$0xf]
      %s4320 = scalar_lea.vmem %s468, 1
      %v4321 = vld [vmem:[%s4320] sm:$0x1]
      %v4323 = vperm.slane %v4321, 0
      %v4329 = vunpack.c.l.b16 %v4316
      %v4330 = vunpack.c.l.b16 %v4317
      %v4331 = vunpack.c.l.b16 %v4318
      %v4332 = vunpack.c.l.b16 %v4319
      %v4333 = vpack.c.b16 %v4330, %v4329
      %v4334 = vpack.c.b16 %v4332, %v4331
      %4337 = vmatpush.bf16.msra.mxu0 0
      %4338 = vmatpush.bf16.msra.mxu0 0
      %4339 = vmatpush.bf16.msra.mxu0 0
      %4340 = vmatpush.bf16.msra.mxu0 0
      %4341 = vmatpush.bf16.msra.mxu0 0
      %4342 = vmatpush.bf16.msra.mxu0 0
      %4343 = vmatpush.bf16.msra.mxu0 %v4334
      %4344 = vmatpush.bf16.msra.mxu0 %v4333
      %4345 = vmatmul.bf16.gmra.mxu0 %v783
      %v4346 = vpop.f32.mrf.mxu0
      %v4347 = vadd.f32 %v4323, %v4346
      %v4348 = vpop.f32.mrf.mxu0
      %v4349 = vadd.f32 %v4323, %v4348
      %4350 = vmatmul.bf16.gmra.mxu0 %v786
      %v4351 = vpop.f32.mrf.mxu0
      %v4352 = vadd.f32 %v4323, %v4351
      %v4353 = vpop.f32.mrf.mxu0
      %v4354 = vadd.f32 %v4323, %v4353
      %4355 = vmatmul.bf16.gmra.mxu0 %v789
      %v4356 = vpop.f32.mrf.mxu0
      %v4357 = vadd.f32 %v4323, %v4356
      %v4358 = vpop.f32.mrf.mxu0
      %v4359 = vadd.f32 %v4323, %v4358
      %4360 = vmatmul.bf16.gmra.mxu0 %v792
      %v4361 = vpop.f32.mrf.mxu0
      %v4362 = vadd.f32 %v4323, %v4361
      %v4363 = vpop.f32.mrf.mxu0
      %v4364 = vadd.f32 %v4323, %v4363
      %4365 = vmatmul.bf16.gmra.mxu0 %v795
      %v4366 = vpop.f32.mrf.mxu0
      %v4367 = vadd.f32 %v4323, %v4366
      %v4368 = vpop.f32.mrf.mxu0
      %v4369 = vadd.f32 %v4323, %v4368
      %4370 = vmatmul.bf16.gmra.mxu0 %v798
      %v4371 = vpop.f32.mrf.mxu0
      %v4372 = vadd.f32 %v4323, %v4371
      %v4373 = vpop.f32.mrf.mxu0
      %v4374 = vadd.f32 %v4323, %v4373
      %4375 = vmatmul.bf16.gmra.mxu0 %v801
      %v4376 = vpop.f32.mrf.mxu0
      %v4377 = vadd.f32 %v4323, %v4376
      %v4378 = vpop.f32.mrf.mxu0
      %v4379 = vadd.f32 %v4323, %v4378
      %4380 = vmatmul.bf16.gmra.mxu0 %v804
      %v4381 = vpop.f32.mrf.mxu0
      %v4382 = vadd.f32 %v4323, %v4381
      %v4383 = vpop.f32.mrf.mxu0
      %v4384 = vadd.f32 %v4323, %v4383
      %4385 = vmatmul.bf16.gmra.mxu0 %v807
      %v4386 = vpop.f32.mrf.mxu0
      %v4387 = vadd.f32 %v4323, %v4386
      %v4388 = vpop.f32.mrf.mxu0
      %v4389 = vadd.f32 %v4323, %v4388
      %4390 = vmatmul.bf16.gmra.mxu0 %v810
      %v4391 = vpop.f32.mrf.mxu0
      %v4392 = vadd.f32 %v4323, %v4391
      %v4393 = vpop.f32.mrf.mxu0
      %v4394 = vadd.f32 %v4323, %v4393
      %4395 = vmatmul.bf16.gmra.mxu0 %v813
      %v4396 = vpop.f32.mrf.mxu0
      %v4397 = vadd.f32 %v4323, %v4396
      %v4398 = vpop.f32.mrf.mxu0
      %v4399 = vadd.f32 %v4323, %v4398
      %4400 = vmatmul.bf16.gmra.mxu0 %v816
      %v4401 = vpop.f32.mrf.mxu0
      %v4402 = vadd.f32 %v4323, %v4401
      %v4403 = vpop.f32.mrf.mxu0
      %v4404 = vadd.f32 %v4323, %v4403
      %4405 = vmatmul.bf16.gmra.mxu0 %v819
      %v4406 = vpop.f32.mrf.mxu0
      %v4407 = vadd.f32 %v4323, %v4406
      %v4408 = vpop.f32.mrf.mxu0
      %v4409 = vadd.f32 %v4323, %v4408
      %4410 = vmatmul.bf16.gmra.mxu0 %v822
      %v4411 = vpop.f32.mrf.mxu0
      %v4412 = vadd.f32 %v4323, %v4411
      %v4413 = vpop.f32.mrf.mxu0
      %v4414 = vadd.f32 %v4323, %v4413
      %4415 = vmatmul.bf16.gmra.mxu0 %v825
      %v4416 = vpop.f32.mrf.mxu0
      %v4417 = vadd.f32 %v4323, %v4416
      %v4418 = vpop.f32.mrf.mxu0
      %v4419 = vadd.f32 %v4323, %v4418
      %4420 = vmatmul.bf16.gmra.mxu0 %v828
      %v4421 = vpop.f32.mrf.mxu0
      %v4422 = vadd.f32 %v4323, %v4421
      %v4423 = vpop.f32.mrf.mxu0
      %v4424 = vadd.f32 %v4323, %v4423
      %4425 = vmatmul.bf16.gmra.mxu0 %v831
      %v4426 = vpop.f32.mrf.mxu0
      %v4427 = vadd.f32 %v4323, %v4426
      %v4428 = vpop.f32.mrf.mxu0
      %v4429 = vadd.f32 %v4323, %v4428
      %4430 = vdwg.mxu0
      %vm4431 = vcmp.ge.f32.partialorder %v4347, 0.0
      %vm4432 = vcmp.ge.f32.partialorder %v4349, 0.0
      %vm4433 = vcmp.ge.f32.partialorder %v4352, 0.0
      %vm4434 = vcmp.ge.f32.partialorder %v4354, 0.0
      %vm4435 = vcmp.ge.f32.partialorder %v4357, 0.0
      %vm4436 = vcmp.ge.f32.partialorder %v4359, 0.0
      %vm4437 = vcmp.ge.f32.partialorder %v4362, 0.0
      %vm4438 = vcmp.ge.f32.partialorder %v4364, 0.0
      %vm4439 = vcmp.ge.f32.partialorder %v4367, 0.0
      %vm4440 = vcmp.ge.f32.partialorder %v4369, 0.0
      %vm4441 = vcmp.ge.f32.partialorder %v4372, 0.0
      %vm4442 = vcmp.ge.f32.partialorder %v4374, 0.0
      %vm4443 = vcmp.ge.f32.partialorder %v4377, 0.0
      %vm4444 = vcmp.ge.f32.partialorder %v4379, 0.0
      %vm4445 = vcmp.ge.f32.partialorder %v4382, 0.0
      %vm4446 = vcmp.ge.f32.partialorder %v4384, 0.0
      %vm4447 = vcmp.ge.f32.partialorder %v4387, 0.0
      %vm4448 = vcmp.ge.f32.partialorder %v4389, 0.0
      %vm4449 = vcmp.ge.f32.partialorder %v4392, 0.0
      %vm4450 = vcmp.ge.f32.partialorder %v4394, 0.0
      %vm4451 = vcmp.ge.f32.partialorder %v4397, 0.0
      %vm4452 = vcmp.ge.f32.partialorder %v4399, 0.0
      %vm4453 = vcmp.ge.f32.partialorder %v4402, 0.0
      %vm4454 = vcmp.ge.f32.partialorder %v4404, 0.0
      %vm4455 = vcmp.ge.f32.partialorder %v4407, 0.0
      %vm4456 = vcmp.ge.f32.partialorder %v4409, 0.0
      %vm4457 = vcmp.ge.f32.partialorder %v4412, 0.0
      %vm4458 = vcmp.ge.f32.partialorder %v4414, 0.0
      %vm4459 = vcmp.ge.f32.partialorder %v4417, 0.0
      %vm4460 = vcmp.ge.f32.partialorder %v4419, 0.0
      %vm4461 = vcmp.ge.f32.partialorder %v4422, 0.0
      %vm4462 = vcmp.ge.f32.partialorder %v4424, 0.0
      %vm4463 = vcmp.ge.f32.partialorder %v4427, 0.0
      %vm4464 = vcmp.ge.f32.partialorder %v4429, 0.0
      %v4465 = vmul.f32 %v4347, 0.1
      %v4466 = vmul.f32 %v4349, 0.1
      %v4467 = vmul.f32 %v4352, 0.1
      %v4468 = vmul.f32 %v4354, 0.1
      %v4469 = vmul.f32 %v4357, 0.1
      %v4470 = vmul.f32 %v4359, 0.1
      %v4471 = vmul.f32 %v4362, 0.1
      %v4472 = vmul.f32 %v4364, 0.1
      %v4473 = vmul.f32 %v4367, 0.1
      %v4474 = vmul.f32 %v4369, 0.1
      %v4475 = vmul.f32 %v4372, 0.1
      %v4476 = vmul.f32 %v4374, 0.1
      %v4477 = vmul.f32 %v4377, 0.1
      %v4478 = vmul.f32 %v4379, 0.1
      %v4479 = vmul.f32 %v4382, 0.1
      %v4480 = vmul.f32 %v4384, 0.1
      %v4481 = vmul.f32 %v4387, 0.1
      %v4482 = vmul.f32 %v4389, 0.1
      %v4483 = vmul.f32 %v4392, 0.1
      %v4484 = vmul.f32 %v4394, 0.1
      %v4485 = vmul.f32 %v4397, 0.1
      %v4486 = vmul.f32 %v4399, 0.1
      %v4487 = vmul.f32 %v4402, 0.1
      %v4488 = vmul.f32 %v4404, 0.1
      %v4489 = vmul.f32 %v4407, 0.1
      %v4490 = vmul.f32 %v4409, 0.1
      %v4491 = vmul.f32 %v4412, 0.1
      %v4492 = vmul.f32 %v4414, 0.1
      %v4493 = vmul.f32 %v4417, 0.1
      %v4494 = vmul.f32 %v4419, 0.1
      %v4495 = vmul.f32 %v4422, 0.1
      %v4496 = vmul.f32 %v4424, 0.1
      %v4497 = vmul.f32 %v4427, 0.1
      %v4498 = vmul.f32 %v4429, 0.1
      %v4499 = vsel %vm4431, %v4347, %v4465
      %v4500 = vsel %vm4432, %v4349, %v4466
      %v4501 = vsel %vm4433, %v4352, %v4467
      %v4502 = vsel %vm4434, %v4354, %v4468
      %v4503 = vsel %vm4435, %v4357, %v4469
      %v4504 = vsel %vm4436, %v4359, %v4470
      %v4505 = vsel %vm4437, %v4362, %v4471
      %v4506 = vsel %vm4438, %v4364, %v4472
      %v4507 = vsel %vm4439, %v4367, %v4473
      %v4508 = vsel %vm4440, %v4369, %v4474
      %v4509 = vsel %vm4441, %v4372, %v4475
      %v4510 = vsel %vm4442, %v4374, %v4476
      %v4511 = vsel %vm4443, %v4377, %v4477
      %v4512 = vsel %vm4444, %v4379, %v4478
      %v4513 = vsel %vm4445, %v4382, %v4479
      %v4514 = vsel %vm4446, %v4384, %v4480
      %v4515 = vsel %vm4447, %v4387, %v4481
      %v4516 = vsel %vm4448, %v4389, %v4482
      %v4517 = vsel %vm4449, %v4392, %v4483
      %v4518 = vsel %vm4450, %v4394, %v4484
      %v4519 = vsel %vm4451, %v4397, %v4485
      %v4520 = vsel %vm4452, %v4399, %v4486
      %v4521 = vsel %vm4453, %v4402, %v4487
      %v4522 = vsel %vm4454, %v4404, %v4488
      %v4523 = vsel %vm4455, %v4407, %v4489
      %v4524 = vsel %vm4456, %v4409, %v4490
      %v4525 = vsel %vm4457, %v4412, %v4491
      %v4526 = vsel %vm4458, %v4414, %v4492
      %v4527 = vsel %vm4459, %v4417, %v4493
      %v4528 = vsel %vm4460, %v4419, %v4494
      %v4529 = vsel %vm4461, %v4422, %v4495
      %v4530 = vsel %vm4462, %v4424, %v4496
      %v4531 = vsel %vm4463, %v4427, %v4497
      %v4532 = vsel %vm4464, %v4429, %v4498
      %v4533 = vpack.c.bf16 %v4500, %v4499
      %v4534 = vpack.c.bf16 %v4502, %v4501
      %v4535 = vpack.c.bf16 %v4504, %v4503
      %v4536 = vpack.c.bf16 %v4506, %v4505
      %v4537 = vpack.c.bf16 %v4508, %v4507
      %v4538 = vpack.c.bf16 %v4510, %v4509
      %v4539 = vpack.c.bf16 %v4512, %v4511
      %v4540 = vpack.c.bf16 %v4514, %v4513
      %v4541 = vpack.c.bf16 %v4516, %v4515
      %v4542 = vpack.c.bf16 %v4518, %v4517
      %v4543 = vpack.c.bf16 %v4520, %v4519
      %v4544 = vpack.c.bf16 %v4522, %v4521
      %v4545 = vpack.c.bf16 %v4524, %v4523
      %v4546 = vpack.c.bf16 %v4526, %v4525
      %v4547 = vpack.c.bf16 %v4528, %v4527
      %v4548 = vpack.c.bf16 %v4530, %v4529
      %v4549 = vpack.c.bf16 %v4532, %v4531
      %s4550 = scalar_lea.vmem %s475, 64
      %v4551 = vld [vmem:[%s4550] sm:$0xf]
      %v4552 = vld [vmem:[%s4550 + $0x4] sm:$0xf]
      %v4553 = vld [vmem:[%s4550 + $0x8] sm:$0xf]
      %v4554 = vld [vmem:[%s4550 + $0xc] sm:$0xf]
      %v4555 = vld [vmem:[%s4550 + $0x10] sm:$0xf]
      %v4556 = vld [vmem:[%s4550 + $0x14] sm:$0xf]
      %v4557 = vld [vmem:[%s4550 + $0x18] sm:$0xf]
      %v4558 = vld [vmem:[%s4550 + $0x1c] sm:$0xf]
      %s4559 = scalar_lea.vmem %s481, 2
      %v4560 = vld [vmem:[%s4559] sm:$0x1]
      %v4562 = vperm.slane %v4560, 0
      %v4572 = vunpack.c.l.b16 %v4551
      %v4573 = vunpack.c.l.b16 %v4552
      %v4574 = vunpack.c.l.b16 %v4553
      %v4575 = vunpack.c.l.b16 %v4554
      %v4576 = vunpack.c.l.b16 %v4555
      %v4577 = vunpack.c.l.b16 %v4556
      %v4578 = vunpack.c.l.b16 %v4557
      %v4579 = vunpack.c.l.b16 %v4558
      %v4580 = vpack.c.b16 %v4573, %v4572
      %v4581 = vpack.c.b16 %v4575, %v4574
      %v4582 = vpack.c.b16 %v4577, %v4576
      %v4583 = vpack.c.b16 %v4579, %v4578
      %v4589 = vsel %vm1082, %v4533, 0
      %v4592 = vsel %vm1082, %v4534, 0
      %v4595 = vsel %vm1082, %v4535, 0
      %v4598 = vsel %vm1082, %v4536, 0
      %v4601 = vsel %vm1082, %v4537, 0
      %v4604 = vsel %vm1082, %v4538, 0
      %v4607 = vsel %vm1082, %v4539, 0
      %v4610 = vsel %vm1082, %v4540, 0
      %v4613 = vsel %vm1082, %v4541, 0
      %v4616 = vsel %vm1082, %v4542, 0
      %v4619 = vsel %vm1082, %v4543, 0
      %v4622 = vsel %vm1082, %v4544, 0
      %v4625 = vsel %vm1082, %v4545, 0
      %v4628 = vsel %vm1082, %v4546, 0
      %v4631 = vsel %vm1082, %v4547, 0
      %v4634 = vsel %vm1082, %v4548, 0
      %v4637 = vsel %vm1082, %v4549, 0
      %4639 = vmatpush.bf16.msra.mxu0 0
      %4640 = vmatpush.bf16.msra.mxu0 0
      %4641 = vmatpush.bf16.msra.mxu0 0
      %4642 = vmatpush.bf16.msra.mxu0 0
      %4643 = vmatpush.bf16.msra.mxu0 %v4583
      %4644 = vmatpush.bf16.msra.mxu0 %v4582
      %4645 = vmatpush.bf16.msra.mxu0 %v4581
      %4646 = vmatpush.bf16.msra.mxu0 %v4580
      %4647 = vmatmul.bf16.gmra.mxu0 %v4589
      %v4648 = vpop.f32.mrf.mxu0
      %v4649 = vadd.f32 %v4562, %v4648
      %v4650 = vpop.f32.mrf.mxu0
      %v4651 = vadd.f32 %v4562, %v4650
      %4652 = vmatmul.bf16.gmra.mxu0 %v4592
      %v4653 = vpop.f32.mrf.mxu0
      %v4654 = vadd.f32 %v4562, %v4653
      %v4655 = vpop.f32.mrf.mxu0
      %v4656 = vadd.f32 %v4562, %v4655
      %4657 = vmatmul.bf16.gmra.mxu0 %v4595
      %v4658 = vpop.f32.mrf.mxu0
      %v4659 = vadd.f32 %v4562, %v4658
      %v4660 = vpop.f32.mrf.mxu0
      %v4661 = vadd.f32 %v4562, %v4660
      %4662 = vmatmul.bf16.gmra.mxu0 %v4598
      %v4663 = vpop.f32.mrf.mxu0
      %v4664 = vadd.f32 %v4562, %v4663
      %v4665 = vpop.f32.mrf.mxu0
      %v4666 = vadd.f32 %v4562, %v4665
      %4667 = vmatmul.bf16.gmra.mxu0 %v4601
      %v4668 = vpop.f32.mrf.mxu0
      %v4669 = vadd.f32 %v4562, %v4668
      %v4670 = vpop.f32.mrf.mxu0
      %v4671 = vadd.f32 %v4562, %v4670
      %4672 = vmatmul.bf16.gmra.mxu0 %v4604
      %v4673 = vpop.f32.mrf.mxu0
      %v4674 = vadd.f32 %v4562, %v4673
      %v4675 = vpop.f32.mrf.mxu0
      %v4676 = vadd.f32 %v4562, %v4675
      %4677 = vmatmul.bf16.gmra.mxu0 %v4607
      %v4678 = vpop.f32.mrf.mxu0
      %v4679 = vadd.f32 %v4562, %v4678
      %v4680 = vpop.f32.mrf.mxu0
      %v4681 = vadd.f32 %v4562, %v4680
      %4682 = vmatmul.bf16.gmra.mxu0 %v4610
      %v4683 = vpop.f32.mrf.mxu0
      %v4684 = vadd.f32 %v4562, %v4683
      %v4685 = vpop.f32.mrf.mxu0
      %v4686 = vadd.f32 %v4562, %v4685
      %4687 = vmatmul.bf16.gmra.mxu0 %v4613
      %v4688 = vpop.f32.mrf.mxu0
      %v4689 = vadd.f32 %v4562, %v4688
      %v4690 = vpop.f32.mrf.mxu0
      %v4691 = vadd.f32 %v4562, %v4690
      %4692 = vmatmul.bf16.gmra.mxu0 %v4616
      %v4693 = vpop.f32.mrf.mxu0
      %v4694 = vadd.f32 %v4562, %v4693
      %v4695 = vpop.f32.mrf.mxu0
      %v4696 = vadd.f32 %v4562, %v4695
      %4697 = vmatmul.bf16.gmra.mxu0 %v4619
      %v4698 = vpop.f32.mrf.mxu0
      %v4699 = vadd.f32 %v4562, %v4698
      %v4700 = vpop.f32.mrf.mxu0
      %v4701 = vadd.f32 %v4562, %v4700
      %4702 = vmatmul.bf16.gmra.mxu0 %v4622
      %v4703 = vpop.f32.mrf.mxu0
      %v4704 = vadd.f32 %v4562, %v4703
      %v4705 = vpop.f32.mrf.mxu0
      %v4706 = vadd.f32 %v4562, %v4705
      %4707 = vmatmul.bf16.gmra.mxu0 %v4625
      %v4708 = vpop.f32.mrf.mxu0
      %v4709 = vadd.f32 %v4562, %v4708
      %v4710 = vpop.f32.mrf.mxu0
      %v4711 = vadd.f32 %v4562, %v4710
      %4712 = vmatmul.bf16.gmra.mxu0 %v4628
      %v4713 = vpop.f32.mrf.mxu0
      %v4714 = vadd.f32 %v4562, %v4713
      %v4715 = vpop.f32.mrf.mxu0
      %v4716 = vadd.f32 %v4562, %v4715
      %4717 = vmatmul.bf16.gmra.mxu0 %v4631
      %v4718 = vpop.f32.mrf.mxu0
      %v4719 = vadd.f32 %v4562, %v4718
      %v4720 = vpop.f32.mrf.mxu0
      %v4721 = vadd.f32 %v4562, %v4720
      %4722 = vmatmul.bf16.gmra.mxu0 %v4634
      %v4723 = vpop.f32.mrf.mxu0
      %v4724 = vadd.f32 %v4562, %v4723
      %v4725 = vpop.f32.mrf.mxu0
      %v4726 = vadd.f32 %v4562, %v4725
      %4727 = vmatmul.bf16.gmra.mxu0 %v4637
      %v4728 = vpop.f32.mrf.mxu0
      %v4729 = vadd.f32 %v4562, %v4728
      %v4730 = vpop.f32.mrf.mxu0
      %v4731 = vadd.f32 %v4562, %v4730
      %4732 = vdwg.mxu0
      %s4733 = scalar_lea.vmem %s475, 96
      %v4734 = vld [vmem:[%s4733] sm:$0xf]
      %v4735 = vld [vmem:[%s4733 + $0x4] sm:$0xf]
      %v4736 = vld [vmem:[%s4733 + $0x8] sm:$0xf]
      %v4737 = vld [vmem:[%s4733 + $0xc] sm:$0xf]
      %v4738 = vld [vmem:[%s4733 + $0x10] sm:$0xf]
      %v4739 = vld [vmem:[%s4733 + $0x14] sm:$0xf]
      %v4740 = vld [vmem:[%s4733 + $0x18] sm:$0xf]
      %v4741 = vld [vmem:[%s4733 + $0x1c] sm:$0xf]
      %s4742 = scalar_lea.vmem %s481, 3
      %v4743 = vld [vmem:[%s4742] sm:$0x1]
      %v4745 = vperm.slane %v4743, 0
      %v4755 = vunpack.c.l.b16 %v4734
      %v4756 = vunpack.c.l.b16 %v4735
      %v4757 = vunpack.c.l.b16 %v4736
      %v4758 = vunpack.c.l.b16 %v4737
      %v4759 = vunpack.c.l.b16 %v4738
      %v4760 = vunpack.c.l.b16 %v4739
      %v4761 = vunpack.c.l.b16 %v4740
      %v4762 = vunpack.c.l.b16 %v4741
      %v4763 = vpack.c.b16 %v4756, %v4755
      %v4764 = vpack.c.b16 %v4758, %v4757
      %v4765 = vpack.c.b16 %v4760, %v4759
      %v4766 = vpack.c.b16 %v4762, %v4761
      %4771 = vmatpush.bf16.msra.mxu0 0
      %4772 = vmatpush.bf16.msra.mxu0 0
      %4773 = vmatpush.bf16.msra.mxu0 0
      %4774 = vmatpush.bf16.msra.mxu0 0
      %4775 = vmatpush.bf16.msra.mxu0 %v4766
      %4776 = vmatpush.bf16.msra.mxu0 %v4765
      %4777 = vmatpush.bf16.msra.mxu0 %v4764
      %4778 = vmatpush.bf16.msra.mxu0 %v4763
      %4779 = vmatmul.bf16.gmra.mxu0 %v4589
      %v4780 = vpop.f32.mrf.mxu0
      %v4781 = vadd.f32 %v4745, %v4780
      %v4782 = vpop.f32.mrf.mxu0
      %v4783 = vadd.f32 %v4745, %v4782
      %4784 = vmatmul.bf16.gmra.mxu0 %v4592
      %v4785 = vpop.f32.mrf.mxu0
      %v4786 = vadd.f32 %v4745, %v4785
      %v4787 = vpop.f32.mrf.mxu0
      %v4788 = vadd.f32 %v4745, %v4787
      %4789 = vmatmul.bf16.gmra.mxu0 %v4595
      %v4790 = vpop.f32.mrf.mxu0
      %v4791 = vadd.f32 %v4745, %v4790
      %v4792 = vpop.f32.mrf.mxu0
      %v4793 = vadd.f32 %v4745, %v4792
      %4794 = vmatmul.bf16.gmra.mxu0 %v4598
      %v4795 = vpop.f32.mrf.mxu0
      %v4796 = vadd.f32 %v4745, %v4795
      %v4797 = vpop.f32.mrf.mxu0
      %v4798 = vadd.f32 %v4745, %v4797
      %4799 = vmatmul.bf16.gmra.mxu0 %v4601
      %v4800 = vpop.f32.mrf.mxu0
      %v4801 = vadd.f32 %v4745, %v4800
      %v4802 = vpop.f32.mrf.mxu0
      %v4803 = vadd.f32 %v4745, %v4802
      %4804 = vmatmul.bf16.gmra.mxu0 %v4604
      %v4805 = vpop.f32.mrf.mxu0
      %v4806 = vadd.f32 %v4745, %v4805
      %v4807 = vpop.f32.mrf.mxu0
      %v4808 = vadd.f32 %v4745, %v4807
      %4809 = vmatmul.bf16.gmra.mxu0 %v4607
      %v4810 = vpop.f32.mrf.mxu0
      %v4811 = vadd.f32 %v4745, %v4810
      %v4812 = vpop.f32.mrf.mxu0
      %v4813 = vadd.f32 %v4745, %v4812
      %4814 = vmatmul.bf16.gmra.mxu0 %v4610
      %v4815 = vpop.f32.mrf.mxu0
      %v4816 = vadd.f32 %v4745, %v4815
      %v4817 = vpop.f32.mrf.mxu0
      %v4818 = vadd.f32 %v4745, %v4817
      %4819 = vmatmul.bf16.gmra.mxu0 %v4613
      %v4820 = vpop.f32.mrf.mxu0
      %v4821 = vadd.f32 %v4745, %v4820
      %v4822 = vpop.f32.mrf.mxu0
      %v4823 = vadd.f32 %v4745, %v4822
      %4824 = vmatmul.bf16.gmra.mxu0 %v4616
      %v4825 = vpop.f32.mrf.mxu0
      %v4826 = vadd.f32 %v4745, %v4825
      %v4827 = vpop.f32.mrf.mxu0
      %v4828 = vadd.f32 %v4745, %v4827
      %4829 = vmatmul.bf16.gmra.mxu0 %v4619
      %v4830 = vpop.f32.mrf.mxu0
      %v4831 = vadd.f32 %v4745, %v4830
      %v4832 = vpop.f32.mrf.mxu0
      %v4833 = vadd.f32 %v4745, %v4832
      %4834 = vmatmul.bf16.gmra.mxu0 %v4622
      %v4835 = vpop.f32.mrf.mxu0
      %v4836 = vadd.f32 %v4745, %v4835
      %v4837 = vpop.f32.mrf.mxu0
      %v4838 = vadd.f32 %v4745, %v4837
      %4839 = vmatmul.bf16.gmra.mxu0 %v4625
      %v4840 = vpop.f32.mrf.mxu0
      %v4841 = vadd.f32 %v4745, %v4840
      %v4842 = vpop.f32.mrf.mxu0
      %v4843 = vadd.f32 %v4745, %v4842
      %4844 = vmatmul.bf16.gmra.mxu0 %v4628
      %v4845 = vpop.f32.mrf.mxu0
      %v4846 = vadd.f32 %v4745, %v4845
      %v4847 = vpop.f32.mrf.mxu0
      %v4848 = vadd.f32 %v4745, %v4847
      %4849 = vmatmul.bf16.gmra.mxu0 %v4631
      %v4850 = vpop.f32.mrf.mxu0
      %v4851 = vadd.f32 %v4745, %v4850
      %v4852 = vpop.f32.mrf.mxu0
      %v4853 = vadd.f32 %v4745, %v4852
      %4854 = vmatmul.bf16.gmra.mxu0 %v4634
      %v4855 = vpop.f32.mrf.mxu0
      %v4856 = vadd.f32 %v4745, %v4855
      %v4857 = vpop.f32.mrf.mxu0
      %v4858 = vadd.f32 %v4745, %v4857
      %4859 = vmatmul.bf16.gmra.mxu0 %v4637
      %v4860 = vpop.f32.mrf.mxu0
      %v4861 = vadd.f32 %v4745, %v4860
      %v4862 = vpop.f32.mrf.mxu0
      %v4863 = vadd.f32 %v4745, %v4862
      %4864 = vdwg.mxu0
      %v4865 = vmul.f32 %v4281, %v4649
      %v4866 = vmul.f32 %v4282, %v4651
      %v4867 = vmul.f32 %v4283, %v4654
      %v4868 = vmul.f32 %v4284, %v4656
      %v4869 = vmul.f32 %v4285, %v4659
      %v4870 = vmul.f32 %v4286, %v4661
      %v4871 = vmul.f32 %v4287, %v4664
      %v4872 = vmul.f32 %v4288, %v4666
      %v4873 = vmul.f32 %v4289, %v4669
      %v4874 = vmul.f32 %v4290, %v4671
      %v4875 = vmul.f32 %v4291, %v4674
      %v4876 = vmul.f32 %v4292, %v4676
      %v4877 = vmul.f32 %v4293, %v4679
      %v4878 = vmul.f32 %v4294, %v4681
      %v4879 = vmul.f32 %v4295, %v4684
      %v4880 = vmul.f32 %v4296, %v4686
      %v4881 = vmul.f32 %v4297, %v4689
      %v4882 = vmul.f32 %v4298, %v4691
      %v4883 = vmul.f32 %v4299, %v4694
      %v4884 = vmul.f32 %v4300, %v4696
      %v4885 = vmul.f32 %v4301, %v4699
      %v4886 = vmul.f32 %v4302, %v4701
      %v4887 = vmul.f32 %v4303, %v4704
      %v4888 = vmul.f32 %v4304, %v4706
      %v4889 = vmul.f32 %v4305, %v4709
      %v4890 = vmul.f32 %v4306, %v4711
      %v4891 = vmul.f32 %v4307, %v4714
      %v4892 = vmul.f32 %v4308, %v4716
      %v4893 = vmul.f32 %v4309, %v4719
      %v4894 = vmul.f32 %v4310, %v4721
      %v4895 = vmul.f32 %v4311, %v4724
      %v4896 = vmul.f32 %v4312, %v4726
      %v4897 = vmul.f32 %v4313, %v4729
      %v4898 = vmul.f32 %v4314, %v4731
      %v4899 = vadd.f32 %v4865, %v4781
      %v4900 = vadd.f32 %v4866, %v4783
      %v4901 = vadd.f32 %v4867, %v4786
      %v4902 = vadd.f32 %v4868, %v4788
      %v4903 = vadd.f32 %v4869, %v4791
      %v4904 = vadd.f32 %v4870, %v4793
      %v4905 = vadd.f32 %v4871, %v4796
      %v4906 = vadd.f32 %v4872, %v4798
      %v4907 = vadd.f32 %v4873, %v4801
      %v4908 = vadd.f32 %v4874, %v4803
      %v4909 = vadd.f32 %v4875, %v4806
      %v4910 = vadd.f32 %v4876, %v4808
      %v4911 = vadd.f32 %v4877, %v4811
      %v4912 = vadd.f32 %v4878, %v4813
      %v4913 = vadd.f32 %v4879, %v4816
      %v4914 = vadd.f32 %v4880, %v4818
      %v4915 = vadd.f32 %v4881, %v4821
      %v4916 = vadd.f32 %v4882, %v4823
      %v4917 = vadd.f32 %v4883, %v4826
      %v4918 = vadd.f32 %v4884, %v4828
      %v4919 = vadd.f32 %v4885, %v4831
      %v4920 = vadd.f32 %v4886, %v4833
      %v4921 = vadd.f32 %v4887, %v4836
      %v4922 = vadd.f32 %v4888, %v4838
      %v4923 = vadd.f32 %v4889, %v4841
      %v4924 = vadd.f32 %v4890, %v4843
      %v4925 = vadd.f32 %v4891, %v4846
      %v4926 = vadd.f32 %v4892, %v4848
      %v4927 = vadd.f32 %v4893, %v4851
      %v4928 = vadd.f32 %v4894, %v4853
      %v4929 = vadd.f32 %v4895, %v4856
      %v4930 = vadd.f32 %v4896, %v4858
      %v4931 = vadd.f32 %v4897, %v4861
      %v4932 = vadd.f32 %v4898, %v4863
      %v4933 = vmul.f32 %v4899, %v1431
      %v4934 = vmul.f32 %v4900, %v1436
      %v4935 = vmul.f32 %v4901, %v1441
      %v4936 = vmul.f32 %v4902, %v1446
      %v4937 = vmul.f32 %v4903, %v1451
      %v4938 = vmul.f32 %v4904, %v1456
      %v4939 = vmul.f32 %v4905, %v1461
      %v4940 = vmul.f32 %v4906, %v1466
      %v4941 = vmul.f32 %v4907, %v1471
      %v4942 = vmul.f32 %v4908, %v1476
      %v4943 = vmul.f32 %v4909, %v1481
      %v4944 = vmul.f32 %v4910, %v1486
      %v4945 = vmul.f32 %v4911, %v1491
      %v4946 = vmul.f32 %v4912, %v1496
      %v4947 = vmul.f32 %v4913, %v1501
      %v4948 = vmul.f32 %v4914, %v1506
      %v4949 = vmul.f32 %v4915, %v1511
      %v4950 = vmul.f32 %v4916, %v1516
      %v4951 = vmul.f32 %v4917, %v1521
      %v4952 = vmul.f32 %v4918, %v1526
      %v4953 = vmul.f32 %v4919, %v1531
      %v4954 = vmul.f32 %v4920, %v1536
      %v4955 = vmul.f32 %v4921, %v1541
      %v4956 = vmul.f32 %v4922, %v1546
      %v4957 = vmul.f32 %v4923, %v1551
      %v4958 = vmul.f32 %v4924, %v1556
      %v4959 = vmul.f32 %v4925, %v1561
      %v4960 = vmul.f32 %v4926, %v1566
      %v4961 = vmul.f32 %v4927, %v1571
      %v4962 = vmul.f32 %v4928, %v1576
      %v4963 = vmul.f32 %v4929, %v1581
      %v4964 = vmul.f32 %v4930, %v1586
      %v4965 = vmul.f32 %v4931, %v1591
      %v4966 = vmul.f32 %v4932, %v1596
      %v4967 = vpack.c.bf16 %v4933, %v4933
      %v4968 = vpack.c.bf16 %v4934, %v4934
      %v4969 = vpack.c.bf16 %v4935, %v4935
      %v4970 = vpack.c.bf16 %v4936, %v4936
      %v4971 = vpack.c.bf16 %v4937, %v4937
      %v4972 = vpack.c.bf16 %v4938, %v4938
      %v4973 = vpack.c.bf16 %v4939, %v4939
      %v4974 = vpack.c.bf16 %v4940, %v4940
      %v4975 = vpack.c.bf16 %v4941, %v4941
      %v4976 = vpack.c.bf16 %v4942, %v4942
      %v4977 = vpack.c.bf16 %v4943, %v4943
      %v4978 = vpack.c.bf16 %v4944, %v4944
      %v4979 = vpack.c.bf16 %v4945, %v4945
      %v4980 = vpack.c.bf16 %v4946, %v4946
      %v4981 = vpack.c.bf16 %v4947, %v4947
      %v4982 = vpack.c.bf16 %v4948, %v4948
      %v4983 = vpack.c.bf16 %v4949, %v4949
      %v4984 = vpack.c.bf16 %v4950, %v4950
      %v4985 = vpack.c.bf16 %v4951, %v4951
      %v4986 = vpack.c.bf16 %v4952, %v4952
      %v4987 = vpack.c.bf16 %v4953, %v4953
      %v4988 = vpack.c.bf16 %v4954, %v4954
      %v4989 = vpack.c.bf16 %v4955, %v4955
      %v4990 = vpack.c.bf16 %v4956, %v4956
      %v4991 = vpack.c.bf16 %v4957, %v4957
      %v4992 = vpack.c.bf16 %v4958, %v4958
      %v4993 = vpack.c.bf16 %v4959, %v4959
      %v4994 = vpack.c.bf16 %v4960, %v4960
      %v4995 = vpack.c.bf16 %v4961, %v4961
      %v4996 = vpack.c.bf16 %v4962, %v4962
      %v4997 = vpack.c.bf16 %v4963, %v4963
      %v4998 = vpack.c.bf16 %v4964, %v4964
      %v4999 = vpack.c.bf16 %v4965, %v4965
      %v5000 = vpack.c.bf16 %v4966, %v4966
      %v5033 = vunpack.c.l.b16 %v4967
      %v5034 = vunpack.c.l.b16 %v4968
      %v5035 = vunpack.c.l.b16 %v4969
      %v5036 = vunpack.c.l.b16 %v4970
      %v5037 = vunpack.c.l.b16 %v4971
      %v5038 = vunpack.c.l.b16 %v4972
      %v5039 = vunpack.c.l.b16 %v4973
      %v5040 = vunpack.c.l.b16 %v4974
      %v5041 = vunpack.c.l.b16 %v4975
      %v5042 = vunpack.c.l.b16 %v4976
      %v5043 = vunpack.c.l.b16 %v4977
      %v5044 = vunpack.c.l.b16 %v4978
      %v5045 = vunpack.c.l.b16 %v4979
      %v5046 = vunpack.c.l.b16 %v4980
      %v5047 = vunpack.c.l.b16 %v4981
      %v5048 = vunpack.c.l.b16 %v4982
      %v5049 = vunpack.c.l.b16 %v4983
      %v5050 = vunpack.c.l.b16 %v4984
      %v5051 = vunpack.c.l.b16 %v4985
      %v5052 = vunpack.c.l.b16 %v4986
      %v5053 = vunpack.c.l.b16 %v4987
      %v5054 = vunpack.c.l.b16 %v4988
      %v5055 = vunpack.c.l.b16 %v4989
      %v5056 = vunpack.c.l.b16 %v4990
      %v5057 = vunpack.c.l.b16 %v4991
      %v5058 = vunpack.c.l.b16 %v4992
      %v5059 = vunpack.c.l.b16 %v4993
      %v5060 = vunpack.c.l.b16 %v4994
      %v5061 = vunpack.c.l.b16 %v4995
      %v5062 = vunpack.c.l.b16 %v4996
      %v5063 = vunpack.c.l.b16 %v4997
      %v5064 = vunpack.c.l.b16 %v4998
      %v5065 = vpack.c.b16 %v5034, %v5033
      %v5066 = vpack.c.b16 %v5036, %v5035
      %v5067 = vpack.c.b16 %v5038, %v5037
      %v5068 = vpack.c.b16 %v5040, %v5039
      %v5069 = vpack.c.b16 %v5042, %v5041
      %v5070 = vpack.c.b16 %v5044, %v5043
      %v5071 = vpack.c.b16 %v5046, %v5045
      %v5072 = vpack.c.b16 %v5048, %v5047
      %v5073 = vpack.c.b16 %v5050, %v5049
      %v5074 = vpack.c.b16 %v5052, %v5051
      %v5075 = vpack.c.b16 %v5054, %v5053
      %v5076 = vpack.c.b16 %v5056, %v5055
      %v5077 = vpack.c.b16 %v5058, %v5057
      %v5078 = vpack.c.b16 %v5060, %v5059
      %v5079 = vpack.c.b16 %v5062, %v5061
      %v5080 = vpack.c.b16 %v5064, %v5063
      %v5081 = vrot.slane %v5065, 7
      %v5082 = vrot.slane %v5066, 7
      %v5083 = vsel %vm1746, %v5081, %v5082
      %v5084 = vrot.slane %v5067, 7
      %v5085 = vsel %vm1746, %v5082, %v5084
      %v5086 = vrot.slane %v5068, 7
      %v5087 = vsel %vm1746, %v5084, %v5086
      %v5088 = vrot.slane %v5069, 7
      %v5089 = vsel %vm1746, %v5086, %v5088
      %v5090 = vrot.slane %v5070, 7
      %v5091 = vsel %vm1746, %v5088, %v5090
      %v5092 = vrot.slane %v5071, 7
      %v5093 = vsel %vm1746, %v5090, %v5092
      %v5094 = vrot.slane %v5072, 7
      %v5095 = vsel %vm1746, %v5092, %v5094
      %v5096 = vrot.slane %v5073, 7
      %v5097 = vsel %vm1746, %v5094, %v5096
      %v5098 = vrot.slane %v5074, 7
      %v5099 = vsel %vm1746, %v5096, %v5098
      %v5100 = vrot.slane %v5075, 7
      %v5101 = vsel %vm1746, %v5098, %v5100
      %v5102 = vrot.slane %v5076, 7
      %v5103 = vsel %vm1746, %v5100, %v5102
      %v5104 = vrot.slane %v5077, 7
      %v5105 = vsel %vm1746, %v5102, %v5104
      %v5106 = vrot.slane %v5078, 7
      %v5107 = vsel %vm1746, %v5104, %v5106
      %v5108 = vrot.slane %v5079, 7
      %v5109 = vsel %vm1746, %v5106, %v5108
      %v5110 = vrot.slane %v5080, 7
      %v5111 = vsel %vm1746, %v5108, %v5110
      %v5113 = vsel %vm1778, 0, %v5081
      %v5115 = vunpack.c.l.b16 %v5113
      %v5116 = vunpack.c.h.b16 %v5113
      %v5117 = vunpack.c.l.b16 %v5083
      %v5118 = vunpack.c.h.b16 %v5083
      %v5119 = vunpack.c.l.b16 %v5085
      %v5120 = vunpack.c.h.b16 %v5085
      %v5121 = vunpack.c.l.b16 %v5087
      %v5122 = vunpack.c.h.b16 %v5087
      %v5123 = vunpack.c.l.b16 %v5089
      %v5124 = vunpack.c.h.b16 %v5089
      %v5125 = vunpack.c.l.b16 %v5091
      %v5126 = vunpack.c.h.b16 %v5091
      %v5127 = vunpack.c.l.b16 %v5093
      %v5128 = vunpack.c.h.b16 %v5093
      %v5129 = vunpack.c.l.b16 %v5095
      %v5130 = vunpack.c.h.b16 %v5095
      %v5131 = vunpack.c.l.b16 %v5097
      %v5132 = vunpack.c.h.b16 %v5097
      %v5133 = vunpack.c.l.b16 %v5099
      %v5134 = vunpack.c.h.b16 %v5099
      %v5135 = vunpack.c.l.b16 %v5101
      %v5136 = vunpack.c.h.b16 %v5101
      %v5137 = vunpack.c.l.b16 %v5103
      %v5138 = vunpack.c.h.b16 %v5103
      %v5139 = vunpack.c.l.b16 %v5105
      %v5140 = vunpack.c.h.b16 %v5105
      %v5141 = vunpack.c.l.b16 %v5107
      %v5142 = vunpack.c.h.b16 %v5107
      %v5143 = vunpack.c.l.b16 %v5109
      %v5144 = vunpack.c.h.b16 %v5109
      %v5145 = vunpack.c.l.b16 %v5111
      %v5146 = vunpack.c.h.b16 %v5111
      %v5147 = vpack.c.b16 %v5115, %v5115
      %v5148 = vpack.c.b16 %v5116, %v5116
      %v5149 = vpack.c.b16 %v5117, %v5117
      %v5150 = vpack.c.b16 %v5118, %v5118
      %v5151 = vpack.c.b16 %v5119, %v5119
      %v5152 = vpack.c.b16 %v5120, %v5120
      %v5153 = vpack.c.b16 %v5121, %v5121
      %v5154 = vpack.c.b16 %v5122, %v5122
      %v5155 = vpack.c.b16 %v5123, %v5123
      %v5156 = vpack.c.b16 %v5124, %v5124
      %v5157 = vpack.c.b16 %v5125, %v5125
      %v5158 = vpack.c.b16 %v5126, %v5126
      %v5159 = vpack.c.b16 %v5127, %v5127
      %v5160 = vpack.c.b16 %v5128, %v5128
      %v5161 = vpack.c.b16 %v5129, %v5129
      %v5162 = vpack.c.b16 %v5130, %v5130
      %v5163 = vpack.c.b16 %v5131, %v5131
      %v5164 = vpack.c.b16 %v5132, %v5132
      %v5165 = vpack.c.b16 %v5133, %v5133
      %v5166 = vpack.c.b16 %v5134, %v5134
      %v5167 = vpack.c.b16 %v5135, %v5135
      %v5168 = vpack.c.b16 %v5136, %v5136
      %v5169 = vpack.c.b16 %v5137, %v5137
      %v5170 = vpack.c.b16 %v5138, %v5138
      %v5171 = vpack.c.b16 %v5139, %v5139
      %v5172 = vpack.c.b16 %v5140, %v5140
      %v5173 = vpack.c.b16 %v5141, %v5141
      %v5174 = vpack.c.b16 %v5142, %v5142
      %v5175 = vpack.c.b16 %v5143, %v5143
      %v5176 = vpack.c.b16 %v5144, %v5144
      %v5177 = vpack.c.b16 %v5145, %v5145
      %v5178 = vpack.c.b16 %v5146, %v5146
      %5211 = vst.msk [vmem:[#allocation2] sm:$0xf] %vm1886, %v1818
      %5212 = vst.msk [vmem:[#allocation2 + $0x14] sm:$0xf] %vm1886, %v1819
      %5213 = vst.msk [vmem:[#allocation2 + $0x28] sm:$0xf] %vm1886, %v5147
      %5214 = vst.msk [vmem:[#allocation2 + $0x3c] sm:$0xf] %vm1886, %v5148
      %5215 = vst.msk [vmem:[#allocation2 + $0x50] sm:$0xf] %vm1886, %v5149
      %5216 = vst.msk [vmem:[#allocation2 + $0x64] sm:$0xf] %vm1886, %v5150
      %5217 = vst.msk [vmem:[#allocation2 + $0x78] sm:$0xf] %vm1886, %v5151
      %5218 = vst.msk [vmem:[#allocation2 + $0x8c] sm:$0xf] %vm1886, %v5152
      %5219 = vst.msk [vmem:[#allocation2 + $0xa0] sm:$0xf] %vm1886, %v5153
      %5220 = vst.msk [vmem:[#allocation2 + $0xb4] sm:$0xf] %vm1886, %v5154
      %5221 = vst.msk [vmem:[#allocation2 + $0xc8] sm:$0xf] %vm1886, %v5155
      %5222 = vst.msk [vmem:[#allocation2 + $0xdc] sm:$0xf] %vm1886, %v5156
      %5223 = vst.msk [vmem:[#allocation2 + $0xf0] sm:$0xf] %vm1886, %v5157
      %5224 = vst.msk [vmem:[#allocation2 + $0x104] sm:$0xf] %vm1886, %v5158
      %5225 = vst.msk [vmem:[#allocation2 + $0x118] sm:$0xf] %vm1886, %v5159
      %5226 = vst.msk [vmem:[#allocation2 + $0x12c] sm:$0xf] %vm1886, %v5160
      %5227 = vst.msk [vmem:[#allocation2 + $0x140] sm:$0xf] %vm1886, %v5161
      %5228 = vst.msk [vmem:[#allocation2 + $0x154] sm:$0xf] %vm1886, %v5162
      %5229 = vst.msk [vmem:[#allocation2 + $0x168] sm:$0xf] %vm1886, %v5163
      %5230 = vst.msk [vmem:[#allocation2 + $0x17c] sm:$0xf] %vm1886, %v5164
      %5231 = vst.msk [vmem:[#allocation2 + $0x190] sm:$0xf] %vm1886, %v5165
      %5232 = vst.msk [vmem:[#allocation2 + $0x1a4] sm:$0xf] %vm1886, %v5166
      %5233 = vst.msk [vmem:[#allocation2 + $0x1b8] sm:$0xf] %vm1886, %v5167
      %5234 = vst.msk [vmem:[#allocation2 + $0x1cc] sm:$0xf] %vm1886, %v5168
      %5235 = vst.msk [vmem:[#allocation2 + $0x1e0] sm:$0xf] %vm1886, %v5169
      %5236 = vst.msk [vmem:[#allocation2 + $0x1f4] sm:$0xf] %vm1886, %v5170
      %5237 = vst.msk [vmem:[#allocation2 + $0x208] sm:$0xf] %vm1886, %v5171
      %5238 = vst.msk [vmem:[#allocation2 + $0x21c] sm:$0xf] %vm1886, %v5172
      %5239 = vst.msk [vmem:[#allocation2 + $0x230] sm:$0xf] %vm1886, %v5173
      %5240 = vst.msk [vmem:[#allocation2 + $0x244] sm:$0xf] %vm1886, %v5174
      %5241 = vst.msk [vmem:[#allocation2 + $0x258] sm:$0xf] %vm1886, %v5175
      %5242 = vst.msk [vmem:[#allocation2 + $0x26c] sm:$0xf] %vm1886, %v5176
      %5243 = vst.msk [vmem:[#allocation2 + $0x280] sm:$0xf] %vm1886, %v5177
      %5244 = vst.msk [vmem:[#allocation2 + $0x294] sm:$0xf] %vm1886, %v5178
      %v5246 = vshrl.u32 %v5065, 16
      %v5248 = vrot.slane %v5246, 7
      %v5249 = vshll.u32 %v5065, 16
      %v5251 = vor.u32 %v5248, %v5249
      %v5253 = vshrl.u32 %v5066, 16
      %v5255 = vrot.slane %v5253, 7
      %v5256 = vshll.u32 %v5066, 16
      %v5258 = vor.u32 %v5255, %v5256
      %v5259 = vsel %vm1921, %v5248, %v5258
      %v5261 = vshrl.u32 %v5067, 16
      %v5263 = vrot.slane %v5261, 7
      %v5264 = vshll.u32 %v5067, 16
      %v5266 = vor.u32 %v5263, %v5264
      %v5267 = vsel %vm1921, %v5255, %v5266
      %v5269 = vshrl.u32 %v5068, 16
      %v5271 = vrot.slane %v5269, 7
      %v5272 = vshll.u32 %v5068, 16
      %v5274 = vor.u32 %v5271, %v5272
      %v5275 = vsel %vm1921, %v5263, %v5274
      %v5277 = vshrl.u32 %v5069, 16
      %v5279 = vrot.slane %v5277, 7
      %v5280 = vshll.u32 %v5069, 16
      %v5282 = vor.u32 %v5279, %v5280
      %v5283 = vsel %vm1921, %v5271, %v5282
      %v5285 = vshrl.u32 %v5070, 16
      %v5287 = vrot.slane %v5285, 7
      %v5288 = vshll.u32 %v5070, 16
      %v5290 = vor.u32 %v5287, %v5288
      %v5291 = vsel %vm1921, %v5279, %v5290
      %v5293 = vshrl.u32 %v5071, 16
      %v5295 = vrot.slane %v5293, 7
      %v5296 = vshll.u32 %v5071, 16
      %v5298 = vor.u32 %v5295, %v5296
      %v5299 = vsel %vm1921, %v5287, %v5298
      %v5301 = vshrl.u32 %v5072, 16
      %v5303 = vrot.slane %v5301, 7
      %v5304 = vshll.u32 %v5072, 16
      %v5306 = vor.u32 %v5303, %v5304
      %v5307 = vsel %vm1921, %v5295, %v5306
      %v5309 = vshrl.u32 %v5073, 16
      %v5311 = vrot.slane %v5309, 7
      %v5312 = vshll.u32 %v5073, 16
      %v5314 = vor.u32 %v5311, %v5312
      %v5315 = vsel %vm1921, %v5303, %v5314
      %v5317 = vshrl.u32 %v5074, 16
      %v5319 = vrot.slane %v5317, 7
      %v5320 = vshll.u32 %v5074, 16
      %v5322 = vor.u32 %v5319, %v5320
      %v5323 = vsel %vm1921, %v5311, %v5322
      %v5325 = vshrl.u32 %v5075, 16
      %v5327 = vrot.slane %v5325, 7
      %v5328 = vshll.u32 %v5075, 16
      %v5330 = vor.u32 %v5327, %v5328
      %v5331 = vsel %vm1921, %v5319, %v5330
      %v5333 = vshrl.u32 %v5076, 16
      %v5335 = vrot.slane %v5333, 7
      %v5336 = vshll.u32 %v5076, 16
      %v5338 = vor.u32 %v5335, %v5336
      %v5339 = vsel %vm1921, %v5327, %v5338
      %v5341 = vshrl.u32 %v5077, 16
      %v5343 = vrot.slane %v5341, 7
      %v5344 = vshll.u32 %v5077, 16
      %v5346 = vor.u32 %v5343, %v5344
      %v5347 = vsel %vm1921, %v5335, %v5346
      %v5349 = vshrl.u32 %v5078, 16
      %v5351 = vrot.slane %v5349, 7
      %v5352 = vshll.u32 %v5078, 16
      %v5354 = vor.u32 %v5351, %v5352
      %v5355 = vsel %vm1921, %v5343, %v5354
      %v5357 = vshrl.u32 %v5079, 16
      %v5359 = vrot.slane %v5357, 7
      %v5360 = vshll.u32 %v5079, 16
      %v5362 = vor.u32 %v5359, %v5360
      %v5363 = vsel %vm1921, %v5351, %v5362
      %v5365 = vshrl.u32 %v5080, 16
      %v5367 = vrot.slane %v5365, 7
      %v5368 = vshll.u32 %v5080, 16
      %v5370 = vor.u32 %v5367, %v5368
      %v5371 = vsel %vm1921, %v5359, %v5370
      %v5373 = vsel %vm2050, 0, %v5251
      %v5375 = vunpack.c.l.b16 %v5373
      %v5376 = vunpack.c.h.b16 %v5373
      %v5377 = vunpack.c.l.b16 %v5259
      %v5378 = vunpack.c.h.b16 %v5259
      %v5379 = vunpack.c.l.b16 %v5267
      %v5380 = vunpack.c.h.b16 %v5267
      %v5381 = vunpack.c.l.b16 %v5275
      %v5382 = vunpack.c.h.b16 %v5275
      %v5383 = vunpack.c.l.b16 %v5283
      %v5384 = vunpack.c.h.b16 %v5283
      %v5385 = vunpack.c.l.b16 %v5291
      %v5386 = vunpack.c.h.b16 %v5291
      %v5387 = vunpack.c.l.b16 %v5299
      %v5388 = vunpack.c.h.b16 %v5299
      %v5389 = vunpack.c.l.b16 %v5307
      %v5390 = vunpack.c.h.b16 %v5307
      %v5391 = vunpack.c.l.b16 %v5315
      %v5392 = vunpack.c.h.b16 %v5315
      %v5393 = vunpack.c.l.b16 %v5323
      %v5394 = vunpack.c.h.b16 %v5323
      %v5395 = vunpack.c.l.b16 %v5331
      %v5396 = vunpack.c.h.b16 %v5331
      %v5397 = vunpack.c.l.b16 %v5339
      %v5398 = vunpack.c.h.b16 %v5339
      %v5399 = vunpack.c.l.b16 %v5347
      %v5400 = vunpack.c.h.b16 %v5347
      %v5401 = vunpack.c.l.b16 %v5355
      %v5402 = vunpack.c.h.b16 %v5355
      %v5403 = vunpack.c.l.b16 %v5363
      %v5404 = vunpack.c.h.b16 %v5363
      %v5405 = vunpack.c.l.b16 %v5371
      %v5406 = vunpack.c.h.b16 %v5371
      %v5407 = vpack.c.b16 %v5375, %v5375
      %v5408 = vpack.c.b16 %v5376, %v5376
      %v5409 = vpack.c.b16 %v5377, %v5377
      %v5410 = vpack.c.b16 %v5378, %v5378
      %v5411 = vpack.c.b16 %v5379, %v5379
      %v5412 = vpack.c.b16 %v5380, %v5380
      %v5413 = vpack.c.b16 %v5381, %v5381
      %v5414 = vpack.c.b16 %v5382, %v5382
      %v5415 = vpack.c.b16 %v5383, %v5383
      %v5416 = vpack.c.b16 %v5384, %v5384
      %v5417 = vpack.c.b16 %v5385, %v5385
      %v5418 = vpack.c.b16 %v5386, %v5386
      %v5419 = vpack.c.b16 %v5387, %v5387
      %v5420 = vpack.c.b16 %v5388, %v5388
      %v5421 = vpack.c.b16 %v5389, %v5389
      %v5422 = vpack.c.b16 %v5390, %v5390
      %v5423 = vpack.c.b16 %v5391, %v5391
      %v5424 = vpack.c.b16 %v5392, %v5392
      %v5425 = vpack.c.b16 %v5393, %v5393
      %v5426 = vpack.c.b16 %v5394, %v5394
      %v5427 = vpack.c.b16 %v5395, %v5395
      %v5428 = vpack.c.b16 %v5396, %v5396
      %v5429 = vpack.c.b16 %v5397, %v5397
      %v5430 = vpack.c.b16 %v5398, %v5398
      %v5431 = vpack.c.b16 %v5399, %v5399
      %v5432 = vpack.c.b16 %v5400, %v5400
      %v5433 = vpack.c.b16 %v5401, %v5401
      %v5434 = vpack.c.b16 %v5402, %v5402
      %v5435 = vpack.c.b16 %v5403, %v5403
      %v5436 = vpack.c.b16 %v5404, %v5404
      %v5437 = vpack.c.b16 %v5405, %v5405
      %v5438 = vpack.c.b16 %v5406, %v5406
      %5439 = vrot.lane.b32.xlu0 %v5407, 64
      %v5440 = vpop.permute.xlu0 %5439
      %5441 = vrot.lane.b32.xlu0 %v5408, 64
      %v5442 = vpop.permute.xlu0 %5441
      %5443 = vrot.lane.b32.xlu0 %v5409, 64
      %v5444 = vpop.permute.xlu0 %5443
      %5445 = vrot.lane.b32.xlu0 %v5410, 64
      %v5446 = vpop.permute.xlu0 %5445
      %5447 = vrot.lane.b32.xlu0 %v5411, 64
      %v5448 = vpop.permute.xlu0 %5447
      %5449 = vrot.lane.b32.xlu0 %v5412, 64
      %v5450 = vpop.permute.xlu0 %5449
      %5451 = vrot.lane.b32.xlu0 %v5413, 64
      %v5452 = vpop.permute.xlu0 %5451
      %5453 = vrot.lane.b32.xlu0 %v5414, 64
      %v5454 = vpop.permute.xlu0 %5453
      %5455 = vrot.lane.b32.xlu0 %v5415, 64
      %v5456 = vpop.permute.xlu0 %5455
      %5457 = vrot.lane.b32.xlu0 %v5416, 64
      %v5458 = vpop.permute.xlu0 %5457
      %5459 = vrot.lane.b32.xlu0 %v5417, 64
      %v5460 = vpop.permute.xlu0 %5459
      %5461 = vrot.lane.b32.xlu0 %v5418, 64
      %v5462 = vpop.permute.xlu0 %5461
      %5463 = vrot.lane.b32.xlu0 %v5419, 64
      %v5464 = vpop.permute.xlu0 %5463
      %5465 = vrot.lane.b32.xlu0 %v5420, 64
      %v5466 = vpop.permute.xlu0 %5465
      %5467 = vrot.lane.b32.xlu0 %v5421, 64
      %v5468 = vpop.permute.xlu0 %5467
      %5469 = vrot.lane.b32.xlu0 %v5422, 64
      %v5470 = vpop.permute.xlu0 %5469
      %5471 = vrot.lane.b32.xlu0 %v5423, 64
      %v5472 = vpop.permute.xlu0 %5471
      %5473 = vrot.lane.b32.xlu0 %v5424, 64
      %v5474 = vpop.permute.xlu0 %5473
      %5475 = vrot.lane.b32.xlu0 %v5425, 64
      %v5476 = vpop.permute.xlu0 %5475
      %5477 = vrot.lane.b32.xlu0 %v5426, 64
      %v5478 = vpop.permute.xlu0 %5477
      %5479 = vrot.lane.b32.xlu0 %v5427, 64
      %v5480 = vpop.permute.xlu0 %5479
      %5481 = vrot.lane.b32.xlu0 %v5428, 64
      %v5482 = vpop.permute.xlu0 %5481
      %5483 = vrot.lane.b32.xlu0 %v5429, 64
      %v5484 = vpop.permute.xlu0 %5483
      %5485 = vrot.lane.b32.xlu0 %v5430, 64
      %v5486 = vpop.permute.xlu0 %5485
      %5487 = vrot.lane.b32.xlu0 %v5431, 64
      %v5488 = vpop.permute.xlu0 %5487
      %5489 = vrot.lane.b32.xlu0 %v5432, 64
      %v5490 = vpop.permute.xlu0 %5489
      %5491 = vrot.lane.b32.xlu0 %v5433, 64
      %v5492 = vpop.permute.xlu0 %5491
      %5493 = vrot.lane.b32.xlu0 %v5434, 64
      %v5494 = vpop.permute.xlu0 %5493
      %5495 = vrot.lane.b32.xlu0 %v5435, 64
      %v5496 = vpop.permute.xlu0 %5495
      %5497 = vrot.lane.b32.xlu0 %v5436, 64
      %v5498 = vpop.permute.xlu0 %5497
      %5499 = vrot.lane.b32.xlu0 %v5437, 64
      %v5500 = vpop.permute.xlu0 %5499
      %5501 = vrot.lane.b32.xlu0 %v5438, 64
      %v5502 = vpop.permute.xlu0 %5501
      %5535 = vst.msk [vmem:[#allocation2] sm:$0xf] %vm2219, %v2118
      %5536 = vst.msk [vmem:[#allocation2 + $0x14] sm:$0xf] %vm2219, %v2120
      %5537 = vst.msk [vmem:[#allocation2 + $0x28] sm:$0xf] %vm2219, %v5440
      %5538 = vst.msk [vmem:[#allocation2 + $0x3c] sm:$0xf] %vm2219, %v5442
      %5539 = vst.msk [vmem:[#allocation2 + $0x50] sm:$0xf] %vm2219, %v5444
      %5540 = vst.msk [vmem:[#allocation2 + $0x64] sm:$0xf] %vm2219, %v5446
      %5541 = vst.msk [vmem:[#allocation2 + $0x78] sm:$0xf] %vm2219, %v5448
      %5542 = vst.msk [vmem:[#allocation2 + $0x8c] sm:$0xf] %vm2219, %v5450
      %5543 = vst.msk [vmem:[#allocation2 + $0xa0] sm:$0xf] %vm2219, %v5452
      %5544 = vst.msk [vmem:[#allocation2 + $0xb4] sm:$0xf] %vm2219, %v5454
      %5545 = vst.msk [vmem:[#allocation2 + $0xc8] sm:$0xf] %vm2219, %v5456
      %5546 = vst.msk [vmem:[#allocation2 + $0xdc] sm:$0xf] %vm2219, %v5458
      %5547 = vst.msk [vmem:[#allocation2 + $0xf0] sm:$0xf] %vm2219, %v5460
      %5548 = vst.msk [vmem:[#allocation2 + $0x104] sm:$0xf] %vm2219, %v5462
      %5549 = vst.msk [vmem:[#allocation2 + $0x118] sm:$0xf] %vm2219, %v5464
      %5550 = vst.msk [vmem:[#allocation2 + $0x12c] sm:$0xf] %vm2219, %v5466
      %5551 = vst.msk [vmem:[#allocation2 + $0x140] sm:$0xf] %vm2219, %v5468
      %5552 = vst.msk [vmem:[#allocation2 + $0x154] sm:$0xf] %vm2219, %v5470
      %5553 = vst.msk [vmem:[#allocation2 + $0x168] sm:$0xf] %vm2219, %v5472
      %5554 = vst.msk [vmem:[#allocation2 + $0x17c] sm:$0xf] %vm2219, %v5474
      %5555 = vst.msk [vmem:[#allocation2 + $0x190] sm:$0xf] %vm2219, %v5476
      %5556 = vst.msk [vmem:[#allocation2 + $0x1a4] sm:$0xf] %vm2219, %v5478
      %5557 = vst.msk [vmem:[#allocation2 + $0x1b8] sm:$0xf] %vm2219, %v5480
      %5558 = vst.msk [vmem:[#allocation2 + $0x1cc] sm:$0xf] %vm2219, %v5482
      %5559 = vst.msk [vmem:[#allocation2 + $0x1e0] sm:$0xf] %vm2219, %v5484
      %5560 = vst.msk [vmem:[#allocation2 + $0x1f4] sm:$0xf] %vm2219, %v5486
      %5561 = vst.msk [vmem:[#allocation2 + $0x208] sm:$0xf] %vm2219, %v5488
      %5562 = vst.msk [vmem:[#allocation2 + $0x21c] sm:$0xf] %vm2219, %v5490
      %5563 = vst.msk [vmem:[#allocation2 + $0x230] sm:$0xf] %vm2219, %v5492
      %5564 = vst.msk [vmem:[#allocation2 + $0x244] sm:$0xf] %vm2219, %v5494
      %5565 = vst.msk [vmem:[#allocation2 + $0x258] sm:$0xf] %vm2219, %v5496
      %5566 = vst.msk [vmem:[#allocation2 + $0x26c] sm:$0xf] %vm2219, %v5498
      %5567 = vst.msk [vmem:[#allocation2 + $0x280] sm:$0xf] %vm2219, %v5500
      %5568 = vst.msk [vmem:[#allocation2 + $0x294] sm:$0xf] %vm2219, %v5502
      %v5569 = vpack.c.b16 %v5033, %v5033
      %v5570 = vpack.c.b16 %v5034, %v5034
      %v5571 = vpack.c.b16 %v5035, %v5035
      %v5572 = vpack.c.b16 %v5036, %v5036
      %v5573 = vpack.c.b16 %v5037, %v5037
      %v5574 = vpack.c.b16 %v5038, %v5038
      %v5575 = vpack.c.b16 %v5039, %v5039
      %v5576 = vpack.c.b16 %v5040, %v5040
      %v5577 = vpack.c.b16 %v5041, %v5041
      %v5578 = vpack.c.b16 %v5042, %v5042
      %v5579 = vpack.c.b16 %v5043, %v5043
      %v5580 = vpack.c.b16 %v5044, %v5044
      %v5581 = vpack.c.b16 %v5045, %v5045
      %v5582 = vpack.c.b16 %v5046, %v5046
      %v5583 = vpack.c.b16 %v5047, %v5047
      %v5584 = vpack.c.b16 %v5048, %v5048
      %v5585 = vpack.c.b16 %v5049, %v5049
      %v5586 = vpack.c.b16 %v5050, %v5050
      %v5587 = vpack.c.b16 %v5051, %v5051
      %v5588 = vpack.c.b16 %v5052, %v5052
      %v5589 = vpack.c.b16 %v5053, %v5053
      %v5590 = vpack.c.b16 %v5054, %v5054
      %v5591 = vpack.c.b16 %v5055, %v5055
      %v5592 = vpack.c.b16 %v5056, %v5056
      %v5593 = vpack.c.b16 %v5057, %v5057
      %v5594 = vpack.c.b16 %v5058, %v5058
      %v5595 = vpack.c.b16 %v5059, %v5059
      %v5596 = vpack.c.b16 %v5060, %v5060
      %v5597 = vpack.c.b16 %v5061, %v5061
      %v5598 = vpack.c.b16 %v5062, %v5062
      %v5599 = vpack.c.b16 %v5063, %v5063
      %v5600 = vpack.c.b16 %v5064, %v5064
      %5633 = vst.msk [vmem:[#allocation2 + $0x4] sm:$0xf] %vm1886, %v1818
      %5634 = vst.msk [vmem:[#allocation2 + $0x18] sm:$0xf] %vm1886, %v1819
      %5635 = vst.msk [vmem:[#allocation2 + $0x2c] sm:$0xf] %vm1886, %v5569
      %5636 = vst.msk [vmem:[#allocation2 + $0x40] sm:$0xf] %vm1886, %v5570
      %5637 = vst.msk [vmem:[#allocation2 + $0x54] sm:$0xf] %vm1886, %v5571
      %5638 = vst.msk [vmem:[#allocation2 + $0x68] sm:$0xf] %vm1886, %v5572
      %5639 = vst.msk [vmem:[#allocation2 + $0x7c] sm:$0xf] %vm1886, %v5573
      %5640 = vst.msk [vmem:[#allocation2 + $0x90] sm:$0xf] %vm1886, %v5574
      %5641 = vst.msk [vmem:[#allocation2 + $0xa4] sm:$0xf] %vm1886, %v5575
      %5642 = vst.msk [vmem:[#allocation2 + $0xb8] sm:$0xf] %vm1886, %v5576
      %5643 = vst.msk [vmem:[#allocation2 + $0xcc] sm:$0xf] %vm1886, %v5577
      %5644 = vst.msk [vmem:[#allocation2 + $0xe0] sm:$0xf] %vm1886, %v5578
      %5645 = vst.msk [vmem:[#allocation2 + $0xf4] sm:$0xf] %vm1886, %v5579
      %5646 = vst.msk [vmem:[#allocation2 + $0x108] sm:$0xf] %vm1886, %v5580
      %5647 = vst.msk [vmem:[#allocation2 + $0x11c] sm:$0xf] %vm1886, %v5581
      %5648 = vst.msk [vmem:[#allocation2 + $0x130] sm:$0xf] %vm1886, %v5582
      %5649 = vst.msk [vmem:[#allocation2 + $0x144] sm:$0xf] %vm1886, %v5583
      %5650 = vst.msk [vmem:[#allocation2 + $0x158] sm:$0xf] %vm1886, %v5584
      %5651 = vst.msk [vmem:[#allocation2 + $0x16c] sm:$0xf] %vm1886, %v5585
      %5652 = vst.msk [vmem:[#allocation2 + $0x180] sm:$0xf] %vm1886, %v5586
      %5653 = vst.msk [vmem:[#allocation2 + $0x194] sm:$0xf] %vm1886, %v5587
      %5654 = vst.msk [vmem:[#allocation2 + $0x1a8] sm:$0xf] %vm1886, %v5588
      %5655 = vst.msk [vmem:[#allocation2 + $0x1bc] sm:$0xf] %vm1886, %v5589
      %5656 = vst.msk [vmem:[#allocation2 + $0x1d0] sm:$0xf] %vm1886, %v5590
      %5657 = vst.msk [vmem:[#allocation2 + $0x1e4] sm:$0xf] %vm1886, %v5591
      %5658 = vst.msk [vmem:[#allocation2 + $0x1f8] sm:$0xf] %vm1886, %v5592
      %5659 = vst.msk [vmem:[#allocation2 + $0x20c] sm:$0xf] %vm1886, %v5593
      %5660 = vst.msk [vmem:[#allocation2 + $0x220] sm:$0xf] %vm1886, %v5594
      %5661 = vst.msk [vmem:[#allocation2 + $0x234] sm:$0xf] %vm1886, %v5595
      %5662 = vst.msk [vmem:[#allocation2 + $0x248] sm:$0xf] %vm1886, %v5596
      %5663 = vst.msk [vmem:[#allocation2 + $0x25c] sm:$0xf] %vm1886, %v5597
      %5664 = vst.msk [vmem:[#allocation2 + $0x270] sm:$0xf] %vm1886, %v5598
      %5665 = vst.msk [vmem:[#allocation2 + $0x284] sm:$0xf] %vm1886, %v5599
      %5666 = vst.msk [vmem:[#allocation2 + $0x298] sm:$0xf] %vm1886, %v5600
      %v5669 = vunpack.c.l.b16 %v4999
      %v5670 = vunpack.c.l.b16 %v5000
      %v5671 = vpack.c.b16 %v5670, %v5669
      %v5673 = vshrl.u32 %v5671, 16
      %v5675 = vrot.slane %v5673, 7
      %v5676 = vshll.u32 %v5671, 16
      %v5678 = vor.u32 %v5675, %v5676
      %v5679 = vsel %vm1921, %v5367, %v5678
      %v5680 = vunpack.c.l.b16 %v5679
      %v5681 = vunpack.c.h.b16 %v5679
      %v5682 = vpack.c.b16 %v5680, %v5680
      %v5683 = vpack.c.b16 %v5681, %v5681
      %5684 = vrot.lane.b32.xlu0 %v5682, 64
      %v5685 = vpop.permute.xlu0 %5684
      %5686 = vrot.lane.b32.xlu0 %v5683, 64
      %v5687 = vpop.permute.xlu0 %5686
      %5690 = vst.msk [vmem:[#allocation2 + $0x4] sm:$0xf] %vm2219, %v5440
      %5691 = vst.msk [vmem:[#allocation2 + $0x18] sm:$0xf] %vm2219, %v5442
      %5692 = vst.msk [vmem:[#allocation2 + $0x2c] sm:$0xf] %vm2219, %v5444
      %5693 = vst.msk [vmem:[#allocation2 + $0x40] sm:$0xf] %vm2219, %v5446
      %5694 = vst.msk [vmem:[#allocation2 + $0x54] sm:$0xf] %vm2219, %v5448
      %5695 = vst.msk [vmem:[#allocation2 + $0x68] sm:$0xf] %vm2219, %v5450
      %5696 = vst.msk [vmem:[#allocation2 + $0x7c] sm:$0xf] %vm2219, %v5452
      %5697 = vst.msk [vmem:[#allocation2 + $0x90] sm:$0xf] %vm2219, %v5454
      %5698 = vst.msk [vmem:[#allocation2 + $0xa4] sm:$0xf] %vm2219, %v5456
      %5699 = vst.msk [vmem:[#allocation2 + $0xb8] sm:$0xf] %vm2219, %v5458
      %5700 = vst.msk [vmem:[#allocation2 + $0xcc] sm:$0xf] %vm2219, %v5460
      %5701 = vst.msk [vmem:[#allocation2 + $0xe0] sm:$0xf] %vm2219, %v5462
      %5702 = vst.msk [vmem:[#allocation2 + $0xf4] sm:$0xf] %vm2219, %v5464
      %5703 = vst.msk [vmem:[#allocation2 + $0x108] sm:$0xf] %vm2219, %v5466
      %5704 = vst.msk [vmem:[#allocation2 + $0x11c] sm:$0xf] %vm2219, %v5468
      %5705 = vst.msk [vmem:[#allocation2 + $0x130] sm:$0xf] %vm2219, %v5470
      %5706 = vst.msk [vmem:[#allocation2 + $0x144] sm:$0xf] %vm2219, %v5472
      %5707 = vst.msk [vmem:[#allocation2 + $0x158] sm:$0xf] %vm2219, %v5474
      %5708 = vst.msk [vmem:[#allocation2 + $0x16c] sm:$0xf] %vm2219, %v5476
      %5709 = vst.msk [vmem:[#allocation2 + $0x180] sm:$0xf] %vm2219, %v5478
      %5710 = vst.msk [vmem:[#allocation2 + $0x194] sm:$0xf] %vm2219, %v5480
      %5711 = vst.msk [vmem:[#allocation2 + $0x1a8] sm:$0xf] %vm2219, %v5482
      %5712 = vst.msk [vmem:[#allocation2 + $0x1bc] sm:$0xf] %vm2219, %v5484
      %5713 = vst.msk [vmem:[#allocation2 + $0x1d0] sm:$0xf] %vm2219, %v5486
      %5714 = vst.msk [vmem:[#allocation2 + $0x1e4] sm:$0xf] %vm2219, %v5488
      %5715 = vst.msk [vmem:[#allocation2 + $0x1f8] sm:$0xf] %vm2219, %v5490
      %5716 = vst.msk [vmem:[#allocation2 + $0x20c] sm:$0xf] %vm2219, %v5492
      %5717 = vst.msk [vmem:[#allocation2 + $0x220] sm:$0xf] %vm2219, %v5494
      %5718 = vst.msk [vmem:[#allocation2 + $0x234] sm:$0xf] %vm2219, %v5496
      %5719 = vst.msk [vmem:[#allocation2 + $0x248] sm:$0xf] %vm2219, %v5498
      %5720 = vst.msk [vmem:[#allocation2 + $0x25c] sm:$0xf] %vm2219, %v5500
      %5721 = vst.msk [vmem:[#allocation2 + $0x270] sm:$0xf] %vm2219, %v5502
      %5722 = vst.msk [vmem:[#allocation2 + $0x284] sm:$0xf] %vm2219, %v5685
      %5723 = vst.msk [vmem:[#allocation2 + $0x298] sm:$0xf] %vm2219, %v5687
      %5724 = vst.msk [vmem:[#allocation2 + $0x8] sm:$0xf] %vm1886, %v4967
      %5725 = vst.msk [vmem:[#allocation2 + $0x1c] sm:$0xf] %vm1886, %v4968
      %5726 = vst.msk [vmem:[#allocation2 + $0x30] sm:$0xf] %vm1886, %v4969
      %5727 = vst.msk [vmem:[#allocation2 + $0x44] sm:$0xf] %vm1886, %v4970
      %5728 = vst.msk [vmem:[#allocation2 + $0x58] sm:$0xf] %vm1886, %v4971
      %5729 = vst.msk [vmem:[#allocation2 + $0x6c] sm:$0xf] %vm1886, %v4972
      %5730 = vst.msk [vmem:[#allocation2 + $0x80] sm:$0xf] %vm1886, %v4973
      %5731 = vst.msk [vmem:[#allocation2 + $0x94] sm:$0xf] %vm1886, %v4974
      %5732 = vst.msk [vmem:[#allocation2 + $0xa8] sm:$0xf] %vm1886, %v4975
      %5733 = vst.msk [vmem:[#allocation2 + $0xbc] sm:$0xf] %vm1886, %v4976
      %5734 = vst.msk [vmem:[#allocation2 + $0xd0] sm:$0xf] %vm1886, %v4977
      %5735 = vst.msk [vmem:[#allocation2 + $0xe4] sm:$0xf] %vm1886, %v4978
      %5736 = vst.msk [vmem:[#allocation2 + $0xf8] sm:$0xf] %vm1886, %v4979
      %5737 = vst.msk [vmem:[#allocation2 + $0x10c] sm:$0xf] %vm1886, %v4980
      %5738 = vst.msk [vmem:[#allocation2 + $0x120] sm:$0xf] %vm1886, %v4981
      %5739 = vst.msk [vmem:[#allocation2 + $0x134] sm:$0xf] %vm1886, %v4982
      %5740 = vst.msk [vmem:[#allocation2 + $0x148] sm:$0xf] %vm1886, %v4983
      %5741 = vst.msk [vmem:[#allocation2 + $0x15c] sm:$0xf] %vm1886, %v4984
      %5742 = vst.msk [vmem:[#allocation2 + $0x170] sm:$0xf] %vm1886, %v4985
      %5743 = vst.msk [vmem:[#allocation2 + $0x184] sm:$0xf] %vm1886, %v4986
      %5744 = vst.msk [vmem:[#allocation2 + $0x198] sm:$0xf] %vm1886, %v4987
      %5745 = vst.msk [vmem:[#allocation2 + $0x1ac] sm:$0xf] %vm1886, %v4988
      %5746 = vst.msk [vmem:[#allocation2 + $0x1c0] sm:$0xf] %vm1886, %v4989
      %5747 = vst.msk [vmem:[#allocation2 + $0x1d4] sm:$0xf] %vm1886, %v4990
      %5748 = vst.msk [vmem:[#allocation2 + $0x1e8] sm:$0xf] %vm1886, %v4991
      %5749 = vst.msk [vmem:[#allocation2 + $0x1fc] sm:$0xf] %vm1886, %v4992
      %5750 = vst.msk [vmem:[#allocation2 + $0x210] sm:$0xf] %vm1886, %v4993
      %5751 = vst.msk [vmem:[#allocation2 + $0x224] sm:$0xf] %vm1886, %v4994
      %5752 = vst.msk [vmem:[#allocation2 + $0x238] sm:$0xf] %vm1886, %v4995
      %5753 = vst.msk [vmem:[#allocation2 + $0x24c] sm:$0xf] %vm1886, %v4996
      %5754 = vst.msk [vmem:[#allocation2 + $0x260] sm:$0xf] %vm1886, %v4997
      %5755 = vst.msk [vmem:[#allocation2 + $0x274] sm:$0xf] %vm1886, %v4998
      %5756 = vst.msk [vmem:[#allocation2 + $0x288] sm:$0xf] %vm1886, %v4999
      %5757 = vst.msk [vmem:[#allocation2 + $0x29c] sm:$0xf] %vm1886, %v5000
      %v5758 = vrot.slane %v5249, 1
      %v5759 = vor.u32 %v5246, %v5758
      %v5760 = vrot.slane %v5256, 1
      %v5761 = vsel %vm2443, %v5759, %v5760
      %v5762 = vor.u32 %v5253, %v5760
      %v5763 = vrot.slane %v5264, 1
      %v5764 = vsel %vm2443, %v5762, %v5763
      %v5765 = vor.u32 %v5261, %v5763
      %v5766 = vrot.slane %v5272, 1
      %v5767 = vsel %vm2443, %v5765, %v5766
      %v5768 = vor.u32 %v5269, %v5766
      %v5769 = vrot.slane %v5280, 1
      %v5770 = vsel %vm2443, %v5768, %v5769
      %v5771 = vor.u32 %v5277, %v5769
      %v5772 = vrot.slane %v5288, 1
      %v5773 = vsel %vm2443, %v5771, %v5772
      %v5774 = vor.u32 %v5285, %v5772
      %v5775 = vrot.slane %v5296, 1
      %v5776 = vsel %vm2443, %v5774, %v5775
      %v5777 = vor.u32 %v5293, %v5775
      %v5778 = vrot.slane %v5304, 1
      %v5779 = vsel %vm2443, %v5777, %v5778
      %v5780 = vor.u32 %v5301, %v5778
      %v5781 = vrot.slane %v5312, 1
      %v5782 = vsel %vm2443, %v5780, %v5781
      %v5783 = vor.u32 %v5309, %v5781
      %v5784 = vrot.slane %v5320, 1
      %v5785 = vsel %vm2443, %v5783, %v5784
      %v5786 = vor.u32 %v5317, %v5784
      %v5787 = vrot.slane %v5328, 1
      %v5788 = vsel %vm2443, %v5786, %v5787
      %v5789 = vor.u32 %v5325, %v5787
      %v5790 = vrot.slane %v5336, 1
      %v5791 = vsel %vm2443, %v5789, %v5790
      %v5792 = vor.u32 %v5333, %v5790
      %v5793 = vrot.slane %v5344, 1
      %v5794 = vsel %vm2443, %v5792, %v5793
      %v5795 = vor.u32 %v5341, %v5793
      %v5796 = vrot.slane %v5352, 1
      %v5797 = vsel %vm2443, %v5795, %v5796
      %v5798 = vor.u32 %v5349, %v5796
      %v5799 = vrot.slane %v5360, 1
      %v5800 = vsel %vm2443, %v5798, %v5799
      %v5801 = vor.u32 %v5357, %v5799
      %v5802 = vrot.slane %v5368, 1
      %v5803 = vsel %vm2443, %v5801, %v5802
      %v5804 = vor.u32 %v5365, %v5802
      %v5805 = vrot.slane %v5676, 1
      %v5806 = vsel %vm2443, %v5804, %v5805
      %v5807 = vor.u32 %v5673, %v5805
      %v5809 = vsel %vm2496, %v5807, 0
      %v5811 = vunpack.c.l.b16 %v5761
      %v5812 = vunpack.c.h.b16 %v5761
      %v5813 = vunpack.c.l.b16 %v5764
      %v5814 = vunpack.c.h.b16 %v5764
      %v5815 = vunpack.c.l.b16 %v5767
      %v5816 = vunpack.c.h.b16 %v5767
      %v5817 = vunpack.c.l.b16 %v5770
      %v5818 = vunpack.c.h.b16 %v5770
      %v5819 = vunpack.c.l.b16 %v5773
      %v5820 = vunpack.c.h.b16 %v5773
      %v5821 = vunpack.c.l.b16 %v5776
      %v5822 = vunpack.c.h.b16 %v5776
      %v5823 = vunpack.c.l.b16 %v5779
      %v5824 = vunpack.c.h.b16 %v5779
      %v5825 = vunpack.c.l.b16 %v5782
      %v5826 = vunpack.c.h.b16 %v5782
      %v5827 = vunpack.c.l.b16 %v5785
      %v5828 = vunpack.c.h.b16 %v5785
      %v5829 = vunpack.c.l.b16 %v5788
      %v5830 = vunpack.c.h.b16 %v5788
      %v5831 = vunpack.c.l.b16 %v5791
      %v5832 = vunpack.c.h.b16 %v5791
      %v5833 = vunpack.c.l.b16 %v5794
      %v5834 = vunpack.c.h.b16 %v5794
      %v5835 = vunpack.c.l.b16 %v5797
      %v5836 = vunpack.c.h.b16 %v5797
      %v5837 = vunpack.c.l.b16 %v5800
      %v5838 = vunpack.c.h.b16 %v5800
      %v5839 = vunpack.c.l.b16 %v5803
      %v5840 = vunpack.c.h.b16 %v5803
      %v5841 = vunpack.c.l.b16 %v5806
      %v5842 = vunpack.c.h.b16 %v5806
      %v5843 = vunpack.c.l.b16 %v5809
      %v5844 = vunpack.c.h.b16 %v5809
      %v5845 = vpack.c.b16 %v5811, %v5811
      %v5846 = vpack.c.b16 %v5812, %v5812
      %v5847 = vpack.c.b16 %v5813, %v5813
      %v5848 = vpack.c.b16 %v5814, %v5814
      %v5849 = vpack.c.b16 %v5815, %v5815
      %v5850 = vpack.c.b16 %v5816, %v5816
      %v5851 = vpack.c.b16 %v5817, %v5817
      %v5852 = vpack.c.b16 %v5818, %v5818
      %v5853 = vpack.c.b16 %v5819, %v5819
      %v5854 = vpack.c.b16 %v5820, %v5820
      %v5855 = vpack.c.b16 %v5821, %v5821
      %v5856 = vpack.c.b16 %v5822, %v5822
      %v5857 = vpack.c.b16 %v5823, %v5823
      %v5858 = vpack.c.b16 %v5824, %v5824
      %v5859 = vpack.c.b16 %v5825, %v5825
      %v5860 = vpack.c.b16 %v5826, %v5826
      %v5861 = vpack.c.b16 %v5827, %v5827
      %v5862 = vpack.c.b16 %v5828, %v5828
      %v5863 = vpack.c.b16 %v5829, %v5829
      %v5864 = vpack.c.b16 %v5830, %v5830
      %v5865 = vpack.c.b16 %v5831, %v5831
      %v5866 = vpack.c.b16 %v5832, %v5832
      %v5867 = vpack.c.b16 %v5833, %v5833
      %v5868 = vpack.c.b16 %v5834, %v5834
      %v5869 = vpack.c.b16 %v5835, %v5835
      %v5870 = vpack.c.b16 %v5836, %v5836
      %v5871 = vpack.c.b16 %v5837, %v5837
      %v5872 = vpack.c.b16 %v5838, %v5838
      %v5873 = vpack.c.b16 %v5839, %v5839
      %v5874 = vpack.c.b16 %v5840, %v5840
      %v5875 = vpack.c.b16 %v5841, %v5841
      %v5876 = vpack.c.b16 %v5842, %v5842
      %v5877 = vpack.c.b16 %v5843, %v5843
      %v5878 = vpack.c.b16 %v5844, %v5844
      %5879 = vrot.lane.b32.xlu0 %v5845, 64
      %v5880 = vpop.permute.xlu0 %5879
      %5881 = vrot.lane.b32.xlu0 %v5846, 64
      %v5882 = vpop.permute.xlu0 %5881
      %5883 = vrot.lane.b32.xlu0 %v5847, 64
      %v5884 = vpop.permute.xlu0 %5883
      %5885 = vrot.lane.b32.xlu0 %v5848, 64
      %v5886 = vpop.permute.xlu0 %5885
      %5887 = vrot.lane.b32.xlu0 %v5849, 64
      %v5888 = vpop.permute.xlu0 %5887
      %5889 = vrot.lane.b32.xlu0 %v5850, 64
      %v5890 = vpop.permute.xlu0 %5889
      %5891 = vrot.lane.b32.xlu0 %v5851, 64
      %v5892 = vpop.permute.xlu0 %5891
      %5893 = vrot.lane.b32.xlu0 %v5852, 64
      %v5894 = vpop.permute.xlu0 %5893
      %5895 = vrot.lane.b32.xlu0 %v5853, 64
      %v5896 = vpop.permute.xlu0 %5895
      %5897 = vrot.lane.b32.xlu0 %v5854, 64
      %v5898 = vpop.permute.xlu0 %5897
      %5899 = vrot.lane.b32.xlu0 %v5855, 64
      %v5900 = vpop.permute.xlu0 %5899
      %5901 = vrot.lane.b32.xlu0 %v5856, 64
      %v5902 = vpop.permute.xlu0 %5901
      %5903 = vrot.lane.b32.xlu0 %v5857, 64
      %v5904 = vpop.permute.xlu0 %5903
      %5905 = vrot.lane.b32.xlu0 %v5858, 64
      %v5906 = vpop.permute.xlu0 %5905
      %5907 = vrot.lane.b32.xlu0 %v5859, 64
      %v5908 = vpop.permute.xlu0 %5907
      %5909 = vrot.lane.b32.xlu0 %v5860, 64
      %v5910 = vpop.permute.xlu0 %5909
      %5911 = vrot.lane.b32.xlu0 %v5861, 64
      %v5912 = vpop.permute.xlu0 %5911
      %5913 = vrot.lane.b32.xlu0 %v5862, 64
      %v5914 = vpop.permute.xlu0 %5913
      %5915 = vrot.lane.b32.xlu0 %v5863, 64
      %v5916 = vpop.permute.xlu0 %5915
      %5917 = vrot.lane.b32.xlu0 %v5864, 64
      %v5918 = vpop.permute.xlu0 %5917
      %5919 = vrot.lane.b32.xlu0 %v5865, 64
      %v5920 = vpop.permute.xlu0 %5919
      %5921 = vrot.lane.b32.xlu0 %v5866, 64
      %v5922 = vpop.permute.xlu0 %5921
      %5923 = vrot.lane.b32.xlu0 %v5867, 64
      %v5924 = vpop.permute.xlu0 %5923
      %5925 = vrot.lane.b32.xlu0 %v5868, 64
      %v5926 = vpop.permute.xlu0 %5925
      %5927 = vrot.lane.b32.xlu0 %v5869, 64
      %v5928 = vpop.permute.xlu0 %5927
      %5929 = vrot.lane.b32.xlu0 %v5870, 64
      %v5930 = vpop.permute.xlu0 %5929
      %5931 = vrot.lane.b32.xlu0 %v5871, 64
      %v5932 = vpop.permute.xlu0 %5931
      %5933 = vrot.lane.b32.xlu0 %v5872, 64
      %v5934 = vpop.permute.xlu0 %5933
      %5935 = vrot.lane.b32.xlu0 %v5873, 64
      %v5936 = vpop.permute.xlu0 %5935
      %5937 = vrot.lane.b32.xlu0 %v5874, 64
      %v5938 = vpop.permute.xlu0 %5937
      %5939 = vrot.lane.b32.xlu0 %v5875, 64
      %v5940 = vpop.permute.xlu0 %5939
      %5941 = vrot.lane.b32.xlu0 %v5876, 64
      %v5942 = vpop.permute.xlu0 %5941
      %5943 = vrot.lane.b32.xlu0 %v5877, 64
      %v5944 = vpop.permute.xlu0 %5943
      %5945 = vrot.lane.b32.xlu0 %v5878, 64
      %v5946 = vpop.permute.xlu0 %5945
      %5981 = vst.msk [vmem:[#allocation2 + $0x8] sm:$0xf] %vm2219, %v5880
      %5982 = vst.msk [vmem:[#allocation2 + $0x1c] sm:$0xf] %vm2219, %v5882
      %5983 = vst.msk [vmem:[#allocation2 + $0x30] sm:$0xf] %vm2219, %v5884
      %5984 = vst.msk [vmem:[#allocation2 + $0x44] sm:$0xf] %vm2219, %v5886
      %5985 = vst.msk [vmem:[#allocation2 + $0x58] sm:$0xf] %vm2219, %v5888
      %5986 = vst.msk [vmem:[#allocation2 + $0x6c] sm:$0xf] %vm2219, %v5890
      %5987 = vst.msk [vmem:[#allocation2 + $0x80] sm:$0xf] %vm2219, %v5892
      %5988 = vst.msk [vmem:[#allocation2 + $0x94] sm:$0xf] %vm2219, %v5894
      %5989 = vst.msk [vmem:[#allocation2 + $0xa8] sm:$0xf] %vm2219, %v5896
      %5990 = vst.msk [vmem:[#allocation2 + $0xbc] sm:$0xf] %vm2219, %v5898
      %5991 = vst.msk [vmem:[#allocation2 + $0xd0] sm:$0xf] %vm2219, %v5900
      %5992 = vst.msk [vmem:[#allocation2 + $0xe4] sm:$0xf] %vm2219, %v5902
      %5993 = vst.msk [vmem:[#allocation2 + $0xf8] sm:$0xf] %vm2219, %v5904
      %5994 = vst.msk [vmem:[#allocation2 + $0x10c] sm:$0xf] %vm2219, %v5906
      %5995 = vst.msk [vmem:[#allocation2 + $0x120] sm:$0xf] %vm2219, %v5908
      %5996 = vst.msk [vmem:[#allocation2 + $0x134] sm:$0xf] %vm2219, %v5910
      %5997 = vst.msk [vmem:[#allocation2 + $0x148] sm:$0xf] %vm2219, %v5912
      %5998 = vst.msk [vmem:[#allocation2 + $0x15c] sm:$0xf] %vm2219, %v5914
      %5999 = vst.msk [vmem:[#allocation2 + $0x170] sm:$0xf] %vm2219, %v5916
      %6000 = vst.msk [vmem:[#allocation2 + $0x184] sm:$0xf] %vm2219, %v5918
      %6001 = vst.msk [vmem:[#allocation2 + $0x198] sm:$0xf] %vm2219, %v5920
      %6002 = vst.msk [vmem:[#allocation2 + $0x1ac] sm:$0xf] %vm2219, %v5922
      %6003 = vst.msk [vmem:[#allocation2 + $0x1c0] sm:$0xf] %vm2219, %v5924
      %6004 = vst.msk [vmem:[#allocation2 + $0x1d4] sm:$0xf] %vm2219, %v5926
      %6005 = vst.msk [vmem:[#allocation2 + $0x1e8] sm:$0xf] %vm2219, %v5928
      %6006 = vst.msk [vmem:[#allocation2 + $0x1fc] sm:$0xf] %vm2219, %v5930
      %6007 = vst.msk [vmem:[#allocation2 + $0x210] sm:$0xf] %vm2219, %v5932
      %6008 = vst.msk [vmem:[#allocation2 + $0x224] sm:$0xf] %vm2219, %v5934
      %6009 = vst.msk [vmem:[#allocation2 + $0x238] sm:$0xf] %vm2219, %v5936
      %6010 = vst.msk [vmem:[#allocation2 + $0x24c] sm:$0xf] %vm2219, %v5938
      %6011 = vst.msk [vmem:[#allocation2 + $0x260] sm:$0xf] %vm2219, %v5940
      %6012 = vst.msk [vmem:[#allocation2 + $0x274] sm:$0xf] %vm2219, %v5942
      %6013 = vst.msk [vmem:[#allocation2 + $0x288] sm:$0xf] %vm2219, %v5944
      %6014 = vst.msk [vmem:[#allocation2 + $0x29c] sm:$0xf] %vm2219, %v5946
      %v6015 = vpack.c.b16 %v5669, %v5669
      %v6016 = vpack.c.b16 %v5670, %v5670
      %6019 = vst.msk [vmem:[#allocation2 + $0xc] sm:$0xf] %vm1886, %v5571
      %6020 = vst.msk [vmem:[#allocation2 + $0x20] sm:$0xf] %vm1886, %v5572
      %6021 = vst.msk [vmem:[#allocation2 + $0x34] sm:$0xf] %vm1886, %v5573
      %6022 = vst.msk [vmem:[#allocation2 + $0x48] sm:$0xf] %vm1886, %v5574
      %6023 = vst.msk [vmem:[#allocation2 + $0x5c] sm:$0xf] %vm1886, %v5575
      %6024 = vst.msk [vmem:[#allocation2 + $0x70] sm:$0xf] %vm1886, %v5576
      %6025 = vst.msk [vmem:[#allocation2 + $0x84] sm:$0xf] %vm1886, %v5577
      %6026 = vst.msk [vmem:[#allocation2 + $0x98] sm:$0xf] %vm1886, %v5578
      %6027 = vst.msk [vmem:[#allocation2 + $0xac] sm:$0xf] %vm1886, %v5579
      %6028 = vst.msk [vmem:[#allocation2 + $0xc0] sm:$0xf] %vm1886, %v5580
      %6029 = vst.msk [vmem:[#allocation2 + $0xd4] sm:$0xf] %vm1886, %v5581
      %6030 = vst.msk [vmem:[#allocation2 + $0xe8] sm:$0xf] %vm1886, %v5582
      %6031 = vst.msk [vmem:[#allocation2 + $0xfc] sm:$0xf] %vm1886, %v5583
      %6032 = vst.msk [vmem:[#allocation2 + $0x110] sm:$0xf] %vm1886, %v5584
      %6033 = vst.msk [vmem:[#allocation2 + $0x124] sm:$0xf] %vm1886, %v5585
      %6034 = vst.msk [vmem:[#allocation2 + $0x138] sm:$0xf] %vm1886, %v5586
      %6035 = vst.msk [vmem:[#allocation2 + $0x14c] sm:$0xf] %vm1886, %v5587
      %6036 = vst.msk [vmem:[#allocation2 + $0x160] sm:$0xf] %vm1886, %v5588
      %6037 = vst.msk [vmem:[#allocation2 + $0x174] sm:$0xf] %vm1886, %v5589
      %6038 = vst.msk [vmem:[#allocation2 + $0x188] sm:$0xf] %vm1886, %v5590
      %6039 = vst.msk [vmem:[#allocation2 + $0x19c] sm:$0xf] %vm1886, %v5591
      %6040 = vst.msk [vmem:[#allocation2 + $0x1b0] sm:$0xf] %vm1886, %v5592
      %6041 = vst.msk [vmem:[#allocation2 + $0x1c4] sm:$0xf] %vm1886, %v5593
      %6042 = vst.msk [vmem:[#allocation2 + $0x1d8] sm:$0xf] %vm1886, %v5594
      %6043 = vst.msk [vmem:[#allocation2 + $0x1ec] sm:$0xf] %vm1886, %v5595
      %6044 = vst.msk [vmem:[#allocation2 + $0x200] sm:$0xf] %vm1886, %v5596
      %6045 = vst.msk [vmem:[#allocation2 + $0x214] sm:$0xf] %vm1886, %v5597
      %6046 = vst.msk [vmem:[#allocation2 + $0x228] sm:$0xf] %vm1886, %v5598
      %6047 = vst.msk [vmem:[#allocation2 + $0x23c] sm:$0xf] %vm1886, %v5599
      %6048 = vst.msk [vmem:[#allocation2 + $0x250] sm:$0xf] %vm1886, %v5600
      %6049 = vst.msk [vmem:[#allocation2 + $0x264] sm:$0xf] %vm1886, %v6015
      %6050 = vst.msk [vmem:[#allocation2 + $0x278] sm:$0xf] %vm1886, %v6016
      %6051 = vst.msk [vmem:[#allocation2 + $0x28c] sm:$0xf] %vm1886, %v1818
      %6052 = vst.msk [vmem:[#allocation2 + $0x2a0] sm:$0xf] %vm1886, %v1819
      %6053 = vst.msk [vmem:[#allocation2 + $0xc] sm:$0xf] %vm2219, %v5884
      %6054 = vst.msk [vmem:[#allocation2 + $0x20] sm:$0xf] %vm2219, %v5886
      %6055 = vst.msk [vmem:[#allocation2 + $0x34] sm:$0xf] %vm2219, %v5888
      %6056 = vst.msk [vmem:[#allocation2 + $0x48] sm:$0xf] %vm2219, %v5890
      %6057 = vst.msk [vmem:[#allocation2 + $0x5c] sm:$0xf] %vm2219, %v5892
      %6058 = vst.msk [vmem:[#allocation2 + $0x70] sm:$0xf] %vm2219, %v5894
      %6059 = vst.msk [vmem:[#allocation2 + $0x84] sm:$0xf] %vm2219, %v5896
      %6060 = vst.msk [vmem:[#allocation2 + $0x98] sm:$0xf] %vm2219, %v5898
      %6061 = vst.msk [vmem:[#allocation2 + $0xac] sm:$0xf] %vm2219, %v5900
      %6062 = vst.msk [vmem:[#allocation2 + $0xc0] sm:$0xf] %vm2219, %v5902
      %6063 = vst.msk [vmem:[#allocation2 + $0xd4] sm:$0xf] %vm2219, %v5904
      %6064 = vst.msk [vmem:[#allocation2 + $0xe8] sm:$0xf] %vm2219, %v5906
      %6065 = vst.msk [vmem:[#allocation2 + $0xfc] sm:$0xf] %vm2219, %v5908
      %6066 = vst.msk [vmem:[#allocation2 + $0x110] sm:$0xf] %vm2219, %v5910
      %6067 = vst.msk [vmem:[#allocation2 + $0x124] sm:$0xf] %vm2219, %v5912
      %6068 = vst.msk [vmem:[#allocation2 + $0x138] sm:$0xf] %vm2219, %v5914
      %6069 = vst.msk [vmem:[#allocation2 + $0x14c] sm:$0xf] %vm2219, %v5916
      %6070 = vst.msk [vmem:[#allocation2 + $0x160] sm:$0xf] %vm2219, %v5918
      %6071 = vst.msk [vmem:[#allocation2 + $0x174] sm:$0xf] %vm2219, %v5920
      %6072 = vst.msk [vmem:[#allocation2 + $0x188] sm:$0xf] %vm2219, %v5922
      %6073 = vst.msk [vmem:[#allocation2 + $0x19c] sm:$0xf] %vm2219, %v5924
      %6074 = vst.msk [vmem:[#allocation2 + $0x1b0] sm:$0xf] %vm2219, %v5926
      %6075 = vst.msk [vmem:[#allocation2 + $0x1c4] sm:$0xf] %vm2219, %v5928
      %6076 = vst.msk [vmem:[#allocation2 + $0x1d8] sm:$0xf] %vm2219, %v5930
      %6077 = vst.msk [vmem:[#allocation2 + $0x1ec] sm:$0xf] %vm2219, %v5932
      %6078 = vst.msk [vmem:[#allocation2 + $0x200] sm:$0xf] %vm2219, %v5934
      %6079 = vst.msk [vmem:[#allocation2 + $0x214] sm:$0xf] %vm2219, %v5936
      %6080 = vst.msk [vmem:[#allocation2 + $0x228] sm:$0xf] %vm2219, %v5938
      %6081 = vst.msk [vmem:[#allocation2 + $0x23c] sm:$0xf] %vm2219, %v5940
      %6082 = vst.msk [vmem:[#allocation2 + $0x250] sm:$0xf] %vm2219, %v5942
      %6083 = vst.msk [vmem:[#allocation2 + $0x264] sm:$0xf] %vm2219, %v5944
      %6084 = vst.msk [vmem:[#allocation2 + $0x278] sm:$0xf] %vm2219, %v5946
      %6085 = vst.msk [vmem:[#allocation2 + $0x28c] sm:$0xf] %vm2219, %v2118
      %6086 = vst.msk [vmem:[#allocation2 + $0x2a0] sm:$0xf] %vm2219, %v2120
      %v6087 = vrot.slane %v5066, 1
      %v6088 = vrot.slane %v5067, 1
      %v6089 = vsel %vm2775, %v6087, %v6088
      %v6090 = vrot.slane %v5068, 1
      %v6091 = vsel %vm2775, %v6088, %v6090
      %v6092 = vrot.slane %v5069, 1
      %v6093 = vsel %vm2775, %v6090, %v6092
      %v6094 = vrot.slane %v5070, 1
      %v6095 = vsel %vm2775, %v6092, %v6094
      %v6096 = vrot.slane %v5071, 1
      %v6097 = vsel %vm2775, %v6094, %v6096
      %v6098 = vrot.slane %v5072, 1
      %v6099 = vsel %vm2775, %v6096, %v6098
      %v6100 = vrot.slane %v5073, 1
      %v6101 = vsel %vm2775, %v6098, %v6100
      %v6102 = vrot.slane %v5074, 1
      %v6103 = vsel %vm2775, %v6100, %v6102
      %v6104 = vrot.slane %v5075, 1
      %v6105 = vsel %vm2775, %v6102, %v6104
      %v6106 = vrot.slane %v5076, 1
      %v6107 = vsel %vm2775, %v6104, %v6106
      %v6108 = vrot.slane %v5077, 1
      %v6109 = vsel %vm2775, %v6106, %v6108
      %v6110 = vrot.slane %v5078, 1
      %v6111 = vsel %vm2775, %v6108, %v6110
      %v6112 = vrot.slane %v5079, 1
      %v6113 = vsel %vm2775, %v6110, %v6112
      %v6114 = vrot.slane %v5080, 1
      %v6115 = vsel %vm2775, %v6112, %v6114
      %v6116 = vrot.slane %v5671, 1
      %v6117 = vsel %vm2775, %v6114, %v6116
      %v6119 = vsel %vm2807, %v6116, 0
      %v6121 = vunpack.c.l.b16 %v6089
      %v6122 = vunpack.c.h.b16 %v6089
      %v6123 = vunpack.c.l.b16 %v6091
      %v6124 = vunpack.c.h.b16 %v6091
      %v6125 = vunpack.c.l.b16 %v6093
      %v6126 = vunpack.c.h.b16 %v6093
      %v6127 = vunpack.c.l.b16 %v6095
      %v6128 = vunpack.c.h.b16 %v6095
      %v6129 = vunpack.c.l.b16 %v6097
      %v6130 = vunpack.c.h.b16 %v6097
      %v6131 = vunpack.c.l.b16 %v6099
      %v6132 = vunpack.c.h.b16 %v6099
      %v6133 = vunpack.c.l.b16 %v6101
      %v6134 = vunpack.c.h.b16 %v6101
      %v6135 = vunpack.c.l.b16 %v6103
      %v6136 = vunpack.c.h.b16 %v6103
      %v6137 = vunpack.c.l.b16 %v6105
      %v6138 = vunpack.c.h.b16 %v6105
      %v6139 = vunpack.c.l.b16 %v6107
      %v6140 = vunpack.c.h.b16 %v6107
      %v6141 = vunpack.c.l.b16 %v6109
      %v6142 = vunpack.c.h.b16 %v6109
      %v6143 = vunpack.c.l.b16 %v6111
      %v6144 = vunpack.c.h.b16 %v6111
      %v6145 = vunpack.c.l.b16 %v6113
      %v6146 = vunpack.c.h.b16 %v6113
      %v6147 = vunpack.c.l.b16 %v6115
      %v6148 = vunpack.c.h.b16 %v6115
      %v6149 = vunpack.c.l.b16 %v6117
      %v6150 = vunpack.c.h.b16 %v6117
      %v6151 = vunpack.c.l.b16 %v6119
      %v6152 = vunpack.c.h.b16 %v6119
      %v6153 = vpack.c.b16 %v6121, %v6121
      %v6154 = vpack.c.b16 %v6122, %v6122
      %v6155 = vpack.c.b16 %v6123, %v6123
      %v6156 = vpack.c.b16 %v6124, %v6124
      %v6157 = vpack.c.b16 %v6125, %v6125
      %v6158 = vpack.c.b16 %v6126, %v6126
      %v6159 = vpack.c.b16 %v6127, %v6127
      %v6160 = vpack.c.b16 %v6128, %v6128
      %v6161 = vpack.c.b16 %v6129, %v6129
      %v6162 = vpack.c.b16 %v6130, %v6130
      %v6163 = vpack.c.b16 %v6131, %v6131
      %v6164 = vpack.c.b16 %v6132, %v6132
      %v6165 = vpack.c.b16 %v6133, %v6133
      %v6166 = vpack.c.b16 %v6134, %v6134
      %v6167 = vpack.c.b16 %v6135, %v6135
      %v6168 = vpack.c.b16 %v6136, %v6136
      %v6169 = vpack.c.b16 %v6137, %v6137
      %v6170 = vpack.c.b16 %v6138, %v6138
      %v6171 = vpack.c.b16 %v6139, %v6139
      %v6172 = vpack.c.b16 %v6140, %v6140
      %v6173 = vpack.c.b16 %v6141, %v6141
      %v6174 = vpack.c.b16 %v6142, %v6142
      %v6175 = vpack.c.b16 %v6143, %v6143
      %v6176 = vpack.c.b16 %v6144, %v6144
      %v6177 = vpack.c.b16 %v6145, %v6145
      %v6178 = vpack.c.b16 %v6146, %v6146
      %v6179 = vpack.c.b16 %v6147, %v6147
      %v6180 = vpack.c.b16 %v6148, %v6148
      %v6181 = vpack.c.b16 %v6149, %v6149
      %v6182 = vpack.c.b16 %v6150, %v6150
      %v6183 = vpack.c.b16 %v6151, %v6151
      %v6184 = vpack.c.b16 %v6152, %v6152
      %6217 = vst.msk [vmem:[#allocation2 + $0x10] sm:$0xf] %vm1886, %v6153
      %6218 = vst.msk [vmem:[#allocation2 + $0x24] sm:$0xf] %vm1886, %v6154
      %6219 = vst.msk [vmem:[#allocation2 + $0x38] sm:$0xf] %vm1886, %v6155
      %6220 = vst.msk [vmem:[#allocation2 + $0x4c] sm:$0xf] %vm1886, %v6156
      %6221 = vst.msk [vmem:[#allocation2 + $0x60] sm:$0xf] %vm1886, %v6157
      %6222 = vst.msk [vmem:[#allocation2 + $0x74] sm:$0xf] %vm1886, %v6158
      %6223 = vst.msk [vmem:[#allocation2 + $0x88] sm:$0xf] %vm1886, %v6159
      %6224 = vst.msk [vmem:[#allocation2 + $0x9c] sm:$0xf] %vm1886, %v6160
      %6225 = vst.msk [vmem:[#allocation2 + $0xb0] sm:$0xf] %vm1886, %v6161
      %6226 = vst.msk [vmem:[#allocation2 + $0xc4] sm:$0xf] %vm1886, %v6162
      %6227 = vst.msk [vmem:[#allocation2 + $0xd8] sm:$0xf] %vm1886, %v6163
      %6228 = vst.msk [vmem:[#allocation2 + $0xec] sm:$0xf] %vm1886, %v6164
      %6229 = vst.msk [vmem:[#allocation2 + $0x100] sm:$0xf] %vm1886, %v6165
      %6230 = vst.msk [vmem:[#allocation2 + $0x114] sm:$0xf] %vm1886, %v6166
      %6231 = vst.msk [vmem:[#allocation2 + $0x128] sm:$0xf] %vm1886, %v6167
      %6232 = vst.msk [vmem:[#allocation2 + $0x13c] sm:$0xf] %vm1886, %v6168
      %6233 = vst.msk [vmem:[#allocation2 + $0x150] sm:$0xf] %vm1886, %v6169
      %6234 = vst.msk [vmem:[#allocation2 + $0x164] sm:$0xf] %vm1886, %v6170
      %6235 = vst.msk [vmem:[#allocation2 + $0x178] sm:$0xf] %vm1886, %v6171
      %6236 = vst.msk [vmem:[#allocation2 + $0x18c] sm:$0xf] %vm1886, %v6172
      %6237 = vst.msk [vmem:[#allocation2 + $0x1a0] sm:$0xf] %vm1886, %v6173
      %6238 = vst.msk [vmem:[#allocation2 + $0x1b4] sm:$0xf] %vm1886, %v6174
      %6239 = vst.msk [vmem:[#allocation2 + $0x1c8] sm:$0xf] %vm1886, %v6175
      %6240 = vst.msk [vmem:[#allocation2 + $0x1dc] sm:$0xf] %vm1886, %v6176
      %6241 = vst.msk [vmem:[#allocation2 + $0x1f0] sm:$0xf] %vm1886, %v6177
      %6242 = vst.msk [vmem:[#allocation2 + $0x204] sm:$0xf] %vm1886, %v6178
      %6243 = vst.msk [vmem:[#allocation2 + $0x218] sm:$0xf] %vm1886, %v6179
      %6244 = vst.msk [vmem:[#allocation2 + $0x22c] sm:$0xf] %vm1886, %v6180
      %6245 = vst.msk [vmem:[#allocation2 + $0x240] sm:$0xf] %vm1886, %v6181
      %6246 = vst.msk [vmem:[#allocation2 + $0x254] sm:$0xf] %vm1886, %v6182
      %6247 = vst.msk [vmem:[#allocation2 + $0x268] sm:$0xf] %vm1886, %v6183
      %6248 = vst.msk [vmem:[#allocation2 + $0x27c] sm:$0xf] %vm1886, %v6184
      %6249 = vst.msk [vmem:[#allocation2 + $0x290] sm:$0xf] %vm1886, %v1818
      %6250 = vst.msk [vmem:[#allocation2 + $0x2a4] sm:$0xf] %vm1886, %v1819
      %v6251 = vld [vmem:[#allocation2] sm:$0xff]
      %v6252 = vld [vmem:[#allocation2 + $0x8] sm:$0xff]
      %v6253 = vld [vmem:[#allocation2 + $0x10] sm:$0xf]
      %v6254 = vld [vmem:[#allocation2 + $0x14] sm:$0xff]
      %v6255 = vld [vmem:[#allocation2 + $0x1c] sm:$0xff]
      %v6256 = vld [vmem:[#allocation2 + $0x24] sm:$0xf]
      %v6257 = vld [vmem:[#allocation2 + $0x28] sm:$0xff]
      %v6258 = vld [vmem:[#allocation2 + $0x30] sm:$0xff]
      %v6259 = vld [vmem:[#allocation2 + $0x38] sm:$0xf]
      %v6260 = vld [vmem:[#allocation2 + $0x3c] sm:$0xff]
      %v6261 = vld [vmem:[#allocation2 + $0x44] sm:$0xff]
      %v6262 = vld [vmem:[#allocation2 + $0x4c] sm:$0xf]
      %v6263 = vld [vmem:[#allocation2 + $0x50] sm:$0xff]
      %v6264 = vld [vmem:[#allocation2 + $0x58] sm:$0xff]
      %v6265 = vld [vmem:[#allocation2 + $0x60] sm:$0xf]
      %v6266 = vld [vmem:[#allocation2 + $0x64] sm:$0xff]
      %v6267 = vld [vmem:[#allocation2 + $0x6c] sm:$0xff]
      %v6268 = vld [vmem:[#allocation2 + $0x74] sm:$0xf]
      %v6269 = vld [vmem:[#allocation2 + $0x78] sm:$0xff]
      %v6270 = vld [vmem:[#allocation2 + $0x80] sm:$0xff]
      %v6271 = vld [vmem:[#allocation2 + $0x88] sm:$0xf]
      %v6272 = vld [vmem:[#allocation2 + $0x8c] sm:$0xff]
      %v6273 = vld [vmem:[#allocation2 + $0x94] sm:$0xff]
      %v6274 = vld [vmem:[#allocation2 + $0x9c] sm:$0xf]
      %v6275 = vld [vmem:[#allocation2 + $0xa0] sm:$0xff]
      %v6276 = vld [vmem:[#allocation2 + $0xa8] sm:$0xff]
      %v6277 = vld [vmem:[#allocation2 + $0xb0] sm:$0xf]
      %v6278 = vld [vmem:[#allocation2 + $0xb4] sm:$0xff]
      %v6279 = vld [vmem:[#allocation2 + $0xbc] sm:$0xff]
      %v6280 = vld [vmem:[#allocation2 + $0xc4] sm:$0xf]
      %v6281 = vld [vmem:[#allocation2 + $0xc8] sm:$0xff]
      %v6282 = vld [vmem:[#allocation2 + $0xd0] sm:$0xff]
      %v6283 = vld [vmem:[#allocation2 + $0xd8] sm:$0xf]
      %v6284 = vld [vmem:[#allocation2 + $0xdc] sm:$0xff]
      %v6285 = vld [vmem:[#allocation2 + $0xe4] sm:$0xff]
      %v6286 = vld [vmem:[#allocation2 + $0xec] sm:$0xf]
      %v6287 = vld [vmem:[#allocation2 + $0xf0] sm:$0xff]
      %v6288 = vld [vmem:[#allocation2 + $0xf8] sm:$0xff]
      %v6289 = vld [vmem:[#allocation2 + $0x100] sm:$0xf]
      %v6290 = vld [vmem:[#allocation2 + $0x104] sm:$0xff]
      %v6291 = vld [vmem:[#allocation2 + $0x10c] sm:$0xff]
      %v6292 = vld [vmem:[#allocation2 + $0x114] sm:$0xf]
      %v6293 = vld [vmem:[#allocation2 + $0x118] sm:$0xff]
      %v6294 = vld [vmem:[#allocation2 + $0x120] sm:$0xff]
      %v6295 = vld [vmem:[#allocation2 + $0x128] sm:$0xf]
      %v6296 = vld [vmem:[#allocation2 + $0x12c] sm:$0xff]
      %v6297 = vld [vmem:[#allocation2 + $0x134] sm:$0xff]
      %v6298 = vld [vmem:[#allocation2 + $0x13c] sm:$0xf]
      %v6299 = vld [vmem:[#allocation2 + $0x140] sm:$0xff]
      %v6300 = vld [vmem:[#allocation2 + $0x148] sm:$0xff]
      %v6301 = vld [vmem:[#allocation2 + $0x150] sm:$0xf]
      %v6302 = vld [vmem:[#allocation2 + $0x154] sm:$0xff]
      %v6303 = vld [vmem:[#allocation2 + $0x15c] sm:$0xff]
      %v6304 = vld [vmem:[#allocation2 + $0x164] sm:$0xf]
      %v6305 = vld [vmem:[#allocation2 + $0x168] sm:$0xff]
      %v6306 = vld [vmem:[#allocation2 + $0x170] sm:$0xff]
      %v6307 = vld [vmem:[#allocation2 + $0x178] sm:$0xf]
      %v6308 = vld [vmem:[#allocation2 + $0x17c] sm:$0xff]
      %v6309 = vld [vmem:[#allocation2 + $0x184] sm:$0xff]
      %v6310 = vld [vmem:[#allocation2 + $0x18c] sm:$0xf]
      %v6311 = vld [vmem:[#allocation2 + $0x190] sm:$0xff]
      %v6312 = vld [vmem:[#allocation2 + $0x198] sm:$0xff]
      %v6313 = vld [vmem:[#allocation2 + $0x1a0] sm:$0xf]
      %v6314 = vld [vmem:[#allocation2 + $0x1a4] sm:$0xff]
      %v6315 = vld [vmem:[#allocation2 + $0x1ac] sm:$0xff]
      %v6316 = vld [vmem:[#allocation2 + $0x1b4] sm:$0xf]
      %v6317 = vld [vmem:[#allocation2 + $0x1b8] sm:$0xff]
      %v6318 = vld [vmem:[#allocation2 + $0x1c0] sm:$0xff]
      %v6319 = vld [vmem:[#allocation2 + $0x1c8] sm:$0xf]
      %v6320 = vld [vmem:[#allocation2 + $0x1cc] sm:$0xff]
      %v6321 = vld [vmem:[#allocation2 + $0x1d4] sm:$0xff]
      %v6322 = vld [vmem:[#allocation2 + $0x1dc] sm:$0xf]
      %v6323 = vld [vmem:[#allocation2 + $0x1e0] sm:$0xff]
      %v6324 = vld [vmem:[#allocation2 + $0x1e8] sm:$0xff]
      %v6325 = vld [vmem:[#allocation2 + $0x1f0] sm:$0xf]
      %v6326 = vld [vmem:[#allocation2 + $0x1f4] sm:$0xff]
      %v6327 = vld [vmem:[#allocation2 + $0x1fc] sm:$0xff]
      %v6328 = vld [vmem:[#allocation2 + $0x204] sm:$0xf]
      %v6329 = vld [vmem:[#allocation2 + $0x208] sm:$0xff]
      %v6330 = vld [vmem:[#allocation2 + $0x210] sm:$0xff]
      %v6331 = vld [vmem:[#allocation2 + $0x218] sm:$0xf]
      %v6332 = vld [vmem:[#allocation2 + $0x21c] sm:$0xff]
      %v6333 = vld [vmem:[#allocation2 + $0x224] sm:$0xff]
      %v6334 = vld [vmem:[#allocation2 + $0x22c] sm:$0xf]
      %v6335 = vld [vmem:[#allocation2 + $0x230] sm:$0xff]
      %v6336 = vld [vmem:[#allocation2 + $0x238] sm:$0xff]
      %v6337 = vld [vmem:[#allocation2 + $0x240] sm:$0xf]
      %v6338 = vld [vmem:[#allocation2 + $0x244] sm:$0xff]
      %v6339 = vld [vmem:[#allocation2 + $0x24c] sm:$0xff]
      %v6340 = vld [vmem:[#allocation2 + $0x254] sm:$0xf]
      %v6341 = vld [vmem:[#allocation2 + $0x258] sm:$0xff]
      %v6342 = vld [vmem:[#allocation2 + $0x260] sm:$0xff]
      %v6343 = vld [vmem:[#allocation2 + $0x268] sm:$0xf]
      %v6344 = vld [vmem:[#allocation2 + $0x26c] sm:$0xff]
      %v6345 = vld [vmem:[#allocation2 + $0x274] sm:$0xff]
      %v6346 = vld [vmem:[#allocation2 + $0x27c] sm:$0xf]
      %v6347 = vld [vmem:[#allocation2 + $0x280] sm:$0xff]
      %v6348 = vld [vmem:[#allocation2 + $0x288] sm:$0xff]
      %v6349 = vld [vmem:[#allocation2 + $0x290] sm:$0xf]
      %v6350 = vld [vmem:[#allocation2 + $0x294] sm:$0xff]
      %v6351 = vld [vmem:[#allocation2 + $0x29c] sm:$0xff]
      %v6352 = vld [vmem:[#allocation2 + $0x2a4] sm:$0xf]
      %s6353 = scalar_lea.vmem %s488, 288
      %v6354 = vld [vmem:[%s6353] sm:$0xf]
      %v6355 = vld [vmem:[%s6353 + $0x4] sm:$0xf]
      %v6356 = vld [vmem:[%s6353 + $0x8] sm:$0xf]
      %v6357 = vld [vmem:[%s6353 + $0xc] sm:$0xf]
      %v6358 = vld [vmem:[%s6353 + $0x10] sm:$0xf]
      %v6359 = vld [vmem:[%s6353 + $0x14] sm:$0xf]
      %v6360 = vld [vmem:[%s6353 + $0x18] sm:$0xf]
      %v6361 = vld [vmem:[%s6353 + $0x1c] sm:$0xf]
      %v6362 = vld [vmem:[%s6353 + $0x20] sm:$0xf]
      %v6363 = vld [vmem:[%s6353 + $0x24] sm:$0xf]
      %v6364 = vld [vmem:[%s6353 + $0x28] sm:$0xf]
      %v6365 = vld [vmem:[%s6353 + $0x2c] sm:$0xf]
      %v6366 = vld [vmem:[%s6353 + $0x30] sm:$0xf]
      %v6367 = vld [vmem:[%s6353 + $0x34] sm:$0xf]
      %v6368 = vld [vmem:[%s6353 + $0x38] sm:$0xf]
      %v6369 = vld [vmem:[%s6353 + $0x3c] sm:$0xf]
      %v6370 = vld [vmem:[%s6353 + $0x40] sm:$0xf]
      %v6371 = vld [vmem:[%s6353 + $0x44] sm:$0xf]
      %v6372 = vld [vmem:[%s6353 + $0x48] sm:$0xf]
      %v6373 = vld [vmem:[%s6353 + $0x4c] sm:$0xf]
      %v6374 = vld [vmem:[%s6353 + $0x50] sm:$0xf]
      %v6375 = vld [vmem:[%s6353 + $0x54] sm:$0xf]
      %v6376 = vld [vmem:[%s6353 + $0x58] sm:$0xf]
      %v6377 = vld [vmem:[%s6353 + $0x5c] sm:$0xf]
      %v6378 = vld [vmem:[%s6353 + $0x60] sm:$0xf]
      %v6379 = vld [vmem:[%s6353 + $0x64] sm:$0xf]
      %v6380 = vld [vmem:[%s6353 + $0x68] sm:$0xf]
      %v6381 = vld [vmem:[%s6353 + $0x6c] sm:$0xf]
      %v6382 = vld [vmem:[%s6353 + $0x70] sm:$0xf]
      %v6383 = vld [vmem:[%s6353 + $0x74] sm:$0xf]
      %v6384 = vld [vmem:[%s6353 + $0x78] sm:$0xf]
      %v6385 = vld [vmem:[%s6353 + $0x7c] sm:$0xf]
      %v6386 = vld [vmem:[%s6353 + $0x80] sm:$0xf]
      %v6387 = vld [vmem:[%s6353 + $0x84] sm:$0xf]
      %v6388 = vld [vmem:[%s6353 + $0x88] sm:$0xf]
      %v6389 = vld [vmem:[%s6353 + $0x8c] sm:$0xf]
      %v6390 = vld [vmem:[%s6353 + $0x90] sm:$0xf]
      %v6391 = vld [vmem:[%s6353 + $0x94] sm:$0xf]
      %v6392 = vld [vmem:[%s6353 + $0x98] sm:$0xf]
      %v6393 = vld [vmem:[%s6353 + $0x9c] sm:$0xf]
      %v6394 = vld [vmem:[%s6353 + $0xa0] sm:$0xf]
      %v6395 = vld [vmem:[%s6353 + $0xa4] sm:$0xf]
      %v6396 = vld [vmem:[%s6353 + $0xa8] sm:$0xf]
      %v6397 = vld [vmem:[%s6353 + $0xac] sm:$0xf]
      %v6398 = vld [vmem:[%s6353 + $0xb0] sm:$0xf]
      %v6399 = vld [vmem:[%s6353 + $0xb4] sm:$0xf]
      %v6400 = vld [vmem:[%s6353 + $0xb8] sm:$0xf]
      %v6401 = vld [vmem:[%s6353 + $0xbc] sm:$0xf]
      %v6402 = vld [vmem:[%s6353 + $0xc0] sm:$0xf]
      %v6403 = vld [vmem:[%s6353 + $0xc4] sm:$0xf]
      %v6404 = vld [vmem:[%s6353 + $0xc8] sm:$0xf]
      %v6405 = vld [vmem:[%s6353 + $0xcc] sm:$0xf]
      %v6406 = vld [vmem:[%s6353 + $0xd0] sm:$0xf]
      %v6407 = vld [vmem:[%s6353 + $0xd4] sm:$0xf]
      %v6408 = vld [vmem:[%s6353 + $0xd8] sm:$0xf]
      %v6409 = vld [vmem:[%s6353 + $0xdc] sm:$0xf]
      %v6410 = vld [vmem:[%s6353 + $0xe0] sm:$0xf]
      %v6411 = vld [vmem:[%s6353 + $0xe4] sm:$0xf]
      %v6412 = vld [vmem:[%s6353 + $0xe8] sm:$0xf]
      %v6413 = vld [vmem:[%s6353 + $0xec] sm:$0xf]
      %v6414 = vld [vmem:[%s6353 + $0xf0] sm:$0xf]
      %v6415 = vld [vmem:[%s6353 + $0xf4] sm:$0xf]
      %v6416 = vld [vmem:[%s6353 + $0xf8] sm:$0xf]
      %v6417 = vld [vmem:[%s6353 + $0xfc] sm:$0xf]
      %v6418 = vld [vmem:[%s6353 + $0x100] sm:$0xf]
      %v6419 = vld [vmem:[%s6353 + $0x104] sm:$0xf]
      %v6420 = vld [vmem:[%s6353 + $0x108] sm:$0xf]
      %v6421 = vld [vmem:[%s6353 + $0x10c] sm:$0xf]
      %v6422 = vld [vmem:[%s6353 + $0x110] sm:$0xf]
      %v6423 = vld [vmem:[%s6353 + $0x114] sm:$0xf]
      %v6424 = vld [vmem:[%s6353 + $0x118] sm:$0xf]
      %v6425 = vld [vmem:[%s6353 + $0x11c] sm:$0xf]
      %s6426 = scalar_lea.vmem %s493, 1
      %v6427 = vld [vmem:[%s6426] sm:$0x1]
      %v6429 = vperm.slane %v6427, 0
      %v6533 = vunpack.c.l.b16 %v6251
      %v6534 = vunpack.c.h.b16 %v6251
      %v6535 = vunpack.c.l.b16 %v6252
      %v6536 = vunpack.c.h.b16 %v6252
      %v6537 = vunpack.c.l.b16 %v6253
      %v6538 = vunpack.c.l.b16 %v6254
      %v6539 = vunpack.c.h.b16 %v6254
      %v6540 = vunpack.c.l.b16 %v6255
      %v6541 = vunpack.c.h.b16 %v6255
      %v6542 = vunpack.c.l.b16 %v6256
      %v6543 = vunpack.c.l.b16 %v6257
      %v6544 = vunpack.c.h.b16 %v6257
      %v6545 = vunpack.c.l.b16 %v6258
      %v6546 = vunpack.c.h.b16 %v6258
      %v6547 = vunpack.c.l.b16 %v6259
      %v6548 = vunpack.c.l.b16 %v6260
      %v6549 = vunpack.c.h.b16 %v6260
      %v6550 = vunpack.c.l.b16 %v6261
      %v6551 = vunpack.c.h.b16 %v6261
      %v6552 = vunpack.c.l.b16 %v6262
      %v6553 = vunpack.c.l.b16 %v6263
      %v6554 = vunpack.c.h.b16 %v6263
      %v6555 = vunpack.c.l.b16 %v6264
      %v6556 = vunpack.c.h.b16 %v6264
      %v6557 = vunpack.c.l.b16 %v6265
      %v6558 = vunpack.c.l.b16 %v6266
      %v6559 = vunpack.c.h.b16 %v6266
      %v6560 = vunpack.c.l.b16 %v6267
      %v6561 = vunpack.c.h.b16 %v6267
      %v6562 = vunpack.c.l.b16 %v6268
      %v6563 = vunpack.c.l.b16 %v6269
      %v6564 = vunpack.c.h.b16 %v6269
      %v6565 = vunpack.c.l.b16 %v6270
      %v6566 = vunpack.c.h.b16 %v6270
      %v6567 = vunpack.c.l.b16 %v6271
      %v6568 = vunpack.c.l.b16 %v6272
      %v6569 = vunpack.c.h.b16 %v6272
      %v6570 = vunpack.c.l.b16 %v6273
      %v6571 = vunpack.c.h.b16 %v6273
      %v6572 = vunpack.c.l.b16 %v6274
      %v6573 = vunpack.c.l.b16 %v6275
      %v6574 = vunpack.c.h.b16 %v6275
      %v6575 = vunpack.c.l.b16 %v6276
      %v6576 = vunpack.c.h.b16 %v6276
      %v6577 = vunpack.c.l.b16 %v6277
      %v6578 = vunpack.c.l.b16 %v6278
      %v6579 = vunpack.c.h.b16 %v6278
      %v6580 = vunpack.c.l.b16 %v6279
      %v6581 = vunpack.c.h.b16 %v6279
      %v6582 = vunpack.c.l.b16 %v6280
      %v6583 = vunpack.c.l.b16 %v6281
      %v6584 = vunpack.c.h.b16 %v6281
      %v6585 = vunpack.c.l.b16 %v6282
      %v6586 = vunpack.c.h.b16 %v6282
      %v6587 = vunpack.c.l.b16 %v6283
      %v6588 = vunpack.c.l.b16 %v6284
      %v6589 = vunpack.c.h.b16 %v6284
      %v6590 = vunpack.c.l.b16 %v6285
      %v6591 = vunpack.c.h.b16 %v6285
      %v6592 = vunpack.c.l.b16 %v6286
      %v6593 = vunpack.c.l.b16 %v6287
      %v6594 = vunpack.c.h.b16 %v6287
      %v6595 = vunpack.c.l.b16 %v6288
      %v6596 = vunpack.c.h.b16 %v6288
      %v6597 = vunpack.c.l.b16 %v6289
      %v6598 = vunpack.c.l.b16 %v6290
      %v6599 = vunpack.c.h.b16 %v6290
      %v6600 = vunpack.c.l.b16 %v6291
      %v6601 = vunpack.c.h.b16 %v6291
      %v6602 = vunpack.c.l.b16 %v6292
      %v6603 = vunpack.c.l.b16 %v6293
      %v6604 = vunpack.c.h.b16 %v6293
      %v6605 = vunpack.c.l.b16 %v6294
      %v6606 = vunpack.c.h.b16 %v6294
      %v6607 = vunpack.c.l.b16 %v6295
      %v6608 = vunpack.c.l.b16 %v6296
      %v6609 = vunpack.c.h.b16 %v6296
      %v6610 = vunpack.c.l.b16 %v6297
      %v6611 = vunpack.c.h.b16 %v6297
      %v6612 = vunpack.c.l.b16 %v6298
      %v6613 = vunpack.c.l.b16 %v6299
      %v6614 = vunpack.c.h.b16 %v6299
      %v6615 = vunpack.c.l.b16 %v6300
      %v6616 = vunpack.c.h.b16 %v6300
      %v6617 = vunpack.c.l.b16 %v6301
      %v6618 = vunpack.c.l.b16 %v6302
      %v6619 = vunpack.c.h.b16 %v6302
      %v6620 = vunpack.c.l.b16 %v6303
      %v6621 = vunpack.c.h.b16 %v6303
      %v6622 = vunpack.c.l.b16 %v6304
      %v6623 = vunpack.c.l.b16 %v6305
      %v6624 = vunpack.c.h.b16 %v6305
      %v6625 = vunpack.c.l.b16 %v6306
      %v6626 = vunpack.c.h.b16 %v6306
      %v6627 = vunpack.c.l.b16 %v6307
      %v6628 = vunpack.c.l.b16 %v6308
      %v6629 = vunpack.c.h.b16 %v6308
      %v6630 = vunpack.c.l.b16 %v6309
      %v6631 = vunpack.c.h.b16 %v6309
      %v6632 = vunpack.c.l.b16 %v6310
      %v6633 = vunpack.c.l.b16 %v6311
      %v6634 = vunpack.c.h.b16 %v6311
      %v6635 = vunpack.c.l.b16 %v6312
      %v6636 = vunpack.c.h.b16 %v6312
      %v6637 = vunpack.c.l.b16 %v6313
      %v6638 = vunpack.c.l.b16 %v6314
      %v6639 = vunpack.c.h.b16 %v6314
      %v6640 = vunpack.c.l.b16 %v6315
      %v6641 = vunpack.c.h.b16 %v6315
      %v6642 = vunpack.c.l.b16 %v6316
      %v6643 = vunpack.c.l.b16 %v6317
      %v6644 = vunpack.c.h.b16 %v6317
      %v6645 = vunpack.c.l.b16 %v6318
      %v6646 = vunpack.c.h.b16 %v6318
      %v6647 = vunpack.c.l.b16 %v6319
      %v6648 = vunpack.c.l.b16 %v6320
      %v6649 = vunpack.c.h.b16 %v6320
      %v6650 = vunpack.c.l.b16 %v6321
      %v6651 = vunpack.c.h.b16 %v6321
      %v6652 = vunpack.c.l.b16 %v6322
      %v6653 = vunpack.c.l.b16 %v6323
      %v6654 = vunpack.c.h.b16 %v6323
      %v6655 = vunpack.c.l.b16 %v6324
      %v6656 = vunpack.c.h.b16 %v6324
      %v6657 = vunpack.c.l.b16 %v6325
      %v6658 = vunpack.c.l.b16 %v6326
      %v6659 = vunpack.c.h.b16 %v6326
      %v6660 = vunpack.c.l.b16 %v6327
      %v6661 = vunpack.c.h.b16 %v6327
      %v6662 = vunpack.c.l.b16 %v6328
      %v6663 = vunpack.c.l.b16 %v6329
      %v6664 = vunpack.c.h.b16 %v6329
      %v6665 = vunpack.c.l.b16 %v6330
      %v6666 = vunpack.c.h.b16 %v6330
      %v6667 = vunpack.c.l.b16 %v6331
      %v6668 = vunpack.c.l.b16 %v6332
      %v6669 = vunpack.c.h.b16 %v6332
      %v6670 = vunpack.c.l.b16 %v6333
      %v6671 = vunpack.c.h.b16 %v6333
      %v6672 = vunpack.c.l.b16 %v6334
      %v6673 = vunpack.c.l.b16 %v6335
      %v6674 = vunpack.c.h.b16 %v6335
      %v6675 = vunpack.c.l.b16 %v6336
      %v6676 = vunpack.c.h.b16 %v6336
      %v6677 = vunpack.c.l.b16 %v6337
      %v6678 = vunpack.c.l.b16 %v6338
      %v6679 = vunpack.c.h.b16 %v6338
      %v6680 = vunpack.c.l.b16 %v6339
      %v6681 = vunpack.c.h.b16 %v6339
      %v6682 = vunpack.c.l.b16 %v6340
      %v6683 = vunpack.c.l.b16 %v6341
      %v6684 = vunpack.c.h.b16 %v6341
      %v6685 = vunpack.c.l.b16 %v6342
      %v6686 = vunpack.c.h.b16 %v6342
      %v6687 = vunpack.c.l.b16 %v6343
      %v6688 = vunpack.c.l.b16 %v6344
      %v6689 = vunpack.c.h.b16 %v6344
      %v6690 = vunpack.c.l.b16 %v6345
      %v6691 = vunpack.c.h.b16 %v6345
      %v6692 = vunpack.c.l.b16 %v6346
      %v6693 = vunpack.c.l.b16 %v6347
      %v6694 = vunpack.c.h.b16 %v6347
      %v6695 = vunpack.c.l.b16 %v6348
      %v6696 = vunpack.c.h.b16 %v6348
      %v6697 = vunpack.c.l.b16 %v6349
      %v6698 = vunpack.c.l.b16 %v6350
      %v6699 = vunpack.c.h.b16 %v6350
      %v6700 = vunpack.c.l.b16 %v6351
      %v6701 = vunpack.c.h.b16 %v6351
      %v6702 = vunpack.c.l.b16 %v6352
      %v6703 = vpack.c.b16 %v6538, %v6533
      %v6704 = vpack.c.b16 %v6539, %v6534
      %v6705 = vpack.c.b16 %v6540, %v6535
      %v6706 = vpack.c.b16 %v6541, %v6536
      %v6707 = vpack.c.b16 %v6542, %v6537
      %v6708 = vpack.c.b16 %v6548, %v6543
      %v6709 = vpack.c.b16 %v6549, %v6544
      %v6710 = vpack.c.b16 %v6550, %v6545
      %v6711 = vpack.c.b16 %v6551, %v6546
      %v6712 = vpack.c.b16 %v6552, %v6547
      %v6713 = vpack.c.b16 %v6558, %v6553
      %v6714 = vpack.c.b16 %v6559, %v6554
      %v6715 = vpack.c.b16 %v6560, %v6555
      %v6716 = vpack.c.b16 %v6561, %v6556
      %v6717 = vpack.c.b16 %v6562, %v6557
      %v6718 = vpack.c.b16 %v6568, %v6563
      %v6719 = vpack.c.b16 %v6569, %v6564
      %v6720 = vpack.c.b16 %v6570, %v6565
      %v6721 = vpack.c.b16 %v6571, %v6566
      %v6722 = vpack.c.b16 %v6572, %v6567
      %v6723 = vpack.c.b16 %v6578, %v6573
      %v6724 = vpack.c.b16 %v6579, %v6574
      %v6725 = vpack.c.b16 %v6580, %v6575
      %v6726 = vpack.c.b16 %v6581, %v6576
      %v6727 = vpack.c.b16 %v6582, %v6577
      %v6728 = vpack.c.b16 %v6588, %v6583
      %v6729 = vpack.c.b16 %v6589, %v6584
      %v6730 = vpack.c.b16 %v6590, %v6585
      %v6731 = vpack.c.b16 %v6591, %v6586
      %v6732 = vpack.c.b16 %v6592, %v6587
      %v6733 = vpack.c.b16 %v6598, %v6593
      %v6734 = vpack.c.b16 %v6599, %v6594
      %v6735 = vpack.c.b16 %v6600, %v6595
      %v6736 = vpack.c.b16 %v6601, %v6596
      %v6737 = vpack.c.b16 %v6602, %v6597
      %v6738 = vpack.c.b16 %v6608, %v6603
      %v6739 = vpack.c.b16 %v6609, %v6604
      %v6740 = vpack.c.b16 %v6610, %v6605
      %v6741 = vpack.c.b16 %v6611, %v6606
      %v6742 = vpack.c.b16 %v6612, %v6607
      %v6743 = vpack.c.b16 %v6618, %v6613
      %v6744 = vpack.c.b16 %v6619, %v6614
      %v6745 = vpack.c.b16 %v6620, %v6615
      %v6746 = vpack.c.b16 %v6621, %v6616
      %v6747 = vpack.c.b16 %v6622, %v6617
      %v6748 = vpack.c.b16 %v6628, %v6623
      %v6749 = vpack.c.b16 %v6629, %v6624
      %v6750 = vpack.c.b16 %v6630, %v6625
      %v6751 = vpack.c.b16 %v6631, %v6626
      %v6752 = vpack.c.b16 %v6632, %v6627
      %v6753 = vpack.c.b16 %v6638, %v6633
      %v6754 = vpack.c.b16 %v6639, %v6634
      %v6755 = vpack.c.b16 %v6640, %v6635
      %v6756 = vpack.c.b16 %v6641, %v6636
      %v6757 = vpack.c.b16 %v6642, %v6637
      %v6758 = vpack.c.b16 %v6648, %v6643
      %v6759 = vpack.c.b16 %v6649, %v6644
      %v6760 = vpack.c.b16 %v6650, %v6645
      %v6761 = vpack.c.b16 %v6651, %v6646
      %v6762 = vpack.c.b16 %v6652, %v6647
      %v6763 = vpack.c.b16 %v6658, %v6653
      %v6764 = vpack.c.b16 %v6659, %v6654
      %v6765 = vpack.c.b16 %v6660, %v6655
      %v6766 = vpack.c.b16 %v6661, %v6656
      %v6767 = vpack.c.b16 %v6662, %v6657
      %v6768 = vpack.c.b16 %v6668, %v6663
      %v6769 = vpack.c.b16 %v6669, %v6664
      %v6770 = vpack.c.b16 %v6670, %v6665
      %v6771 = vpack.c.b16 %v6671, %v6666
      %v6772 = vpack.c.b16 %v6672, %v6667
      %v6773 = vpack.c.b16 %v6678, %v6673
      %v6774 = vpack.c.b16 %v6679, %v6674
      %v6775 = vpack.c.b16 %v6680, %v6675
      %v6776 = vpack.c.b16 %v6681, %v6676
      %v6777 = vpack.c.b16 %v6682, %v6677
      %v6778 = vpack.c.b16 %v6688, %v6683
      %v6779 = vpack.c.b16 %v6689, %v6684
      %v6780 = vpack.c.b16 %v6690, %v6685
      %v6781 = vpack.c.b16 %v6691, %v6686
      %v6782 = vpack.c.b16 %v6692, %v6687
      %v6783 = vpack.c.b16 %v6698, %v6693
      %v6784 = vpack.c.b16 %v6699, %v6694
      %v6785 = vpack.c.b16 %v6700, %v6695
      %v6786 = vpack.c.b16 %v6701, %v6696
      %v6787 = vpack.c.b16 %v6702, %v6697
      %v6928 = vunpack.c.l.b16 %v6354
      %v6929 = vunpack.c.l.b16 %v6355
      %v6930 = vunpack.c.l.b16 %v6356
      %v6931 = vunpack.c.l.b16 %v6357
      %v6932 = vunpack.c.l.b16 %v6358
      %v6933 = vunpack.c.l.b16 %v6359
      %v6934 = vunpack.c.l.b16 %v6360
      %v6935 = vunpack.c.l.b16 %v6361
      %v6936 = vunpack.c.l.b16 %v6362
      %v6937 = vunpack.c.l.b16 %v6363
      %v6938 = vunpack.c.l.b16 %v6364
      %v6939 = vunpack.c.l.b16 %v6365
      %v6940 = vunpack.c.l.b16 %v6366
      %v6941 = vunpack.c.l.b16 %v6367
      %v6942 = vunpack.c.l.b16 %v6368
      %v6943 = vunpack.c.l.b16 %v6369
      %v6944 = vunpack.c.l.b16 %v6370
      %v6945 = vunpack.c.l.b16 %v6371
      %v6946 = vunpack.c.l.b16 %v6372
      %v6947 = vunpack.c.l.b16 %v6373
      %v6948 = vunpack.c.l.b16 %v6374
      %v6949 = vunpack.c.l.b16 %v6375
      %v6950 = vunpack.c.l.b16 %v6376
      %v6951 = vunpack.c.l.b16 %v6377
      %v6952 = vunpack.c.l.b16 %v6378
      %v6953 = vunpack.c.l.b16 %v6379
      %v6954 = vunpack.c.l.b16 %v6380
      %v6955 = vunpack.c.l.b16 %v6381
      %v6956 = vunpack.c.l.b16 %v6382
      %v6957 = vunpack.c.l.b16 %v6383
      %v6958 = vunpack.c.l.b16 %v6384
      %v6959 = vunpack.c.l.b16 %v6385
      %v6960 = vunpack.c.l.b16 %v6386
      %v6961 = vunpack.c.l.b16 %v6387
      %v6962 = vunpack.c.l.b16 %v6388
      %v6963 = vunpack.c.l.b16 %v6389
      %v6964 = vunpack.c.l.b16 %v6390
      %v6965 = vunpack.c.l.b16 %v6391
      %v6966 = vunpack.c.l.b16 %v6392
      %v6967 = vunpack.c.l.b16 %v6393
      %v6968 = vunpack.c.l.b16 %v6394
      %v6969 = vunpack.c.l.b16 %v6395
      %v6970 = vunpack.c.l.b16 %v6396
      %v6971 = vunpack.c.l.b16 %v6397
      %v6972 = vunpack.c.l.b16 %v6398
      %v6973 = vunpack.c.l.b16 %v6399
      %v6974 = vunpack.c.l.b16 %v6400
      %v6975 = vunpack.c.l.b16 %v6401
      %v6976 = vunpack.c.l.b16 %v6402
      %v6977 = vunpack.c.l.b16 %v6403
      %v6978 = vunpack.c.l.b16 %v6404
      %v6979 = vunpack.c.l.b16 %v6405
      %v6980 = vunpack.c.l.b16 %v6406
      %v6981 = vunpack.c.l.b16 %v6407
      %v6982 = vunpack.c.l.b16 %v6408
      %v6983 = vunpack.c.l.b16 %v6409
      %v6984 = vunpack.c.l.b16 %v6410
      %v6985 = vunpack.c.l.b16 %v6411
      %v6986 = vunpack.c.l.b16 %v6412
      %v6987 = vunpack.c.l.b16 %v6413
      %v6988 = vunpack.c.l.b16 %v6414
      %v6989 = vunpack.c.l.b16 %v6415
      %v6990 = vunpack.c.l.b16 %v6416
      %v6991 = vunpack.c.l.b16 %v6417
      %v6992 = vunpack.c.l.b16 %v6418
      %v6993 = vunpack.c.l.b16 %v6419
      %v6994 = vunpack.c.l.b16 %v6420
      %v6995 = vunpack.c.l.b16 %v6421
      %v6996 = vunpack.c.l.b16 %v6422
      %v6997 = vunpack.c.l.b16 %v6423
      %v6998 = vunpack.c.l.b16 %v6424
      %v6999 = vunpack.c.l.b16 %v6425
      %v7000 = vpack.c.b16 %v6929, %v6928
      %v7001 = vpack.c.b16 %v6931, %v6930
      %v7002 = vpack.c.b16 %v6933, %v6932
      %v7003 = vpack.c.b16 %v6935, %v6934
      %v7004 = vpack.c.b16 %v6937, %v6936
      %v7005 = vpack.c.b16 %v6939, %v6938
      %v7006 = vpack.c.b16 %v6941, %v6940
      %v7007 = vpack.c.b16 %v6943, %v6942
      %v7008 = vpack.c.b16 %v6945, %v6944
      %v7009 = vpack.c.b16 %v6947, %v6946
      %v7010 = vpack.c.b16 %v6949, %v6948
      %v7011 = vpack.c.b16 %v6951, %v6950
      %v7012 = vpack.c.b16 %v6953, %v6952
      %v7013 = vpack.c.b16 %v6955, %v6954
      %v7014 = vpack.c.b16 %v6957, %v6956
      %v7015 = vpack.c.b16 %v6959, %v6958
      %v7016 = vpack.c.b16 %v6961, %v6960
      %v7017 = vpack.c.b16 %v6963, %v6962
      %v7018 = vpack.c.b16 %v6965, %v6964
      %v7019 = vpack.c.b16 %v6967, %v6966
      %v7020 = vpack.c.b16 %v6969, %v6968
      %v7021 = vpack.c.b16 %v6971, %v6970
      %v7022 = vpack.c.b16 %v6973, %v6972
      %v7023 = vpack.c.b16 %v6975, %v6974
      %v7024 = vpack.c.b16 %v6977, %v6976
      %v7025 = vpack.c.b16 %v6979, %v6978
      %v7026 = vpack.c.b16 %v6981, %v6980
      %v7027 = vpack.c.b16 %v6983, %v6982
      %v7028 = vpack.c.b16 %v6985, %v6984
      %v7029 = vpack.c.b16 %v6987, %v6986
      %v7030 = vpack.c.b16 %v6989, %v6988
      %v7031 = vpack.c.b16 %v6991, %v6990
      %v7032 = vpack.c.b16 %v6993, %v6992
      %v7033 = vpack.c.b16 %v6995, %v6994
      %v7034 = vpack.c.b16 %v6997, %v6996
      %v7035 = vpack.c.b16 %v6999, %v6998
      %v7073 = vsel %vm1082, %v6707, 0
      %v7076 = vsel %vm1082, %v6712, 0
      %v7079 = vsel %vm1082, %v6717, 0
      %v7082 = vsel %vm1082, %v6722, 0
      %v7085 = vsel %vm1082, %v6727, 0
      %v7088 = vsel %vm1082, %v6732, 0
      %v7091 = vsel %vm1082, %v6737, 0
      %v7094 = vsel %vm1082, %v6742, 0
      %v7097 = vsel %vm1082, %v6747, 0
      %v7100 = vsel %vm1082, %v6752, 0
      %v7103 = vsel %vm1082, %v6757, 0
      %v7106 = vsel %vm1082, %v6762, 0
      %v7109 = vsel %vm1082, %v6767, 0
      %v7112 = vsel %vm1082, %v6772, 0
      %v7115 = vsel %vm1082, %v6777, 0
      %v7118 = vsel %vm1082, %v6782, 0
      %v7121 = vsel %vm1082, %v6787, 0
      %7123 = vmatpush.bf16.msra.mxu0 %v7007
      %7124 = vmatpush.bf16.msra.mxu0 %v7006
      %7125 = vmatpush.bf16.msra.mxu0 %v7005
      %7126 = vmatpush.bf16.msra.mxu0 %v7004
      %7127 = vmatpush.bf16.msra.mxu0 %v7003
      %7128 = vmatpush.bf16.msra.mxu0 %v7002
      %7129 = vmatpush.bf16.msra.mxu0 %v7001
      %7130 = vmatpush.bf16.msra.mxu0 %v7000
      %7131 = vmatmul.bf16.gmra.mxu0 %v6703
      %v7132 = vpop.f32.mrf.mxu0
      %v7133 = vadd.f32 %v6429, %v7132
      %v7134 = vpop.f32.mrf.mxu0
      %v7135 = vadd.f32 %v6429, %v7134
      %7136 = vmatmul.bf16.gmra.mxu0 %v6708
      %v7137 = vpop.f32.mrf.mxu0
      %v7138 = vadd.f32 %v6429, %v7137
      %v7139 = vpop.f32.mrf.mxu0
      %v7140 = vadd.f32 %v6429, %v7139
      %7141 = vmatmul.bf16.gmra.mxu0 %v6713
      %v7142 = vpop.f32.mrf.mxu0
      %v7143 = vadd.f32 %v6429, %v7142
      %v7144 = vpop.f32.mrf.mxu0
      %v7145 = vadd.f32 %v6429, %v7144
      %7146 = vmatmul.bf16.gmra.mxu0 %v6718
      %v7147 = vpop.f32.mrf.mxu0
      %v7148 = vadd.f32 %v6429, %v7147
      %v7149 = vpop.f32.mrf.mxu0
      %v7150 = vadd.f32 %v6429, %v7149
      %7151 = vmatmul.bf16.gmra.mxu0 %v6723
      %v7152 = vpop.f32.mrf.mxu0
      %v7153 = vadd.f32 %v6429, %v7152
      %v7154 = vpop.f32.mrf.mxu0
      %v7155 = vadd.f32 %v6429, %v7154
      %7156 = vmatmul.bf16.gmra.mxu0 %v6728
      %v7157 = vpop.f32.mrf.mxu0
      %v7158 = vadd.f32 %v6429, %v7157
      %v7159 = vpop.f32.mrf.mxu0
      %v7160 = vadd.f32 %v6429, %v7159
      %7161 = vmatmul.bf16.gmra.mxu0 %v6733
      %v7162 = vpop.f32.mrf.mxu0
      %v7163 = vadd.f32 %v6429, %v7162
      %v7164 = vpop.f32.mrf.mxu0
      %v7165 = vadd.f32 %v6429, %v7164
      %7166 = vmatmul.bf16.gmra.mxu0 %v6738
      %v7167 = vpop.f32.mrf.mxu0
      %v7168 = vadd.f32 %v6429, %v7167
      %v7169 = vpop.f32.mrf.mxu0
      %v7170 = vadd.f32 %v6429, %v7169
      %7171 = vmatmul.bf16.gmra.mxu0 %v6743
      %v7172 = vpop.f32.mrf.mxu0
      %v7173 = vadd.f32 %v6429, %v7172
      %v7174 = vpop.f32.mrf.mxu0
      %v7175 = vadd.f32 %v6429, %v7174
      %7176 = vmatmul.bf16.gmra.mxu0 %v6748
      %v7177 = vpop.f32.mrf.mxu0
      %v7178 = vadd.f32 %v6429, %v7177
      %v7179 = vpop.f32.mrf.mxu0
      %v7180 = vadd.f32 %v6429, %v7179
      %7181 = vmatmul.bf16.gmra.mxu0 %v6753
      %v7182 = vpop.f32.mrf.mxu0
      %v7183 = vadd.f32 %v6429, %v7182
      %v7184 = vpop.f32.mrf.mxu0
      %v7185 = vadd.f32 %v6429, %v7184
      %7186 = vmatmul.bf16.gmra.mxu0 %v6758
      %v7187 = vpop.f32.mrf.mxu0
      %v7188 = vadd.f32 %v6429, %v7187
      %v7189 = vpop.f32.mrf.mxu0
      %v7190 = vadd.f32 %v6429, %v7189
      %7191 = vmatmul.bf16.gmra.mxu0 %v6763
      %v7192 = vpop.f32.mrf.mxu0
      %v7193 = vadd.f32 %v6429, %v7192
      %v7194 = vpop.f32.mrf.mxu0
      %v7195 = vadd.f32 %v6429, %v7194
      %7196 = vmatmul.bf16.gmra.mxu0 %v6768
      %v7197 = vpop.f32.mrf.mxu0
      %v7198 = vadd.f32 %v6429, %v7197
      %v7199 = vpop.f32.mrf.mxu0
      %v7200 = vadd.f32 %v6429, %v7199
      %7201 = vmatmul.bf16.gmra.mxu0 %v6773
      %v7202 = vpop.f32.mrf.mxu0
      %v7203 = vadd.f32 %v6429, %v7202
      %v7204 = vpop.f32.mrf.mxu0
      %v7205 = vadd.f32 %v6429, %v7204
      %7206 = vmatmul.bf16.gmra.mxu0 %v6778
      %v7207 = vpop.f32.mrf.mxu0
      %v7208 = vadd.f32 %v6429, %v7207
      %v7209 = vpop.f32.mrf.mxu0
      %v7210 = vadd.f32 %v6429, %v7209
      %7211 = vmatmul.bf16.gmra.mxu0 %v6783
      %v7212 = vpop.f32.mrf.mxu0
      %v7213 = vadd.f32 %v6429, %v7212
      %v7214 = vpop.f32.mrf.mxu0
      %v7215 = vadd.f32 %v6429, %v7214
      %7216 = vdwg.mxu0
      %7217 = vmatpush.bf16.msra.mxu0 %v7015
      %7218 = vmatpush.bf16.msra.mxu0 %v7014
      %7219 = vmatpush.bf16.msra.mxu0 %v7013
      %7220 = vmatpush.bf16.msra.mxu0 %v7012
      %7221 = vmatpush.bf16.msra.mxu0 %v7011
      %7222 = vmatpush.bf16.msra.mxu0 %v7010
      %7223 = vmatpush.bf16.msra.mxu0 %v7009
      %7224 = vmatpush.bf16.msra.mxu0 %v7008
      %7225 = vmatmul.bf16.gmra.mxu0 %v6704
      %v7226 = vpop.f32.mrf.mxu0
      %v7227 = vadd.f32 %v7133, %v7226
      %v7228 = vpop.f32.mrf.mxu0
      %v7229 = vadd.f32 %v7135, %v7228
      %7230 = vmatmul.bf16.gmra.mxu0 %v6709
      %v7231 = vpop.f32.mrf.mxu0
      %v7232 = vadd.f32 %v7138, %v7231
      %v7233 = vpop.f32.mrf.mxu0
      %v7234 = vadd.f32 %v7140, %v7233
      %7235 = vmatmul.bf16.gmra.mxu0 %v6714
      %v7236 = vpop.f32.mrf.mxu0
      %v7237 = vadd.f32 %v7143, %v7236
      %v7238 = vpop.f32.mrf.mxu0
      %v7239 = vadd.f32 %v7145, %v7238
      %7240 = vmatmul.bf16.gmra.mxu0 %v6719
      %v7241 = vpop.f32.mrf.mxu0
      %v7242 = vadd.f32 %v7148, %v7241
      %v7243 = vpop.f32.mrf.mxu0
      %v7244 = vadd.f32 %v7150, %v7243
      %7245 = vmatmul.bf16.gmra.mxu0 %v6724
      %v7246 = vpop.f32.mrf.mxu0
      %v7247 = vadd.f32 %v7153, %v7246
      %v7248 = vpop.f32.mrf.mxu0
      %v7249 = vadd.f32 %v7155, %v7248
      %7250 = vmatmul.bf16.gmra.mxu0 %v6729
      %v7251 = vpop.f32.mrf.mxu0
      %v7252 = vadd.f32 %v7158, %v7251
      %v7253 = vpop.f32.mrf.mxu0
      %v7254 = vadd.f32 %v7160, %v7253
      %7255 = vmatmul.bf16.gmra.mxu0 %v6734
      %v7256 = vpop.f32.mrf.mxu0
      %v7257 = vadd.f32 %v7163, %v7256
      %v7258 = vpop.f32.mrf.mxu0
      %v7259 = vadd.f32 %v7165, %v7258
      %7260 = vmatmul.bf16.gmra.mxu0 %v6739
      %v7261 = vpop.f32.mrf.mxu0
      %v7262 = vadd.f32 %v7168, %v7261
      %v7263 = vpop.f32.mrf.mxu0
      %v7264 = vadd.f32 %v7170, %v7263
      %7265 = vmatmul.bf16.gmra.mxu0 %v6744
      %v7266 = vpop.f32.mrf.mxu0
      %v7267 = vadd.f32 %v7173, %v7266
      %v7268 = vpop.f32.mrf.mxu0
      %v7269 = vadd.f32 %v7175, %v7268
      %7270 = vmatmul.bf16.gmra.mxu0 %v6749
      %v7271 = vpop.f32.mrf.mxu0
      %v7272 = vadd.f32 %v7178, %v7271
      %v7273 = vpop.f32.mrf.mxu0
      %v7274 = vadd.f32 %v7180, %v7273
      %7275 = vmatmul.bf16.gmra.mxu0 %v6754
      %v7276 = vpop.f32.mrf.mxu0
      %v7277 = vadd.f32 %v7183, %v7276
      %v7278 = vpop.f32.mrf.mxu0
      %v7279 = vadd.f32 %v7185, %v7278
      %7280 = vmatmul.bf16.gmra.mxu0 %v6759
      %v7281 = vpop.f32.mrf.mxu0
      %v7282 = vadd.f32 %v7188, %v7281
      %v7283 = vpop.f32.mrf.mxu0
      %v7284 = vadd.f32 %v7190, %v7283
      %7285 = vmatmul.bf16.gmra.mxu0 %v6764
      %v7286 = vpop.f32.mrf.mxu0
      %v7287 = vadd.f32 %v7193, %v7286
      %v7288 = vpop.f32.mrf.mxu0
      %v7289 = vadd.f32 %v7195, %v7288
      %7290 = vmatmul.bf16.gmra.mxu0 %v6769
      %v7291 = vpop.f32.mrf.mxu0
      %v7292 = vadd.f32 %v7198, %v7291
      %v7293 = vpop.f32.mrf.mxu0
      %v7294 = vadd.f32 %v7200, %v7293
      %7295 = vmatmul.bf16.gmra.mxu0 %v6774
      %v7296 = vpop.f32.mrf.mxu0
      %v7297 = vadd.f32 %v7203, %v7296
      %v7298 = vpop.f32.mrf.mxu0
      %v7299 = vadd.f32 %v7205, %v7298
      %7300 = vmatmul.bf16.gmra.mxu0 %v6779
      %v7301 = vpop.f32.mrf.mxu0
      %v7302 = vadd.f32 %v7208, %v7301
      %v7303 = vpop.f32.mrf.mxu0
      %v7304 = vadd.f32 %v7210, %v7303
      %7305 = vmatmul.bf16.gmra.mxu0 %v6784
      %v7306 = vpop.f32.mrf.mxu0
      %v7307 = vadd.f32 %v7213, %v7306
      %v7308 = vpop.f32.mrf.mxu0
      %v7309 = vadd.f32 %v7215, %v7308
      %7310 = vdwg.mxu0
      %7311 = vmatpush.bf16.msra.mxu0 %v7023
      %7312 = vmatpush.bf16.msra.mxu0 %v7022
      %7313 = vmatpush.bf16.msra.mxu0 %v7021
      %7314 = vmatpush.bf16.msra.mxu0 %v7020
      %7315 = vmatpush.bf16.msra.mxu0 %v7019
      %7316 = vmatpush.bf16.msra.mxu0 %v7018
      %7317 = vmatpush.bf16.msra.mxu0 %v7017
      %7318 = vmatpush.bf16.msra.mxu0 %v7016
      %7319 = vmatmul.bf16.gmra.mxu0 %v6705
      %v7320 = vpop.f32.mrf.mxu0
      %v7321 = vadd.f32 %v7227, %v7320
      %v7322 = vpop.f32.mrf.mxu0
      %v7323 = vadd.f32 %v7229, %v7322
      %7324 = vmatmul.bf16.gmra.mxu0 %v6710
      %v7325 = vpop.f32.mrf.mxu0
      %v7326 = vadd.f32 %v7232, %v7325
      %v7327 = vpop.f32.mrf.mxu0
      %v7328 = vadd.f32 %v7234, %v7327
      %7329 = vmatmul.bf16.gmra.mxu0 %v6715
      %v7330 = vpop.f32.mrf.mxu0
      %v7331 = vadd.f32 %v7237, %v7330
      %v7332 = vpop.f32.mrf.mxu0
      %v7333 = vadd.f32 %v7239, %v7332
      %7334 = vmatmul.bf16.gmra.mxu0 %v6720
      %v7335 = vpop.f32.mrf.mxu0
      %v7336 = vadd.f32 %v7242, %v7335
      %v7337 = vpop.f32.mrf.mxu0
      %v7338 = vadd.f32 %v7244, %v7337
      %7339 = vmatmul.bf16.gmra.mxu0 %v6725
      %v7340 = vpop.f32.mrf.mxu0
      %v7341 = vadd.f32 %v7247, %v7340
      %v7342 = vpop.f32.mrf.mxu0
      %v7343 = vadd.f32 %v7249, %v7342
      %7344 = vmatmul.bf16.gmra.mxu0 %v6730
      %v7345 = vpop.f32.mrf.mxu0
      %v7346 = vadd.f32 %v7252, %v7345
      %v7347 = vpop.f32.mrf.mxu0
      %v7348 = vadd.f32 %v7254, %v7347
      %7349 = vmatmul.bf16.gmra.mxu0 %v6735
      %v7350 = vpop.f32.mrf.mxu0
      %v7351 = vadd.f32 %v7257, %v7350
      %v7352 = vpop.f32.mrf.mxu0
      %v7353 = vadd.f32 %v7259, %v7352
      %7354 = vmatmul.bf16.gmra.mxu0 %v6740
      %v7355 = vpop.f32.mrf.mxu0
      %v7356 = vadd.f32 %v7262, %v7355
      %v7357 = vpop.f32.mrf.mxu0
      %v7358 = vadd.f32 %v7264, %v7357
      %7359 = vmatmul.bf16.gmra.mxu0 %v6745
      %v7360 = vpop.f32.mrf.mxu0
      %v7361 = vadd.f32 %v7267, %v7360
      %v7362 = vpop.f32.mrf.mxu0
      %v7363 = vadd.f32 %v7269, %v7362
      %7364 = vmatmul.bf16.gmra.mxu0 %v6750
      %v7365 = vpop.f32.mrf.mxu0
      %v7366 = vadd.f32 %v7272, %v7365
      %v7367 = vpop.f32.mrf.mxu0
      %v7368 = vadd.f32 %v7274, %v7367
      %7369 = vmatmul.bf16.gmra.mxu0 %v6755
      %v7370 = vpop.f32.mrf.mxu0
      %v7371 = vadd.f32 %v7277, %v7370
      %v7372 = vpop.f32.mrf.mxu0
      %v7373 = vadd.f32 %v7279, %v7372
      %7374 = vmatmul.bf16.gmra.mxu0 %v6760
      %v7375 = vpop.f32.mrf.mxu0
      %v7376 = vadd.f32 %v7282, %v7375
      %v7377 = vpop.f32.mrf.mxu0
      %v7378 = vadd.f32 %v7284, %v7377
      %7379 = vmatmul.bf16.gmra.mxu0 %v6765
      %v7380 = vpop.f32.mrf.mxu0
      %v7381 = vadd.f32 %v7287, %v7380
      %v7382 = vpop.f32.mrf.mxu0
      %v7383 = vadd.f32 %v7289, %v7382
      %7384 = vmatmul.bf16.gmra.mxu0 %v6770
      %v7385 = vpop.f32.mrf.mxu0
      %v7386 = vadd.f32 %v7292, %v7385
      %v7387 = vpop.f32.mrf.mxu0
      %v7388 = vadd.f32 %v7294, %v7387
      %7389 = vmatmul.bf16.gmra.mxu0 %v6775
      %v7390 = vpop.f32.mrf.mxu0
      %v7391 = vadd.f32 %v7297, %v7390
      %v7392 = vpop.f32.mrf.mxu0
      %v7393 = vadd.f32 %v7299, %v7392
      %7394 = vmatmul.bf16.gmra.mxu0 %v6780
      %v7395 = vpop.f32.mrf.mxu0
      %v7396 = vadd.f32 %v7302, %v7395
      %v7397 = vpop.f32.mrf.mxu0
      %v7398 = vadd.f32 %v7304, %v7397
      %7399 = vmatmul.bf16.gmra.mxu0 %v6785
      %v7400 = vpop.f32.mrf.mxu0
      %v7401 = vadd.f32 %v7307, %v7400
      %v7402 = vpop.f32.mrf.mxu0
      %v7403 = vadd.f32 %v7309, %v7402
      %7404 = vdwg.mxu0
      %7405 = vmatpush.bf16.msra.mxu0 %v7031
      %7406 = vmatpush.bf16.msra.mxu0 %v7030
      %7407 = vmatpush.bf16.msra.mxu0 %v7029
      %7408 = vmatpush.bf16.msra.mxu0 %v7028
      %7409 = vmatpush.bf16.msra.mxu0 %v7027
      %7410 = vmatpush.bf16.msra.mxu0 %v7026
      %7411 = vmatpush.bf16.msra.mxu0 %v7025
      %7412 = vmatpush.bf16.msra.mxu0 %v7024
      %7413 = vmatmul.bf16.gmra.mxu0 %v6706
      %v7414 = vpop.f32.mrf.mxu0
      %v7415 = vadd.f32 %v7321, %v7414
      %v7416 = vpop.f32.mrf.mxu0
      %v7417 = vadd.f32 %v7323, %v7416
      %7418 = vmatmul.bf16.gmra.mxu0 %v6711
      %v7419 = vpop.f32.mrf.mxu0
      %v7420 = vadd.f32 %v7326, %v7419
      %v7421 = vpop.f32.mrf.mxu0
      %v7422 = vadd.f32 %v7328, %v7421
      %7423 = vmatmul.bf16.gmra.mxu0 %v6716
      %v7424 = vpop.f32.mrf.mxu0
      %v7425 = vadd.f32 %v7331, %v7424
      %v7426 = vpop.f32.mrf.mxu0
      %v7427 = vadd.f32 %v7333, %v7426
      %7428 = vmatmul.bf16.gmra.mxu0 %v6721
      %v7429 = vpop.f32.mrf.mxu0
      %v7430 = vadd.f32 %v7336, %v7429
      %v7431 = vpop.f32.mrf.mxu0
      %v7432 = vadd.f32 %v7338, %v7431
      %7433 = vmatmul.bf16.gmra.mxu0 %v6726
      %v7434 = vpop.f32.mrf.mxu0
      %v7435 = vadd.f32 %v7341, %v7434
      %v7436 = vpop.f32.mrf.mxu0
      %v7437 = vadd.f32 %v7343, %v7436
      %7438 = vmatmul.bf16.gmra.mxu0 %v6731
      %v7439 = vpop.f32.mrf.mxu0
      %v7440 = vadd.f32 %v7346, %v7439
      %v7441 = vpop.f32.mrf.mxu0
      %v7442 = vadd.f32 %v7348, %v7441
      %7443 = vmatmul.bf16.gmra.mxu0 %v6736
      %v7444 = vpop.f32.mrf.mxu0
      %v7445 = vadd.f32 %v7351, %v7444
      %v7446 = vpop.f32.mrf.mxu0
      %v7447 = vadd.f32 %v7353, %v7446
      %7448 = vmatmul.bf16.gmra.mxu0 %v6741
      %v7449 = vpop.f32.mrf.mxu0
      %v7450 = vadd.f32 %v7356, %v7449
      %v7451 = vpop.f32.mrf.mxu0
      %v7452 = vadd.f32 %v7358, %v7451
      %7453 = vmatmul.bf16.gmra.mxu0 %v6746
      %v7454 = vpop.f32.mrf.mxu0
      %v7455 = vadd.f32 %v7361, %v7454
      %v7456 = vpop.f32.mrf.mxu0
      %v7457 = vadd.f32 %v7363, %v7456
      %7458 = vmatmul.bf16.gmra.mxu0 %v6751
      %v7459 = vpop.f32.mrf.mxu0
      %v7460 = vadd.f32 %v7366, %v7459
      %v7461 = vpop.f32.mrf.mxu0
      %v7462 = vadd.f32 %v7368, %v7461
      %7463 = vmatmul.bf16.gmra.mxu0 %v6756
      %v7464 = vpop.f32.mrf.mxu0
      %v7465 = vadd.f32 %v7371, %v7464
      %v7466 = vpop.f32.mrf.mxu0
      %v7467 = vadd.f32 %v7373, %v7466
      %7468 = vmatmul.bf16.gmra.mxu0 %v6761
      %v7469 = vpop.f32.mrf.mxu0
      %v7470 = vadd.f32 %v7376, %v7469
      %v7471 = vpop.f32.mrf.mxu0
      %v7472 = vadd.f32 %v7378, %v7471
      %7473 = vmatmul.bf16.gmra.mxu0 %v6766
      %v7474 = vpop.f32.mrf.mxu0
      %v7475 = vadd.f32 %v7381, %v7474
      %v7476 = vpop.f32.mrf.mxu0
      %v7477 = vadd.f32 %v7383, %v7476
      %7478 = vmatmul.bf16.gmra.mxu0 %v6771
      %v7479 = vpop.f32.mrf.mxu0
      %v7480 = vadd.f32 %v7386, %v7479
      %v7481 = vpop.f32.mrf.mxu0
      %v7482 = vadd.f32 %v7388, %v7481
      %7483 = vmatmul.bf16.gmra.mxu0 %v6776
      %v7484 = vpop.f32.mrf.mxu0
      %v7485 = vadd.f32 %v7391, %v7484
      %v7486 = vpop.f32.mrf.mxu0
      %v7487 = vadd.f32 %v7393, %v7486
      %7488 = vmatmul.bf16.gmra.mxu0 %v6781
      %v7489 = vpop.f32.mrf.mxu0
      %v7490 = vadd.f32 %v7396, %v7489
      %v7491 = vpop.f32.mrf.mxu0
      %v7492 = vadd.f32 %v7398, %v7491
      %7493 = vmatmul.bf16.gmra.mxu0 %v6786
      %v7494 = vpop.f32.mrf.mxu0
      %v7495 = vadd.f32 %v7401, %v7494
      %v7496 = vpop.f32.mrf.mxu0
      %v7497 = vadd.f32 %v7403, %v7496
      %7498 = vdwg.mxu0
      %7499 = vmatpush.bf16.msra.mxu0 0
      %7500 = vmatpush.bf16.msra.mxu0 0
      %7501 = vmatpush.bf16.msra.mxu0 0
      %7502 = vmatpush.bf16.msra.mxu0 0
      %7503 = vmatpush.bf16.msra.mxu0 %v7035
      %7504 = vmatpush.bf16.msra.mxu0 %v7034
      %7505 = vmatpush.bf16.msra.mxu0 %v7033
      %7506 = vmatpush.bf16.msra.mxu0 %v7032
      %7507 = vmatmul.bf16.gmra.mxu0 %v7073
      %v7508 = vpop.f32.mrf.mxu0
      %v7509 = vadd.f32 %v7415, %v7508
      %v7510 = vpop.f32.mrf.mxu0
      %v7511 = vadd.f32 %v7417, %v7510
      %7512 = vmatmul.bf16.gmra.mxu0 %v7076
      %v7513 = vpop.f32.mrf.mxu0
      %v7514 = vadd.f32 %v7420, %v7513
      %v7515 = vpop.f32.mrf.mxu0
      %v7516 = vadd.f32 %v7422, %v7515
      %7517 = vmatmul.bf16.gmra.mxu0 %v7079
      %v7518 = vpop.f32.mrf.mxu0
      %v7519 = vadd.f32 %v7425, %v7518
      %v7520 = vpop.f32.mrf.mxu0
      %v7521 = vadd.f32 %v7427, %v7520
      %7522 = vmatmul.bf16.gmra.mxu0 %v7082
      %v7523 = vpop.f32.mrf.mxu0
      %v7524 = vadd.f32 %v7430, %v7523
      %v7525 = vpop.f32.mrf.mxu0
      %v7526 = vadd.f32 %v7432, %v7525
      %7527 = vmatmul.bf16.gmra.mxu0 %v7085
      %v7528 = vpop.f32.mrf.mxu0
      %v7529 = vadd.f32 %v7435, %v7528
      %v7530 = vpop.f32.mrf.mxu0
      %v7531 = vadd.f32 %v7437, %v7530
      %7532 = vmatmul.bf16.gmra.mxu0 %v7088
      %v7533 = vpop.f32.mrf.mxu0
      %v7534 = vadd.f32 %v7440, %v7533
      %v7535 = vpop.f32.mrf.mxu0
      %v7536 = vadd.f32 %v7442, %v7535
      %7537 = vmatmul.bf16.gmra.mxu0 %v7091
      %v7538 = vpop.f32.mrf.mxu0
      %v7539 = vadd.f32 %v7445, %v7538
      %v7540 = vpop.f32.mrf.mxu0
      %v7541 = vadd.f32 %v7447, %v7540
      %7542 = vmatmul.bf16.gmra.mxu0 %v7094
      %v7543 = vpop.f32.mrf.mxu0
      %v7544 = vadd.f32 %v7450, %v7543
      %v7545 = vpop.f32.mrf.mxu0
      %v7546 = vadd.f32 %v7452, %v7545
      %7547 = vmatmul.bf16.gmra.mxu0 %v7097
      %v7548 = vpop.f32.mrf.mxu0
      %v7549 = vadd.f32 %v7455, %v7548
      %v7550 = vpop.f32.mrf.mxu0
      %v7551 = vadd.f32 %v7457, %v7550
      %7552 = vmatmul.bf16.gmra.mxu0 %v7100
      %v7553 = vpop.f32.mrf.mxu0
      %v7554 = vadd.f32 %v7460, %v7553
      %v7555 = vpop.f32.mrf.mxu0
      %v7556 = vadd.f32 %v7462, %v7555
      %7557 = vmatmul.bf16.gmra.mxu0 %v7103
      %v7558 = vpop.f32.mrf.mxu0
      %v7559 = vadd.f32 %v7465, %v7558
      %v7560 = vpop.f32.mrf.mxu0
      %v7561 = vadd.f32 %v7467, %v7560
      %7562 = vmatmul.bf16.gmra.mxu0 %v7106
      %v7563 = vpop.f32.mrf.mxu0
      %v7564 = vadd.f32 %v7470, %v7563
      %v7565 = vpop.f32.mrf.mxu0
      %v7566 = vadd.f32 %v7472, %v7565
      %7567 = vmatmul.bf16.gmra.mxu0 %v7109
      %v7568 = vpop.f32.mrf.mxu0
      %v7569 = vadd.f32 %v7475, %v7568
      %v7570 = vpop.f32.mrf.mxu0
      %v7571 = vadd.f32 %v7477, %v7570
      %7572 = vmatmul.bf16.gmra.mxu0 %v7112
      %v7573 = vpop.f32.mrf.mxu0
      %v7574 = vadd.f32 %v7480, %v7573
      %v7575 = vpop.f32.mrf.mxu0
      %v7576 = vadd.f32 %v7482, %v7575
      %7577 = vmatmul.bf16.gmra.mxu0 %v7115
      %v7578 = vpop.f32.mrf.mxu0
      %v7579 = vadd.f32 %v7485, %v7578
      %v7580 = vpop.f32.mrf.mxu0
      %v7581 = vadd.f32 %v7487, %v7580
      %7582 = vmatmul.bf16.gmra.mxu0 %v7118
      %v7583 = vpop.f32.mrf.mxu0
      %v7584 = vadd.f32 %v7490, %v7583
      %v7585 = vpop.f32.mrf.mxu0
      %v7586 = vadd.f32 %v7492, %v7585
      %7587 = vmatmul.bf16.gmra.mxu0 %v7121
      %v7588 = vpop.f32.mrf.mxu0
      %v7589 = vadd.f32 %v7495, %v7588
      %v7590 = vpop.f32.mrf.mxu0
      %v7591 = vadd.f32 %v7497, %v7590
      %7592 = vdwg.mxu0
      %v7593 = vadd.f32 %v642, %v7509
      %v7594 = vadd.f32 %v643, %v7511
      %v7595 = vadd.f32 %v644, %v7514
      %v7596 = vadd.f32 %v645, %v7516
      %v7597 = vadd.f32 %v646, %v7519
      %v7598 = vadd.f32 %v647, %v7521
      %v7599 = vadd.f32 %v648, %v7524
      %v7600 = vadd.f32 %v649, %v7526
      %v7601 = vadd.f32 %v650, %v7529
      %v7602 = vadd.f32 %v651, %v7531
      %v7603 = vadd.f32 %v652, %v7534
      %v7604 = vadd.f32 %v653, %v7536
      %v7605 = vadd.f32 %v654, %v7539
      %v7606 = vadd.f32 %v655, %v7541
      %v7607 = vadd.f32 %v656, %v7544
      %v7608 = vadd.f32 %v657, %v7546
      %v7609 = vadd.f32 %v658, %v7549
      %v7610 = vadd.f32 %v659, %v7551
      %v7611 = vadd.f32 %v660, %v7554
      %v7612 = vadd.f32 %v661, %v7556
      %v7613 = vadd.f32 %v662, %v7559
      %v7614 = vadd.f32 %v663, %v7561
      %v7615 = vadd.f32 %v664, %v7564
      %v7616 = vadd.f32 %v665, %v7566
      %v7617 = vadd.f32 %v666, %v7569
      %v7618 = vadd.f32 %v667, %v7571
      %v7619 = vadd.f32 %v668, %v7574
      %v7620 = vadd.f32 %v669, %v7576
      %v7621 = vadd.f32 %v670, %v7579
      %v7622 = vadd.f32 %v671, %v7581
      %v7623 = vadd.f32 %v672, %v7584
      %v7624 = vadd.f32 %v673, %v7586
      %v7625 = vadd.f32 %v674, %v7589
      %v7626 = vadd.f32 %v675, %v7591
      %7627 = vst.msk [vmem:[%s499] sm:$0xff] %vm1082, %v7593
      %7628 = vst.msk [vmem:[%s499 + $0x8] sm:$0xff] %vm1082, %v7594
      %7629 = vst.msk [vmem:[%s499 + $0x10] sm:$0xff] %vm1082, %v7595
      %7630 = vst.msk [vmem:[%s499 + $0x18] sm:$0xff] %vm1082, %v7596
      %7631 = vst.msk [vmem:[%s499 + $0x20] sm:$0xff] %vm1082, %v7597
      %7632 = vst.msk [vmem:[%s499 + $0x28] sm:$0xff] %vm1082, %v7598
      %7633 = vst.msk [vmem:[%s499 + $0x30] sm:$0xff] %vm1082, %v7599
      %7634 = vst.msk [vmem:[%s499 + $0x38] sm:$0xff] %vm1082, %v7600
      %7635 = vst.msk [vmem:[%s499 + $0x40] sm:$0xff] %vm1082, %v7601
      %7636 = vst.msk [vmem:[%s499 + $0x48] sm:$0xff] %vm1082, %v7602
      %7637 = vst.msk [vmem:[%s499 + $0x50] sm:$0xff] %vm1082, %v7603
      %7638 = vst.msk [vmem:[%s499 + $0x58] sm:$0xff] %vm1082, %v7604
      %7639 = vst.msk [vmem:[%s499 + $0x60] sm:$0xff] %vm1082, %v7605
      %7640 = vst.msk [vmem:[%s499 + $0x68] sm:$0xff] %vm1082, %v7606
      %7641 = vst.msk [vmem:[%s499 + $0x70] sm:$0xff] %vm1082, %v7607
      %7642 = vst.msk [vmem:[%s499 + $0x78] sm:$0xff] %vm1082, %v7608
      %7643 = vst.msk [vmem:[%s499 + $0x80] sm:$0xff] %vm1082, %v7609
      %7644 = vst.msk [vmem:[%s499 + $0x88] sm:$0xff] %vm1082, %v7610
      %7645 = vst.msk [vmem:[%s499 + $0x90] sm:$0xff] %vm1082, %v7611
      %7646 = vst.msk [vmem:[%s499 + $0x98] sm:$0xff] %vm1082, %v7612
      %7647 = vst.msk [vmem:[%s499 + $0xa0] sm:$0xff] %vm1082, %v7613
      %7648 = vst.msk [vmem:[%s499 + $0xa8] sm:$0xff] %vm1082, %v7614
      %7649 = vst.msk [vmem:[%s499 + $0xb0] sm:$0xff] %vm1082, %v7615
      %7650 = vst.msk [vmem:[%s499 + $0xb8] sm:$0xff] %vm1082, %v7616
      %7651 = vst.msk [vmem:[%s499 + $0xc0] sm:$0xff] %vm1082, %v7617
      %7652 = vst.msk [vmem:[%s499 + $0xc8] sm:$0xff] %vm1082, %v7618
      %7653 = vst.msk [vmem:[%s499 + $0xd0] sm:$0xff] %vm1082, %v7619
      %7654 = vst.msk [vmem:[%s499 + $0xd8] sm:$0xff] %vm1082, %v7620
      %7655 = vst.msk [vmem:[%s499 + $0xe0] sm:$0xff] %vm1082, %v7621
      %7656 = vst.msk [vmem:[%s499 + $0xe8] sm:$0xff] %vm1082, %v7622
      %7657 = vst.msk [vmem:[%s499 + $0xf0] sm:$0xff] %vm1082, %v7623
      %7658 = vst.msk [vmem:[%s499 + $0xf8] sm:$0xff] %vm1082, %v7624
      %7659 = vst.msk [vmem:[%s499 + $0x100] sm:$0xff] %vm1082, %v7625
      %7660 = vst.msk [vmem:[%s499 + $0x108] sm:$0xff] %vm1082, %v7626
      %p7661 = scmp.lt.s32.totalorder %s24, 1
      %s7662 = scalar_select %p7661, %s24, 1
      %s7663 = smul.addr %s7662, 34
      %s7664 = smul.addr %s7663, 8
      %s7665 = scalar_lea.vmem %s9, %s7664
      // Predicated region
      $region61: #{side_embeded_feature_extract_block.1} parent=55 // pred_check
        %p7666 = pneg %p279
      $region62: #{side_embeded_feature_extract_block.1} parent=55 // pred_check_branch
        %7668 = sbr.rel (%p7666) target = $region64
      $region63: #{side_embeded_feature_extract_block.1} parent=55 // pred_region
        _
      $region64: #{side_embeded_feature_extract_block.1} parent=55 // pred_fallthru
        _
    $region56: #{side_embeded_feature_extract_block.1} parent=5 // pred_fallthru
      _
    %p7669 = scmp.le.s32.totalorder 2, %s15
    // Predicated region
    $region65: #{side_embeded_feature_extract_block.1} parent=5 // pred_check
      %p7670 = pneg %p7669
    $region66: #{side_embeded_feature_extract_block.1} parent=5 // pred_check_branch
      %7672 = sbr.rel (%p7670) target = $region68
    $region67: #{side_embeded_feature_extract_block.1} parent=5 // pred_region
      %s7673 = ssub.s32 %s15, 2
      // Predicated region
      $region69: #{side_embeded_feature_extract_block.1} parent=67 // pred_check
        %p7674 = pneg %p285
      $region70: #{side_embeded_feature_extract_block.1} parent=67 // pred_check_branch
        %7676 = sbr.rel (%p7674) target = $region72
      $region71: #{side_embeded_feature_extract_block.1} parent=67 // pred_region
        %p7677 = scmp.lt.s32.totalorder %s26, 1
        %s7678 = scalar_select %p7677, %s26, 1
        %s7679 = smul.addr %s7678, 34
        %s7680 = smul.addr %s7679, 8
        %s7681 = scalar_lea.vmem %s9, %s7680
      $region72: #{side_embeded_feature_extract_block.1} parent=67 // pred_fallthru
        _
    $region68: #{side_embeded_feature_extract_block.1} parent=5 // pred_fallthru
      _
  $region6: #{side_embeded_feature_extract_block.1} parent=0 // loop_footer
    %s19 = sadd.s32 1, %s15
  $region7: #{side_embeded_feature_extract_block.1} parent=0 // loop_footer_branch
    %14 = sbr.rel target = $region3
  $region8: #{side_embeded_feature_extract_block.1} parent=0 // loop_exit
    _

</llo_original>
